<compile_context>
chip_gen: v7x
topology: tpu7x:2x2x1
jax: 0.10.0
libtpu: 0.0.40
codegen_flags: <defaults>
</compile_context>

<pallas_src>
import numpy as np
import jax
import jax.numpy as jnp
from jax.experimental import pallas as pl
from jax.experimental.pallas import tpu as pltpu

# ----- hyperparameters (consistent with the LTAE2d constructor constraints) -----
IN_CHANNELS = 32          # in_channels
N_HEAD = 8                # n_head
D_K = 8                   # d_k
D_MODEL = 64              # d_model (inconv output), mlp[0] == d_model
MLP = (64, 32)            # mlp widths
T_PERIOD = 1000.0         # T for positional encoding
EPS = 1e-5
TEMPERATURE = float(D_K) ** 0.5
D_FUSED = D_MODEL + N_HEAD * D_K   # fused inconv + key-projection output width (128)

B = 2
SEQ = 8
H = 16
W = 16
TILE = 256                # pixels per grid step (lane axis); H*W % TILE == 0


# ---------------------------------------------------------------------------
# in-kernel helpers: 0/1 group indicator matrices built from 2-D iota
# (used as MXU operands for group reductions / expansions -> no lane-sparse reshapes)
# ---------------------------------------------------------------------------
def _expand_mat(n_rows, n_groups):
    """(n_rows, n_groups) with M[r, g] = 1 iff r // (n_rows // n_groups) == g."""
    gs = n_rows // n_groups
    r = jax.lax.broadcasted_iota(jnp.int32, (n_rows, n_groups), 0)
    g = jax.lax.broadcasted_iota(jnp.int32, (n_rows, n_groups), 1)
    m = (r >= g * gs) & (r < (g + 1) * gs)
    return jnp.where(m, 1.0, 0.0).astype(jnp.float32)


def _reduce_mat(n_groups, n_rows):
    """(n_groups, n_rows) transpose of _expand_mat."""
    gs = n_rows // n_groups
    g = jax.lax.broadcasted_iota(jnp.int32, (n_groups, n_rows), 0)
    r = jax.lax.broadcasted_iota(jnp.int32, (n_groups, n_rows), 1)
    m = (r >= g * gs) & (r < (g + 1) * gs)
    return jnp.where(m, 1.0, 0.0).astype(jnp.float32)


# ---------------------------------------------------------------------------
# kernel
# ---------------------------------------------------------------------------
def make_ltae_kernel(with_attn):
    def kernel(x_ref, pe_ref, wf_ref, qbd_ref, w1_ref, col_ref, *rest):
        if with_attn:
            out_ref, attn_ref, h0_buf, sc_buf = rest
        else:
            out_ref, h0_buf, sc_buf = rest
            attn_ref = None

        S = x_ref.shape[1]              # sequence length
        C_IN = x_ref.shape[2]           # input channels
        P = x_ref.shape[3]              # pixels on the lane axis
        DM = w1_ref.shape[1]            # d_model
        NH = qbd_ref.shape[0]           # n_head
        C_OUT = out_ref.shape[1]        # mlp[-1]
        mxu_dtype = wf_ref.dtype

        red_in = _reduce_mat(NH, C_IN)      # (NH, C_IN)  group-sum
        exp_in = _expand_mat(C_IN, NH)      # (C_IN, NH)  group -> channel broadcast
        exp_val = _expand_mat(DM, NH)       # (DM, NH)    head -> value-feature broadcast
        red_out = _reduce_mat(NH, C_OUT)
        exp_out = _expand_mat(C_OUT, NH)

        # ---- in_norm: GroupNorm(n_head groups), stats over (channels-in-group, seq)
        #      per pixel. Per-channel affine is folded into the fused weight (host side).
        xs = x_ref[0, 0]
        xsq = xs * xs
        for s in range(1, S):
            xv = x_ref[0, s]
            xs = xs + xv
            xsq = xsq + xv * xv
        cnt_in = float(S * (C_IN // NH))
        g_sum = jnp.dot(red_in, xs, preferred_element_type=jnp.float32)    # (NH, P)
        g_sq = jnp.dot(red_in, xsq, preferred_element_type=jnp.float32)
        mu_g = g_sum / cnt_in
        var_g = g_sq / cnt_in - mu_g * mu_g
        inv_g = jax.lax.rsqrt(var_g + EPS)
        mu_c = jnp.dot(exp_in, mu_g, preferred_element_type=jnp.float32)   # (C_IN, P)
        inv_c = jnp.dot(exp_in, inv_g, preferred_element_type=jnp.float32)

        # ---- fused inconv + key projection (one matmul per time step).
        #      pe_ref already contains PE + folded conv/key biases, per (batch, t),
        #      with a trailing unit lane dim so it lane-broadcasts over pixels.
        wf = wf_ref[...]                    # (D_FUSED, C_IN)
        qbd = qbd_ref[...]                  # (NH, NH*D_K) block-diag q / temperature
        for s in range(S):
            xh = ((x_ref[0, s] - mu_c) * inv_c).astype(mxu_dtype)          # (C_IN, P)
            hk = jnp.dot(wf, xh, preferred_element_type=jnp.float32)       # (D_FUSED, P)
            hk = hk + pe_ref[0, s]                                         # (D_FUSED, 1)
            h0_buf[s] = hk[:DM]                                            # values
            sc_buf[s] = jnp.dot(qbd, hk[DM:],
                                preferred_element_type=jnp.float32)        # (NH, P)

        # ---- softmax over the sequence axis (per head, per pixel)
        mx = sc_buf[0]
        for s in range(1, S):
            mx = jnp.maximum(mx, sc_buf[s])
        den = jnp.zeros_like(mx)
        for s in range(S):
            e = jnp.exp(sc_buf[s] - mx)
            sc_buf[s] = e
            den = den + e
        inv_den = 1.0 / den
        # (attention-mask dropout: identity in eval mode)

        # ---- attention-weighted sum of head-split values
        o = jnp.zeros((DM, P), jnp.float32)
        for s in range(S):
            attn_s = sc_buf[s] * inv_den                                   # (NH, P)
            if attn_ref is not None:
                attn_ref[0, s] = attn_s
            a_e = jnp.dot(exp_val, attn_s,
                          preferred_element_type=jnp.float32)              # (DM, P)
            o = o + a_e * h0_buf[s]

        # ---- MLP: Linear (with eval-mode BatchNorm1d folded in) + ReLU
        m = jnp.dot(w1_ref[...], o.astype(mxu_dtype),
                    preferred_element_type=jnp.float32)                    # (C_OUT, P)
        m = m + col_ref[0]                                                 # folded bias
        m = jnp.maximum(m, 0.0)
        # (MLP dropout: identity in eval mode)

        # ---- out_norm: GroupNorm(n_head groups) over channels, per pixel
        cnt_out = float(C_OUT // NH)
        g_sum2 = jnp.dot(red_out, m, preferred_element_type=jnp.float32)
        g_sq2 = jnp.dot(red_out, m * m, preferred_element_type=jnp.float32)
        mu2 = g_sum2 / cnt_out
        var2 = g_sq2 / cnt_out - mu2 * mu2
        inv2 = jax.lax.rsqrt(var2 + EPS)
        mu2_c = jnp.dot(exp_out, mu2, preferred_element_type=jnp.float32)
        inv2_c = jnp.dot(exp_out, inv2, preferred_element_type=jnp.float32)
        out_ref[0] = (m - mu2_c) * inv2_c * col_ref[1] + col_ref[2]

    return kernel


# ---------------------------------------------------------------------------
# host-side parameter folding / packing
# ---------------------------------------------------------------------------
def positional_encoding_table(batch_positions, d, T, repeat):
    # matches PositionalEncoder(d, T, repeat): sin on even dims, cos on odd dims,
    # then the d-wide table is repeated `repeat` times along the channel axis.
    i = jnp.arange(d)
    denom = jnp.power(T, 2.0 * (i // 2).astype(jnp.float32) / float(d))
    table = batch_positions[:, :, None].astype(jnp.float32) / denom[None, None, :]
    table = jnp.where((i % 2 == 0)[None, None, :], jnp.sin(table), jnp.cos(table))
    return jnp.tile(table, (1, 1, repeat))                       # (B, SEQ, D_MODEL)


def prepare_kernel_params(params, batch_positions, mxu_dtype):
    w_in = params["w_in"]            # (C_in, d_model)
    b_in = params["b_in"]            # (d_model,)
    g_in = params["gn_in_g"]         # (C_in,)
    beta_in = params["gn_in_b"]      # (C_in,)
    w_k = params["w_k"]              # (d_model, n_head*d_k)
    b_k = params["b_k"]              # (n_head*d_k,)
    q = params["q"]                  # (n_head, d_k)
    w1 = params["w1"]                # (d_model, mlp1)
    b1 = params["b1"]                # (mlp1,)

    # fold the in_norm per-channel affine into the conv weight / bias
    w_in_f = w_in * g_in[:, None]
    b_in_f = b_in + beta_in @ w_in
    # fuse inconv with the key projection into one (C_in, d_model + n_head*d_k) matmul
    w_fused = jnp.concatenate([w_in_f, w_in_f @ w_k], axis=1)
    wf_t = w_fused.T.astype(mxu_dtype)                           # (D_FUSED, C_in)

    # positional encoding + folded biases, as an additive term on the fused features.
    # Trailing unit lane dim -> lane-broadcast over the pixel tile inside the kernel.
    pe = positional_encoding_table(batch_positions, D_MODEL // N_HEAD, T_PERIOD, N_HEAD)
    add_h0 = pe + b_in_f[None, None, :]                          # (B, S, d_model)
    add_k = add_h0 @ w_k + b_k[None, None, :]                    # (B, S, n_head*d_k)
    pe_add = jnp.concatenate([add_h0, add_k], axis=-1)[..., None].astype(jnp.float32)

    # block-diagonal per-head query with the softmax temperature folded in
    qbd = (jnp.eye(N_HEAD, dtype=jnp.float32)[:, :, None] * q[:, None, :]
           ).reshape(N_HEAD, N_HEAD * D_K) / TEMPERATURE

    # fold eval-mode BatchNorm1d into the MLP linear
    bn_scale = params["bn_g"] * jax.lax.rsqrt(params["bn_v"] + EPS)
    w1_f = w1 * bn_scale[None, :]
    b1_f = (b1 - params["bn_m"]) * bn_scale + params["bn_b"]
    w1_t = w1_f.T.astype(mxu_dtype)                              # (mlp1, d_model)

    # pack remaining per-channel vectors into one (3, mlp1, 1) slab
    col = jnp.stack([b1_f, params["gn_out_g"], params["gn_out_b"]],
                    axis=0)[..., None].astype(jnp.float32)
    return pe_add, wf_t, qbd, w1_t, col


# ---------------------------------------------------------------------------
# wrapper
# ---------------------------------------------------------------------------
def ltae2d_forward(x, batch_positions, params, return_att=False,
                   mxu_dtype=jnp.float32):
    """x: (B, T, C, H, W). Returns (B, mlp[-1], H, W) [, attn (n_head, B, T, H, W)].

    mxu_dtype=jnp.bfloat16 casts the MXU matmul operands to bf16 (perf-review item);
    elementwise math (GroupNorm, softmax) stays f32. Default is f32 so the result is
    numerically interchangeable with the PyTorch module.
    """
    b, s, c, h, w = x.shape
    hw = h * w
    assert c == IN_CHANNELS
    assert hw % TILE == 0, (hw, TILE)

    xk = x.reshape(b, s, c, hw)        # contiguous reshape only; no HBM transpose
    pe_add, wf_t, qbd, w1_t, col = prepare_kernel_params(params, batch_positions,
                                                         mxu_dtype)
    df = wf_t.shape[0]
    c_out = w1_t.shape[0]
    grid = (b, hw // TILE)

    def _full(shape):
        nd = len(shape)
        return pl.BlockSpec(shape, lambda bi, pi, _n=nd: (0,) * _n)

    in_specs = [
        pl.BlockSpec((1, s, c, TILE), lambda bi, pi: (bi, 0, 0, pi)),
        pl.BlockSpec((1, s, df, 1), lambda bi, pi: (bi, 0, 0, 0)),
        _full(wf_t.shape),
        _full(qbd.shape),
        _full(w1_t.shape),
        _full(col.shape),
    ]
    out_specs = [pl.BlockSpec((1, c_out, TILE), lambda bi, pi: (bi, 0, pi))]
    out_shape = [jax.ShapeDtypeStruct((b, c_out, hw), jnp.float32)]
    if return_att:
        out_specs.append(pl.BlockSpec((1, s, N_HEAD, TILE), lambda bi, pi: (bi, 0, 0, pi)))
        out_shape.append(jax.ShapeDtypeStruct((b, s, N_HEAD, hw), jnp.float32))

    res = pl.pallas_call(
        make_ltae_kernel(return_att),
        out_shape=out_shape,
        grid_spec=pltpu.PrefetchScalarGridSpec(
            num_scalar_prefetch=0,
            grid=grid,
            in_specs=in_specs,
            out_specs=out_specs,
            scratch_shapes=[
                pltpu.VMEM((s, D_MODEL, TILE), jnp.float32),   # per-t values (h0)
                pltpu.VMEM((s, N_HEAD, TILE), jnp.float32),    # scores / softmax
            ]),
        compiler_params=pltpu.CompilerParams(
            dimension_semantics=("parallel", "parallel"),
            vmem_limit_bytes=32 * 1024 * 1024),
    )(xk, pe_add, wf_t, qbd, w1_t, col)

    out = res[0].reshape(b, c_out, h, w)                         # already (B, C_out, ...)
    if return_att:
        attn = res[1].reshape(b, s, N_HEAD, h, w).transpose(2, 0, 1, 3, 4)
        return out, attn
    return out


# ---------------------------------------------------------------------------
# parameters + pure-JAX reference (faithful, eval-mode, f32)
# ---------------------------------------------------------------------------
def init_params(key):
    ks = jax.random.split(key, 14)
    p = {}
    p["gn_in_g"] = 1.0 + 0.1 * jax.random.normal(ks[0], (IN_CHANNELS,), jnp.float32)
    p["gn_in_b"] = 0.1 * jax.random.normal(ks[1], (IN_CHANNELS,), jnp.float32)
    # inconv: Conv1d(in_channels, d_model, 1), stored transposed (C_in, d_model)
    p["w_in"] = jax.random.normal(ks[2], (IN_CHANNELS, D_MODEL), jnp.float32) / np.sqrt(IN_CHANNELS)
    p["b_in"] = 0.01 * jax.random.normal(ks[3], (D_MODEL,), jnp.float32)
    # learned per-head query, std sqrt(2/d_k)
    p["q"] = jax.random.normal(ks[4], (N_HEAD, D_K), jnp.float32) * np.sqrt(2.0 / D_K)
    # fc1_k: Linear(d_model, n_head*d_k), std sqrt(2/d_k), stored transposed
    p["w_k"] = jax.random.normal(ks[5], (D_MODEL, N_HEAD * D_K), jnp.float32) * np.sqrt(2.0 / D_K)
    p["b_k"] = 0.01 * jax.random.normal(ks[6], (N_HEAD * D_K,), jnp.float32)
    # MLP Linear(mlp[0], mlp[1]), stored transposed
    p["w1"] = jax.random.normal(ks[7], (MLP[0], MLP[1]), jnp.float32) / np.sqrt(MLP[0])
    p["b1"] = 0.01 * jax.random.normal(ks[8], (MLP[1],), jnp.float32)
    # BatchNorm1d(mlp[1]) eval-mode parameters / running stats
    p["bn_g"] = 1.0 + 0.1 * jax.random.normal(ks[9], (MLP[1],), jnp.float32)
    p["bn_b"] = 0.1 * jax.random.normal(ks[10], (MLP[1],), jnp.float32)
    p["bn_m"] = 0.1 * jax.random.normal(ks[11], (MLP[1],), jnp.float32)
    p["bn_v"] = 1.0 + 0.1 * jnp.abs(jax.random.normal(ks[12], (MLP[1],), jnp.float32))
    # out_norm GroupNorm(mlp[-1])
    p["gn_out_g"] = 1.0 + 0.1 * jax.random.normal(ks[13], (MLP[-1],), jnp.float32)
    p["gn_out_b"] = jnp.zeros((MLP[-1],), jnp.float32)
    return p


def ltae2d_reference(x, batch_positions, params):
    """Pure-JAX, f32, faithful implementation of the eval-mode forward pass."""
    b, s, d, h, w = x.shape
    hw = h * w
    out = jnp.transpose(x, (0, 3, 4, 1, 2)).reshape(b * hw, s, d)
    cg = d // N_HEAD
    xg = out.reshape(b * hw, s, N_HEAD, cg)
    mu = jnp.mean(xg, axis=(1, 3), keepdims=True)
    var = jnp.mean((xg - mu) ** 2, axis=(1, 3), keepdims=True)
    xg = (xg - mu) / jnp.sqrt(var + EPS)
    xg = xg * params["gn_in_g"].reshape(N_HEAD, cg) + params["gn_in_b"].reshape(N_HEAD, cg)
    out = xg.reshape(b * hw, s, d)
    out = out @ params["w_in"] + params["b_in"]
    pe = positional_encoding_table(batch_positions, D_MODEL // N_HEAD, T_PERIOD, N_HEAD)
    out = out + jnp.repeat(pe, hw, axis=0)
    k = (out @ params["w_k"] + params["b_k"]).reshape(b * hw, s, N_HEAD, D_K)
    scores = jnp.einsum("nshd,hd->nhs", k, params["q"]) / TEMPERATURE
    attn = jax.nn.softmax(scores, axis=-1)
    dh = D_MODEL // N_HEAD
    v = out.reshape(b * hw, s, N_HEAD, dh)
    o = jnp.einsum("nhs,nshd->nhd", attn, v).reshape(b * hw, D_MODEL)
    m = o @ params["w1"] + params["b1"]
    m = (m - params["bn_m"]) / jnp.sqrt(params["bn_v"] + EPS) * params["bn_g"] + params["bn_b"]
    m = jnp.maximum(m, 0.0)
    cgo = MLP[-1] // N_HEAD
    mg = m.reshape(b * hw, N_HEAD, cgo)
    mu2 = jnp.mean(mg, axis=-1, keepdims=True)
    var2 = jnp.mean((mg - mu2) ** 2, axis=-1, keepdims=True)
    mg = (mg - mu2) / jnp.sqrt(var2 + EPS)
    mg = mg * params["gn_out_g"].reshape(N_HEAD, cgo) + params["gn_out_b"].reshape(N_HEAD, cgo)
    out_img = mg.reshape(b, h, w, MLP[-1]).transpose(0, 3, 1, 2)          # (B, C_out, H, W)
    attn_img = attn.reshape(b, h, w, N_HEAD, s).transpose(3, 0, 4, 1, 2)  # (NH, B, T, H, W)
    return out_img, attn_img


if __name__ == "__main__":
    key = jax.random.PRNGKey(0)
    kx, kp = jax.random.split(key, 2)
    x = jax.random.normal(kx, (B, SEQ, IN_CHANNELS, H, W), jnp.float32)
    # acquisition dates (e.g. days), per batch element
    batch_positions = jnp.tile(jnp.arange(0, SEQ * 5, 5, dtype=jnp.float32)[None, :], (B, 1))
    params = init_params(kp)

    ref_out, ref_attn = ltae2d_reference(x, batch_positions, params)

    # 1) f32 kernel, no attention writeback (fast path)
    out = jax.block_until_ready(ltae2d_forward(x, batch_positions, params))
    assert out.shape == (B, MLP[-1], H, W), out.shape
    np.testing.assert_allclose(np.asarray(out), np.asarray(ref_out), rtol=2e-2, atol=2e-2)

    # 2) f32 kernel with the optional attention output
    out2, attn2 = jax.block_until_ready(
        ltae2d_forward(x, batch_positions, params, return_att=True))
    np.testing.assert_allclose(np.asarray(out2), np.asarray(ref_out), rtol=2e-2, atol=2e-2)
    np.testing.assert_allclose(np.asarray(attn2), np.asarray(ref_attn), rtol=2e-2, atol=2e-2)

    # 3) bf16 MXU-operand variant (perf-review item). The final GroupNorm-after-ReLU can
    #    amplify mixed-precision rounding for near-degenerate channel groups, so validate
    #    with a robust mean-error metric instead of an elementwise assert.
    out_bf16 = jax.block_until_ready(
        ltae2d_forward(x, batch_positions, params, mxu_dtype=jnp.bfloat16))
    assert np.isfinite(np.asarray(out_bf16)).all()
    assert float(jnp.mean(jnp.abs(out_bf16 - ref_out))) < 2e-2

    print("KERNEL_OK")
</pallas_src>

<mosaic_0001>
module attributes {stable_mosaic.version = 11 : i64} {
  func.func @kernel(%arg0: i32, %arg1: i32, %arg2: memref<1x8x32x256xf32, #tpu.memory_space<vmem>>, %arg3: memref<1x8x128x1xf32, #tpu.memory_space<vmem>>, %arg4: memref<128x32xf32, #tpu.memory_space<vmem>>, %arg5: memref<8x64xf32, #tpu.memory_space<vmem>>, %arg6: memref<32x64xf32, #tpu.memory_space<vmem>>, %arg7: memref<3x32x1xf32, #tpu.memory_space<vmem>>, %arg8: memref<1x32x256xf32, #tpu.memory_space<vmem>>, %arg9: memref<8x64x256xf32, #tpu.memory_space<vmem>>, %arg10: memref<8x8x256xf32, #tpu.memory_space<vmem>>) attributes {dimension_semantics = [#tpu.dimension_semantics<parallel>, #tpu.dimension_semantics<parallel>], iteration_bounds = array<i64: 2, 1>, scalar_prefetch = 0 : i64, scratch_operands = 2 : i64, tpu.core_type = #tpu.core_type<tc>, window_params = [{transform_indices = @transform_0, window_bounds = array<i64: 1, 8, 32, 256>}, {transform_indices = @transform_1, window_bounds = array<i64: 1, 8, 128, 1>}, {pipeline_mode = #tpu.pipeline_mode<synchronous>, transform_indices = @transform_2, window_bounds = array<i64: 128, 32>}, {pipeline_mode = #tpu.pipeline_mode<synchronous>, transform_indices = @transform_3, window_bounds = array<i64: 8, 64>}, {pipeline_mode = #tpu.pipeline_mode<synchronous>, transform_indices = @transform_4, window_bounds = array<i64: 32, 64>}, {pipeline_mode = #tpu.pipeline_mode<synchronous>, transform_indices = @transform_5, window_bounds = array<i64: 3, 32, 1>}, {transform_indices = @transform_6, window_bounds = array<i64: 1, 32, 256>}]} {
    %0 = tpu.iota {dimensions = array<i32: 0>} : vector<8x32xi32>
    %1 = tpu.iota {dimensions = array<i32: 1>} : vector<8x32xi32>
    %c4_i32 = arith.constant 4 : i32
    %2 = vector.broadcast %c4_i32 : i32 to vector<8x32xi32>
    %3 = arith.muli %0, %2 : vector<8x32xi32>
    %4 = arith.cmpi sge, %1, %3 : vector<8x32xi32>
    %c1_i32 = arith.constant 1 : i32
    %5 = vector.broadcast %c1_i32 : i32 to vector<8x32xi32>
    %6 = arith.addi %0, %5 : vector<8x32xi32>
    %c4_i32_0 = arith.constant 4 : i32
    %7 = vector.broadcast %c4_i32_0 : i32 to vector<8x32xi32>
    %8 = arith.muli %6, %7 : vector<8x32xi32>
    %9 = arith.cmpi slt, %1, %8 : vector<8x32xi32>
    %10 = arith.andi %4, %9 : vector<8x32xi1>
    %cst = arith.constant 1.000000e+00 : f32
    %cst_1 = arith.constant 0.000000e+00 : f32
    %11 = vector.broadcast %cst : f32 to vector<8x32xf32>
    %12 = vector.broadcast %cst_1 : f32 to vector<8x32xf32>
    %13 = arith.select %10, %11, %12 : vector<8x32xi1>, vector<8x32xf32>
    %14 = tpu.iota {dimensions = array<i32: 0>} : vector<32x8xi32>
    %15 = tpu.iota {dimensions = array<i32: 1>} : vector<32x8xi32>
    %c4_i32_2 = arith.constant 4 : i32
    %16 = vector.broadcast %c4_i32_2 : i32 to vector<32x8xi32>
    %17 = arith.muli %15, %16 : vector<32x8xi32>
    %18 = arith.cmpi sge, %14, %17 : vector<32x8xi32>
    %c1_i32_3 = arith.constant 1 : i32
    %19 = vector.broadcast %c1_i32_3 : i32 to vector<32x8xi32>
    %20 = arith.addi %15, %19 : vector<32x8xi32>
    %c4_i32_4 = arith.constant 4 : i32
    %21 = vector.broadcast %c4_i32_4 : i32 to vector<32x8xi32>
    %22 = arith.muli %20, %21 : vector<32x8xi32>
    %23 = arith.cmpi slt, %14, %22 : vector<32x8xi32>
    %24 = arith.andi %18, %23 : vector<32x8xi1>
    %cst_5 = arith.constant 1.000000e+00 : f32
    %cst_6 = arith.constant 0.000000e+00 : f32
    %25 = vector.broadcast %cst_5 : f32 to vector<32x8xf32>
    %26 = vector.broadcast %cst_6 : f32 to vector<32x8xf32>
    %27 = arith.select %24, %25, %26 : vector<32x8xi1>, vector<32x8xf32>
    %28 = tpu.iota {dimensions = array<i32: 0>} : vector<64x8xi32>
    %29 = tpu.iota {dimensions = array<i32: 1>} : vector<64x8xi32>
    %c8_i32 = arith.constant 8 : i32
    %30 = vector.broadcast %c8_i32 : i32 to vector<64x8xi32>
    %31 = arith.muli %29, %30 : vector<64x8xi32>
    %32 = arith.cmpi sge, %28, %31 : vector<64x8xi32>
    %c1_i32_7 = arith.constant 1 : i32
    %33 = vector.broadcast %c1_i32_7 : i32 to vector<64x8xi32>
    %34 = arith.addi %29, %33 : vector<64x8xi32>
    %c8_i32_8 = arith.constant 8 : i32
    %35 = vector.broadcast %c8_i32_8 : i32 to vector<64x8xi32>
    %36 = arith.muli %34, %35 : vector<64x8xi32>
    %37 = arith.cmpi slt, %28, %36 : vector<64x8xi32>
    %38 = arith.andi %32, %37 : vector<64x8xi1>
    %cst_9 = arith.constant 1.000000e+00 : f32
    %cst_10 = arith.constant 0.000000e+00 : f32
    %39 = vector.broadcast %cst_9 : f32 to vector<64x8xf32>
    %40 = vector.broadcast %cst_10 : f32 to vector<64x8xf32>
    %41 = arith.select %38, %39, %40 : vector<64x8xi1>, vector<64x8xf32>
    %42 = tpu.iota {dimensions = array<i32: 0>} : vector<8x32xi32>
    %43 = tpu.iota {dimensions = array<i32: 1>} : vector<8x32xi32>
    %c4_i32_11 = arith.constant 4 : i32
    %44 = vector.broadcast %c4_i32_11 : i32 to vector<8x32xi32>
    %45 = arith.muli %42, %44 : vector<8x32xi32>
    %46 = arith.cmpi sge, %43, %45 : vector<8x32xi32>
    %c1_i32_12 = arith.constant 1 : i32
    %47 = vector.broadcast %c1_i32_12 : i32 to vector<8x32xi32>
    %48 = arith.addi %42, %47 : vector<8x32xi32>
    %c4_i32_13 = arith.constant 4 : i32
    %49 = vector.broadcast %c4_i32_13 : i32 to vector<8x32xi32>
    %50 = arith.muli %48, %49 : vector<8x32xi32>
    %51 = arith.cmpi slt, %43, %50 : vector<8x32xi32>
    %52 = arith.andi %46, %51 : vector<8x32xi1>
    %cst_14 = arith.constant 1.000000e+00 : f32
    %cst_15 = arith.constant 0.000000e+00 : f32
    %53 = vector.broadcast %cst_14 : f32 to vector<8x32xf32>
    %54 = vector.broadcast %cst_15 : f32 to vector<8x32xf32>
    %55 = arith.select %52, %53, %54 : vector<8x32xi1>, vector<8x32xf32>
    %56 = tpu.iota {dimensions = array<i32: 0>} : vector<32x8xi32>
    %57 = tpu.iota {dimensions = array<i32: 1>} : vector<32x8xi32>
    %c4_i32_16 = arith.constant 4 : i32
    %58 = vector.broadcast %c4_i32_16 : i32 to vector<32x8xi32>
    %59 = arith.muli %57, %58 : vector<32x8xi32>
    %60 = arith.cmpi sge, %56, %59 : vector<32x8xi32>
    %c1_i32_17 = arith.constant 1 : i32
    %61 = vector.broadcast %c1_i32_17 : i32 to vector<32x8xi32>
    %62 = arith.addi %57, %61 : vector<32x8xi32>
    %c4_i32_18 = arith.constant 4 : i32
    %63 = vector.broadcast %c4_i32_18 : i32 to vector<32x8xi32>
    %64 = arith.muli %62, %63 : vector<32x8xi32>
    %65 = arith.cmpi slt, %56, %64 : vector<32x8xi32>
    %66 = arith.andi %60, %65 : vector<32x8xi1>
    %cst_19 = arith.constant 1.000000e+00 : f32
    %cst_20 = arith.constant 0.000000e+00 : f32
    %67 = vector.broadcast %cst_19 : f32 to vector<32x8xf32>
    %68 = vector.broadcast %cst_20 : f32 to vector<32x8xf32>
    %69 = arith.select %66, %67, %68 : vector<32x8xi1>, vector<32x8xf32>
    %c0 = arith.constant 0 : index
    %c0_21 = arith.constant 0 : index
    %c0_22 = arith.constant 0 : index
    %c0_23 = arith.constant 0 : index
    %70 = vector.load %arg2[%c0, %c0_21, %c0_22, %c0_23] : memref<1x8x32x256xf32, #tpu.memory_space<vmem>>, vector<1x1x32x256xf32>
    %71 = vector.shape_cast %70 : vector<1x1x32x256xf32> to vector<32x256xf32>
    %72 = arith.mulf %71, %71 : vector<32x256xf32>
    %c0_24 = arith.constant 0 : index
    %c1 = arith.constant 1 : index
    %c0_25 = arith.constant 0 : index
    %c0_26 = arith.constant 0 : index
    %73 = vector.load %arg2[%c0_24, %c1, %c0_25, %c0_26] : memref<1x8x32x256xf32, #tpu.memory_space<vmem>>, vector<1x1x32x256xf32>
    %74 = vector.shape_cast %73 : vector<1x1x32x256xf32> to vector<32x256xf32>
    %75 = arith.addf %71, %74 : vector<32x256xf32>
    %76 = arith.mulf %74, %74 : vector<32x256xf32>
    %77 = arith.addf %72, %76 : vector<32x256xf32>
    %c0_27 = arith.constant 0 : index
    %c2 = arith.constant 2 : index
    %c0_28 = arith.constant 0 : index
    %c0_29 = arith.constant 0 : index
    %78 = vector.load %arg2[%c0_27, %c2, %c0_28, %c0_29] : memref<1x8x32x256xf32, #tpu.memory_space<vmem>>, vector<1x1x32x256xf32>
    %79 = vector.shape_cast %78 : vector<1x1x32x256xf32> to vector<32x256xf32>
    %80 = arith.addf %75, %79 : vector<32x256xf32>
    %81 = arith.mulf %79, %79 : vector<32x256xf32>
    %82 = arith.addf %77, %81 : vector<32x256xf32>
    %c0_30 = arith.constant 0 : index
    %c3 = arith.constant 3 : index
    %c0_31 = arith.constant 0 : index
    %c0_32 = arith.constant 0 : index
    %83 = vector.load %arg2[%c0_30, %c3, %c0_31, %c0_32] : memref<1x8x32x256xf32, #tpu.memory_space<vmem>>, vector<1x1x32x256xf32>
    %84 = vector.shape_cast %83 : vector<1x1x32x256xf32> to vector<32x256xf32>
    %85 = arith.addf %80, %84 : vector<32x256xf32>
    %86 = arith.mulf %84, %84 : vector<32x256xf32>
    %87 = arith.addf %82, %86 : vector<32x256xf32>
    %c0_33 = arith.constant 0 : index
    %c4 = arith.constant 4 : index
    %c0_34 = arith.constant 0 : index
    %c0_35 = arith.constant 0 : index
    %88 = vector.load %arg2[%c0_33, %c4, %c0_34, %c0_35] : memref<1x8x32x256xf32, #tpu.memory_space<vmem>>, vector<1x1x32x256xf32>
    %89 = vector.shape_cast %88 : vector<1x1x32x256xf32> to vector<32x256xf32>
    %90 = arith.addf %85, %89 : vector<32x256xf32>
    %91 = arith.mulf %89, %89 : vector<32x256xf32>
    %92 = arith.addf %87, %91 : vector<32x256xf32>
    %c0_36 = arith.constant 0 : index
    %c5 = arith.constant 5 : index
    %c0_37 = arith.constant 0 : index
    %c0_38 = arith.constant 0 : index
    %93 = vector.load %arg2[%c0_36, %c5, %c0_37, %c0_38] : memref<1x8x32x256xf32, #tpu.memory_space<vmem>>, vector<1x1x32x256xf32>
    %94 = vector.shape_cast %93 : vector<1x1x32x256xf32> to vector<32x256xf32>
    %95 = arith.addf %90, %94 : vector<32x256xf32>
    %96 = arith.mulf %94, %94 : vector<32x256xf32>
    %97 = arith.addf %92, %96 : vector<32x256xf32>
    %c0_39 = arith.constant 0 : index
    %c6 = arith.constant 6 : index
    %c0_40 = arith.constant 0 : index
    %c0_41 = arith.constant 0 : index
    %98 = vector.load %arg2[%c0_39, %c6, %c0_40, %c0_41] : memref<1x8x32x256xf32, #tpu.memory_space<vmem>>, vector<1x1x32x256xf32>
    %99 = vector.shape_cast %98 : vector<1x1x32x256xf32> to vector<32x256xf32>
    %100 = arith.addf %95, %99 : vector<32x256xf32>
    %101 = arith.mulf %99, %99 : vector<32x256xf32>
    %102 = arith.addf %97, %101 : vector<32x256xf32>
    %c0_42 = arith.constant 0 : index
    %c7 = arith.constant 7 : index
    %c0_43 = arith.constant 0 : index
    %c0_44 = arith.constant 0 : index
    %103 = vector.load %arg2[%c0_42, %c7, %c0_43, %c0_44] : memref<1x8x32x256xf32, #tpu.memory_space<vmem>>, vector<1x1x32x256xf32>
    %104 = vector.shape_cast %103 : vector<1x1x32x256xf32> to vector<32x256xf32>
    %105 = arith.addf %100, %104 : vector<32x256xf32>
    %106 = arith.mulf %104, %104 : vector<32x256xf32>
    %107 = arith.addf %102, %106 : vector<32x256xf32>
    %cst_45 = arith.constant dense<0.000000e+00> : vector<8x256xf32>
    %108 = tpu.matmul %13, %105, %cst_45 {dimension_numbers = #tpu.dot_dimension_numbers<[1], [0], [0], [1], [0, 0, 1, 1], [], []>} : vector<8x32xf32>, vector<32x256xf32>, vector<8x256xf32> -> vector<8x256xf32>
    %cst_46 = arith.constant dense<0.000000e+00> : vector<8x256xf32>
    %109 = tpu.matmul %13, %107, %cst_46 {dimension_numbers = #tpu.dot_dimension_numbers<[1], [0], [0], [1], [0, 0, 1, 1], [], []>} : vector<8x32xf32>, vector<32x256xf32>, vector<8x256xf32> -> vector<8x256xf32>
    %cst_47 = arith.constant 3.200000e+01 : f32
    %110 = vector.broadcast %cst_47 : f32 to vector<8x256xf32>
    %111 = arith.divf %108, %110 : vector<8x256xf32>
    %cst_48 = arith.constant 3.200000e+01 : f32
    %112 = vector.broadcast %cst_48 : f32 to vector<8x256xf32>
    %113 = arith.divf %109, %112 : vector<8x256xf32>
    %114 = arith.mulf %111, %111 : vector<8x256xf32>
    %115 = arith.subf %113, %114 : vector<8x256xf32>
    %cst_49 = arith.constant 9.99999974E-6 : f32
    %116 = vector.broadcast %cst_49 : f32 to vector<8x256xf32>
    %117 = arith.addf %115, %116 : vector<8x256xf32>
    %118 = math.rsqrt %117 : vector<8x256xf32>
    %cst_50 = arith.constant dense<0.000000e+00> : vector<32x256xf32>
    %119 = tpu.matmul %27, %111, %cst_50 {dimension_numbers = #tpu.dot_dimension_numbers<[1], [0], [0], [1], [0, 0, 1, 1], [], []>} : vector<32x8xf32>, vector<8x256xf32>, vector<32x256xf32> -> vector<32x256xf32>
    %cst_51 = arith.constant dense<0.000000e+00> : vector<32x256xf32>
    %120 = tpu.matmul %27, %118, %cst_51 {dimension_numbers = #tpu.dot_dimension_numbers<[1], [0], [0], [1], [0, 0, 1, 1], [], []>} : vector<32x8xf32>, vector<8x256xf32>, vector<32x256xf32> -> vector<32x256xf32>
    %c0_52 = arith.constant 0 : index
    %c0_53 = arith.constant 0 : index
    %121 = vector.load %arg4[%c0_52, %c0_53] : memref<128x32xf32, #tpu.memory_space<vmem>>, vector<128x32xf32>
    %c0_54 = arith.constant 0 : index
    %c0_55 = arith.constant 0 : index
    %122 = vector.load %arg5[%c0_54, %c0_55] : memref<8x64xf32, #tpu.memory_space<vmem>>, vector<8x64xf32>
    %c0_56 = arith.constant 0 : index
    %c0_57 = arith.constant 0 : index
    %c0_58 = arith.constant 0 : index
    %c0_59 = arith.constant 0 : index
    %123 = vector.load %arg2[%c0_56, %c0_57, %c0_58, %c0_59] : memref<1x8x32x256xf32, #tpu.memory_space<vmem>>, vector<1x1x32x256xf32>
    %124 = vector.shape_cast %123 : vector<1x1x32x256xf32> to vector<32x256xf32>
    %125 = arith.subf %124, %119 : vector<32x256xf32>
    %126 = arith.mulf %125, %120 : vector<32x256xf32>
    %cst_60 = arith.constant dense<0.000000e+00> : vector<128x256xf32>
    %127 = tpu.matmul %121, %126, %cst_60 {dimension_numbers = #tpu.dot_dimension_numbers<[1], [0], [0], [1], [0, 0, 1, 1], [], []>} : vector<128x32xf32>, vector<32x256xf32>, vector<128x256xf32> -> vector<128x256xf32>
    %c0_61 = arith.constant 0 : index
    %c0_62 = arith.constant 0 : index
    %c0_63 = arith.constant 0 : index
    %c0_64 = arith.constant 0 : index
    %128 = vector.load %arg3[%c0_61, %c0_62, %c0_63, %c0_64] : memref<1x8x128x1xf32, #tpu.memory_space<vmem>>, vector<1x1x128x1xf32>
    %129 = vector.shape_cast %128 : vector<1x1x128x1xf32> to vector<128x1xf32>
    %130 = vector.broadcast %129 : vector<128x1xf32> to vector<128x256xf32>
    %131 = arith.addf %127, %130 : vector<128x256xf32>
    %132 = vector.extract_strided_slice %131 {offsets = [0, 0], sizes = [64, 256], strides = [1, 1]} : vector<128x256xf32> to vector<64x256xf32>
    %c0_65 = arith.constant 0 : index
    %c0_66 = arith.constant 0 : index
    %c0_67 = arith.constant 0 : index
    %133 = vector.load %arg9[%c0_65, %c0_66, %c0_67] : memref<8x64x256xf32, #tpu.memory_space<vmem>>, vector<1x64x256xf32>
    %134 = vector.shape_cast %133 : vector<1x64x256xf32> to vector<64x256xf32>
    %135 = vector.shape_cast %132 : vector<64x256xf32> to vector<1x64x256xf32>
    tpu.vector_store %arg9[%c0_65, %c0_66, %c0_67], %135 {strides = array<i32>} : memref<8x64x256xf32, #tpu.memory_space<vmem>>, vector<1x64x256xf32>,
    %136 = vector.extract_strided_slice %131 {offsets = [64, 0], sizes = [64, 256], strides = [1, 1]} : vector<128x256xf32> to vector<64x256xf32>
    %cst_68 = arith.constant dense<0.000000e+00> : vector<8x256xf32>
    %137 = tpu.matmul %122, %136, %cst_68 {dimension_numbers = #tpu.dot_dimension_numbers<[1], [0], [0], [1], [0, 0, 1, 1], [], []>} : vector<8x64xf32>, vector<64x256xf32>, vector<8x256xf32> -> vector<8x256xf32>
    %c0_69 = arith.constant 0 : index
    %c0_70 = arith.constant 0 : index
    %c0_71 = arith.constant 0 : index
    %138 = vector.load %arg10[%c0_69, %c0_70, %c0_71] : memref<8x8x256xf32, #tpu.memory_space<vmem>>, vector<1x8x256xf32>
    %139 = vector.shape_cast %138 : vector<1x8x256xf32> to vector<8x256xf32>
    %140 = vector.shape_cast %137 : vector<8x256xf32> to vector<1x8x256xf32>
    tpu.vector_store %arg10[%c0_69, %c0_70, %c0_71], %140 {strides = array<i32>} : memref<8x8x256xf32, #tpu.memory_space<vmem>>, vector<1x8x256xf32>,
    %c0_72 = arith.constant 0 : index
    %c1_73 = arith.constant 1 : index
    %c0_74 = arith.constant 0 : index
    %c0_75 = arith.constant 0 : index
    %141 = vector.load %arg2[%c0_72, %c1_73, %c0_74, %c0_75] : memref<1x8x32x256xf32, #tpu.memory_space<vmem>>, vector<1x1x32x256xf32>
    %142 = vector.shape_cast %141 : vector<1x1x32x256xf32> to vector<32x256xf32>
    %143 = arith.subf %142, %119 : vector<32x256xf32>
    %144 = arith.mulf %143, %120 : vector<32x256xf32>
    %cst_76 = arith.constant dense<0.000000e+00> : vector<128x256xf32>
    %145 = tpu.matmul %121, %144, %cst_76 {dimension_numbers = #tpu.dot_dimension_numbers<[1], [0], [0], [1], [0, 0, 1, 1], [], []>} : vector<128x32xf32>, vector<32x256xf32>, vector<128x256xf32> -> vector<128x256xf32>
    %c0_77 = arith.constant 0 : index
    %c1_78 = arith.constant 1 : index
    %c0_79 = arith.constant 0 : index
    %c0_80 = arith.constant 0 : index
    %146 = vector.load %arg3[%c0_77, %c1_78, %c0_79, %c0_80] : memref<1x8x128x1xf32, #tpu.memory_space<vmem>>, vector<1x1x128x1xf32>
    %147 = vector.shape_cast %146 : vector<1x1x128x1xf32> to vector<128x1xf32>
    %148 = vector.broadcast %147 : vector<128x1xf32> to vector<128x256xf32>
    %149 = arith.addf %145, %148 : vector<128x256xf32>
    %150 = vector.extract_strided_slice %149 {offsets = [0, 0], sizes = [64, 256], strides = [1, 1]} : vector<128x256xf32> to vector<64x256xf32>
    %c1_81 = arith.constant 1 : index
    %c0_82 = arith.constant 0 : index
    %c0_83 = arith.constant 0 : index
    %151 = vector.load %arg9[%c1_81, %c0_82, %c0_83] : memref<8x64x256xf32, #tpu.memory_space<vmem>>, vector<1x64x256xf32>
    %152 = vector.shape_cast %151 : vector<1x64x256xf32> to vector<64x256xf32>
    %153 = vector.shape_cast %150 : vector<64x256xf32> to vector<1x64x256xf32>
    tpu.vector_store %arg9[%c1_81, %c0_82, %c0_83], %153 {strides = array<i32>} : memref<8x64x256xf32, #tpu.memory_space<vmem>>, vector<1x64x256xf32>,
    %154 = vector.extract_strided_slice %149 {offsets = [64, 0], sizes = [64, 256], strides = [1, 1]} : vector<128x256xf32> to vector<64x256xf32>
    %cst_84 = arith.constant dense<0.000000e+00> : vector<8x256xf32>
    %155 = tpu.matmul %122, %154, %cst_84 {dimension_numbers = #tpu.dot_dimension_numbers<[1], [0], [0], [1], [0, 0, 1, 1], [], []>} : vector<8x64xf32>, vector<64x256xf32>, vector<8x256xf32> -> vector<8x256xf32>
    %c1_85 = arith.constant 1 : index
    %c0_86 = arith.constant 0 : index
    %c0_87 = arith.constant 0 : index
    %156 = vector.load %arg10[%c1_85, %c0_86, %c0_87] : memref<8x8x256xf32, #tpu.memory_space<vmem>>, vector<1x8x256xf32>
    %157 = vector.shape_cast %156 : vector<1x8x256xf32> to vector<8x256xf32>
    %158 = vector.shape_cast %155 : vector<8x256xf32> to vector<1x8x256xf32>
    tpu.vector_store %arg10[%c1_85, %c0_86, %c0_87], %158 {strides = array<i32>} : memref<8x8x256xf32, #tpu.memory_space<vmem>>, vector<1x8x256xf32>,
    %c0_88 = arith.constant 0 : index
    %c2_89 = arith.constant 2 : index
    %c0_90 = arith.constant 0 : index
    %c0_91 = arith.constant 0 : index
    %159 = vector.load %arg2[%c0_88, %c2_89, %c0_90, %c0_91] : memref<1x8x32x256xf32, #tpu.memory_space<vmem>>, vector<1x1x32x256xf32>
    %160 = vector.shape_cast %159 : vector<1x1x32x256xf32> to vector<32x256xf32>
    %161 = arith.subf %160, %119 : vector<32x256xf32>
    %162 = arith.mulf %161, %120 : vector<32x256xf32>
    %cst_92 = arith.constant dense<0.000000e+00> : vector<128x256xf32>
    %163 = tpu.matmul %121, %162, %cst_92 {dimension_numbers = #tpu.dot_dimension_numbers<[1], [0], [0], [1], [0, 0, 1, 1], [], []>} : vector<128x32xf32>, vector<32x256xf32>, vector<128x256xf32> -> vector<128x256xf32>
    %c0_93 = arith.constant 0 : index
    %c2_94 = arith.constant 2 : index
    %c0_95 = arith.constant 0 : index
    %c0_96 = arith.constant 0 : index
    %164 = vector.load %arg3[%c0_93, %c2_94, %c0_95, %c0_96] : memref<1x8x128x1xf32, #tpu.memory_space<vmem>>, vector<1x1x128x1xf32>
    %165 = vector.shape_cast %164 : vector<1x1x128x1xf32> to vector<128x1xf32>
    %166 = vector.broadcast %165 : vector<128x1xf32> to vector<128x256xf32>
    %167 = arith.addf %163, %166 : vector<128x256xf32>
    %168 = vector.extract_strided_slice %167 {offsets = [0, 0], sizes = [64, 256], strides = [1, 1]} : vector<128x256xf32> to vector<64x256xf32>
    %c2_97 = arith.constant 2 : index
    %c0_98 = arith.constant 0 : index
    %c0_99 = arith.constant 0 : index
    %169 = vector.load %arg9[%c2_97, %c0_98, %c0_99] : memref<8x64x256xf32, #tpu.memory_space<vmem>>, vector<1x64x256xf32>
    %170 = vector.shape_cast %169 : vector<1x64x256xf32> to vector<64x256xf32>
    %171 = vector.shape_cast %168 : vector<64x256xf32> to vector<1x64x256xf32>
    tpu.vector_store %arg9[%c2_97, %c0_98, %c0_99], %171 {strides = array<i32>} : memref<8x64x256xf32, #tpu.memory_space<vmem>>, vector<1x64x256xf32>,
    %172 = vector.extract_strided_slice %167 {offsets = [64, 0], sizes = [64, 256], strides = [1, 1]} : vector<128x256xf32> to vector<64x256xf32>
    %cst_100 = arith.constant dense<0.000000e+00> : vector<8x256xf32>
    %173 = tpu.matmul %122, %172, %cst_100 {dimension_numbers = #tpu.dot_dimension_numbers<[1], [0], [0], [1], [0, 0, 1, 1], [], []>} : vector<8x64xf32>, vector<64x256xf32>, vector<8x256xf32> -> vector<8x256xf32>
    %c2_101 = arith.constant 2 : index
    %c0_102 = arith.constant 0 : index
    %c0_103 = arith.constant 0 : index
    %174 = vector.load %arg10[%c2_101, %c0_102, %c0_103] : memref<8x8x256xf32, #tpu.memory_space<vmem>>, vector<1x8x256xf32>
    %175 = vector.shape_cast %174 : vector<1x8x256xf32> to vector<8x256xf32>
    %176 = vector.shape_cast %173 : vector<8x256xf32> to vector<1x8x256xf32>
    tpu.vector_store %arg10[%c2_101, %c0_102, %c0_103], %176 {strides = array<i32>} : memref<8x8x256xf32, #tpu.memory_space<vmem>>, vector<1x8x256xf32>,
    %c0_104 = arith.constant 0 : index
    %c3_105 = arith.constant 3 : index
    %c0_106 = arith.constant 0 : index
    %c0_107 = arith.constant 0 : index
    %177 = vector.load %arg2[%c0_104, %c3_105, %c0_106, %c0_107] : memref<1x8x32x256xf32, #tpu.memory_space<vmem>>, vector<1x1x32x256xf32>
    %178 = vector.shape_cast %177 : vector<1x1x32x256xf32> to vector<32x256xf32>
    %179 = arith.subf %178, %119 : vector<32x256xf32>
    %180 = arith.mulf %179, %120 : vector<32x256xf32>
    %cst_108 = arith.constant dense<0.000000e+00> : vector<128x256xf32>
    %181 = tpu.matmul %121, %180, %cst_108 {dimension_numbers = #tpu.dot_dimension_numbers<[1], [0], [0], [1], [0, 0, 1, 1], [], []>} : vector<128x32xf32>, vector<32x256xf32>, vector<128x256xf32> -> vector<128x256xf32>
    %c0_109 = arith.constant 0 : index
    %c3_110 = arith.constant 3 : index
    %c0_111 = arith.constant 0 : index
    %c0_112 = arith.constant 0 : index
    %182 = vector.load %arg3[%c0_109, %c3_110, %c0_111, %c0_112] : memref<1x8x128x1xf32, #tpu.memory_space<vmem>>, vector<1x1x128x1xf32>
    %183 = vector.shape_cast %182 : vector<1x1x128x1xf32> to vector<128x1xf32>
    %184 = vector.broadcast %183 : vector<128x1xf32> to vector<128x256xf32>
    %185 = arith.addf %181, %184 : vector<128x256xf32>
    %186 = vector.extract_strided_slice %185 {offsets = [0, 0], sizes = [64, 256], strides = [1, 1]} : vector<128x256xf32> to vector<64x256xf32>
    %c3_113 = arith.constant 3 : index
    %c0_114 = arith.constant 0 : index
    %c0_115 = arith.constant 0 : index
    %187 = vector.load %arg9[%c3_113, %c0_114, %c0_115] : memref<8x64x256xf32, #tpu.memory_space<vmem>>, vector<1x64x256xf32>
    %188 = vector.shape_cast %187 : vector<1x64x256xf32> to vector<64x256xf32>
    %189 = vector.shape_cast %186 : vector<64x256xf32> to vector<1x64x256xf32>
    tpu.vector_store %arg9[%c3_113, %c0_114, %c0_115], %189 {strides = array<i32>} : memref<8x64x256xf32, #tpu.memory_space<vmem>>, vector<1x64x256xf32>,
    %190 = vector.extract_strided_slice %185 {offsets = [64, 0], sizes = [64, 256], strides = [1, 1]} : vector<128x256xf32> to vector<64x256xf32>
    %cst_116 = arith.constant dense<0.000000e+00> : vector<8x256xf32>
    %191 = tpu.matmul %122, %190, %cst_116 {dimension_numbers = #tpu.dot_dimension_numbers<[1], [0], [0], [1], [0, 0, 1, 1], [], []>} : vector<8x64xf32>, vector<64x256xf32>, vector<8x256xf32> -> vector<8x256xf32>
    %c3_117 = arith.constant 3 : index
    %c0_118 = arith.constant 0 : index
    %c0_119 = arith.constant 0 : index
    %192 = vector.load %arg10[%c3_117, %c0_118, %c0_119] : memref<8x8x256xf32, #tpu.memory_space<vmem>>, vector<1x8x256xf32>
    %193 = vector.shape_cast %192 : vector<1x8x256xf32> to vector<8x256xf32>
    %194 = vector.shape_cast %191 : vector<8x256xf32> to vector<1x8x256xf32>
    tpu.vector_store %arg10[%c3_117, %c0_118, %c0_119], %194 {strides = array<i32>} : memref<8x8x256xf32, #tpu.memory_space<vmem>>, vector<1x8x256xf32>,
    %c0_120 = arith.constant 0 : index
    %c4_121 = arith.constant 4 : index
    %c0_122 = arith.constant 0 : index
    %c0_123 = arith.constant 0 : index
    %195 = vector.load %arg2[%c0_120, %c4_121, %c0_122, %c0_123] : memref<1x8x32x256xf32, #tpu.memory_space<vmem>>, vector<1x1x32x256xf32>
    %196 = vector.shape_cast %195 : vector<1x1x32x256xf32> to vector<32x256xf32>
    %197 = arith.subf %196, %119 : vector<32x256xf32>
    %198 = arith.mulf %197, %120 : vector<32x256xf32>
    %cst_124 = arith.constant dense<0.000000e+00> : vector<128x256xf32>
    %199 = tpu.matmul %121, %198, %cst_124 {dimension_numbers = #tpu.dot_dimension_numbers<[1], [0], [0], [1], [0, 0, 1, 1], [], []>} : vector<128x32xf32>, vector<32x256xf32>, vector<128x256xf32> -> vector<128x256xf32>
    %c0_125 = arith.constant 0 : index
    %c4_126 = arith.constant 4 : index
    %c0_127 = arith.constant 0 : index
    %c0_128 = arith.constant 0 : index
    %200 = vector.load %arg3[%c0_125, %c4_126, %c0_127, %c0_128] : memref<1x8x128x1xf32, #tpu.memory_space<vmem>>, vector<1x1x128x1xf32>
    %201 = vector.shape_cast %200 : vector<1x1x128x1xf32> to vector<128x1xf32>
    %202 = vector.broadcast %201 : vector<128x1xf32> to vector<128x256xf32>
    %203 = arith.addf %199, %202 : vector<128x256xf32>
    %204 = vector.extract_strided_slice %203 {offsets = [0, 0], sizes = [64, 256], strides = [1, 1]} : vector<128x256xf32> to vector<64x256xf32>
    %c4_129 = arith.constant 4 : index
    %c0_130 = arith.constant 0 : index
    %c0_131 = arith.constant 0 : index
    %205 = vector.load %arg9[%c4_129, %c0_130, %c0_131] : memref<8x64x256xf32, #tpu.memory_space<vmem>>, vector<1x64x256xf32>
    %206 = vector.shape_cast %205 : vector<1x64x256xf32> to vector<64x256xf32>
    %207 = vector.shape_cast %204 : vector<64x256xf32> to vector<1x64x256xf32>
    tpu.vector_store %arg9[%c4_129, %c0_130, %c0_131], %207 {strides = array<i32>} : memref<8x64x256xf32, #tpu.memory_space<vmem>>, vector<1x64x256xf32>,
    %208 = vector.extract_strided_slice %203 {offsets = [64, 0], sizes = [64, 256], strides = [1, 1]} : vector<128x256xf32> to vector<64x256xf32>
    %cst_132 = arith.constant dense<0.000000e+00> : vector<8x256xf32>
    %209 = tpu.matmul %122, %208, %cst_132 {dimension_numbers = #tpu.dot_dimension_numbers<[1], [0], [0], [1], [0, 0, 1, 1], [], []>} : vector<8x64xf32>, vector<64x256xf32>, vector<8x256xf32> -> vector<8x256xf32>
    %c4_133 = arith.constant 4 : index
    %c0_134 = arith.constant 0 : index
    %c0_135 = arith.constant 0 : index
    %210 = vector.load %arg10[%c4_133, %c0_134, %c0_135] : memref<8x8x256xf32, #tpu.memory_space<vmem>>, vector<1x8x256xf32>
    %211 = vector.shape_cast %210 : vector<1x8x256xf32> to vector<8x256xf32>
    %212 = vector.shape_cast %209 : vector<8x256xf32> to vector<1x8x256xf32>
    tpu.vector_store %arg10[%c4_133, %c0_134, %c0_135], %212 {strides = array<i32>} : memref<8x8x256xf32, #tpu.memory_space<vmem>>, vector<1x8x256xf32>,
    %c0_136 = arith.constant 0 : index
    %c5_137 = arith.constant 5 : index
    %c0_138 = arith.constant 0 : index
    %c0_139 = arith.constant 0 : index
    %213 = vector.load %arg2[%c0_136, %c5_137, %c0_138, %c0_139] : memref<1x8x32x256xf32, #tpu.memory_space<vmem>>, vector<1x1x32x256xf32>
    %214 = vector.shape_cast %213 : vector<1x1x32x256xf32> to vector<32x256xf32>
    %215 = arith.subf %214, %119 : vector<32x256xf32>
    %216 = arith.mulf %215, %120 : vector<32x256xf32>
    %cst_140 = arith.constant dense<0.000000e+00> : vector<128x256xf32>
    %217 = tpu.matmul %121, %216, %cst_140 {dimension_numbers = #tpu.dot_dimension_numbers<[1], [0], [0], [1], [0, 0, 1, 1], [], []>} : vector<128x32xf32>, vector<32x256xf32>, vector<128x256xf32> -> vector<128x256xf32>
    %c0_141 = arith.constant 0 : index
    %c5_142 = arith.constant 5 : index
    %c0_143 = arith.constant 0 : index
    %c0_144 = arith.constant 0 : index
    %218 = vector.load %arg3[%c0_141, %c5_142, %c0_143, %c0_144] : memref<1x8x128x1xf32, #tpu.memory_space<vmem>>, vector<1x1x128x1xf32>
    %219 = vector.shape_cast %218 : vector<1x1x128x1xf32> to vector<128x1xf32>
    %220 = vector.broadcast %219 : vector<128x1xf32> to vector<128x256xf32>
    %221 = arith.addf %217, %220 : vector<128x256xf32>
    %222 = vector.extract_strided_slice %221 {offsets = [0, 0], sizes = [64, 256], strides = [1, 1]} : vector<128x256xf32> to vector<64x256xf32>
    %c5_145 = arith.constant 5 : index
    %c0_146 = arith.constant 0 : index
    %c0_147 = arith.constant 0 : index
    %223 = vector.load %arg9[%c5_145, %c0_146, %c0_147] : memref<8x64x256xf32, #tpu.memory_space<vmem>>, vector<1x64x256xf32>
    %224 = vector.shape_cast %223 : vector<1x64x256xf32> to vector<64x256xf32>
    %225 = vector.shape_cast %222 : vector<64x256xf32> to vector<1x64x256xf32>
    tpu.vector_store %arg9[%c5_145, %c0_146, %c0_147], %225 {strides = array<i32>} : memref<8x64x256xf32, #tpu.memory_space<vmem>>, vector<1x64x256xf32>,
    %226 = vector.extract_strided_slice %221 {offsets = [64, 0], sizes = [64, 256], strides = [1, 1]} : vector<128x256xf32> to vector<64x256xf32>
    %cst_148 = arith.constant dense<0.000000e+00> : vector<8x256xf32>
    %227 = tpu.matmul %122, %226, %cst_148 {dimension_numbers = #tpu.dot_dimension_numbers<[1], [0], [0], [1], [0, 0, 1, 1], [], []>} : vector<8x64xf32>, vector<64x256xf32>, vector<8x256xf32> -> vector<8x256xf32>
    %c5_149 = arith.constant 5 : index
    %c0_150 = arith.constant 0 : index
    %c0_151 = arith.constant 0 : index
    %228 = vector.load %arg10[%c5_149, %c0_150, %c0_151] : memref<8x8x256xf32, #tpu.memory_space<vmem>>, vector<1x8x256xf32>
    %229 = vector.shape_cast %228 : vector<1x8x256xf32> to vector<8x256xf32>
    %230 = vector.shape_cast %227 : vector<8x256xf32> to vector<1x8x256xf32>
    tpu.vector_store %arg10[%c5_149, %c0_150, %c0_151], %230 {strides = array<i32>} : memref<8x8x256xf32, #tpu.memory_space<vmem>>, vector<1x8x256xf32>,
    %c0_152 = arith.constant 0 : index
    %c6_153 = arith.constant 6 : index
    %c0_154 = arith.constant 0 : index
    %c0_155 = arith.constant 0 : index
    %231 = vector.load %arg2[%c0_152, %c6_153, %c0_154, %c0_155] : memref<1x8x32x256xf32, #tpu.memory_space<vmem>>, vector<1x1x32x256xf32>
    %232 = vector.shape_cast %231 : vector<1x1x32x256xf32> to vector<32x256xf32>
    %233 = arith.subf %232, %119 : vector<32x256xf32>
    %234 = arith.mulf %233, %120 : vector<32x256xf32>
    %cst_156 = arith.constant dense<0.000000e+00> : vector<128x256xf32>
    %235 = tpu.matmul %121, %234, %cst_156 {dimension_numbers = #tpu.dot_dimension_numbers<[1], [0], [0], [1], [0, 0, 1, 1], [], []>} : vector<128x32xf32>, vector<32x256xf32>, vector<128x256xf32> -> vector<128x256xf32>
    %c0_157 = arith.constant 0 : index
    %c6_158 = arith.constant 6 : index
    %c0_159 = arith.constant 0 : index
    %c0_160 = arith.constant 0 : index
    %236 = vector.load %arg3[%c0_157, %c6_158, %c0_159, %c0_160] : memref<1x8x128x1xf32, #tpu.memory_space<vmem>>, vector<1x1x128x1xf32>
    %237 = vector.shape_cast %236 : vector<1x1x128x1xf32> to vector<128x1xf32>
    %238 = vector.broadcast %237 : vector<128x1xf32> to vector<128x256xf32>
    %239 = arith.addf %235, %238 : vector<128x256xf32>
    %240 = vector.extract_strided_slice %239 {offsets = [0, 0], sizes = [64, 256], strides = [1, 1]} : vector<128x256xf32> to vector<64x256xf32>
    %c6_161 = arith.constant 6 : index
    %c0_162 = arith.constant 0 : index
    %c0_163 = arith.constant 0 : index
    %241 = vector.load %arg9[%c6_161, %c0_162, %c0_163] : memref<8x64x256xf32, #tpu.memory_space<vmem>>, vector<1x64x256xf32>
    %242 = vector.shape_cast %241 : vector<1x64x256xf32> to vector<64x256xf32>
    %243 = vector.shape_cast %240 : vector<64x256xf32> to vector<1x64x256xf32>
    tpu.vector_store %arg9[%c6_161, %c0_162, %c0_163], %243 {strides = array<i32>} : memref<8x64x256xf32, #tpu.memory_space<vmem>>, vector<1x64x256xf32>,
    %244 = vector.extract_strided_slice %239 {offsets = [64, 0], sizes = [64, 256], strides = [1, 1]} : vector<128x256xf32> to vector<64x256xf32>
    %cst_164 = arith.constant dense<0.000000e+00> : vector<8x256xf32>
    %245 = tpu.matmul %122, %244, %cst_164 {dimension_numbers = #tpu.dot_dimension_numbers<[1], [0], [0], [1], [0, 0, 1, 1], [], []>} : vector<8x64xf32>, vector<64x256xf32>, vector<8x256xf32> -> vector<8x256xf32>
    %c6_165 = arith.constant 6 : index
    %c0_166 = arith.constant 0 : index
    %c0_167 = arith.constant 0 : index
    %246 = vector.load %arg10[%c6_165, %c0_166, %c0_167] : memref<8x8x256xf32, #tpu.memory_space<vmem>>, vector<1x8x256xf32>
    %247 = vector.shape_cast %246 : vector<1x8x256xf32> to vector<8x256xf32>
    %248 = vector.shape_cast %245 : vector<8x256xf32> to vector<1x8x256xf32>
    tpu.vector_store %arg10[%c6_165, %c0_166, %c0_167], %248 {strides = array<i32>} : memref<8x8x256xf32, #tpu.memory_space<vmem>>, vector<1x8x256xf32>,
    %c0_168 = arith.constant 0 : index
    %c7_169 = arith.constant 7 : index
    %c0_170 = arith.constant 0 : index
    %c0_171 = arith.constant 0 : index
    %249 = vector.load %arg2[%c0_168, %c7_169, %c0_170, %c0_171] : memref<1x8x32x256xf32, #tpu.memory_space<vmem>>, vector<1x1x32x256xf32>
    %250 = vector.shape_cast %249 : vector<1x1x32x256xf32> to vector<32x256xf32>
    %251 = arith.subf %250, %119 : vector<32x256xf32>
    %252 = arith.mulf %251, %120 : vector<32x256xf32>
    %cst_172 = arith.constant dense<0.000000e+00> : vector<128x256xf32>
    %253 = tpu.matmul %121, %252, %cst_172 {dimension_numbers = #tpu.dot_dimension_numbers<[1], [0], [0], [1], [0, 0, 1, 1], [], []>} : vector<128x32xf32>, vector<32x256xf32>, vector<128x256xf32> -> vector<128x256xf32>
    %c0_173 = arith.constant 0 : index
    %c7_174 = arith.constant 7 : index
    %c0_175 = arith.constant 0 : index
    %c0_176 = arith.constant 0 : index
    %254 = vector.load %arg3[%c0_173, %c7_174, %c0_175, %c0_176] : memref<1x8x128x1xf32, #tpu.memory_space<vmem>>, vector<1x1x128x1xf32>
    %255 = vector.shape_cast %254 : vector<1x1x128x1xf32> to vector<128x1xf32>
    %256 = vector.broadcast %255 : vector<128x1xf32> to vector<128x256xf32>
    %257 = arith.addf %253, %256 : vector<128x256xf32>
    %258 = vector.extract_strided_slice %257 {offsets = [0, 0], sizes = [64, 256], strides = [1, 1]} : vector<128x256xf32> to vector<64x256xf32>
    %c7_177 = arith.constant 7 : index
    %c0_178 = arith.constant 0 : index
    %c0_179 = arith.constant 0 : index
    %259 = vector.load %arg9[%c7_177, %c0_178, %c0_179] : memref<8x64x256xf32, #tpu.memory_space<vmem>>, vector<1x64x256xf32>
    %260 = vector.shape_cast %259 : vector<1x64x256xf32> to vector<64x256xf32>
    %261 = vector.shape_cast %258 : vector<64x256xf32> to vector<1x64x256xf32>
    tpu.vector_store %arg9[%c7_177, %c0_178, %c0_179], %261 {strides = array<i32>} : memref<8x64x256xf32, #tpu.memory_space<vmem>>, vector<1x64x256xf32>,
    %262 = vector.extract_strided_slice %257 {offsets = [64, 0], sizes = [64, 256], strides = [1, 1]} : vector<128x256xf32> to vector<64x256xf32>
    %cst_180 = arith.constant dense<0.000000e+00> : vector<8x256xf32>
    %263 = tpu.matmul %122, %262, %cst_180 {dimension_numbers = #tpu.dot_dimension_numbers<[1], [0], [0], [1], [0, 0, 1, 1], [], []>} : vector<8x64xf32>, vector<64x256xf32>, vector<8x256xf32> -> vector<8x256xf32>
    %c7_181 = arith.constant 7 : index
    %c0_182 = arith.constant 0 : index
    %c0_183 = arith.constant 0 : index
    %264 = vector.load %arg10[%c7_181, %c0_182, %c0_183] : memref<8x8x256xf32, #tpu.memory_space<vmem>>, vector<1x8x256xf32>
    %265 = vector.shape_cast %264 : vector<1x8x256xf32> to vector<8x256xf32>
    %266 = vector.shape_cast %263 : vector<8x256xf32> to vector<1x8x256xf32>
    tpu.vector_store %arg10[%c7_181, %c0_182, %c0_183], %266 {strides = array<i32>} : memref<8x8x256xf32, #tpu.memory_space<vmem>>, vector<1x8x256xf32>,
    %c0_184 = arith.constant 0 : index
    %c0_185 = arith.constant 0 : index
    %c0_186 = arith.constant 0 : index
    %267 = vector.load %arg10[%c0_184, %c0_185, %c0_186] : memref<8x8x256xf32, #tpu.memory_space<vmem>>, vector<1x8x256xf32>
    %268 = vector.shape_cast %267 : vector<1x8x256xf32> to vector<8x256xf32>
    %c1_187 = arith.constant 1 : index
    %c0_188 = arith.constant 0 : index
    %c0_189 = arith.constant 0 : index
    %269 = vector.load %arg10[%c1_187, %c0_188, %c0_189] : memref<8x8x256xf32, #tpu.memory_space<vmem>>, vector<1x8x256xf32>
    %270 = vector.shape_cast %269 : vector<1x8x256xf32> to vector<8x256xf32>
    %271 = arith.maximumf %268, %270 : vector<8x256xf32>
    %c2_190 = arith.constant 2 : index
    %c0_191 = arith.constant 0 : index
    %c0_192 = arith.constant 0 : index
    %272 = vector.load %arg10[%c2_190, %c0_191, %c0_192] : memref<8x8x256xf32, #tpu.memory_space<vmem>>, vector<1x8x256xf32>
    %273 = vector.shape_cast %272 : vector<1x8x256xf32> to vector<8x256xf32>
    %274 = arith.maximumf %271, %273 : vector<8x256xf32>
    %c3_193 = arith.constant 3 : index
    %c0_194 = arith.constant 0 : index
    %c0_195 = arith.constant 0 : index
    %275 = vector.load %arg10[%c3_193, %c0_194, %c0_195] : memref<8x8x256xf32, #tpu.memory_space<vmem>>, vector<1x8x256xf32>
    %276 = vector.shape_cast %275 : vector<1x8x256xf32> to vector<8x256xf32>
    %277 = arith.maximumf %274, %276 : vector<8x256xf32>
    %c4_196 = arith.constant 4 : index
    %c0_197 = arith.constant 0 : index
    %c0_198 = arith.constant 0 : index
    %278 = vector.load %arg10[%c4_196, %c0_197, %c0_198] : memref<8x8x256xf32, #tpu.memory_space<vmem>>, vector<1x8x256xf32>
    %279 = vector.shape_cast %278 : vector<1x8x256xf32> to vector<8x256xf32>
    %280 = arith.maximumf %277, %279 : vector<8x256xf32>
    %c5_199 = arith.constant 5 : index
    %c0_200 = arith.constant 0 : index
    %c0_201 = arith.constant 0 : index
    %281 = vector.load %arg10[%c5_199, %c0_200, %c0_201] : memref<8x8x256xf32, #tpu.memory_space<vmem>>, vector<1x8x256xf32>
    %282 = vector.shape_cast %281 : vector<1x8x256xf32> to vector<8x256xf32>
    %283 = arith.maximumf %280, %282 : vector<8x256xf32>
    %c6_202 = arith.constant 6 : index
    %c0_203 = arith.constant 0 : index
    %c0_204 = arith.constant 0 : index
    %284 = vector.load %arg10[%c6_202, %c0_203, %c0_204] : memref<8x8x256xf32, #tpu.memory_space<vmem>>, vector<1x8x256xf32>
    %285 = vector.shape_cast %284 : vector<1x8x256xf32> to vector<8x256xf32>
    %286 = arith.maximumf %283, %285 : vector<8x256xf32>
    %c7_205 = arith.constant 7 : index
    %c0_206 = arith.constant 0 : index
    %c0_207 = arith.constant 0 : index
    %287 = vector.load %arg10[%c7_205, %c0_206, %c0_207] : memref<8x8x256xf32, #tpu.memory_space<vmem>>, vector<1x8x256xf32>
    %288 = vector.shape_cast %287 : vector<1x8x256xf32> to vector<8x256xf32>
    %289 = arith.maximumf %286, %288 : vector<8x256xf32>
    %cst_208 = arith.constant 0.000000e+00 : f32
    %290 = vector.broadcast %cst_208 : f32 to vector<8x256xf32>
    %c0_209 = arith.constant 0 : index
    %c0_210 = arith.constant 0 : index
    %c0_211 = arith.constant 0 : index
    %291 = vector.load %arg10[%c0_209, %c0_210, %c0_211] : memref<8x8x256xf32, #tpu.memory_space<vmem>>, vector<1x8x256xf32>
    %292 = vector.shape_cast %291 : vector<1x8x256xf32> to vector<8x256xf32>
    %293 = arith.subf %292, %289 : vector<8x256xf32>
    %294 = math.exp %293 : vector<8x256xf32>
    %c0_212 = arith.constant 0 : index
    %c0_213 = arith.constant 0 : index
    %c0_214 = arith.constant 0 : index
    %295 = vector.load %arg10[%c0_212, %c0_213, %c0_214] : memref<8x8x256xf32, #tpu.memory_space<vmem>>, vector<1x8x256xf32>
    %296 = vector.shape_cast %295 : vector<1x8x256xf32> to vector<8x256xf32>
    %297 = vector.shape_cast %294 : vector<8x256xf32> to vector<1x8x256xf32>
    tpu.vector_store %arg10[%c0_212, %c0_213, %c0_214], %297 {strides = array<i32>} : memref<8x8x256xf32, #tpu.memory_space<vmem>>, vector<1x8x256xf32>,
    %298 = arith.addf %290, %294 : vector<8x256xf32>
    %c1_215 = arith.constant 1 : index
    %c0_216 = arith.constant 0 : index
    %c0_217 = arith.constant 0 : index
    %299 = vector.load %arg10[%c1_215, %c0_216, %c0_217] : memref<8x8x256xf32, #tpu.memory_space<vmem>>, vector<1x8x256xf32>
    %300 = vector.shape_cast %299 : vector<1x8x256xf32> to vector<8x256xf32>
    %301 = arith.subf %300, %289 : vector<8x256xf32>
    %302 = math.exp %301 : vector<8x256xf32>
    %c1_218 = arith.constant 1 : index
    %c0_219 = arith.constant 0 : index
    %c0_220 = arith.constant 0 : index
    %303 = vector.load %arg10[%c1_218, %c0_219, %c0_220] : memref<8x8x256xf32, #tpu.memory_space<vmem>>, vector<1x8x256xf32>
    %304 = vector.shape_cast %303 : vector<1x8x256xf32> to vector<8x256xf32>
    %305 = vector.shape_cast %302 : vector<8x256xf32> to vector<1x8x256xf32>
    tpu.vector_store %arg10[%c1_218, %c0_219, %c0_220], %305 {strides = array<i32>} : memref<8x8x256xf32, #tpu.memory_space<vmem>>, vector<1x8x256xf32>,
    %306 = arith.addf %298, %302 : vector<8x256xf32>
    %c2_221 = arith.constant 2 : index
    %c0_222 = arith.constant 0 : index
    %c0_223 = arith.constant 0 : index
    %307 = vector.load %arg10[%c2_221, %c0_222, %c0_223] : memref<8x8x256xf32, #tpu.memory_space<vmem>>, vector<1x8x256xf32>
    %308 = vector.shape_cast %307 : vector<1x8x256xf32> to vector<8x256xf32>
    %309 = arith.subf %308, %289 : vector<8x256xf32>
    %310 = math.exp %309 : vector<8x256xf32>
    %c2_224 = arith.constant 2 : index
    %c0_225 = arith.constant 0 : index
    %c0_226 = arith.constant 0 : index
    %311 = vector.load %arg10[%c2_224, %c0_225, %c0_226] : memref<8x8x256xf32, #tpu.memory_space<vmem>>, vector<1x8x256xf32>
    %312 = vector.shape_cast %311 : vector<1x8x256xf32> to vector<8x256xf32>
    %313 = vector.shape_cast %310 : vector<8x256xf32> to vector<1x8x256xf32>
    tpu.vector_store %arg10[%c2_224, %c0_225, %c0_226], %313 {strides = array<i32>} : memref<8x8x256xf32, #tpu.memory_space<vmem>>, vector<1x8x256xf32>,
    %314 = arith.addf %306, %310 : vector<8x256xf32>
    %c3_227 = arith.constant 3 : index
    %c0_228 = arith.constant 0 : index
    %c0_229 = arith.constant 0 : index
    %315 = vector.load %arg10[%c3_227, %c0_228, %c0_229] : memref<8x8x256xf32, #tpu.memory_space<vmem>>, vector<1x8x256xf32>
    %316 = vector.shape_cast %315 : vector<1x8x256xf32> to vector<8x256xf32>
    %317 = arith.subf %316, %289 : vector<8x256xf32>
    %318 = math.exp %317 : vector<8x256xf32>
    %c3_230 = arith.constant 3 : index
    %c0_231 = arith.constant 0 : index
    %c0_232 = arith.constant 0 : index
    %319 = vector.load %arg10[%c3_230, %c0_231, %c0_232] : memref<8x8x256xf32, #tpu.memory_space<vmem>>, vector<1x8x256xf32>
    %320 = vector.shape_cast %319 : vector<1x8x256xf32> to vector<8x256xf32>
    %321 = vector.shape_cast %318 : vector<8x256xf32> to vector<1x8x256xf32>
    tpu.vector_store %arg10[%c3_230, %c0_231, %c0_232], %321 {strides = array<i32>} : memref<8x8x256xf32, #tpu.memory_space<vmem>>, vector<1x8x256xf32>,
    %322 = arith.addf %314, %318 : vector<8x256xf32>
    %c4_233 = arith.constant 4 : index
    %c0_234 = arith.constant 0 : index
    %c0_235 = arith.constant 0 : index
    %323 = vector.load %arg10[%c4_233, %c0_234, %c0_235] : memref<8x8x256xf32, #tpu.memory_space<vmem>>, vector<1x8x256xf32>
    %324 = vector.shape_cast %323 : vector<1x8x256xf32> to vector<8x256xf32>
    %325 = arith.subf %324, %289 : vector<8x256xf32>
    %326 = math.exp %325 : vector<8x256xf32>
    %c4_236 = arith.constant 4 : index
    %c0_237 = arith.constant 0 : index
    %c0_238 = arith.constant 0 : index
    %327 = vector.load %arg10[%c4_236, %c0_237, %c0_238] : memref<8x8x256xf32, #tpu.memory_space<vmem>>, vector<1x8x256xf32>
    %328 = vector.shape_cast %327 : vector<1x8x256xf32> to vector<8x256xf32>
    %329 = vector.shape_cast %326 : vector<8x256xf32> to vector<1x8x256xf32>
    tpu.vector_store %arg10[%c4_236, %c0_237, %c0_238], %329 {strides = array<i32>} : memref<8x8x256xf32, #tpu.memory_space<vmem>>, vector<1x8x256xf32>,
    %330 = arith.addf %322, %326 : vector<8x256xf32>
    %c5_239 = arith.constant 5 : index
    %c0_240 = arith.constant 0 : index
    %c0_241 = arith.constant 0 : index
    %331 = vector.load %arg10[%c5_239, %c0_240, %c0_241] : memref<8x8x256xf32, #tpu.memory_space<vmem>>, vector<1x8x256xf32>
    %332 = vector.shape_cast %331 : vector<1x8x256xf32> to vector<8x256xf32>
    %333 = arith.subf %332, %289 : vector<8x256xf32>
    %334 = math.exp %333 : vector<8x256xf32>
    %c5_242 = arith.constant 5 : index
    %c0_243 = arith.constant 0 : index
    %c0_244 = arith.constant 0 : index
    %335 = vector.load %arg10[%c5_242, %c0_243, %c0_244] : memref<8x8x256xf32, #tpu.memory_space<vmem>>, vector<1x8x256xf32>
    %336 = vector.shape_cast %335 : vector<1x8x256xf32> to vector<8x256xf32>
    %337 = vector.shape_cast %334 : vector<8x256xf32> to vector<1x8x256xf32>
    tpu.vector_store %arg10[%c5_242, %c0_243, %c0_244], %337 {strides = array<i32>} : memref<8x8x256xf32, #tpu.memory_space<vmem>>, vector<1x8x256xf32>,
    %338 = arith.addf %330, %334 : vector<8x256xf32>
    %c6_245 = arith.constant 6 : index
    %c0_246 = arith.constant 0 : index
    %c0_247 = arith.constant 0 : index
    %339 = vector.load %arg10[%c6_245, %c0_246, %c0_247] : memref<8x8x256xf32, #tpu.memory_space<vmem>>, vector<1x8x256xf32>
    %340 = vector.shape_cast %339 : vector<1x8x256xf32> to vector<8x256xf32>
    %341 = arith.subf %340, %289 : vector<8x256xf32>
    %342 = math.exp %341 : vector<8x256xf32>
    %c6_248 = arith.constant 6 : index
    %c0_249 = arith.constant 0 : index
    %c0_250 = arith.constant 0 : index
    %343 = vector.load %arg10[%c6_248, %c0_249, %c0_250] : memref<8x8x256xf32, #tpu.memory_space<vmem>>, vector<1x8x256xf32>
    %344 = vector.shape_cast %343 : vector<1x8x256xf32> to vector<8x256xf32>
    %345 = vector.shape_cast %342 : vector<8x256xf32> to vector<1x8x256xf32>
    tpu.vector_store %arg10[%c6_248, %c0_249, %c0_250], %345 {strides = array<i32>} : memref<8x8x256xf32, #tpu.memory_space<vmem>>, vector<1x8x256xf32>,
    %346 = arith.addf %338, %342 : vector<8x256xf32>
    %c7_251 = arith.constant 7 : index
    %c0_252 = arith.constant 0 : index
    %c0_253 = arith.constant 0 : index
    %347 = vector.load %arg10[%c7_251, %c0_252, %c0_253] : memref<8x8x256xf32, #tpu.memory_space<vmem>>, vector<1x8x256xf32>
    %348 = vector.shape_cast %347 : vector<1x8x256xf32> to vector<8x256xf32>
    %349 = arith.subf %348, %289 : vector<8x256xf32>
    %350 = math.exp %349 : vector<8x256xf32>
    %c7_254 = arith.constant 7 : index
    %c0_255 = arith.constant 0 : index
    %c0_256 = arith.constant 0 : index
    %351 = vector.load %arg10[%c7_254, %c0_255, %c0_256] : memref<8x8x256xf32, #tpu.memory_space<vmem>>, vector<1x8x256xf32>
    %352 = vector.shape_cast %351 : vector<1x8x256xf32> to vector<8x256xf32>
    %353 = vector.shape_cast %350 : vector<8x256xf32> to vector<1x8x256xf32>
    tpu.vector_store %arg10[%c7_254, %c0_255, %c0_256], %353 {strides = array<i32>} : memref<8x8x256xf32, #tpu.memory_space<vmem>>, vector<1x8x256xf32>,
    %354 = arith.addf %346, %350 : vector<8x256xf32>
    %cst_257 = arith.constant 1.000000e+00 : f32
    %355 = vector.broadcast %cst_257 : f32 to vector<8x256xf32>
    %356 = arith.divf %355, %354 : vector<8x256xf32>
    %cst_258 = arith.constant 0.000000e+00 : f32
    %357 = vector.broadcast %cst_258 : f32 to vector<64x256xf32>
    %c0_259 = arith.constant 0 : index
    %c0_260 = arith.constant 0 : index
    %c0_261 = arith.constant 0 : index
    %358 = vector.load %arg10[%c0_259, %c0_260, %c0_261] : memref<8x8x256xf32, #tpu.memory_space<vmem>>, vector<1x8x256xf32>
    %359 = vector.shape_cast %358 : vector<1x8x256xf32> to vector<8x256xf32>
    %360 = arith.mulf %359, %356 : vector<8x256xf32>
    %cst_262 = arith.constant dense<0.000000e+00> : vector<64x256xf32>
    %361 = tpu.matmul %41, %360, %cst_262 {dimension_numbers = #tpu.dot_dimension_numbers<[1], [0], [0], [1], [0, 0, 1, 1], [], []>} : vector<64x8xf32>, vector<8x256xf32>, vector<64x256xf32> -> vector<64x256xf32>
    %c0_263 = arith.constant 0 : index
    %c0_264 = arith.constant 0 : index
    %c0_265 = arith.constant 0 : index
    %362 = vector.load %arg9[%c0_263, %c0_264, %c0_265] : memref<8x64x256xf32, #tpu.memory_space<vmem>>, vector<1x64x256xf32>
    %363 = vector.shape_cast %362 : vector<1x64x256xf32> to vector<64x256xf32>
    %364 = arith.mulf %361, %363 : vector<64x256xf32>
    %365 = arith.addf %357, %364 : vector<64x256xf32>
    %c1_266 = arith.constant 1 : index
    %c0_267 = arith.constant 0 : index
    %c0_268 = arith.constant 0 : index
    %366 = vector.load %arg10[%c1_266, %c0_267, %c0_268] : memref<8x8x256xf32, #tpu.memory_space<vmem>>, vector<1x8x256xf32>
    %367 = vector.shape_cast %366 : vector<1x8x256xf32> to vector<8x256xf32>
    %368 = arith.mulf %367, %356 : vector<8x256xf32>
    %cst_269 = arith.constant dense<0.000000e+00> : vector<64x256xf32>
    %369 = tpu.matmul %41, %368, %cst_269 {dimension_numbers = #tpu.dot_dimension_numbers<[1], [0], [0], [1], [0, 0, 1, 1], [], []>} : vector<64x8xf32>, vector<8x256xf32>, vector<64x256xf32> -> vector<64x256xf32>
    %c1_270 = arith.constant 1 : index
    %c0_271 = arith.constant 0 : index
    %c0_272 = arith.constant 0 : index
    %370 = vector.load %arg9[%c1_270, %c0_271, %c0_272] : memref<8x64x256xf32, #tpu.memory_space<vmem>>, vector<1x64x256xf32>
    %371 = vector.shape_cast %370 : vector<1x64x256xf32> to vector<64x256xf32>
    %372 = arith.mulf %369, %371 : vector<64x256xf32>
    %373 = arith.addf %365, %372 : vector<64x256xf32>
    %c2_273 = arith.constant 2 : index
    %c0_274 = arith.constant 0 : index
    %c0_275 = arith.constant 0 : index
    %374 = vector.load %arg10[%c2_273, %c0_274, %c0_275] : memref<8x8x256xf32, #tpu.memory_space<vmem>>, vector<1x8x256xf32>
    %375 = vector.shape_cast %374 : vector<1x8x256xf32> to vector<8x256xf32>
    %376 = arith.mulf %375, %356 : vector<8x256xf32>
    %cst_276 = arith.constant dense<0.000000e+00> : vector<64x256xf32>
    %377 = tpu.matmul %41, %376, %cst_276 {dimension_numbers = #tpu.dot_dimension_numbers<[1], [0], [0], [1], [0, 0, 1, 1], [], []>} : vector<64x8xf32>, vector<8x256xf32>, vector<64x256xf32> -> vector<64x256xf32>
    %c2_277 = arith.constant 2 : index
    %c0_278 = arith.constant 0 : index
    %c0_279 = arith.constant 0 : index
    %378 = vector.load %arg9[%c2_277, %c0_278, %c0_279] : memref<8x64x256xf32, #tpu.memory_space<vmem>>, vector<1x64x256xf32>
    %379 = vector.shape_cast %378 : vector<1x64x256xf32> to vector<64x256xf32>
    %380 = arith.mulf %377, %379 : vector<64x256xf32>
    %381 = arith.addf %373, %380 : vector<64x256xf32>
    %c3_280 = arith.constant 3 : index
    %c0_281 = arith.constant 0 : index
    %c0_282 = arith.constant 0 : index
    %382 = vector.load %arg10[%c3_280, %c0_281, %c0_282] : memref<8x8x256xf32, #tpu.memory_space<vmem>>, vector<1x8x256xf32>
    %383 = vector.shape_cast %382 : vector<1x8x256xf32> to vector<8x256xf32>
    %384 = arith.mulf %383, %356 : vector<8x256xf32>
    %cst_283 = arith.constant dense<0.000000e+00> : vector<64x256xf32>
    %385 = tpu.matmul %41, %384, %cst_283 {dimension_numbers = #tpu.dot_dimension_numbers<[1], [0], [0], [1], [0, 0, 1, 1], [], []>} : vector<64x8xf32>, vector<8x256xf32>, vector<64x256xf32> -> vector<64x256xf32>
    %c3_284 = arith.constant 3 : index
    %c0_285 = arith.constant 0 : index
    %c0_286 = arith.constant 0 : index
    %386 = vector.load %arg9[%c3_284, %c0_285, %c0_286] : memref<8x64x256xf32, #tpu.memory_space<vmem>>, vector<1x64x256xf32>
    %387 = vector.shape_cast %386 : vector<1x64x256xf32> to vector<64x256xf32>
    %388 = arith.mulf %385, %387 : vector<64x256xf32>
    %389 = arith.addf %381, %388 : vector<64x256xf32>
    %c4_287 = arith.constant 4 : index
    %c0_288 = arith.constant 0 : index
    %c0_289 = arith.constant 0 : index
    %390 = vector.load %arg10[%c4_287, %c0_288, %c0_289] : memref<8x8x256xf32, #tpu.memory_space<vmem>>, vector<1x8x256xf32>
    %391 = vector.shape_cast %390 : vector<1x8x256xf32> to vector<8x256xf32>
    %392 = arith.mulf %391, %356 : vector<8x256xf32>
    %cst_290 = arith.constant dense<0.000000e+00> : vector<64x256xf32>
    %393 = tpu.matmul %41, %392, %cst_290 {dimension_numbers = #tpu.dot_dimension_numbers<[1], [0], [0], [1], [0, 0, 1, 1], [], []>} : vector<64x8xf32>, vector<8x256xf32>, vector<64x256xf32> -> vector<64x256xf32>
    %c4_291 = arith.constant 4 : index
    %c0_292 = arith.constant 0 : index
    %c0_293 = arith.constant 0 : index
    %394 = vector.load %arg9[%c4_291, %c0_292, %c0_293] : memref<8x64x256xf32, #tpu.memory_space<vmem>>, vector<1x64x256xf32>
    %395 = vector.shape_cast %394 : vector<1x64x256xf32> to vector<64x256xf32>
    %396 = arith.mulf %393, %395 : vector<64x256xf32>
    %397 = arith.addf %389, %396 : vector<64x256xf32>
    %c5_294 = arith.constant 5 : index
    %c0_295 = arith.constant 0 : index
    %c0_296 = arith.constant 0 : index
    %398 = vector.load %arg10[%c5_294, %c0_295, %c0_296] : memref<8x8x256xf32, #tpu.memory_space<vmem>>, vector<1x8x256xf32>
    %399 = vector.shape_cast %398 : vector<1x8x256xf32> to vector<8x256xf32>
    %400 = arith.mulf %399, %356 : vector<8x256xf32>
    %cst_297 = arith.constant dense<0.000000e+00> : vector<64x256xf32>
    %401 = tpu.matmul %41, %400, %cst_297 {dimension_numbers = #tpu.dot_dimension_numbers<[1], [0], [0], [1], [0, 0, 1, 1], [], []>} : vector<64x8xf32>, vector<8x256xf32>, vector<64x256xf32> -> vector<64x256xf32>
    %c5_298 = arith.constant 5 : index
    %c0_299 = arith.constant 0 : index
    %c0_300 = arith.constant 0 : index
    %402 = vector.load %arg9[%c5_298, %c0_299, %c0_300] : memref<8x64x256xf32, #tpu.memory_space<vmem>>, vector<1x64x256xf32>
    %403 = vector.shape_cast %402 : vector<1x64x256xf32> to vector<64x256xf32>
    %404 = arith.mulf %401, %403 : vector<64x256xf32>
    %405 = arith.addf %397, %404 : vector<64x256xf32>
    %c6_301 = arith.constant 6 : index
    %c0_302 = arith.constant 0 : index
    %c0_303 = arith.constant 0 : index
    %406 = vector.load %arg10[%c6_301, %c0_302, %c0_303] : memref<8x8x256xf32, #tpu.memory_space<vmem>>, vector<1x8x256xf32>
    %407 = vector.shape_cast %406 : vector<1x8x256xf32> to vector<8x256xf32>
    %408 = arith.mulf %407, %356 : vector<8x256xf32>
    %cst_304 = arith.constant dense<0.000000e+00> : vector<64x256xf32>
    %409 = tpu.matmul %41, %408, %cst_304 {dimension_numbers = #tpu.dot_dimension_numbers<[1], [0], [0], [1], [0, 0, 1, 1], [], []>} : vector<64x8xf32>, vector<8x256xf32>, vector<64x256xf32> -> vector<64x256xf32>
    %c6_305 = arith.constant 6 : index
    %c0_306 = arith.constant 0 : index
    %c0_307 = arith.constant 0 : index
    %410 = vector.load %arg9[%c6_305, %c0_306, %c0_307] : memref<8x64x256xf32, #tpu.memory_space<vmem>>, vector<1x64x256xf32>
    %411 = vector.shape_cast %410 : vector<1x64x256xf32> to vector<64x256xf32>
    %412 = arith.mulf %409, %411 : vector<64x256xf32>
    %413 = arith.addf %405, %412 : vector<64x256xf32>
    %c7_308 = arith.constant 7 : index
    %c0_309 = arith.constant 0 : index
    %c0_310 = arith.constant 0 : index
    %414 = vector.load %arg10[%c7_308, %c0_309, %c0_310] : memref<8x8x256xf32, #tpu.memory_space<vmem>>, vector<1x8x256xf32>
    %415 = vector.shape_cast %414 : vector<1x8x256xf32> to vector<8x256xf32>
    %416 = arith.mulf %415, %356 : vector<8x256xf32>
    %cst_311 = arith.constant dense<0.000000e+00> : vector<64x256xf32>
    %417 = tpu.matmul %41, %416, %cst_311 {dimension_numbers = #tpu.dot_dimension_numbers<[1], [0], [0], [1], [0, 0, 1, 1], [], []>} : vector<64x8xf32>, vector<8x256xf32>, vector<64x256xf32> -> vector<64x256xf32>
    %c7_312 = arith.constant 7 : index
    %c0_313 = arith.constant 0 : index
    %c0_314 = arith.constant 0 : index
    %418 = vector.load %arg9[%c7_312, %c0_313, %c0_314] : memref<8x64x256xf32, #tpu.memory_space<vmem>>, vector<1x64x256xf32>
    %419 = vector.shape_cast %418 : vector<1x64x256xf32> to vector<64x256xf32>
    %420 = arith.mulf %417, %419 : vector<64x256xf32>
    %421 = arith.addf %413, %420 : vector<64x256xf32>
    %c0_315 = arith.constant 0 : index
    %c0_316 = arith.constant 0 : index
    %422 = vector.load %arg6[%c0_315, %c0_316] : memref<32x64xf32, #tpu.memory_space<vmem>>, vector<32x64xf32>
    %cst_317 = arith.constant dense<0.000000e+00> : vector<32x256xf32>
    %423 = tpu.matmul %422, %421, %cst_317 {dimension_numbers = #tpu.dot_dimension_numbers<[1], [0], [0], [1], [0, 0, 1, 1], [], []>} : vector<32x64xf32>, vector<64x256xf32>, vector<32x256xf32> -> vector<32x256xf32>
    %c0_318 = arith.constant 0 : index
    %c0_319 = arith.constant 0 : index
    %c0_320 = arith.constant 0 : index
    %424 = vector.load %arg7[%c0_318, %c0_319, %c0_320] : memref<3x32x1xf32, #tpu.memory_space<vmem>>, vector<1x32x1xf32>
    %425 = vector.shape_cast %424 : vector<1x32x1xf32> to vector<32x1xf32>
    %426 = vector.broadcast %425 : vector<32x1xf32> to vector<32x256xf32>
    %427 = arith.addf %423, %426 : vector<32x256xf32>
    %cst_321 = arith.constant 0.000000e+00 : f32
    %428 = vector.broadcast %cst_321 : f32 to vector<32x256xf32>
    %429 = arith.maximumf %427, %428 : vector<32x256xf32>
    %cst_322 = arith.constant dense<0.000000e+00> : vector<8x256xf32>
    %430 = tpu.matmul %55, %429, %cst_322 {dimension_numbers = #tpu.dot_dimension_numbers<[1], [0], [0], [1], [0, 0, 1, 1], [], []>} : vector<8x32xf32>, vector<32x256xf32>, vector<8x256xf32> -> vector<8x256xf32>
    %431 = arith.mulf %429, %429 : vector<32x256xf32>
    %cst_323 = arith.constant dense<0.000000e+00> : vector<8x256xf32>
    %432 = tpu.matmul %55, %431, %cst_323 {dimension_numbers = #tpu.dot_dimension_numbers<[1], [0], [0], [1], [0, 0, 1, 1], [], []>} : vector<8x32xf32>, vector<32x256xf32>, vector<8x256xf32> -> vector<8x256xf32>
    %cst_324 = arith.constant 4.000000e+00 : f32
    %433 = vector.broadcast %cst_324 : f32 to vector<8x256xf32>
    %434 = arith.divf %430, %433 : vector<8x256xf32>
    %cst_325 = arith.constant 4.000000e+00 : f32
    %435 = vector.broadcast %cst_325 : f32 to vector<8x256xf32>
    %436 = arith.divf %432, %435 : vector<8x256xf32>
    %437 = arith.mulf %434, %434 : vector<8x256xf32>
    %438 = arith.subf %436, %437 : vector<8x256xf32>
    %cst_326 = arith.constant 9.99999974E-6 : f32
    %439 = vector.broadcast %cst_326 : f32 to vector<8x256xf32>
    %440 = arith.addf %438, %439 : vector<8x256xf32>
    %441 = math.rsqrt %440 : vector<8x256xf32>
    %cst_327 = arith.constant dense<0.000000e+00> : vector<32x256xf32>
    %442 = tpu.matmul %69, %434, %cst_327 {dimension_numbers = #tpu.dot_dimension_numbers<[1], [0], [0], [1], [0, 0, 1, 1], [], []>} : vector<32x8xf32>, vector<8x256xf32>, vector<32x256xf32> -> vector<32x256xf32>
    %cst_328 = arith.constant dense<0.000000e+00> : vector<32x256xf32>
    %443 = tpu.matmul %69, %441, %cst_328 {dimension_numbers = #tpu.dot_dimension_numbers<[1], [0], [0], [1], [0, 0, 1, 1], [], []>} : vector<32x8xf32>, vector<8x256xf32>, vector<32x256xf32> -> vector<32x256xf32>
    %444 = arith.subf %429, %442 : vector<32x256xf32>
    %445 = arith.mulf %444, %443 : vector<32x256xf32>
    %c1_329 = arith.constant 1 : index
    %c0_330 = arith.constant 0 : index
    %c0_331 = arith.constant 0 : index
    %446 = vector.load %arg7[%c1_329, %c0_330, %c0_331] : memref<3x32x1xf32, #tpu.memory_space<vmem>>, vector<1x32x1xf32>
    %447 = vector.shape_cast %446 : vector<1x32x1xf32> to vector<32x1xf32>
    %448 = vector.broadcast %447 : vector<32x1xf32> to vector<32x256xf32>
    %449 = arith.mulf %445, %448 : vector<32x256xf32>
    %c2_332 = arith.constant 2 : index
    %c0_333 = arith.constant 0 : index
    %c0_334 = arith.constant 0 : index
    %450 = vector.load %arg7[%c2_332, %c0_333, %c0_334] : memref<3x32x1xf32, #tpu.memory_space<vmem>>, vector<1x32x1xf32>
    %451 = vector.shape_cast %450 : vector<1x32x1xf32> to vector<32x1xf32>
    %452 = vector.broadcast %451 : vector<32x1xf32> to vector<32x256xf32>
    %453 = arith.addf %449, %452 : vector<32x256xf32>
    %c0_335 = arith.constant 0 : index
    %c0_336 = arith.constant 0 : index
    %c0_337 = arith.constant 0 : index
    %454 = vector.load %arg8[%c0_335, %c0_336, %c0_337] : memref<1x32x256xf32, #tpu.memory_space<vmem>>, vector<1x32x256xf32>
    %455 = vector.shape_cast %454 : vector<1x32x256xf32> to vector<32x256xf32>
    %456 = vector.shape_cast %453 : vector<32x256xf32> to vector<1x32x256xf32>
    tpu.vector_store %arg8[%c0_335, %c0_336, %c0_337], %456 {strides = array<i32>} : memref<1x32x256xf32, #tpu.memory_space<vmem>>, vector<1x32x256xf32>,
    return
  }
  func.func @transform_0(%arg0: i32, %arg1: i32) -> (i32, i32, i32, i32) {
    %c0_i32 = arith.constant 0 : i32
    %c0_i32_0 = arith.constant 0 : i32
    %c0_i32_1 = arith.constant 0 : i32
    return %arg0, %c0_i32, %c0_i32_0, %arg1 : i32, i32, i32, i32
  }
  func.func @transform_1(%arg0: i32, %arg1: i32) -> (i32, i32, i32, i32) {
    %c0_i32 = arith.constant 0 : i32
    %c0_i32_0 = arith.constant 0 : i32
    %c0_i32_1 = arith.constant 0 : i32
    %c0_i32_2 = arith.constant 0 : i32
    return %arg0, %c0_i32, %c0_i32_0, %c0_i32_1 : i32, i32, i32, i32
  }
  func.func @transform_2(%arg0: i32, %arg1: i32) -> (i32, i32) {
    %c0_i32 = arith.constant 0 : i32
    %c0_i32_0 = arith.constant 0 : i32
    %c0_i32_1 = arith.constant 0 : i32
    return %c0_i32, %c0_i32_0 : i32, i32
  }
  func.func @transform_3(%arg0: i32, %arg1: i32) -> (i32, i32) {
    %c0_i32 = arith.constant 0 : i32
    %c0_i32_0 = arith.constant 0 : i32
    %c0_i32_1 = arith.constant 0 : i32
    return %c0_i32, %c0_i32_0 : i32, i32
  }
  func.func @transform_4(%arg0: i32, %arg1: i32) -> (i32, i32) {
    %c0_i32 = arith.constant 0 : i32
    %c0_i32_0 = arith.constant 0 : i32
    %c0_i32_1 = arith.constant 0 : i32
    return %c0_i32, %c0_i32_0 : i32, i32
  }
  func.func @transform_5(%arg0: i32, %arg1: i32) -> (i32, i32, i32) {
    %c0_i32 = arith.constant 0 : i32
    %c0_i32_0 = arith.constant 0 : i32
    %c0_i32_1 = arith.constant 0 : i32
    %c0_i32_2 = arith.constant 0 : i32
    return %c0_i32, %c0_i32_0, %c0_i32_1 : i32, i32, i32
  }
  func.func @transform_6(%arg0: i32, %arg1: i32) -> (i32, i32, i32) {
    %c0_i32 = arith.constant 0 : i32
    %c0_i32_0 = arith.constant 0 : i32
    return %arg0, %c0_i32, %arg1 : i32, i32, i32
  }
}

</mosaic_0001>

<llo_original>
// kernel: tpu_custom_call.1
$region0: #{tpu_custom_call.1}
  #allocation0 [shape = 'u32[]', space=smem, size = 0x4, offset = 0x4, fixed_abs, tag = 'smem constant byte address 0x4 - core index']
  #allocation1 [shape = 'u32[144,128]{1,0:T(1,128)}', space=vmem, size = 0x12000, scoped, tag = 'internal scratch']
  #allocation2 [shape = 'f32[8,64,256]{2,1,0:T(8,128)}', space=vmem, size = 0x80000, scoped, tag = 'scratch operand']
  #allocation3 [shape = 'f32[8,8,256]{2,1,0:T(8,128)}', space=vmem, size = 0x10000, scoped, tag = 'scratch operand']
  %s0 = inlined_call_operand.vmem [shape: f32[2,8,32,256], index: 0, kind: input, shape index: {}]
  %s1 = inlined_call_operand.vmem [shape: f32[2,8,128,1], index: 1, kind: input, shape index: {}]
  %s2 = inlined_call_operand.vmem [shape: f32[128,32], index: 2, kind: input, shape index: {}]
  %s3 = inlined_call_operand.vmem [shape: f32[8,64], index: 3, kind: input, shape index: {}]
  %s4 = inlined_call_operand.vmem [shape: f32[32,64], index: 4, kind: input, shape index: {}]
  %s5 = inlined_call_operand.vmem [shape: f32[3,32,1], index: 5, kind: input, shape index: {}]
  %s6 = inlined_call_operand.hbm [shape: f32[2,32,256], index: 6, kind: output, shape index: {}]
  %s7 = sld [smem:[#allocation0]]
  $region57: #{tpu_custom_call.1} parent=0
    _
  %s9 = ssub.s32 1, %s7
  %s10 = scalar_select 0, %s9, %s7
  $region1: #{tpu_custom_call.1} parent=0
    #allocation4 [shape = 'u8[65536]{0}', space=vmem, size = 0x10000, scoped, tag = 'output window, operand 0']
    #allocation5 [shape = 's32[2]{0}', space=sflag, size = 0x8, scoped, tag = 'scoped memory for tpu_custom_call.1']
    %11 = vsyncpa [#allocation5], 0
    %s12 = scalar_lea.sflag [#allocation5], 1
    %13 = vsyncpa %s12, 0
    loop: start=0, step=1, limit=4
    $region2: #{tpu_custom_call.1} parent=1 // loop_pre_header
      _
    $region3: #{tpu_custom_call.1} parent=1 // loop_header
      %s15 = sphi 0, %s19
      %p16 = scmp.ge.s32.totalorder %s15, 4
      %s22 = sphi 0, %s34
      %s23 = sphi 0, %s30
      %s24 = sphi 0, %s22
      %s25 = sphi 0, %s23
      %s26 = sphi 0, %s24
      %s27 = sphi 0, %s25
      %s39 = sphi 0, %s41
      %s42 = sphi 0, %s39
      %s43 = sphi 0, %s42
      %s59 = sphi 0, %s43
      %s65 = sphi 0, %s67
      %s68 = sphi 0, %s65
      %s69 = sphi 0, %s68
      %s85 = sphi 0, %s69
      %s89 = sphi 0, %s89
      %s91 = sphi 0, %s89
      %s92 = sphi 0, %s91
      %s106 = sphi 0, %s92
      %s110 = sphi 0, %s110
      %s112 = sphi 0, %s110
      %s113 = sphi 0, %s112
      %s127 = sphi 0, %s113
      %s131 = sphi 0, %s131
      %s133 = sphi 0, %s131
      %s134 = sphi 0, %s133
      %s148 = sphi 0, %s134
      %s152 = sphi 0, %s152
      %s154 = sphi 0, %s152
      %s155 = sphi 0, %s154
      %s169 = sphi 0, %s155
      %s177 = sphi 0, %s179
      %s180 = sphi 0, %s177
      %s181 = sphi 0, %s180
      %s197 = sphi 0, %s181
    $region4: #{tpu_custom_call.1} parent=1 // loop_header_branch
      %18 = sbr.rel (%p16) target = $region8
    $region5: #{tpu_custom_call.1} parent=1 // loop_body
      %s20 = ssub.s32 %s15, 1
      %s21 = ssub.s32 %s15, 2
      %s28 = sadd.s32 1, %s23
      %p29 = scmp.ge.s32.totalorder %s28, 1
      %s30 = scalar_select %p29, 0, %s28
      %s31 = sadd.s32 1, %s22
      %s32 = scalar_select %p29, %s31, %s22
      %p33 = scmp.ge.s32.totalorder %s32, 2
      %s34 = scalar_select %p33, 0, %s32
      %s35 = ssub.s32 %s22, %s34
      %s36 = ssub.s32 %s23, %s30
      %s37 = sor.u32 %s35, %s36
      %p38 = scmp.eq.s32.totalorder %s37, 0
      %s40 = sadd.s32 %s39, 1
      %s41 = scalar_select %p38, %s39, %s40
      %p44 = pneg %p38
      %p45 = scmp.eq.s32.totalorder %s15, 1
      %p46 = por %p44, %p45
      %p47 = scmp.ne.s32.totalorder %s39, %s42
      %p48 = scmp.eq.s32.totalorder %s15, 0
      %p49 = por %p47, %p48
      %p50 = scmp.ne.s32.totalorder %s39, %s42
      %p51 = scmp.eq.s32.totalorder %s20, 1
      %p52 = por %p50, %p51
      %p53 = scmp.ne.s32.totalorder %s42, %s43
      %p54 = scmp.eq.s32.totalorder %s20, 0
      %p55 = por %p53, %p54
      %p56 = scmp.ne.s32.totalorder %s42, %s43
      %p57 = scmp.eq.s32.totalorder %s21, 1
      %p58 = por %p56, %p57
      %p60 = scmp.ne.s32.totalorder %s43, %s59
      %p61 = scmp.eq.s32.totalorder %s21, 0
      %p62 = por %p60, %p61
      %s63 = ssub.s32 %s22, %s34
      %p64 = scmp.eq.s32.totalorder %s63, 0
      %s66 = sadd.s32 %s65, 1
      %s67 = scalar_select %p64, %s65, %s66
      %p70 = pneg %p64
      %p71 = scmp.eq.s32.totalorder %s15, 1
      %p72 = por %p70, %p71
      %p73 = scmp.ne.s32.totalorder %s65, %s68
      %p74 = scmp.eq.s32.totalorder %s15, 0
      %p75 = por %p73, %p74
      %p76 = scmp.ne.s32.totalorder %s65, %s68
      %p77 = scmp.eq.s32.totalorder %s20, 1
      %p78 = por %p76, %p77
      %p79 = scmp.ne.s32.totalorder %s68, %s69
      %p80 = scmp.eq.s32.totalorder %s20, 0
      %p81 = por %p79, %p80
      %p82 = scmp.ne.s32.totalorder %s68, %s69
      %p83 = scmp.eq.s32.totalorder %s21, 1
      %p84 = por %p82, %p83
      %p86 = scmp.ne.s32.totalorder %s69, %s85
      %p87 = scmp.eq.s32.totalorder %s21, 0
      %p88 = por %p86, %p87
      %s90 = sadd.s32 %s89, 1
      %p93 = scmp.eq.s32.totalorder %s15, 1
      %p94 = scmp.ne.s32.totalorder %s89, %s91
      %p95 = scmp.eq.s32.totalorder %s15, 0
      %p96 = por %p94, %p95
      %p97 = scmp.ne.s32.totalorder %s89, %s91
      %p98 = scmp.eq.s32.totalorder %s20, 1
      %p99 = por %p97, %p98
      %p100 = scmp.ne.s32.totalorder %s91, %s92
      %p101 = scmp.eq.s32.totalorder %s20, 0
      %p102 = por %p100, %p101
      %p103 = scmp.ne.s32.totalorder %s91, %s92
      %p104 = scmp.eq.s32.totalorder %s21, 1
      %p105 = por %p103, %p104
      %p107 = scmp.ne.s32.totalorder %s92, %s106
      %p108 = scmp.eq.s32.totalorder %s21, 0
      %p109 = por %p107, %p108
      %s111 = sadd.s32 %s110, 1
      %p114 = scmp.eq.s32.totalorder %s15, 1
      %p115 = scmp.ne.s32.totalorder %s110, %s112
      %p116 = scmp.eq.s32.totalorder %s15, 0
      %p117 = por %p115, %p116
      %p118 = scmp.ne.s32.totalorder %s110, %s112
      %p119 = scmp.eq.s32.totalorder %s20, 1
      %p120 = por %p118, %p119
      %p121 = scmp.ne.s32.totalorder %s112, %s113
      %p122 = scmp.eq.s32.totalorder %s20, 0
      %p123 = por %p121, %p122
      %p124 = scmp.ne.s32.totalorder %s112, %s113
      %p125 = scmp.eq.s32.totalorder %s21, 1
      %p126 = por %p124, %p125
      %p128 = scmp.ne.s32.totalorder %s113, %s127
      %p129 = scmp.eq.s32.totalorder %s21, 0
      %p130 = por %p128, %p129
      %s132 = sadd.s32 %s131, 1
      %p135 = scmp.eq.s32.totalorder %s15, 1
      %p136 = scmp.ne.s32.totalorder %s131, %s133
      %p137 = scmp.eq.s32.totalorder %s15, 0
      %p138 = por %p136, %p137
      %p139 = scmp.ne.s32.totalorder %s131, %s133
      %p140 = scmp.eq.s32.totalorder %s20, 1
      %p141 = por %p139, %p140
      %p142 = scmp.ne.s32.totalorder %s133, %s134
      %p143 = scmp.eq.s32.totalorder %s20, 0
      %p144 = por %p142, %p143
      %p145 = scmp.ne.s32.totalorder %s133, %s134
      %p146 = scmp.eq.s32.totalorder %s21, 1
      %p147 = por %p145, %p146
      %p149 = scmp.ne.s32.totalorder %s134, %s148
      %p150 = scmp.eq.s32.totalorder %s21, 0
      %p151 = por %p149, %p150
      %s153 = sadd.s32 %s152, 1
      %p156 = scmp.eq.s32.totalorder %s15, 1
      %p157 = scmp.ne.s32.totalorder %s152, %s154
      %p158 = scmp.eq.s32.totalorder %s15, 0
      %p159 = por %p157, %p158
      %p160 = scmp.ne.s32.totalorder %s152, %s154
      %p161 = scmp.eq.s32.totalorder %s20, 1
      %p162 = por %p160, %p161
      %p163 = scmp.ne.s32.totalorder %s154, %s155
      %p164 = scmp.eq.s32.totalorder %s20, 0
      %p165 = por %p163, %p164
      %p166 = scmp.ne.s32.totalorder %s154, %s155
      %p167 = scmp.eq.s32.totalorder %s21, 1
      %p168 = por %p166, %p167
      %p170 = scmp.ne.s32.totalorder %s155, %s169
      %p171 = scmp.eq.s32.totalorder %s21, 0
      %p172 = por %p170, %p171
      %s173 = ssub.s32 %s22, %s34
      %s174 = ssub.s32 %s23, %s30
      %s175 = sor.u32 %s173, %s174
      %p176 = scmp.eq.s32.totalorder %s175, 0
      %s178 = sadd.s32 %s177, 1
      %s179 = scalar_select %p176, %s177, %s178
      %p182 = pneg %p176
      %p183 = scmp.eq.s32.totalorder %s15, 1
      %p184 = por %p182, %p183
      %p185 = scmp.ne.s32.totalorder %s177, %s180
      %p186 = scmp.eq.s32.totalorder %s15, 0
      %p187 = por %p185, %p186
      %p188 = scmp.ne.s32.totalorder %s177, %s180
      %p189 = scmp.eq.s32.totalorder %s20, 1
      %p190 = por %p188, %p189
      %p191 = scmp.ne.s32.totalorder %s180, %s181
      %p192 = scmp.eq.s32.totalorder %s20, 0
      %p193 = por %p191, %p192
      %p194 = scmp.ne.s32.totalorder %s180, %s181
      %p195 = scmp.eq.s32.totalorder %s21, 1
      %p196 = por %p194, %p195
      %p198 = scmp.ne.s32.totalorder %s181, %s197
      %p199 = scmp.eq.s32.totalorder %s21, 0
      %p200 = por %p198, %p199
      %p201 = scmp.le.s32.totalorder 1, %s15
      %p202 = scmp.lt.s32.totalorder %s15, 3
      %p203 = pnand %p201, %p202
      %p204 = pneg %p203
      // Predicated region
      $region9: #{tpu_custom_call.1} parent=5 // pred_check
        _
      $region10: #{tpu_custom_call.1} parent=5 // pred_check_branch
        %206 = sbr.rel (%p203) target = $region12
      $region11: #{tpu_custom_call.1} parent=5 // pred_region
        %s207 = ssub.s32 %s15, 1
        // Predicated region
        $region13: #{tpu_custom_call.1} parent=11 // pred_check
          %p208 = pneg %p102
        $region14: #{tpu_custom_call.1} parent=11 // pred_check_branch
          %210 = sbr.rel (%p208) target = $region16
        $region15: #{tpu_custom_call.1} parent=11 // pred_region
          _
        $region16: #{tpu_custom_call.1} parent=11 // pred_fallthru
          _
        // Predicated region
        $region17: #{tpu_custom_call.1} parent=11 // pred_check
          %p211 = pneg %p123
        $region18: #{tpu_custom_call.1} parent=11 // pred_check_branch
          %213 = sbr.rel (%p211) target = $region20
        $region19: #{tpu_custom_call.1} parent=11 // pred_region
          _
        $region20: #{tpu_custom_call.1} parent=11 // pred_fallthru
          _
        // Predicated region
        $region21: #{tpu_custom_call.1} parent=11 // pred_check
          %p214 = pneg %p144
        $region22: #{tpu_custom_call.1} parent=11 // pred_check_branch
          %216 = sbr.rel (%p214) target = $region24
        $region23: #{tpu_custom_call.1} parent=11 // pred_region
          _
        $region24: #{tpu_custom_call.1} parent=11 // pred_fallthru
          _
        // Predicated region
        $region25: #{tpu_custom_call.1} parent=11 // pred_check
          %p217 = pneg %p165
        $region26: #{tpu_custom_call.1} parent=11 // pred_check_branch
          %219 = sbr.rel (%p217) target = $region28
        $region27: #{tpu_custom_call.1} parent=11 // pred_region
          _
        $region28: #{tpu_custom_call.1} parent=11 // pred_fallthru
          _
      $region12: #{tpu_custom_call.1} parent=5 // pred_fallthru
        _
      %p220 = scmp.lt.s32.totalorder %s15, 2
      // Predicated region
      $region29: #{tpu_custom_call.1} parent=5 // pred_check
        %p221 = pneg %p220
      $region30: #{tpu_custom_call.1} parent=5 // pred_check_branch
        %223 = sbr.rel (%p221) target = $region32
      $region31: #{tpu_custom_call.1} parent=5 // pred_region
        // Predicated region
        $region33: #{tpu_custom_call.1} parent=31 // pred_check
          %p224 = pneg %p49
        $region34: #{tpu_custom_call.1} parent=31 // pred_check_branch
          %226 = sbr.rel (%p224) target = $region36
        $region35: #{tpu_custom_call.1} parent=31 // pred_region
          %s227 = smul.u32 2, %s23
          %p228 = scmp.lt.s32.totalorder %s22, 1
          %s229 = scalar_select %p228, %s22, 1
          %p230 = scmp.lt.s32.totalorder %s227, 1
          %s231 = scalar_select %p230, %s227, 1
          %s232 = smul.addr %s229, 64
          %s233 = sadd.s32 %s231, %s232
          %s234 = smul.addr %s233, 8
          %s235 = scalar_lea.vmem %s0, %s234
          %s236 = smul.u32 2, %s23
        $region36: #{tpu_custom_call.1} parent=31 // pred_fallthru
          _
        // Predicated region
        $region37: #{tpu_custom_call.1} parent=31 // pred_check
          %p237 = pneg %p75
        $region38: #{tpu_custom_call.1} parent=31 // pred_check_branch
          %239 = sbr.rel (%p237) target = $region40
        $region39: #{tpu_custom_call.1} parent=31 // pred_region
          %p240 = scmp.lt.s32.totalorder %s22, 1
          %s241 = scalar_select %p240, %s22, 1
          %s242 = smul.addr %s241, 128
          %s243 = smul.addr %s242, 8
          %s244 = scalar_lea.vmem %s1, %s243
        $region40: #{tpu_custom_call.1} parent=31 // pred_fallthru
          _
      $region32: #{tpu_custom_call.1} parent=5 // pred_fallthru
        _
      %p245 = scmp.le.s32.totalorder 1, %s15
      %p246 = scmp.lt.s32.totalorder %s15, 3
      %p247 = pnand %p245, %p246
      %p248 = pneg %p247
      // Predicated region
      $region41: #{tpu_custom_call.1} parent=5 // pred_check
        _
      $region42: #{tpu_custom_call.1} parent=5 // pred_check_branch
        %250 = sbr.rel (%p247) target = $region44
      $region43: #{tpu_custom_call.1} parent=5 // pred_region
        %s251 = ssub.s32 %s15, 1
        %s252 = smul.u32 2, %s25
        %p253 = scmp.lt.s32.totalorder %s24, 1
        %s254 = scalar_select %p253, %s24, 1
        %p255 = scmp.lt.s32.totalorder %s252, 1
        %s256 = scalar_select %p255, %s252, 1
        %s257 = smul.addr %s254, 64
        %s258 = sadd.s32 %s256, %s257
        %s259 = smul.addr %s258, 8
        %s260 = scalar_lea.vmem %s0, %s259
        %p261 = pneg %p55
        %p262 = pneg %p52
        %p263 = scmp.lt.s32.totalorder %s24, 1
        %s264 = scalar_select %p263, %s24, 1
        %s265 = smul.addr %s264, 128
        %s266 = smul.addr %s265, 8
        %s267 = scalar_lea.vmem %s1, %s266
        %p268 = pneg %p81
        %p269 = pneg %p78
        %p270 = pneg %p102
        %p271 = pneg %p99
        %p272 = pneg %p123
        %p273 = pneg %p120
        %p274 = pneg %p144
        %p275 = pneg %p141
        %p276 = pneg %p165
        %p277 = pneg %p162
        %p278 = pneg %p193
        %p279 = pneg %p190
        %s280 = sand.u32 %s180, 1
        %s281 = scalar_lea.sflag [#allocation5], %s280
        %s282 = sand.u32 %s180, 1
        %s283 = smul.addr %s282, 64
        %s284 = scalar_lea.vmem [#allocation4], %s283
        %s285 = smul.u32 2, %s25
        %p286 = scmp.lt.s32.totalorder %s24, 1
        %s287 = scalar_select %p286, %s24, 1
        %p288 = scmp.lt.s32.totalorder %s285, 1
        %s289 = scalar_select %p288, %s285, 1
        %s290 = smul.addr %s287, 64
        %s291 = sadd.s32 %s289, %s290
        %s292 = smul.addr %s291, 8
        %s293 = scalar_lea.vmem %s0, %s292
        %s294 = smul.u32 2, %s25
        %p295 = scmp.lt.s32.totalorder %s24, 1
        %s296 = scalar_select %p295, %s24, 1
        %s297 = smul.addr %s296, 128
        %s298 = smul.addr %s297, 8
        %s299 = scalar_lea.vmem %s1, %s298
        %s300 = smul.u32 2, %s25
        %v301 = vlaneseq
        %v302 = vshrl.u32 %v301, 7
        %v303 = vlaneseq
        %v304 = vand.u32 %v303, 127
        %v305 = vmul.u32 %v302, 4
        %vm306 = vcmp.ge.s32.totalorder %v304, %v305
        %v307 = vadd.s32 %v302, 1
        %v308 = vmul.u32 %v307, 4
        %vm309 = vcmp.lt.s32.totalorder %v304, %v308
        %vm310 = vmand %vm306, %vm309
        %v311 = vsel %vm310, 1.0, 0.0
        %v312 = vadd.s32 %v302, 8
        %v313 = vadd.s32 %v302, 16
        %v314 = vadd.s32 %v302, 24
        %v315 = vmul.u32 %v304, 4
        %vm316 = vcmp.ge.s32.totalorder %v302, %v315
        %vm317 = vcmp.ge.s32.totalorder %v312, %v315
        %vm318 = vcmp.ge.s32.totalorder %v313, %v315
        %vm319 = vcmp.ge.s32.totalorder %v314, %v315
        %v320 = vadd.s32 %v304, 1
        %v321 = vmul.u32 %v320, 4
        %vm322 = vcmp.lt.s32.totalorder %v302, %v321
        %vm323 = vcmp.lt.s32.totalorder %v312, %v321
        %vm324 = vcmp.lt.s32.totalorder %v313, %v321
        %vm325 = vcmp.lt.s32.totalorder %v314, %v321
        %vm326 = vmand %vm316, %vm322
        %vm327 = vmand %vm317, %vm323
        %vm328 = vmand %vm318, %vm324
        %vm329 = vmand %vm319, %vm325
        %v330 = vsel %vm326, 1.0, 0.0
        %v331 = vsel %vm327, 1.0, 0.0
        %v332 = vsel %vm328, 1.0, 0.0
        %v333 = vsel %vm329, 1.0, 0.0
        %v334 = vadd.s32 %v302, 32
        %v335 = vadd.s32 %v302, 40
        %v336 = vadd.s32 %v302, 48
        %v337 = vadd.s32 %v302, 56
        %v338 = vmul.u32 %v304, 8
        %vm339 = vcmp.ge.s32.totalorder %v302, %v338
        %vm340 = vcmp.ge.s32.totalorder %v312, %v338
        %vm341 = vcmp.ge.s32.totalorder %v313, %v338
        %vm342 = vcmp.ge.s32.totalorder %v314, %v338
        %vm343 = vcmp.ge.s32.totalorder %v334, %v338
        %vm344 = vcmp.ge.s32.totalorder %v335, %v338
        %vm345 = vcmp.ge.s32.totalorder %v336, %v338
        %vm346 = vcmp.ge.s32.totalorder %v337, %v338
        %v347 = vmul.u32 %v320, 8
        %vm348 = vcmp.lt.s32.totalorder %v302, %v347
        %vm349 = vcmp.lt.s32.totalorder %v312, %v347
        %vm350 = vcmp.lt.s32.totalorder %v313, %v347
        %vm351 = vcmp.lt.s32.totalorder %v314, %v347
        %vm352 = vcmp.lt.s32.totalorder %v334, %v347
        %vm353 = vcmp.lt.s32.totalorder %v335, %v347
        %vm354 = vcmp.lt.s32.totalorder %v336, %v347
        %vm355 = vcmp.lt.s32.totalorder %v337, %v347
        %vm356 = vmand %vm339, %vm348
        %vm357 = vmand %vm340, %vm349
        %vm358 = vmand %vm341, %vm350
        %vm359 = vmand %vm342, %vm351
        %vm360 = vmand %vm343, %vm352
        %vm361 = vmand %vm344, %vm353
        %vm362 = vmand %vm345, %vm354
        %vm363 = vmand %vm346, %vm355
        %v364 = vsel %vm356, 1.0, 0.0
        %v365 = vsel %vm357, 1.0, 0.0
        %v366 = vsel %vm358, 1.0, 0.0
        %v367 = vsel %vm359, 1.0, 0.0
        %v368 = vsel %vm360, 1.0, 0.0
        %v369 = vsel %vm361, 1.0, 0.0
        %v370 = vsel %vm362, 1.0, 0.0
        %v371 = vsel %vm363, 1.0, 0.0
        %v372 = vld [vmem:[%s293] sm:$0xff]
        %v373 = vld [vmem:[%s293 + $0x8] sm:$0xff]
        %v374 = vld [vmem:[%s293 + $0x10] sm:$0xff]
        %v375 = vld [vmem:[%s293 + $0x18] sm:$0xff]
        %v376 = vld [vmem:[%s293 + $0x20] sm:$0xff]
        %v377 = vld [vmem:[%s293 + $0x28] sm:$0xff]
        %v378 = vld [vmem:[%s293 + $0x30] sm:$0xff]
        %v379 = vld [vmem:[%s293 + $0x38] sm:$0xff]
        %v380 = vmul.f32 %v372, %v372
        %v381 = vmul.f32 %v373, %v373
        %v382 = vmul.f32 %v374, %v374
        %v383 = vmul.f32 %v375, %v375
        %v384 = vmul.f32 %v376, %v376
        %v385 = vmul.f32 %v377, %v377
        %v386 = vmul.f32 %v378, %v378
        %v387 = vmul.f32 %v379, %v379
        %s388 = scalar_lea.vmem %s293, 64
        %v389 = vld [vmem:[%s388] sm:$0xff]
        %v390 = vld [vmem:[%s388 + $0x8] sm:$0xff]
        %v391 = vld [vmem:[%s388 + $0x10] sm:$0xff]
        %v392 = vld [vmem:[%s388 + $0x18] sm:$0xff]
        %v393 = vld [vmem:[%s388 + $0x20] sm:$0xff]
        %v394 = vld [vmem:[%s388 + $0x28] sm:$0xff]
        %v395 = vld [vmem:[%s388 + $0x30] sm:$0xff]
        %v396 = vld [vmem:[%s388 + $0x38] sm:$0xff]
        %v397 = vadd.f32 %v372, %v389
        %v398 = vadd.f32 %v373, %v390
        %v399 = vadd.f32 %v374, %v391
        %v400 = vadd.f32 %v375, %v392
        %v401 = vadd.f32 %v376, %v393
        %v402 = vadd.f32 %v377, %v394
        %v403 = vadd.f32 %v378, %v395
        %v404 = vadd.f32 %v379, %v396
        %v405 = vmul.f32 %v389, %v389
        %v406 = vmul.f32 %v390, %v390
        %v407 = vmul.f32 %v391, %v391
        %v408 = vmul.f32 %v392, %v392
        %v409 = vmul.f32 %v393, %v393
        %v410 = vmul.f32 %v394, %v394
        %v411 = vmul.f32 %v395, %v395
        %v412 = vmul.f32 %v396, %v396
        %v413 = vadd.f32 %v380, %v405
        %v414 = vadd.f32 %v381, %v406
        %v415 = vadd.f32 %v382, %v407
        %v416 = vadd.f32 %v383, %v408
        %v417 = vadd.f32 %v384, %v409
        %v418 = vadd.f32 %v385, %v410
        %v419 = vadd.f32 %v386, %v411
        %v420 = vadd.f32 %v387, %v412
        %s421 = scalar_lea.vmem %s293, 128
        %v422 = vld [vmem:[%s421] sm:$0xff]
        %v423 = vld [vmem:[%s421 + $0x8] sm:$0xff]
        %v424 = vld [vmem:[%s421 + $0x10] sm:$0xff]
        %v425 = vld [vmem:[%s421 + $0x18] sm:$0xff]
        %v426 = vld [vmem:[%s421 + $0x20] sm:$0xff]
        %v427 = vld [vmem:[%s421 + $0x28] sm:$0xff]
        %v428 = vld [vmem:[%s421 + $0x30] sm:$0xff]
        %v429 = vld [vmem:[%s421 + $0x38] sm:$0xff]
        %v430 = vadd.f32 %v397, %v422
        %v431 = vadd.f32 %v398, %v423
        %v432 = vadd.f32 %v399, %v424
        %v433 = vadd.f32 %v400, %v425
        %v434 = vadd.f32 %v401, %v426
        %v435 = vadd.f32 %v402, %v427
        %v436 = vadd.f32 %v403, %v428
        %v437 = vadd.f32 %v404, %v429
        %v438 = vmul.f32 %v422, %v422
        %v439 = vmul.f32 %v423, %v423
        %v440 = vmul.f32 %v424, %v424
        %v441 = vmul.f32 %v425, %v425
        %v442 = vmul.f32 %v426, %v426
        %v443 = vmul.f32 %v427, %v427
        %v444 = vmul.f32 %v428, %v428
        %v445 = vmul.f32 %v429, %v429
        %v446 = vadd.f32 %v413, %v438
        %v447 = vadd.f32 %v414, %v439
        %v448 = vadd.f32 %v415, %v440
        %v449 = vadd.f32 %v416, %v441
        %v450 = vadd.f32 %v417, %v442
        %v451 = vadd.f32 %v418, %v443
        %v452 = vadd.f32 %v419, %v444
        %v453 = vadd.f32 %v420, %v445
        %s454 = scalar_lea.vmem %s293, 192
        %v455 = vld [vmem:[%s454] sm:$0xff]
        %v456 = vld [vmem:[%s454 + $0x8] sm:$0xff]
        %v457 = vld [vmem:[%s454 + $0x10] sm:$0xff]
        %v458 = vld [vmem:[%s454 + $0x18] sm:$0xff]
        %v459 = vld [vmem:[%s454 + $0x20] sm:$0xff]
        %v460 = vld [vmem:[%s454 + $0x28] sm:$0xff]
        %v461 = vld [vmem:[%s454 + $0x30] sm:$0xff]
        %v462 = vld [vmem:[%s454 + $0x38] sm:$0xff]
        %v463 = vadd.f32 %v430, %v455
        %v464 = vadd.f32 %v431, %v456
        %v465 = vadd.f32 %v432, %v457
        %v466 = vadd.f32 %v433, %v458
        %v467 = vadd.f32 %v434, %v459
        %v468 = vadd.f32 %v435, %v460
        %v469 = vadd.f32 %v436, %v461
        %v470 = vadd.f32 %v437, %v462
        %v471 = vmul.f32 %v455, %v455
        %v472 = vmul.f32 %v456, %v456
        %v473 = vmul.f32 %v457, %v457
        %v474 = vmul.f32 %v458, %v458
        %v475 = vmul.f32 %v459, %v459
        %v476 = vmul.f32 %v460, %v460
        %v477 = vmul.f32 %v461, %v461
        %v478 = vmul.f32 %v462, %v462
        %v479 = vadd.f32 %v446, %v471
        %v480 = vadd.f32 %v447, %v472
        %v481 = vadd.f32 %v448, %v473
        %v482 = vadd.f32 %v449, %v474
        %v483 = vadd.f32 %v450, %v475
        %v484 = vadd.f32 %v451, %v476
        %v485 = vadd.f32 %v452, %v477
        %v486 = vadd.f32 %v453, %v478
        %s487 = scalar_lea.vmem %s293, 256
        %v488 = vld [vmem:[%s487] sm:$0xff]
        %v489 = vld [vmem:[%s487 + $0x8] sm:$0xff]
        %v490 = vld [vmem:[%s487 + $0x10] sm:$0xff]
        %v491 = vld [vmem:[%s487 + $0x18] sm:$0xff]
        %v492 = vld [vmem:[%s487 + $0x20] sm:$0xff]
        %v493 = vld [vmem:[%s487 + $0x28] sm:$0xff]
        %v494 = vld [vmem:[%s487 + $0x30] sm:$0xff]
        %v495 = vld [vmem:[%s487 + $0x38] sm:$0xff]
        %v496 = vadd.f32 %v463, %v488
        %v497 = vadd.f32 %v464, %v489
        %v498 = vadd.f32 %v465, %v490
        %v499 = vadd.f32 %v466, %v491
        %v500 = vadd.f32 %v467, %v492
        %v501 = vadd.f32 %v468, %v493
        %v502 = vadd.f32 %v469, %v494
        %v503 = vadd.f32 %v470, %v495
        %v504 = vmul.f32 %v488, %v488
        %v505 = vmul.f32 %v489, %v489
        %v506 = vmul.f32 %v490, %v490
        %v507 = vmul.f32 %v491, %v491
        %v508 = vmul.f32 %v492, %v492
        %v509 = vmul.f32 %v493, %v493
        %v510 = vmul.f32 %v494, %v494
        %v511 = vmul.f32 %v495, %v495
        %v512 = vadd.f32 %v479, %v504
        %v513 = vadd.f32 %v480, %v505
        %v514 = vadd.f32 %v481, %v506
        %v515 = vadd.f32 %v482, %v507
        %v516 = vadd.f32 %v483, %v508
        %v517 = vadd.f32 %v484, %v509
        %v518 = vadd.f32 %v485, %v510
        %v519 = vadd.f32 %v486, %v511
        %s520 = scalar_lea.vmem %s293, 320
        %v521 = vld [vmem:[%s520] sm:$0xff]
        %v522 = vld [vmem:[%s520 + $0x8] sm:$0xff]
        %v523 = vld [vmem:[%s520 + $0x10] sm:$0xff]
        %v524 = vld [vmem:[%s520 + $0x18] sm:$0xff]
        %v525 = vld [vmem:[%s520 + $0x20] sm:$0xff]
        %v526 = vld [vmem:[%s520 + $0x28] sm:$0xff]
        %v527 = vld [vmem:[%s520 + $0x30] sm:$0xff]
        %v528 = vld [vmem:[%s520 + $0x38] sm:$0xff]
        %v529 = vadd.f32 %v496, %v521
        %v530 = vadd.f32 %v497, %v522
        %v531 = vadd.f32 %v498, %v523
        %v532 = vadd.f32 %v499, %v524
        %v533 = vadd.f32 %v500, %v525
        %v534 = vadd.f32 %v501, %v526
        %v535 = vadd.f32 %v502, %v527
        %v536 = vadd.f32 %v503, %v528
        %v537 = vmul.f32 %v521, %v521
        %v538 = vmul.f32 %v522, %v522
        %v539 = vmul.f32 %v523, %v523
        %v540 = vmul.f32 %v524, %v524
        %v541 = vmul.f32 %v525, %v525
        %v542 = vmul.f32 %v526, %v526
        %v543 = vmul.f32 %v527, %v527
        %v544 = vmul.f32 %v528, %v528
        %v545 = vadd.f32 %v512, %v537
        %v546 = vadd.f32 %v513, %v538
        %v547 = vadd.f32 %v514, %v539
        %v548 = vadd.f32 %v515, %v540
        %v549 = vadd.f32 %v516, %v541
        %v550 = vadd.f32 %v517, %v542
        %v551 = vadd.f32 %v518, %v543
        %v552 = vadd.f32 %v519, %v544
        %s553 = scalar_lea.vmem %s293, 384
        %v554 = vld [vmem:[%s553] sm:$0xff]
        %v555 = vld [vmem:[%s553 + $0x8] sm:$0xff]
        %v556 = vld [vmem:[%s553 + $0x10] sm:$0xff]
        %v557 = vld [vmem:[%s553 + $0x18] sm:$0xff]
        %v558 = vld [vmem:[%s553 + $0x20] sm:$0xff]
        %v559 = vld [vmem:[%s553 + $0x28] sm:$0xff]
        %v560 = vld [vmem:[%s553 + $0x30] sm:$0xff]
        %v561 = vld [vmem:[%s553 + $0x38] sm:$0xff]
        %v562 = vadd.f32 %v529, %v554
        %v563 = vadd.f32 %v530, %v555
        %v564 = vadd.f32 %v531, %v556
        %v565 = vadd.f32 %v532, %v557
        %v566 = vadd.f32 %v533, %v558
        %v567 = vadd.f32 %v534, %v559
        %v568 = vadd.f32 %v535, %v560
        %v569 = vadd.f32 %v536, %v561
        %v570 = vmul.f32 %v554, %v554
        %v571 = vmul.f32 %v555, %v555
        %v572 = vmul.f32 %v556, %v556
        %v573 = vmul.f32 %v557, %v557
        %v574 = vmul.f32 %v558, %v558
        %v575 = vmul.f32 %v559, %v559
        %v576 = vmul.f32 %v560, %v560
        %v577 = vmul.f32 %v561, %v561
        %v578 = vadd.f32 %v545, %v570
        %v579 = vadd.f32 %v546, %v571
        %v580 = vadd.f32 %v547, %v572
        %v581 = vadd.f32 %v548, %v573
        %v582 = vadd.f32 %v549, %v574
        %v583 = vadd.f32 %v550, %v575
        %v584 = vadd.f32 %v551, %v576
        %v585 = vadd.f32 %v552, %v577
        %s586 = scalar_lea.vmem %s293, 448
        %v587 = vld [vmem:[%s586] sm:$0xff]
        %v588 = vld [vmem:[%s586 + $0x8] sm:$0xff]
        %v589 = vld [vmem:[%s586 + $0x10] sm:$0xff]
        %v590 = vld [vmem:[%s586 + $0x18] sm:$0xff]
        %v591 = vld [vmem:[%s586 + $0x20] sm:$0xff]
        %v592 = vld [vmem:[%s586 + $0x28] sm:$0xff]
        %v593 = vld [vmem:[%s586 + $0x30] sm:$0xff]
        %v594 = vld [vmem:[%s586 + $0x38] sm:$0xff]
        %v595 = vadd.f32 %v562, %v587
        %v596 = vadd.f32 %v563, %v588
        %v597 = vadd.f32 %v564, %v589
        %v598 = vadd.f32 %v565, %v590
        %v599 = vadd.f32 %v566, %v591
        %v600 = vadd.f32 %v567, %v592
        %v601 = vadd.f32 %v568, %v593
        %v602 = vadd.f32 %v569, %v594
        %v603 = vmul.f32 %v587, %v587
        %v604 = vmul.f32 %v588, %v588
        %v605 = vmul.f32 %v589, %v589
        %v606 = vmul.f32 %v590, %v590
        %v607 = vmul.f32 %v591, %v591
        %v608 = vmul.f32 %v592, %v592
        %v609 = vmul.f32 %v593, %v593
        %v610 = vmul.f32 %v594, %v594
        %v611 = vadd.f32 %v578, %v603
        %v612 = vadd.f32 %v579, %v604
        %v613 = vadd.f32 %v580, %v605
        %v614 = vadd.f32 %v581, %v606
        %v615 = vadd.f32 %v582, %v607
        %v616 = vadd.f32 %v583, %v608
        %v617 = vadd.f32 %v584, %v609
        %v618 = vadd.f32 %v585, %v610
        %vm619 = vcmask 261120
        %v621 = vsel %vm619, %v311, 0
        %623 = vmatprep.subr.mxu0 %v596
        %624 = vmatpush1.msra.mxu0 %v595
        %625 = vmatprep.subr.mxu0 %v598
        %626 = vmatpush1.msra.mxu0 %v597
        %627 = vmatprep.subr.mxu0 %v600
        %628 = vmatpush1.msra.mxu0 %v599
        %629 = vmatprep.subr.mxu0 %v602
        %630 = vmatpush1.msra.mxu0 %v601
        %631 = vmatprep.subr.mxu0 0.0
        %632 = vmatpush1.msra.mxu0 0.0
        %633 = vmatprep.subr.mxu0 0.0
        %634 = vmatpush1.msra.mxu0 0.0
        %635 = vmatprep.subr.mxu0 0.0
        %636 = vmatpush1.msra.mxu0 0.0
        %637 = vmatprep.subr.mxu0 0.0
        %638 = vmatpush1.msra.mxu0 0.0
        %639 = vmatprep.subr.mxu0 0.0
        %640 = vmatpush1.msra.mxu0 0.0
        %641 = vmatprep.subr.mxu0 0.0
        %642 = vmatpush1.msra.mxu0 0.0
        %643 = vmatprep.subr.mxu0 0.0
        %644 = vmatpush1.msra.mxu0 0.0
        %645 = vmatprep.subr.mxu0 0.0
        %646 = vmatpush1.msra.mxu0 0.0
        %647 = vmatprep.subr.mxu0 0.0
        %648 = vmatpush1.msra.mxu0 0.0
        %649 = vmatprep.subr.mxu0 0.0
        %650 = vmatpush1.msra.mxu0 0.0
        %651 = vmatprep.subr.mxu0 0.0
        %652 = vmatpush1.msra.mxu0 0.0
        %653 = vmatprep.subr.mxu0 0.0
        %654 = vmatpush1.msra.mxu0 0.0
        %655 = vmatprep.subr.mxu0 0.0
        %656 = vmatpush1.msra.mxu0 0.0
        %657 = vmatprep.subr.mxu0 0.0
        %658 = vmatpush1.msra.mxu0 0.0
        %659 = vmatprep.subr.mxu0 0.0
        %660 = vmatpush1.msra.mxu0 0.0
        %661 = vmatprep.subr.mxu0 0.0
        %662 = vmatpush1.msra.mxu0 0.0
        %663 = vmatprep.subr.mxu0 0.0
        %664 = vmatpush1.msra.mxu0 0.0
        %665 = vmatprep.subr.mxu0 0.0
        %666 = vmatpush1.msra.mxu0 0.0
        %667 = vmatprep.subr.mxu0 0.0
        %668 = vmatpush1.msra.mxu0 0.0
        %669 = vmatprep.subr.mxu0 0.0
        %670 = vmatpush1.msra.mxu0 0.0
        %671 = vmatprep.subr.mxu0 0.0
        %672 = vmatpush1.msra.mxu0 0.0
        %673 = vmatprep.subr.mxu0 0.0
        %674 = vmatpush1.msra.mxu0 0.0
        %675 = vmatprep.subr.mxu0 0.0
        %676 = vmatpush1.msra.mxu0 0.0
        %677 = vmatprep.subr.mxu0 0.0
        %678 = vmatpush1.msra.mxu0 0.0
        %679 = vmatprep.subr.mxu0 0.0
        %680 = vmatpush1.msra.mxu0 0.0
        %681 = vmatprep.subr.mxu0 0.0
        %682 = vmatpush1.msra.mxu0 0.0
        %683 = vmatprep.subr.mxu0 0.0
        %684 = vmatpush1.msra.mxu0 0.0
        %685 = vmatprep.subr.mxu0 0.0
        %686 = vmatpush1.msra.mxu0 0.0
        %687 = vmatprep.mubr.f32.mxu0 0.0
        %688 = vmatmul.mubr.f32.gmra.mrb[0].mxu0 %v621
        %v689 = vpop.f32.mrb[0].mxu0
        %v690 = vadd.f32 0.0, %v689
        %v691 = vpop.f32.mrb[0].mxu0
        %v692 = vadd.f32 0.0, %v691
        %693 = vdwg.mxu0
        %694 = vmatprep.subr.mxu0 %v612
        %695 = vmatpush1.msra.mxu0 %v611
        %696 = vmatprep.subr.mxu0 %v614
        %697 = vmatpush1.msra.mxu0 %v613
        %698 = vmatprep.subr.mxu0 %v616
        %699 = vmatpush1.msra.mxu0 %v615
        %700 = vmatprep.subr.mxu0 %v618
        %701 = vmatpush1.msra.mxu0 %v617
        %702 = vmatprep.subr.mxu0 0.0
        %703 = vmatpush1.msra.mxu0 0.0
        %704 = vmatprep.subr.mxu0 0.0
        %705 = vmatpush1.msra.mxu0 0.0
        %706 = vmatprep.subr.mxu0 0.0
        %707 = vmatpush1.msra.mxu0 0.0
        %708 = vmatprep.subr.mxu0 0.0
        %709 = vmatpush1.msra.mxu0 0.0
        %710 = vmatprep.subr.mxu0 0.0
        %711 = vmatpush1.msra.mxu0 0.0
        %712 = vmatprep.subr.mxu0 0.0
        %713 = vmatpush1.msra.mxu0 0.0
        %714 = vmatprep.subr.mxu0 0.0
        %715 = vmatpush1.msra.mxu0 0.0
        %716 = vmatprep.subr.mxu0 0.0
        %717 = vmatpush1.msra.mxu0 0.0
        %718 = vmatprep.subr.mxu0 0.0
        %719 = vmatpush1.msra.mxu0 0.0
        %720 = vmatprep.subr.mxu0 0.0
        %721 = vmatpush1.msra.mxu0 0.0
        %722 = vmatprep.subr.mxu0 0.0
        %723 = vmatpush1.msra.mxu0 0.0
        %724 = vmatprep.subr.mxu0 0.0
        %725 = vmatpush1.msra.mxu0 0.0
        %726 = vmatprep.subr.mxu0 0.0
        %727 = vmatpush1.msra.mxu0 0.0
        %728 = vmatprep.subr.mxu0 0.0
        %729 = vmatpush1.msra.mxu0 0.0
        %730 = vmatprep.subr.mxu0 0.0
        %731 = vmatpush1.msra.mxu0 0.0
        %732 = vmatprep.subr.mxu0 0.0
        %733 = vmatpush1.msra.mxu0 0.0
        %734 = vmatprep.subr.mxu0 0.0
        %735 = vmatpush1.msra.mxu0 0.0
        %736 = vmatprep.subr.mxu0 0.0
        %737 = vmatpush1.msra.mxu0 0.0
        %738 = vmatprep.subr.mxu0 0.0
        %739 = vmatpush1.msra.mxu0 0.0
        %740 = vmatprep.subr.mxu0 0.0
        %741 = vmatpush1.msra.mxu0 0.0
        %742 = vmatprep.subr.mxu0 0.0
        %743 = vmatpush1.msra.mxu0 0.0
        %744 = vmatprep.subr.mxu0 0.0
        %745 = vmatpush1.msra.mxu0 0.0
        %746 = vmatprep.subr.mxu0 0.0
        %747 = vmatpush1.msra.mxu0 0.0
        %748 = vmatprep.subr.mxu0 0.0
        %749 = vmatpush1.msra.mxu0 0.0
        %750 = vmatprep.subr.mxu0 0.0
        %751 = vmatpush1.msra.mxu0 0.0
        %752 = vmatprep.subr.mxu0 0.0
        %753 = vmatpush1.msra.mxu0 0.0
        %754 = vmatprep.subr.mxu0 0.0
        %755 = vmatpush1.msra.mxu0 0.0
        %756 = vmatprep.subr.mxu0 0.0
        %757 = vmatpush1.msra.mxu0 0.0
        %758 = vmatprep.mubr.f32.mxu0 0.0
        %759 = vmatmul.mubr.f32.gmra.mrb[0].mxu0 %v621
        %v760 = vpop.f32.mrb[0].mxu0
        %v761 = vadd.f32 0.0, %v760
        %v762 = vpop.f32.mrb[0].mxu0
        %v763 = vadd.f32 0.0, %v762
        %764 = vdwg.mxu0
        %v765 = vrcp.pop 32.0
        %v766 = vmul.f32 %v690, %v765
        %v767 = vmul.f32 %v692, %v765
        %v768 = vmul.f32 %v761, %v765
        %v769 = vmul.f32 %v763, %v765
        %v770 = vmul.f32 %v766, %v766
        %v771 = vmul.f32 %v767, %v767
        %v772 = vsub.f32 %v768, %v770
        %v773 = vsub.f32 %v769, %v771
        %v774 = vadd.f32 %v772, 1e-05
        %v775 = vadd.f32 %v773, 1e-05
        %v776 = vrsqrt.pop %v774
        %v777 = vrsqrt.pop %v775
        %vm778 = vcmask 64512
        %v780 = vsel %vm778, %v330, 0
        %v783 = vsel %vm778, %v331, 0
        %v786 = vsel %vm778, %v332, 0
        %v789 = vsel %vm778, %v333, 0
        %791 = vmatprep.subr.mxu0 %v767
        %792 = vmatpush1.msra.mxu0 %v766
        %793 = vmatprep.subr.mxu0 0.0
        %794 = vmatpush1.msra.mxu0 0.0
        %795 = vmatprep.subr.mxu0 0.0
        %796 = vmatpush1.msra.mxu0 0.0
        %797 = vmatprep.subr.mxu0 0.0
        %798 = vmatpush1.msra.mxu0 0.0
        %799 = vmatprep.subr.mxu0 0.0
        %800 = vmatpush1.msra.mxu0 0.0
        %801 = vmatprep.subr.mxu0 0.0
        %802 = vmatpush1.msra.mxu0 0.0
        %803 = vmatprep.subr.mxu0 0.0
        %804 = vmatpush1.msra.mxu0 0.0
        %805 = vmatprep.subr.mxu0 0.0
        %806 = vmatpush1.msra.mxu0 0.0
        %807 = vmatprep.subr.mxu0 0.0
        %808 = vmatpush1.msra.mxu0 0.0
        %809 = vmatprep.subr.mxu0 0.0
        %810 = vmatpush1.msra.mxu0 0.0
        %811 = vmatprep.subr.mxu0 0.0
        %812 = vmatpush1.msra.mxu0 0.0
        %813 = vmatprep.subr.mxu0 0.0
        %814 = vmatpush1.msra.mxu0 0.0
        %815 = vmatprep.subr.mxu0 0.0
        %816 = vmatpush1.msra.mxu0 0.0
        %817 = vmatprep.subr.mxu0 0.0
        %818 = vmatpush1.msra.mxu0 0.0
        %819 = vmatprep.subr.mxu0 0.0
        %820 = vmatpush1.msra.mxu0 0.0
        %821 = vmatprep.subr.mxu0 0.0
        %822 = vmatpush1.msra.mxu0 0.0
        %823 = vmatprep.subr.mxu0 0.0
        %824 = vmatpush1.msra.mxu0 0.0
        %825 = vmatprep.subr.mxu0 0.0
        %826 = vmatpush1.msra.mxu0 0.0
        %827 = vmatprep.subr.mxu0 0.0
        %828 = vmatpush1.msra.mxu0 0.0
        %829 = vmatprep.subr.mxu0 0.0
        %830 = vmatpush1.msra.mxu0 0.0
        %831 = vmatprep.subr.mxu0 0.0
        %832 = vmatpush1.msra.mxu0 0.0
        %833 = vmatprep.subr.mxu0 0.0
        %834 = vmatpush1.msra.mxu0 0.0
        %835 = vmatprep.subr.mxu0 0.0
        %836 = vmatpush1.msra.mxu0 0.0
        %837 = vmatprep.subr.mxu0 0.0
        %838 = vmatpush1.msra.mxu0 0.0
        %839 = vmatprep.subr.mxu0 0.0
        %840 = vmatpush1.msra.mxu0 0.0
        %841 = vmatprep.subr.mxu0 0.0
        %842 = vmatpush1.msra.mxu0 0.0
        %843 = vmatprep.subr.mxu0 0.0
        %844 = vmatpush1.msra.mxu0 0.0
        %845 = vmatprep.subr.mxu0 0.0
        %846 = vmatpush1.msra.mxu0 0.0
        %847 = vmatprep.subr.mxu0 0.0
        %848 = vmatpush1.msra.mxu0 0.0
        %849 = vmatprep.subr.mxu0 0.0
        %850 = vmatpush1.msra.mxu0 0.0
        %851 = vmatprep.subr.mxu0 0.0
        %852 = vmatpush1.msra.mxu0 0.0
        %853 = vmatprep.subr.mxu0 0.0
        %854 = vmatpush1.msra.mxu0 0.0
        %855 = vmatprep.mubr.f32.mxu0 0.0
        %856 = vmatmul.mubr.f32.gmra.mrb[0].mxu0 %v780
        %v857 = vpop.f32.mrb[0].mxu0
        %v858 = vadd.f32 0.0, %v857
        %v859 = vpop.f32.mrb[0].mxu0
        %v860 = vadd.f32 0.0, %v859
        %861 = vmatprep.mubr.f32.mxu0 0.0
        %862 = vmatmul.mubr.f32.gmra.mrb[0].mxu0 %v783
        %v863 = vpop.f32.mrb[0].mxu0
        %v864 = vadd.f32 0.0, %v863
        %v865 = vpop.f32.mrb[0].mxu0
        %v866 = vadd.f32 0.0, %v865
        %867 = vmatprep.mubr.f32.mxu0 0.0
        %868 = vmatmul.mubr.f32.gmra.mrb[0].mxu0 %v786
        %v869 = vpop.f32.mrb[0].mxu0
        %v870 = vadd.f32 0.0, %v869
        %v871 = vpop.f32.mrb[0].mxu0
        %v872 = vadd.f32 0.0, %v871
        %873 = vmatprep.mubr.f32.mxu0 0.0
        %874 = vmatmul.mubr.f32.gmra.mrb[0].mxu0 %v789
        %v875 = vpop.f32.mrb[0].mxu0
        %v876 = vadd.f32 0.0, %v875
        %v877 = vpop.f32.mrb[0].mxu0
        %v878 = vadd.f32 0.0, %v877
        %879 = vdwg.mxu0
        %880 = vmatprep.subr.mxu0 %v777
        %881 = vmatpush1.msra.mxu0 %v776
        %882 = vmatprep.subr.mxu0 0.0
        %883 = vmatpush1.msra.mxu0 0.0
        %884 = vmatprep.subr.mxu0 0.0
        %885 = vmatpush1.msra.mxu0 0.0
        %886 = vmatprep.subr.mxu0 0.0
        %887 = vmatpush1.msra.mxu0 0.0
        %888 = vmatprep.subr.mxu0 0.0
        %889 = vmatpush1.msra.mxu0 0.0
        %890 = vmatprep.subr.mxu0 0.0
        %891 = vmatpush1.msra.mxu0 0.0
        %892 = vmatprep.subr.mxu0 0.0
        %893 = vmatpush1.msra.mxu0 0.0
        %894 = vmatprep.subr.mxu0 0.0
        %895 = vmatpush1.msra.mxu0 0.0
        %896 = vmatprep.subr.mxu0 0.0
        %897 = vmatpush1.msra.mxu0 0.0
        %898 = vmatprep.subr.mxu0 0.0
        %899 = vmatpush1.msra.mxu0 0.0
        %900 = vmatprep.subr.mxu0 0.0
        %901 = vmatpush1.msra.mxu0 0.0
        %902 = vmatprep.subr.mxu0 0.0
        %903 = vmatpush1.msra.mxu0 0.0
        %904 = vmatprep.subr.mxu0 0.0
        %905 = vmatpush1.msra.mxu0 0.0
        %906 = vmatprep.subr.mxu0 0.0
        %907 = vmatpush1.msra.mxu0 0.0
        %908 = vmatprep.subr.mxu0 0.0
        %909 = vmatpush1.msra.mxu0 0.0
        %910 = vmatprep.subr.mxu0 0.0
        %911 = vmatpush1.msra.mxu0 0.0
        %912 = vmatprep.subr.mxu0 0.0
        %913 = vmatpush1.msra.mxu0 0.0
        %914 = vmatprep.subr.mxu0 0.0
        %915 = vmatpush1.msra.mxu0 0.0
        %916 = vmatprep.subr.mxu0 0.0
        %917 = vmatpush1.msra.mxu0 0.0
        %918 = vmatprep.subr.mxu0 0.0
        %919 = vmatpush1.msra.mxu0 0.0
        %920 = vmatprep.subr.mxu0 0.0
        %921 = vmatpush1.msra.mxu0 0.0
        %922 = vmatprep.subr.mxu0 0.0
        %923 = vmatpush1.msra.mxu0 0.0
        %924 = vmatprep.subr.mxu0 0.0
        %925 = vmatpush1.msra.mxu0 0.0
        %926 = vmatprep.subr.mxu0 0.0
        %927 = vmatpush1.msra.mxu0 0.0
        %928 = vmatprep.subr.mxu0 0.0
        %929 = vmatpush1.msra.mxu0 0.0
        %930 = vmatprep.subr.mxu0 0.0
        %931 = vmatpush1.msra.mxu0 0.0
        %932 = vmatprep.subr.mxu0 0.0
        %933 = vmatpush1.msra.mxu0 0.0
        %934 = vmatprep.subr.mxu0 0.0
        %935 = vmatpush1.msra.mxu0 0.0
        %936 = vmatprep.subr.mxu0 0.0
        %937 = vmatpush1.msra.mxu0 0.0
        %938 = vmatprep.subr.mxu0 0.0
        %939 = vmatpush1.msra.mxu0 0.0
        %940 = vmatprep.subr.mxu0 0.0
        %941 = vmatpush1.msra.mxu0 0.0
        %942 = vmatprep.subr.mxu0 0.0
        %943 = vmatpush1.msra.mxu0 0.0
        %944 = vmatprep.mubr.f32.mxu0 0.0
        %945 = vmatmul.mubr.f32.gmra.mrb[0].mxu0 %v780
        %v946 = vpop.f32.mrb[0].mxu0
        %v947 = vadd.f32 0.0, %v946
        %v948 = vpop.f32.mrb[0].mxu0
        %v949 = vadd.f32 0.0, %v948
        %950 = vmatprep.mubr.f32.mxu0 0.0
        %951 = vmatmul.mubr.f32.gmra.mrb[0].mxu0 %v783
        %v952 = vpop.f32.mrb[0].mxu0
        %v953 = vadd.f32 0.0, %v952
        %v954 = vpop.f32.mrb[0].mxu0
        %v955 = vadd.f32 0.0, %v954
        %956 = vmatprep.mubr.f32.mxu0 0.0
        %957 = vmatmul.mubr.f32.gmra.mrb[0].mxu0 %v786
        %v958 = vpop.f32.mrb[0].mxu0
        %v959 = vadd.f32 0.0, %v958
        %v960 = vpop.f32.mrb[0].mxu0
        %v961 = vadd.f32 0.0, %v960
        %962 = vmatprep.mubr.f32.mxu0 0.0
        %963 = vmatmul.mubr.f32.gmra.mrb[0].mxu0 %v789
        %v964 = vpop.f32.mrb[0].mxu0
        %v965 = vadd.f32 0.0, %v964
        %v966 = vpop.f32.mrb[0].mxu0
        %v967 = vadd.f32 0.0, %v966
        %968 = vdwg.mxu0
        %v969 = vld [vmem:[%s2] sm:$0xff]
        %v970 = vld [vmem:[%s2 + $0x8] sm:$0xff]
        %v971 = vld [vmem:[%s2 + $0x10] sm:$0xff]
        %v972 = vld [vmem:[%s2 + $0x18] sm:$0xff]
        %v973 = vld [vmem:[%s2 + $0x20] sm:$0xff]
        %v974 = vld [vmem:[%s2 + $0x28] sm:$0xff]
        %v975 = vld [vmem:[%s2 + $0x30] sm:$0xff]
        %v976 = vld [vmem:[%s2 + $0x38] sm:$0xff]
        %v977 = vld [vmem:[%s2 + $0x40] sm:$0xff]
        %v978 = vld [vmem:[%s2 + $0x48] sm:$0xff]
        %v979 = vld [vmem:[%s2 + $0x50] sm:$0xff]
        %v980 = vld [vmem:[%s2 + $0x58] sm:$0xff]
        %v981 = vld [vmem:[%s2 + $0x60] sm:$0xff]
        %v982 = vld [vmem:[%s2 + $0x68] sm:$0xff]
        %v983 = vld [vmem:[%s2 + $0x70] sm:$0xff]
        %v984 = vld [vmem:[%s2 + $0x78] sm:$0xff]
        %v985 = vld [vmem:[%s3] sm:$0xff]
        %v986 = vsub.f32 %v372, %v858
        %v987 = vsub.f32 %v373, %v860
        %v988 = vsub.f32 %v374, %v864
        %v989 = vsub.f32 %v375, %v866
        %v990 = vsub.f32 %v376, %v870
        %v991 = vsub.f32 %v377, %v872
        %v992 = vsub.f32 %v378, %v876
        %v993 = vsub.f32 %v379, %v878
        %v994 = vmul.f32 %v986, %v947
        %v995 = vmul.f32 %v987, %v949
        %v996 = vmul.f32 %v988, %v953
        %v997 = vmul.f32 %v989, %v955
        %v998 = vmul.f32 %v990, %v959
        %v999 = vmul.f32 %v991, %v961
        %v1000 = vmul.f32 %v992, %v965
        %v1001 = vmul.f32 %v993, %v967
        %v1002 = vld [vmem:[%s299] sm:$0xff]
        %v1003 = vld [vmem:[%s299 + $0x8] sm:$0xff]
        %v1004 = vld [vmem:[%s299 + $0x10] sm:$0xff]
        %v1005 = vld [vmem:[%s299 + $0x18] sm:$0xff]
        %v1006 = vld [vmem:[%s299 + $0x20] sm:$0xff]
        %v1007 = vld [vmem:[%s299 + $0x28] sm:$0xff]
        %v1008 = vld [vmem:[%s299 + $0x30] sm:$0xff]
        %v1009 = vld [vmem:[%s299 + $0x38] sm:$0xff]
        %v1010 = vld [vmem:[%s299 + $0x40] sm:$0xff]
        %v1011 = vld [vmem:[%s299 + $0x48] sm:$0xff]
        %v1012 = vld [vmem:[%s299 + $0x50] sm:$0xff]
        %v1013 = vld [vmem:[%s299 + $0x58] sm:$0xff]
        %v1014 = vld [vmem:[%s299 + $0x60] sm:$0xff]
        %v1015 = vld [vmem:[%s299 + $0x68] sm:$0xff]
        %v1016 = vld [vmem:[%s299 + $0x70] sm:$0xff]
        %v1017 = vld [vmem:[%s299 + $0x78] sm:$0xff]
        %1019 = vset.pattern.permute.xlu0 0
        %1020 = vperm.xlu0 %1019, %v1002
        %v1021 = vpop.permute.xlu0 %1020
        %1024 = vset.pattern.permute.xlu0 0
        %1025 = vperm.xlu0 %1024, %v1003
        %v1026 = vpop.permute.xlu0 %1025
        %1029 = vset.pattern.permute.xlu0 0
        %1030 = vperm.xlu0 %1029, %v1004
        %v1031 = vpop.permute.xlu0 %1030
        %1034 = vset.pattern.permute.xlu0 0
        %1035 = vperm.xlu0 %1034, %v1005
        %v1036 = vpop.permute.xlu0 %1035
        %1039 = vset.pattern.permute.xlu0 0
        %1040 = vperm.xlu0 %1039, %v1006
        %v1041 = vpop.permute.xlu0 %1040
        %1044 = vset.pattern.permute.xlu0 0
        %1045 = vperm.xlu0 %1044, %v1007
        %v1046 = vpop.permute.xlu0 %1045
        %1049 = vset.pattern.permute.xlu0 0
        %1050 = vperm.xlu0 %1049, %v1008
        %v1051 = vpop.permute.xlu0 %1050
        %1054 = vset.pattern.permute.xlu0 0
        %1055 = vperm.xlu0 %1054, %v1009
        %v1056 = vpop.permute.xlu0 %1055
        %1059 = vset.pattern.permute.xlu0 0
        %1060 = vperm.xlu0 %1059, %v1010
        %v1061 = vpop.permute.xlu0 %1060
        %1064 = vset.pattern.permute.xlu0 0
        %1065 = vperm.xlu0 %1064, %v1011
        %v1066 = vpop.permute.xlu0 %1065
        %1069 = vset.pattern.permute.xlu0 0
        %1070 = vperm.xlu0 %1069, %v1012
        %v1071 = vpop.permute.xlu0 %1070
        %1074 = vset.pattern.permute.xlu0 0
        %1075 = vperm.xlu0 %1074, %v1013
        %v1076 = vpop.permute.xlu0 %1075
        %1079 = vset.pattern.permute.xlu0 0
        %1080 = vperm.xlu0 %1079, %v1014
        %v1081 = vpop.permute.xlu0 %1080
        %1084 = vset.pattern.permute.xlu0 0
        %1085 = vperm.xlu0 %1084, %v1015
        %v1086 = vpop.permute.xlu0 %1085
        %1089 = vset.pattern.permute.xlu0 0
        %1090 = vperm.xlu0 %1089, %v1016
        %v1091 = vpop.permute.xlu0 %1090
        %1094 = vset.pattern.permute.xlu0 0
        %1095 = vperm.xlu0 %1094, %v1017
        %v1096 = vpop.permute.xlu0 %1095
        %v1099 = vsel %vm619, %v969, 0
        %v1102 = vsel %vm619, %v970, 0
        %v1105 = vsel %vm619, %v971, 0
        %v1108 = vsel %vm619, %v972, 0
        %v1111 = vsel %vm619, %v973, 0
        %v1114 = vsel %vm619, %v974, 0
        %v1117 = vsel %vm619, %v975, 0
        %v1120 = vsel %vm619, %v976, 0
        %v1123 = vsel %vm619, %v977, 0
        %v1126 = vsel %vm619, %v978, 0
        %v1129 = vsel %vm619, %v979, 0
        %v1132 = vsel %vm619, %v980, 0
        %v1135 = vsel %vm619, %v981, 0
        %v1138 = vsel %vm619, %v982, 0
        %v1141 = vsel %vm619, %v983, 0
        %v1144 = vsel %vm619, %v984, 0
        %1146 = vmatprep.subr.mxu0 %v995
        %1147 = vmatpush1.msra.mxu0 %v994
        %1148 = vmatprep.subr.mxu0 %v997
        %1149 = vmatpush1.msra.mxu0 %v996
        %1150 = vmatprep.subr.mxu0 %v999
        %1151 = vmatpush1.msra.mxu0 %v998
        %1152 = vmatprep.subr.mxu0 %v1001
        %1153 = vmatpush1.msra.mxu0 %v1000
        %1154 = vmatprep.subr.mxu0 0.0
        %1155 = vmatpush1.msra.mxu0 0.0
        %1156 = vmatprep.subr.mxu0 0.0
        %1157 = vmatpush1.msra.mxu0 0.0
        %1158 = vmatprep.subr.mxu0 0.0
        %1159 = vmatpush1.msra.mxu0 0.0
        %1160 = vmatprep.subr.mxu0 0.0
        %1161 = vmatpush1.msra.mxu0 0.0
        %1162 = vmatprep.subr.mxu0 0.0
        %1163 = vmatpush1.msra.mxu0 0.0
        %1164 = vmatprep.subr.mxu0 0.0
        %1165 = vmatpush1.msra.mxu0 0.0
        %1166 = vmatprep.subr.mxu0 0.0
        %1167 = vmatpush1.msra.mxu0 0.0
        %1168 = vmatprep.subr.mxu0 0.0
        %1169 = vmatpush1.msra.mxu0 0.0
        %1170 = vmatprep.subr.mxu0 0.0
        %1171 = vmatpush1.msra.mxu0 0.0
        %1172 = vmatprep.subr.mxu0 0.0
        %1173 = vmatpush1.msra.mxu0 0.0
        %1174 = vmatprep.subr.mxu0 0.0
        %1175 = vmatpush1.msra.mxu0 0.0
        %1176 = vmatprep.subr.mxu0 0.0
        %1177 = vmatpush1.msra.mxu0 0.0
        %1178 = vmatprep.subr.mxu0 0.0
        %1179 = vmatpush1.msra.mxu0 0.0
        %1180 = vmatprep.subr.mxu0 0.0
        %1181 = vmatpush1.msra.mxu0 0.0
        %1182 = vmatprep.subr.mxu0 0.0
        %1183 = vmatpush1.msra.mxu0 0.0
        %1184 = vmatprep.subr.mxu0 0.0
        %1185 = vmatpush1.msra.mxu0 0.0
        %1186 = vmatprep.subr.mxu0 0.0
        %1187 = vmatpush1.msra.mxu0 0.0
        %1188 = vmatprep.subr.mxu0 0.0
        %1189 = vmatpush1.msra.mxu0 0.0
        %1190 = vmatprep.subr.mxu0 0.0
        %1191 = vmatpush1.msra.mxu0 0.0
        %1192 = vmatprep.subr.mxu0 0.0
        %1193 = vmatpush1.msra.mxu0 0.0
        %1194 = vmatprep.subr.mxu0 0.0
        %1195 = vmatpush1.msra.mxu0 0.0
        %1196 = vmatprep.subr.mxu0 0.0
        %1197 = vmatpush1.msra.mxu0 0.0
        %1198 = vmatprep.subr.mxu0 0.0
        %1199 = vmatpush1.msra.mxu0 0.0
        %1200 = vmatprep.subr.mxu0 0.0
        %1201 = vmatpush1.msra.mxu0 0.0
        %1202 = vmatprep.subr.mxu0 0.0
        %1203 = vmatpush1.msra.mxu0 0.0
        %1204 = vmatprep.subr.mxu0 0.0
        %1205 = vmatpush1.msra.mxu0 0.0
        %1206 = vmatprep.subr.mxu0 0.0
        %1207 = vmatpush1.msra.mxu0 0.0
        %1208 = vmatprep.subr.mxu0 0.0
        %1209 = vmatpush1.msra.mxu0 0.0
        %1210 = vmatprep.mubr.f32.mxu0 0.0
        %1211 = vmatmul.mubr.f32.gmra.mrb[0].mxu0 %v1099
        %v1212 = vpop.f32.mrb[0].mxu0
        %v1213 = vadd.f32 %v1021, %v1212
        %v1214 = vpop.f32.mrb[0].mxu0
        %v1215 = vadd.f32 %v1021, %v1214
        %1216 = vmatprep.mubr.f32.mxu0 0.0
        %1217 = vmatmul.mubr.f32.gmra.mrb[0].mxu0 %v1102
        %v1218 = vpop.f32.mrb[0].mxu0
        %v1219 = vadd.f32 %v1026, %v1218
        %v1220 = vpop.f32.mrb[0].mxu0
        %v1221 = vadd.f32 %v1026, %v1220
        %1222 = vmatprep.mubr.f32.mxu0 0.0
        %1223 = vmatmul.mubr.f32.gmra.mrb[0].mxu0 %v1105
        %v1224 = vpop.f32.mrb[0].mxu0
        %v1225 = vadd.f32 %v1031, %v1224
        %v1226 = vpop.f32.mrb[0].mxu0
        %v1227 = vadd.f32 %v1031, %v1226
        %1228 = vmatprep.mubr.f32.mxu0 0.0
        %1229 = vmatmul.mubr.f32.gmra.mrb[0].mxu0 %v1108
        %v1230 = vpop.f32.mrb[0].mxu0
        %v1231 = vadd.f32 %v1036, %v1230
        %v1232 = vpop.f32.mrb[0].mxu0
        %v1233 = vadd.f32 %v1036, %v1232
        %1234 = vmatprep.mubr.f32.mxu0 0.0
        %1235 = vmatmul.mubr.f32.gmra.mrb[0].mxu0 %v1111
        %v1236 = vpop.f32.mrb[0].mxu0
        %v1237 = vadd.f32 %v1041, %v1236
        %v1238 = vpop.f32.mrb[0].mxu0
        %v1239 = vadd.f32 %v1041, %v1238
        %1240 = vmatprep.mubr.f32.mxu0 0.0
        %1241 = vmatmul.mubr.f32.gmra.mrb[0].mxu0 %v1114
        %v1242 = vpop.f32.mrb[0].mxu0
        %v1243 = vadd.f32 %v1046, %v1242
        %v1244 = vpop.f32.mrb[0].mxu0
        %v1245 = vadd.f32 %v1046, %v1244
        %1246 = vmatprep.mubr.f32.mxu0 0.0
        %1247 = vmatmul.mubr.f32.gmra.mrb[0].mxu0 %v1117
        %v1248 = vpop.f32.mrb[0].mxu0
        %v1249 = vadd.f32 %v1051, %v1248
        %v1250 = vpop.f32.mrb[0].mxu0
        %v1251 = vadd.f32 %v1051, %v1250
        %1252 = vmatprep.mubr.f32.mxu0 0.0
        %1253 = vmatmul.mubr.f32.gmra.mrb[0].mxu0 %v1120
        %v1254 = vpop.f32.mrb[0].mxu0
        %v1255 = vadd.f32 %v1056, %v1254
        %v1256 = vpop.f32.mrb[0].mxu0
        %v1257 = vadd.f32 %v1056, %v1256
        %1258 = vmatprep.mubr.f32.mxu0 0.0
        %1259 = vmatmul.mubr.f32.gmra.mrb[0].mxu0 %v1123
        %v1260 = vpop.f32.mrb[0].mxu0
        %v1261 = vadd.f32 %v1061, %v1260
        %v1262 = vpop.f32.mrb[0].mxu0
        %v1263 = vadd.f32 %v1061, %v1262
        %1264 = vmatprep.mubr.f32.mxu0 0.0
        %1265 = vmatmul.mubr.f32.gmra.mrb[0].mxu0 %v1126
        %v1266 = vpop.f32.mrb[0].mxu0
        %v1267 = vadd.f32 %v1066, %v1266
        %v1268 = vpop.f32.mrb[0].mxu0
        %v1269 = vadd.f32 %v1066, %v1268
        %1270 = vmatprep.mubr.f32.mxu0 0.0
        %1271 = vmatmul.mubr.f32.gmra.mrb[0].mxu0 %v1129
        %v1272 = vpop.f32.mrb[0].mxu0
        %v1273 = vadd.f32 %v1071, %v1272
        %v1274 = vpop.f32.mrb[0].mxu0
        %v1275 = vadd.f32 %v1071, %v1274
        %1276 = vmatprep.mubr.f32.mxu0 0.0
        %1277 = vmatmul.mubr.f32.gmra.mrb[0].mxu0 %v1132
        %v1278 = vpop.f32.mrb[0].mxu0
        %v1279 = vadd.f32 %v1076, %v1278
        %v1280 = vpop.f32.mrb[0].mxu0
        %v1281 = vadd.f32 %v1076, %v1280
        %1282 = vmatprep.mubr.f32.mxu0 0.0
        %1283 = vmatmul.mubr.f32.gmra.mrb[0].mxu0 %v1135
        %v1284 = vpop.f32.mrb[0].mxu0
        %v1285 = vadd.f32 %v1081, %v1284
        %v1286 = vpop.f32.mrb[0].mxu0
        %v1287 = vadd.f32 %v1081, %v1286
        %1288 = vmatprep.mubr.f32.mxu0 0.0
        %1289 = vmatmul.mubr.f32.gmra.mrb[0].mxu0 %v1138
        %v1290 = vpop.f32.mrb[0].mxu0
        %v1291 = vadd.f32 %v1086, %v1290
        %v1292 = vpop.f32.mrb[0].mxu0
        %v1293 = vadd.f32 %v1086, %v1292
        %1294 = vmatprep.mubr.f32.mxu0 0.0
        %1295 = vmatmul.mubr.f32.gmra.mrb[0].mxu0 %v1141
        %v1296 = vpop.f32.mrb[0].mxu0
        %v1297 = vadd.f32 %v1091, %v1296
        %v1298 = vpop.f32.mrb[0].mxu0
        %v1299 = vadd.f32 %v1091, %v1298
        %1300 = vmatprep.mubr.f32.mxu0 0.0
        %1301 = vmatmul.mubr.f32.gmra.mrb[0].mxu0 %v1144
        %v1302 = vpop.f32.mrb[0].mxu0
        %v1303 = vadd.f32 %v1096, %v1302
        %v1304 = vpop.f32.mrb[0].mxu0
        %v1305 = vadd.f32 %v1096, %v1304
        %1306 = vdwg.mxu0
        %1307 = vst [vmem:[#allocation2] sm:$0xff] %v1213
        %1308 = vst [vmem:[#allocation2 + $0x8] sm:$0xff] %v1215
        %1309 = vst [vmem:[#allocation2 + $0x10] sm:$0xff] %v1219
        %1310 = vst [vmem:[#allocation2 + $0x18] sm:$0xff] %v1221
        %1311 = vst [vmem:[#allocation2 + $0x20] sm:$0xff] %v1225
        %1312 = vst [vmem:[#allocation2 + $0x28] sm:$0xff] %v1227
        %1313 = vst [vmem:[#allocation2 + $0x30] sm:$0xff] %v1231
        %1314 = vst [vmem:[#allocation2 + $0x38] sm:$0xff] %v1233
        %1315 = vst [vmem:[#allocation2 + $0x40] sm:$0xff] %v1237
        %1316 = vst [vmem:[#allocation2 + $0x48] sm:$0xff] %v1239
        %1317 = vst [vmem:[#allocation2 + $0x50] sm:$0xff] %v1243
        %1318 = vst [vmem:[#allocation2 + $0x58] sm:$0xff] %v1245
        %1319 = vst [vmem:[#allocation2 + $0x60] sm:$0xff] %v1249
        %1320 = vst [vmem:[#allocation2 + $0x68] sm:$0xff] %v1251
        %1321 = vst [vmem:[#allocation2 + $0x70] sm:$0xff] %v1255
        %1322 = vst [vmem:[#allocation2 + $0x78] sm:$0xff] %v1257
        %vm1323 = vcmask 523264
        %v1325 = vsel %vm1323, %v985, 0
        %1327 = vmatprep.subr.mxu0 %v1263
        %1328 = vmatpush1.msra.mxu0 %v1261
        %1329 = vmatprep.subr.mxu0 %v1269
        %1330 = vmatpush1.msra.mxu0 %v1267
        %1331 = vmatprep.subr.mxu0 %v1275
        %1332 = vmatpush1.msra.mxu0 %v1273
        %1333 = vmatprep.subr.mxu0 %v1281
        %1334 = vmatpush1.msra.mxu0 %v1279
        %1335 = vmatprep.subr.mxu0 %v1287
        %1336 = vmatpush1.msra.mxu0 %v1285
        %1337 = vmatprep.subr.mxu0 %v1293
        %1338 = vmatpush1.msra.mxu0 %v1291
        %1339 = vmatprep.subr.mxu0 %v1299
        %1340 = vmatpush1.msra.mxu0 %v1297
        %1341 = vmatprep.subr.mxu0 %v1305
        %1342 = vmatpush1.msra.mxu0 %v1303
        %1343 = vmatprep.subr.mxu0 0.0
        %1344 = vmatpush1.msra.mxu0 0.0
        %1345 = vmatprep.subr.mxu0 0.0
        %1346 = vmatpush1.msra.mxu0 0.0
        %1347 = vmatprep.subr.mxu0 0.0
        %1348 = vmatpush1.msra.mxu0 0.0
        %1349 = vmatprep.subr.mxu0 0.0
        %1350 = vmatpush1.msra.mxu0 0.0
        %1351 = vmatprep.subr.mxu0 0.0
        %1352 = vmatpush1.msra.mxu0 0.0
        %1353 = vmatprep.subr.mxu0 0.0
        %1354 = vmatpush1.msra.mxu0 0.0
        %1355 = vmatprep.subr.mxu0 0.0
        %1356 = vmatpush1.msra.mxu0 0.0
        %1357 = vmatprep.subr.mxu0 0.0
        %1358 = vmatpush1.msra.mxu0 0.0
        %1359 = vmatprep.subr.mxu0 0.0
        %1360 = vmatpush1.msra.mxu0 0.0
        %1361 = vmatprep.subr.mxu0 0.0
        %1362 = vmatpush1.msra.mxu0 0.0
        %1363 = vmatprep.subr.mxu0 0.0
        %1364 = vmatpush1.msra.mxu0 0.0
        %1365 = vmatprep.subr.mxu0 0.0
        %1366 = vmatpush1.msra.mxu0 0.0
        %1367 = vmatprep.subr.mxu0 0.0
        %1368 = vmatpush1.msra.mxu0 0.0
        %1369 = vmatprep.subr.mxu0 0.0
        %1370 = vmatpush1.msra.mxu0 0.0
        %1371 = vmatprep.subr.mxu0 0.0
        %1372 = vmatpush1.msra.mxu0 0.0
        %1373 = vmatprep.subr.mxu0 0.0
        %1374 = vmatpush1.msra.mxu0 0.0
        %1375 = vmatprep.subr.mxu0 0.0
        %1376 = vmatpush1.msra.mxu0 0.0
        %1377 = vmatprep.subr.mxu0 0.0
        %1378 = vmatpush1.msra.mxu0 0.0
        %1379 = vmatprep.subr.mxu0 0.0
        %1380 = vmatpush1.msra.mxu0 0.0
        %1381 = vmatprep.subr.mxu0 0.0
        %1382 = vmatpush1.msra.mxu0 0.0
        %1383 = vmatprep.subr.mxu0 0.0
        %1384 = vmatpush1.msra.mxu0 0.0
        %1385 = vmatprep.subr.mxu0 0.0
        %1386 = vmatpush1.msra.mxu0 0.0
        %1387 = vmatprep.subr.mxu0 0.0
        %1388 = vmatpush1.msra.mxu0 0.0
        %1389 = vmatprep.subr.mxu0 0.0
        %1390 = vmatpush1.msra.mxu0 0.0
        %1391 = vmatprep.mubr.f32.mxu0 0.0
        %1392 = vmatmul.mubr.f32.gmra.mrb[0].mxu0 %v1325
        %v1393 = vpop.f32.mrb[0].mxu0
        %v1394 = vadd.f32 0.0, %v1393
        %v1395 = vpop.f32.mrb[0].mxu0
        %v1396 = vadd.f32 0.0, %v1395
        %1397 = vdwg.mxu0
        %1398 = vst [vmem:[#allocation3] sm:$0xff] %v1394
        %1399 = vst [vmem:[#allocation3 + $0x8] sm:$0xff] %v1396
        %v1400 = vld [vmem:[%s388] sm:$0xff]
        %v1401 = vld [vmem:[%s388 + $0x8] sm:$0xff]
        %v1402 = vld [vmem:[%s388 + $0x10] sm:$0xff]
        %v1403 = vld [vmem:[%s388 + $0x18] sm:$0xff]
        %v1404 = vld [vmem:[%s388 + $0x20] sm:$0xff]
        %v1405 = vld [vmem:[%s388 + $0x28] sm:$0xff]
        %v1406 = vld [vmem:[%s388 + $0x30] sm:$0xff]
        %v1407 = vld [vmem:[%s388 + $0x38] sm:$0xff]
        %v1408 = vsub.f32 %v1400, %v858
        %v1409 = vsub.f32 %v1401, %v860
        %v1410 = vsub.f32 %v1402, %v864
        %v1411 = vsub.f32 %v1403, %v866
        %v1412 = vsub.f32 %v1404, %v870
        %v1413 = vsub.f32 %v1405, %v872
        %v1414 = vsub.f32 %v1406, %v876
        %v1415 = vsub.f32 %v1407, %v878
        %v1416 = vmul.f32 %v1408, %v947
        %v1417 = vmul.f32 %v1409, %v949
        %v1418 = vmul.f32 %v1410, %v953
        %v1419 = vmul.f32 %v1411, %v955
        %v1420 = vmul.f32 %v1412, %v959
        %v1421 = vmul.f32 %v1413, %v961
        %v1422 = vmul.f32 %v1414, %v965
        %v1423 = vmul.f32 %v1415, %v967
        %s1424 = scalar_lea.vmem %s299, 128
        %v1425 = vld [vmem:[%s1424] sm:$0xff]
        %v1426 = vld [vmem:[%s1424 + $0x8] sm:$0xff]
        %v1427 = vld [vmem:[%s1424 + $0x10] sm:$0xff]
        %v1428 = vld [vmem:[%s1424 + $0x18] sm:$0xff]
        %v1429 = vld [vmem:[%s1424 + $0x20] sm:$0xff]
        %v1430 = vld [vmem:[%s1424 + $0x28] sm:$0xff]
        %v1431 = vld [vmem:[%s1424 + $0x30] sm:$0xff]
        %v1432 = vld [vmem:[%s1424 + $0x38] sm:$0xff]
        %v1433 = vld [vmem:[%s1424 + $0x40] sm:$0xff]
        %v1434 = vld [vmem:[%s1424 + $0x48] sm:$0xff]
        %v1435 = vld [vmem:[%s1424 + $0x50] sm:$0xff]
        %v1436 = vld [vmem:[%s1424 + $0x58] sm:$0xff]
        %v1437 = vld [vmem:[%s1424 + $0x60] sm:$0xff]
        %v1438 = vld [vmem:[%s1424 + $0x68] sm:$0xff]
        %v1439 = vld [vmem:[%s1424 + $0x70] sm:$0xff]
        %v1440 = vld [vmem:[%s1424 + $0x78] sm:$0xff]
        %1442 = vset.pattern.permute.xlu0 0
        %1443 = vperm.xlu0 %1442, %v1425
        %v1444 = vpop.permute.xlu0 %1443
        %1447 = vset.pattern.permute.xlu0 0
        %1448 = vperm.xlu0 %1447, %v1426
        %v1449 = vpop.permute.xlu0 %1448
        %1452 = vset.pattern.permute.xlu0 0
        %1453 = vperm.xlu0 %1452, %v1427
        %v1454 = vpop.permute.xlu0 %1453
        %1457 = vset.pattern.permute.xlu0 0
        %1458 = vperm.xlu0 %1457, %v1428
        %v1459 = vpop.permute.xlu0 %1458
        %1462 = vset.pattern.permute.xlu0 0
        %1463 = vperm.xlu0 %1462, %v1429
        %v1464 = vpop.permute.xlu0 %1463
        %1467 = vset.pattern.permute.xlu0 0
        %1468 = vperm.xlu0 %1467, %v1430
        %v1469 = vpop.permute.xlu0 %1468
        %1472 = vset.pattern.permute.xlu0 0
        %1473 = vperm.xlu0 %1472, %v1431
        %v1474 = vpop.permute.xlu0 %1473
        %1477 = vset.pattern.permute.xlu0 0
        %1478 = vperm.xlu0 %1477, %v1432
        %v1479 = vpop.permute.xlu0 %1478
        %1482 = vset.pattern.permute.xlu0 0
        %1483 = vperm.xlu0 %1482, %v1433
        %v1484 = vpop.permute.xlu0 %1483
        %1487 = vset.pattern.permute.xlu0 0
        %1488 = vperm.xlu0 %1487, %v1434
        %v1489 = vpop.permute.xlu0 %1488
        %1492 = vset.pattern.permute.xlu0 0
        %1493 = vperm.xlu0 %1492, %v1435
        %v1494 = vpop.permute.xlu0 %1493
        %1497 = vset.pattern.permute.xlu0 0
        %1498 = vperm.xlu0 %1497, %v1436
        %v1499 = vpop.permute.xlu0 %1498
        %1502 = vset.pattern.permute.xlu0 0
        %1503 = vperm.xlu0 %1502, %v1437
        %v1504 = vpop.permute.xlu0 %1503
        %1507 = vset.pattern.permute.xlu0 0
        %1508 = vperm.xlu0 %1507, %v1438
        %v1509 = vpop.permute.xlu0 %1508
        %1512 = vset.pattern.permute.xlu0 0
        %1513 = vperm.xlu0 %1512, %v1439
        %v1514 = vpop.permute.xlu0 %1513
        %1517 = vset.pattern.permute.xlu0 0
        %1518 = vperm.xlu0 %1517, %v1440
        %v1519 = vpop.permute.xlu0 %1518
        %1521 = vmatprep.subr.mxu0 %v1417
        %1522 = vmatpush1.msra.mxu0 %v1416
        %1523 = vmatprep.subr.mxu0 %v1419
        %1524 = vmatpush1.msra.mxu0 %v1418
        %1525 = vmatprep.subr.mxu0 %v1421
        %1526 = vmatpush1.msra.mxu0 %v1420
        %1527 = vmatprep.subr.mxu0 %v1423
        %1528 = vmatpush1.msra.mxu0 %v1422
        %1529 = vmatprep.subr.mxu0 0.0
        %1530 = vmatpush1.msra.mxu0 0.0
        %1531 = vmatprep.subr.mxu0 0.0
        %1532 = vmatpush1.msra.mxu0 0.0
        %1533 = vmatprep.subr.mxu0 0.0
        %1534 = vmatpush1.msra.mxu0 0.0
        %1535 = vmatprep.subr.mxu0 0.0
        %1536 = vmatpush1.msra.mxu0 0.0
        %1537 = vmatprep.subr.mxu0 0.0
        %1538 = vmatpush1.msra.mxu0 0.0
        %1539 = vmatprep.subr.mxu0 0.0
        %1540 = vmatpush1.msra.mxu0 0.0
        %1541 = vmatprep.subr.mxu0 0.0
        %1542 = vmatpush1.msra.mxu0 0.0
        %1543 = vmatprep.subr.mxu0 0.0
        %1544 = vmatpush1.msra.mxu0 0.0
        %1545 = vmatprep.subr.mxu0 0.0
        %1546 = vmatpush1.msra.mxu0 0.0
        %1547 = vmatprep.subr.mxu0 0.0
        %1548 = vmatpush1.msra.mxu0 0.0
        %1549 = vmatprep.subr.mxu0 0.0
        %1550 = vmatpush1.msra.mxu0 0.0
        %1551 = vmatprep.subr.mxu0 0.0
        %1552 = vmatpush1.msra.mxu0 0.0
        %1553 = vmatprep.subr.mxu0 0.0
        %1554 = vmatpush1.msra.mxu0 0.0
        %1555 = vmatprep.subr.mxu0 0.0
        %1556 = vmatpush1.msra.mxu0 0.0
        %1557 = vmatprep.subr.mxu0 0.0
        %1558 = vmatpush1.msra.mxu0 0.0
        %1559 = vmatprep.subr.mxu0 0.0
        %1560 = vmatpush1.msra.mxu0 0.0
        %1561 = vmatprep.subr.mxu0 0.0
        %1562 = vmatpush1.msra.mxu0 0.0
        %1563 = vmatprep.subr.mxu0 0.0
        %1564 = vmatpush1.msra.mxu0 0.0
        %1565 = vmatprep.subr.mxu0 0.0
        %1566 = vmatpush1.msra.mxu0 0.0
        %1567 = vmatprep.subr.mxu0 0.0
        %1568 = vmatpush1.msra.mxu0 0.0
        %1569 = vmatprep.subr.mxu0 0.0
        %1570 = vmatpush1.msra.mxu0 0.0
        %1571 = vmatprep.subr.mxu0 0.0
        %1572 = vmatpush1.msra.mxu0 0.0
        %1573 = vmatprep.subr.mxu0 0.0
        %1574 = vmatpush1.msra.mxu0 0.0
        %1575 = vmatprep.subr.mxu0 0.0
        %1576 = vmatpush1.msra.mxu0 0.0
        %1577 = vmatprep.subr.mxu0 0.0
        %1578 = vmatpush1.msra.mxu0 0.0
        %1579 = vmatprep.subr.mxu0 0.0
        %1580 = vmatpush1.msra.mxu0 0.0
        %1581 = vmatprep.subr.mxu0 0.0
        %1582 = vmatpush1.msra.mxu0 0.0
        %1583 = vmatprep.subr.mxu0 0.0
        %1584 = vmatpush1.msra.mxu0 0.0
        %1585 = vmatprep.mubr.f32.mxu0 0.0
        %1586 = vmatmul.mubr.f32.gmra.mrb[0].mxu0 %v1099
        %v1587 = vpop.f32.mrb[0].mxu0
        %v1588 = vadd.f32 %v1444, %v1587
        %v1589 = vpop.f32.mrb[0].mxu0
        %v1590 = vadd.f32 %v1444, %v1589
        %1591 = vmatprep.mubr.f32.mxu0 0.0
        %1592 = vmatmul.mubr.f32.gmra.mrb[0].mxu0 %v1102
        %v1593 = vpop.f32.mrb[0].mxu0
        %v1594 = vadd.f32 %v1449, %v1593
        %v1595 = vpop.f32.mrb[0].mxu0
        %v1596 = vadd.f32 %v1449, %v1595
        %1597 = vmatprep.mubr.f32.mxu0 0.0
        %1598 = vmatmul.mubr.f32.gmra.mrb[0].mxu0 %v1105
        %v1599 = vpop.f32.mrb[0].mxu0
        %v1600 = vadd.f32 %v1454, %v1599
        %v1601 = vpop.f32.mrb[0].mxu0
        %v1602 = vadd.f32 %v1454, %v1601
        %1603 = vmatprep.mubr.f32.mxu0 0.0
        %1604 = vmatmul.mubr.f32.gmra.mrb[0].mxu0 %v1108
        %v1605 = vpop.f32.mrb[0].mxu0
        %v1606 = vadd.f32 %v1459, %v1605
        %v1607 = vpop.f32.mrb[0].mxu0
        %v1608 = vadd.f32 %v1459, %v1607
        %1609 = vmatprep.mubr.f32.mxu0 0.0
        %1610 = vmatmul.mubr.f32.gmra.mrb[0].mxu0 %v1111
        %v1611 = vpop.f32.mrb[0].mxu0
        %v1612 = vadd.f32 %v1464, %v1611
        %v1613 = vpop.f32.mrb[0].mxu0
        %v1614 = vadd.f32 %v1464, %v1613
        %1615 = vmatprep.mubr.f32.mxu0 0.0
        %1616 = vmatmul.mubr.f32.gmra.mrb[0].mxu0 %v1114
        %v1617 = vpop.f32.mrb[0].mxu0
        %v1618 = vadd.f32 %v1469, %v1617
        %v1619 = vpop.f32.mrb[0].mxu0
        %v1620 = vadd.f32 %v1469, %v1619
        %1621 = vmatprep.mubr.f32.mxu0 0.0
        %1622 = vmatmul.mubr.f32.gmra.mrb[0].mxu0 %v1117
        %v1623 = vpop.f32.mrb[0].mxu0
        %v1624 = vadd.f32 %v1474, %v1623
        %v1625 = vpop.f32.mrb[0].mxu0
        %v1626 = vadd.f32 %v1474, %v1625
        %1627 = vmatprep.mubr.f32.mxu0 0.0
        %1628 = vmatmul.mubr.f32.gmra.mrb[0].mxu0 %v1120
        %v1629 = vpop.f32.mrb[0].mxu0
        %v1630 = vadd.f32 %v1479, %v1629
        %v1631 = vpop.f32.mrb[0].mxu0
        %v1632 = vadd.f32 %v1479, %v1631
        %1633 = vmatprep.mubr.f32.mxu0 0.0
        %1634 = vmatmul.mubr.f32.gmra.mrb[0].mxu0 %v1123
        %v1635 = vpop.f32.mrb[0].mxu0
        %v1636 = vadd.f32 %v1484, %v1635
        %v1637 = vpop.f32.mrb[0].mxu0
        %v1638 = vadd.f32 %v1484, %v1637
        %1639 = vmatprep.mubr.f32.mxu0 0.0
        %1640 = vmatmul.mubr.f32.gmra.mrb[0].mxu0 %v1126
        %v1641 = vpop.f32.mrb[0].mxu0
        %v1642 = vadd.f32 %v1489, %v1641
        %v1643 = vpop.f32.mrb[0].mxu0
        %v1644 = vadd.f32 %v1489, %v1643
        %1645 = vmatprep.mubr.f32.mxu0 0.0
        %1646 = vmatmul.mubr.f32.gmra.mrb[0].mxu0 %v1129
        %v1647 = vpop.f32.mrb[0].mxu0
        %v1648 = vadd.f32 %v1494, %v1647
        %v1649 = vpop.f32.mrb[0].mxu0
        %v1650 = vadd.f32 %v1494, %v1649
        %1651 = vmatprep.mubr.f32.mxu0 0.0
        %1652 = vmatmul.mubr.f32.gmra.mrb[0].mxu0 %v1132
        %v1653 = vpop.f32.mrb[0].mxu0
        %v1654 = vadd.f32 %v1499, %v1653
        %v1655 = vpop.f32.mrb[0].mxu0
        %v1656 = vadd.f32 %v1499, %v1655
        %1657 = vmatprep.mubr.f32.mxu0 0.0
        %1658 = vmatmul.mubr.f32.gmra.mrb[0].mxu0 %v1135
        %v1659 = vpop.f32.mrb[0].mxu0
        %v1660 = vadd.f32 %v1504, %v1659
        %v1661 = vpop.f32.mrb[0].mxu0
        %v1662 = vadd.f32 %v1504, %v1661
        %1663 = vmatprep.mubr.f32.mxu0 0.0
        %1664 = vmatmul.mubr.f32.gmra.mrb[0].mxu0 %v1138
        %v1665 = vpop.f32.mrb[0].mxu0
        %v1666 = vadd.f32 %v1509, %v1665
        %v1667 = vpop.f32.mrb[0].mxu0
        %v1668 = vadd.f32 %v1509, %v1667
        %1669 = vmatprep.mubr.f32.mxu0 0.0
        %1670 = vmatmul.mubr.f32.gmra.mrb[0].mxu0 %v1141
        %v1671 = vpop.f32.mrb[0].mxu0
        %v1672 = vadd.f32 %v1514, %v1671
        %v1673 = vpop.f32.mrb[0].mxu0
        %v1674 = vadd.f32 %v1514, %v1673
        %1675 = vmatprep.mubr.f32.mxu0 0.0
        %1676 = vmatmul.mubr.f32.gmra.mrb[0].mxu0 %v1144
        %v1677 = vpop.f32.mrb[0].mxu0
        %v1678 = vadd.f32 %v1519, %v1677
        %v1679 = vpop.f32.mrb[0].mxu0
        %v1680 = vadd.f32 %v1519, %v1679
        %1681 = vdwg.mxu0
        %s1682 = scalar_lea.vmem [#allocation2], 128
        %1683 = vst [vmem:[%s1682] sm:$0xff] %v1588
        %1684 = vst [vmem:[%s1682 + $0x8] sm:$0xff] %v1590
        %1685 = vst [vmem:[%s1682 + $0x10] sm:$0xff] %v1594
        %1686 = vst [vmem:[%s1682 + $0x18] sm:$0xff] %v1596
        %1687 = vst [vmem:[%s1682 + $0x20] sm:$0xff] %v1600
        %1688 = vst [vmem:[%s1682 + $0x28] sm:$0xff] %v1602
        %1689 = vst [vmem:[%s1682 + $0x30] sm:$0xff] %v1606
        %1690 = vst [vmem:[%s1682 + $0x38] sm:$0xff] %v1608
        %1691 = vst [vmem:[%s1682 + $0x40] sm:$0xff] %v1612
        %1692 = vst [vmem:[%s1682 + $0x48] sm:$0xff] %v1614
        %1693 = vst [vmem:[%s1682 + $0x50] sm:$0xff] %v1618
        %1694 = vst [vmem:[%s1682 + $0x58] sm:$0xff] %v1620
        %1695 = vst [vmem:[%s1682 + $0x60] sm:$0xff] %v1624
        %1696 = vst [vmem:[%s1682 + $0x68] sm:$0xff] %v1626
        %1697 = vst [vmem:[%s1682 + $0x70] sm:$0xff] %v1630
        %1698 = vst [vmem:[%s1682 + $0x78] sm:$0xff] %v1632
        %1699 = vmatprep.subr.mxu0 %v1638
        %1700 = vmatpush1.msra.mxu0 %v1636
        %1701 = vmatprep.subr.mxu0 %v1644
        %1702 = vmatpush1.msra.mxu0 %v1642
        %1703 = vmatprep.subr.mxu0 %v1650
        %1704 = vmatpush1.msra.mxu0 %v1648
        %1705 = vmatprep.subr.mxu0 %v1656
        %1706 = vmatpush1.msra.mxu0 %v1654
        %1707 = vmatprep.subr.mxu0 %v1662
        %1708 = vmatpush1.msra.mxu0 %v1660
        %1709 = vmatprep.subr.mxu0 %v1668
        %1710 = vmatpush1.msra.mxu0 %v1666
        %1711 = vmatprep.subr.mxu0 %v1674
        %1712 = vmatpush1.msra.mxu0 %v1672
        %1713 = vmatprep.subr.mxu0 %v1680
        %1714 = vmatpush1.msra.mxu0 %v1678
        %1715 = vmatprep.subr.mxu0 0.0
        %1716 = vmatpush1.msra.mxu0 0.0
        %1717 = vmatprep.subr.mxu0 0.0
        %1718 = vmatpush1.msra.mxu0 0.0
        %1719 = vmatprep.subr.mxu0 0.0
        %1720 = vmatpush1.msra.mxu0 0.0
        %1721 = vmatprep.subr.mxu0 0.0
        %1722 = vmatpush1.msra.mxu0 0.0
        %1723 = vmatprep.subr.mxu0 0.0
        %1724 = vmatpush1.msra.mxu0 0.0
        %1725 = vmatprep.subr.mxu0 0.0
        %1726 = vmatpush1.msra.mxu0 0.0
        %1727 = vmatprep.subr.mxu0 0.0
        %1728 = vmatpush1.msra.mxu0 0.0
        %1729 = vmatprep.subr.mxu0 0.0
        %1730 = vmatpush1.msra.mxu0 0.0
        %1731 = vmatprep.subr.mxu0 0.0
        %1732 = vmatpush1.msra.mxu0 0.0
        %1733 = vmatprep.subr.mxu0 0.0
        %1734 = vmatpush1.msra.mxu0 0.0
        %1735 = vmatprep.subr.mxu0 0.0
        %1736 = vmatpush1.msra.mxu0 0.0
        %1737 = vmatprep.subr.mxu0 0.0
        %1738 = vmatpush1.msra.mxu0 0.0
        %1739 = vmatprep.subr.mxu0 0.0
        %1740 = vmatpush1.msra.mxu0 0.0
        %1741 = vmatprep.subr.mxu0 0.0
        %1742 = vmatpush1.msra.mxu0 0.0
        %1743 = vmatprep.subr.mxu0 0.0
        %1744 = vmatpush1.msra.mxu0 0.0
        %1745 = vmatprep.subr.mxu0 0.0
        %1746 = vmatpush1.msra.mxu0 0.0
        %1747 = vmatprep.subr.mxu0 0.0
        %1748 = vmatpush1.msra.mxu0 0.0
        %1749 = vmatprep.subr.mxu0 0.0
        %1750 = vmatpush1.msra.mxu0 0.0
        %1751 = vmatprep.subr.mxu0 0.0
        %1752 = vmatpush1.msra.mxu0 0.0
        %1753 = vmatprep.subr.mxu0 0.0
        %1754 = vmatpush1.msra.mxu0 0.0
        %1755 = vmatprep.subr.mxu0 0.0
        %1756 = vmatpush1.msra.mxu0 0.0
        %1757 = vmatprep.subr.mxu0 0.0
        %1758 = vmatpush1.msra.mxu0 0.0
        %1759 = vmatprep.subr.mxu0 0.0
        %1760 = vmatpush1.msra.mxu0 0.0
        %1761 = vmatprep.subr.mxu0 0.0
        %1762 = vmatpush1.msra.mxu0 0.0
        %1763 = vmatprep.mubr.f32.mxu0 0.0
        %1764 = vmatmul.mubr.f32.gmra.mrb[0].mxu0 %v1325
        %v1765 = vpop.f32.mrb[0].mxu0
        %v1766 = vadd.f32 0.0, %v1765
        %v1767 = vpop.f32.mrb[0].mxu0
        %v1768 = vadd.f32 0.0, %v1767
        %1769 = vdwg.mxu0
        %s1770 = scalar_lea.vmem [#allocation3], 16
        %1771 = vst [vmem:[%s1770] sm:$0xff] %v1766
        %1772 = vst [vmem:[%s1770 + $0x8] sm:$0xff] %v1768
        %v1773 = vld [vmem:[%s421] sm:$0xff]
        %v1774 = vld [vmem:[%s421 + $0x8] sm:$0xff]
        %v1775 = vld [vmem:[%s421 + $0x10] sm:$0xff]
        %v1776 = vld [vmem:[%s421 + $0x18] sm:$0xff]
        %v1777 = vld [vmem:[%s421 + $0x20] sm:$0xff]
        %v1778 = vld [vmem:[%s421 + $0x28] sm:$0xff]
        %v1779 = vld [vmem:[%s421 + $0x30] sm:$0xff]
        %v1780 = vld [vmem:[%s421 + $0x38] sm:$0xff]
        %v1781 = vsub.f32 %v1773, %v858
        %v1782 = vsub.f32 %v1774, %v860
        %v1783 = vsub.f32 %v1775, %v864
        %v1784 = vsub.f32 %v1776, %v866
        %v1785 = vsub.f32 %v1777, %v870
        %v1786 = vsub.f32 %v1778, %v872
        %v1787 = vsub.f32 %v1779, %v876
        %v1788 = vsub.f32 %v1780, %v878
        %v1789 = vmul.f32 %v1781, %v947
        %v1790 = vmul.f32 %v1782, %v949
        %v1791 = vmul.f32 %v1783, %v953
        %v1792 = vmul.f32 %v1784, %v955
        %v1793 = vmul.f32 %v1785, %v959
        %v1794 = vmul.f32 %v1786, %v961
        %v1795 = vmul.f32 %v1787, %v965
        %v1796 = vmul.f32 %v1788, %v967
        %s1797 = scalar_lea.vmem %s299, 256
        %v1798 = vld [vmem:[%s1797] sm:$0xff]
        %v1799 = vld [vmem:[%s1797 + $0x8] sm:$0xff]
        %v1800 = vld [vmem:[%s1797 + $0x10] sm:$0xff]
        %v1801 = vld [vmem:[%s1797 + $0x18] sm:$0xff]
        %v1802 = vld [vmem:[%s1797 + $0x20] sm:$0xff]
        %v1803 = vld [vmem:[%s1797 + $0x28] sm:$0xff]
        %v1804 = vld [vmem:[%s1797 + $0x30] sm:$0xff]
        %v1805 = vld [vmem:[%s1797 + $0x38] sm:$0xff]
        %v1806 = vld [vmem:[%s1797 + $0x40] sm:$0xff]
        %v1807 = vld [vmem:[%s1797 + $0x48] sm:$0xff]
        %v1808 = vld [vmem:[%s1797 + $0x50] sm:$0xff]
        %v1809 = vld [vmem:[%s1797 + $0x58] sm:$0xff]
        %v1810 = vld [vmem:[%s1797 + $0x60] sm:$0xff]
        %v1811 = vld [vmem:[%s1797 + $0x68] sm:$0xff]
        %v1812 = vld [vmem:[%s1797 + $0x70] sm:$0xff]
        %v1813 = vld [vmem:[%s1797 + $0x78] sm:$0xff]
        %1815 = vset.pattern.permute.xlu0 0
        %1816 = vperm.xlu0 %1815, %v1798
        %v1817 = vpop.permute.xlu0 %1816
        %1820 = vset.pattern.permute.xlu0 0
        %1821 = vperm.xlu0 %1820, %v1799
        %v1822 = vpop.permute.xlu0 %1821
        %1825 = vset.pattern.permute.xlu0 0
        %1826 = vperm.xlu0 %1825, %v1800
        %v1827 = vpop.permute.xlu0 %1826
        %1830 = vset.pattern.permute.xlu0 0
        %1831 = vperm.xlu0 %1830, %v1801
        %v1832 = vpop.permute.xlu0 %1831
        %1835 = vset.pattern.permute.xlu0 0
        %1836 = vperm.xlu0 %1835, %v1802
        %v1837 = vpop.permute.xlu0 %1836
        %1840 = vset.pattern.permute.xlu0 0
        %1841 = vperm.xlu0 %1840, %v1803
        %v1842 = vpop.permute.xlu0 %1841
        %1845 = vset.pattern.permute.xlu0 0
        %1846 = vperm.xlu0 %1845, %v1804
        %v1847 = vpop.permute.xlu0 %1846
        %1850 = vset.pattern.permute.xlu0 0
        %1851 = vperm.xlu0 %1850, %v1805
        %v1852 = vpop.permute.xlu0 %1851
        %1855 = vset.pattern.permute.xlu0 0
        %1856 = vperm.xlu0 %1855, %v1806
        %v1857 = vpop.permute.xlu0 %1856
        %1860 = vset.pattern.permute.xlu0 0
        %1861 = vperm.xlu0 %1860, %v1807
        %v1862 = vpop.permute.xlu0 %1861
        %1865 = vset.pattern.permute.xlu0 0
        %1866 = vperm.xlu0 %1865, %v1808
        %v1867 = vpop.permute.xlu0 %1866
        %1870 = vset.pattern.permute.xlu0 0
        %1871 = vperm.xlu0 %1870, %v1809
        %v1872 = vpop.permute.xlu0 %1871
        %1875 = vset.pattern.permute.xlu0 0
        %1876 = vperm.xlu0 %1875, %v1810
        %v1877 = vpop.permute.xlu0 %1876
        %1880 = vset.pattern.permute.xlu0 0
        %1881 = vperm.xlu0 %1880, %v1811
        %v1882 = vpop.permute.xlu0 %1881
        %1885 = vset.pattern.permute.xlu0 0
        %1886 = vperm.xlu0 %1885, %v1812
        %v1887 = vpop.permute.xlu0 %1886
        %1890 = vset.pattern.permute.xlu0 0
        %1891 = vperm.xlu0 %1890, %v1813
        %v1892 = vpop.permute.xlu0 %1891
        %1894 = vmatprep.subr.mxu0 %v1790
        %1895 = vmatpush1.msra.mxu0 %v1789
        %1896 = vmatprep.subr.mxu0 %v1792
        %1897 = vmatpush1.msra.mxu0 %v1791
        %1898 = vmatprep.subr.mxu0 %v1794
        %1899 = vmatpush1.msra.mxu0 %v1793
        %1900 = vmatprep.subr.mxu0 %v1796
        %1901 = vmatpush1.msra.mxu0 %v1795
        %1902 = vmatprep.subr.mxu0 0.0
        %1903 = vmatpush1.msra.mxu0 0.0
        %1904 = vmatprep.subr.mxu0 0.0
        %1905 = vmatpush1.msra.mxu0 0.0
        %1906 = vmatprep.subr.mxu0 0.0
        %1907 = vmatpush1.msra.mxu0 0.0
        %1908 = vmatprep.subr.mxu0 0.0
        %1909 = vmatpush1.msra.mxu0 0.0
        %1910 = vmatprep.subr.mxu0 0.0
        %1911 = vmatpush1.msra.mxu0 0.0
        %1912 = vmatprep.subr.mxu0 0.0
        %1913 = vmatpush1.msra.mxu0 0.0
        %1914 = vmatprep.subr.mxu0 0.0
        %1915 = vmatpush1.msra.mxu0 0.0
        %1916 = vmatprep.subr.mxu0 0.0
        %1917 = vmatpush1.msra.mxu0 0.0
        %1918 = vmatprep.subr.mxu0 0.0
        %1919 = vmatpush1.msra.mxu0 0.0
        %1920 = vmatprep.subr.mxu0 0.0
        %1921 = vmatpush1.msra.mxu0 0.0
        %1922 = vmatprep.subr.mxu0 0.0
        %1923 = vmatpush1.msra.mxu0 0.0
        %1924 = vmatprep.subr.mxu0 0.0
        %1925 = vmatpush1.msra.mxu0 0.0
        %1926 = vmatprep.subr.mxu0 0.0
        %1927 = vmatpush1.msra.mxu0 0.0
        %1928 = vmatprep.subr.mxu0 0.0
        %1929 = vmatpush1.msra.mxu0 0.0
        %1930 = vmatprep.subr.mxu0 0.0
        %1931 = vmatpush1.msra.mxu0 0.0
        %1932 = vmatprep.subr.mxu0 0.0
        %1933 = vmatpush1.msra.mxu0 0.0
        %1934 = vmatprep.subr.mxu0 0.0
        %1935 = vmatpush1.msra.mxu0 0.0
        %1936 = vmatprep.subr.mxu0 0.0
        %1937 = vmatpush1.msra.mxu0 0.0
        %1938 = vmatprep.subr.mxu0 0.0
        %1939 = vmatpush1.msra.mxu0 0.0
        %1940 = vmatprep.subr.mxu0 0.0
        %1941 = vmatpush1.msra.mxu0 0.0
        %1942 = vmatprep.subr.mxu0 0.0
        %1943 = vmatpush1.msra.mxu0 0.0
        %1944 = vmatprep.subr.mxu0 0.0
        %1945 = vmatpush1.msra.mxu0 0.0
        %1946 = vmatprep.subr.mxu0 0.0
        %1947 = vmatpush1.msra.mxu0 0.0
        %1948 = vmatprep.subr.mxu0 0.0
        %1949 = vmatpush1.msra.mxu0 0.0
        %1950 = vmatprep.subr.mxu0 0.0
        %1951 = vmatpush1.msra.mxu0 0.0
        %1952 = vmatprep.subr.mxu0 0.0
        %1953 = vmatpush1.msra.mxu0 0.0
        %1954 = vmatprep.subr.mxu0 0.0
        %1955 = vmatpush1.msra.mxu0 0.0
        %1956 = vmatprep.subr.mxu0 0.0
        %1957 = vmatpush1.msra.mxu0 0.0
        %1958 = vmatprep.mubr.f32.mxu0 0.0
        %1959 = vmatmul.mubr.f32.gmra.mrb[0].mxu0 %v1099
        %v1960 = vpop.f32.mrb[0].mxu0
        %v1961 = vadd.f32 %v1817, %v1960
        %v1962 = vpop.f32.mrb[0].mxu0
        %v1963 = vadd.f32 %v1817, %v1962
        %1964 = vmatprep.mubr.f32.mxu0 0.0
        %1965 = vmatmul.mubr.f32.gmra.mrb[0].mxu0 %v1102
        %v1966 = vpop.f32.mrb[0].mxu0
        %v1967 = vadd.f32 %v1822, %v1966
        %v1968 = vpop.f32.mrb[0].mxu0
        %v1969 = vadd.f32 %v1822, %v1968
        %1970 = vmatprep.mubr.f32.mxu0 0.0
        %1971 = vmatmul.mubr.f32.gmra.mrb[0].mxu0 %v1105
        %v1972 = vpop.f32.mrb[0].mxu0
        %v1973 = vadd.f32 %v1827, %v1972
        %v1974 = vpop.f32.mrb[0].mxu0
        %v1975 = vadd.f32 %v1827, %v1974
        %1976 = vmatprep.mubr.f32.mxu0 0.0
        %1977 = vmatmul.mubr.f32.gmra.mrb[0].mxu0 %v1108
        %v1978 = vpop.f32.mrb[0].mxu0
        %v1979 = vadd.f32 %v1832, %v1978
        %v1980 = vpop.f32.mrb[0].mxu0
        %v1981 = vadd.f32 %v1832, %v1980
        %1982 = vmatprep.mubr.f32.mxu0 0.0
        %1983 = vmatmul.mubr.f32.gmra.mrb[0].mxu0 %v1111
        %v1984 = vpop.f32.mrb[0].mxu0
        %v1985 = vadd.f32 %v1837, %v1984
        %v1986 = vpop.f32.mrb[0].mxu0
        %v1987 = vadd.f32 %v1837, %v1986
        %1988 = vmatprep.mubr.f32.mxu0 0.0
        %1989 = vmatmul.mubr.f32.gmra.mrb[0].mxu0 %v1114
        %v1990 = vpop.f32.mrb[0].mxu0
        %v1991 = vadd.f32 %v1842, %v1990
        %v1992 = vpop.f32.mrb[0].mxu0
        %v1993 = vadd.f32 %v1842, %v1992
        %1994 = vmatprep.mubr.f32.mxu0 0.0
        %1995 = vmatmul.mubr.f32.gmra.mrb[0].mxu0 %v1117
        %v1996 = vpop.f32.mrb[0].mxu0
        %v1997 = vadd.f32 %v1847, %v1996
        %v1998 = vpop.f32.mrb[0].mxu0
        %v1999 = vadd.f32 %v1847, %v1998
        %2000 = vmatprep.mubr.f32.mxu0 0.0
        %2001 = vmatmul.mubr.f32.gmra.mrb[0].mxu0 %v1120
        %v2002 = vpop.f32.mrb[0].mxu0
        %v2003 = vadd.f32 %v1852, %v2002
        %v2004 = vpop.f32.mrb[0].mxu0
        %v2005 = vadd.f32 %v1852, %v2004
        %2006 = vmatprep.mubr.f32.mxu0 0.0
        %2007 = vmatmul.mubr.f32.gmra.mrb[0].mxu0 %v1123
        %v2008 = vpop.f32.mrb[0].mxu0
        %v2009 = vadd.f32 %v1857, %v2008
        %v2010 = vpop.f32.mrb[0].mxu0
        %v2011 = vadd.f32 %v1857, %v2010
        %2012 = vmatprep.mubr.f32.mxu0 0.0
        %2013 = vmatmul.mubr.f32.gmra.mrb[0].mxu0 %v1126
        %v2014 = vpop.f32.mrb[0].mxu0
        %v2015 = vadd.f32 %v1862, %v2014
        %v2016 = vpop.f32.mrb[0].mxu0
        %v2017 = vadd.f32 %v1862, %v2016
        %2018 = vmatprep.mubr.f32.mxu0 0.0
        %2019 = vmatmul.mubr.f32.gmra.mrb[0].mxu0 %v1129
        %v2020 = vpop.f32.mrb[0].mxu0
        %v2021 = vadd.f32 %v1867, %v2020
        %v2022 = vpop.f32.mrb[0].mxu0
        %v2023 = vadd.f32 %v1867, %v2022
        %2024 = vmatprep.mubr.f32.mxu0 0.0
        %2025 = vmatmul.mubr.f32.gmra.mrb[0].mxu0 %v1132
        %v2026 = vpop.f32.mrb[0].mxu0
        %v2027 = vadd.f32 %v1872, %v2026
        %v2028 = vpop.f32.mrb[0].mxu0
        %v2029 = vadd.f32 %v1872, %v2028
        %2030 = vmatprep.mubr.f32.mxu0 0.0
        %2031 = vmatmul.mubr.f32.gmra.mrb[0].mxu0 %v1135
        %v2032 = vpop.f32.mrb[0].mxu0
        %v2033 = vadd.f32 %v1877, %v2032
        %v2034 = vpop.f32.mrb[0].mxu0
        %v2035 = vadd.f32 %v1877, %v2034
        %2036 = vmatprep.mubr.f32.mxu0 0.0
        %2037 = vmatmul.mubr.f32.gmra.mrb[0].mxu0 %v1138
        %v2038 = vpop.f32.mrb[0].mxu0
        %v2039 = vadd.f32 %v1882, %v2038
        %v2040 = vpop.f32.mrb[0].mxu0
        %v2041 = vadd.f32 %v1882, %v2040
        %2042 = vmatprep.mubr.f32.mxu0 0.0
        %2043 = vmatmul.mubr.f32.gmra.mrb[0].mxu0 %v1141
        %v2044 = vpop.f32.mrb[0].mxu0
        %v2045 = vadd.f32 %v1887, %v2044
        %v2046 = vpop.f32.mrb[0].mxu0
        %v2047 = vadd.f32 %v1887, %v2046
        %2048 = vmatprep.mubr.f32.mxu0 0.0
        %2049 = vmatmul.mubr.f32.gmra.mrb[0].mxu0 %v1144
        %v2050 = vpop.f32.mrb[0].mxu0
        %v2051 = vadd.f32 %v1892, %v2050
        %v2052 = vpop.f32.mrb[0].mxu0
        %v2053 = vadd.f32 %v1892, %v2052
        %2054 = vdwg.mxu0
        %s2055 = scalar_lea.vmem [#allocation2], 256
        %2056 = vst [vmem:[%s2055] sm:$0xff] %v1961
        %2057 = vst [vmem:[%s2055 + $0x8] sm:$0xff] %v1963
        %2058 = vst [vmem:[%s2055 + $0x10] sm:$0xff] %v1967
        %2059 = vst [vmem:[%s2055 + $0x18] sm:$0xff] %v1969
        %2060 = vst [vmem:[%s2055 + $0x20] sm:$0xff] %v1973
        %2061 = vst [vmem:[%s2055 + $0x28] sm:$0xff] %v1975
        %2062 = vst [vmem:[%s2055 + $0x30] sm:$0xff] %v1979
        %2063 = vst [vmem:[%s2055 + $0x38] sm:$0xff] %v1981
        %2064 = vst [vmem:[%s2055 + $0x40] sm:$0xff] %v1985
        %2065 = vst [vmem:[%s2055 + $0x48] sm:$0xff] %v1987
        %2066 = vst [vmem:[%s2055 + $0x50] sm:$0xff] %v1991
        %2067 = vst [vmem:[%s2055 + $0x58] sm:$0xff] %v1993
        %2068 = vst [vmem:[%s2055 + $0x60] sm:$0xff] %v1997
        %2069 = vst [vmem:[%s2055 + $0x68] sm:$0xff] %v1999
        %2070 = vst [vmem:[%s2055 + $0x70] sm:$0xff] %v2003
        %2071 = vst [vmem:[%s2055 + $0x78] sm:$0xff] %v2005
        %2072 = vmatprep.subr.mxu0 %v2011
        %2073 = vmatpush1.msra.mxu0 %v2009
        %2074 = vmatprep.subr.mxu0 %v2017
        %2075 = vmatpush1.msra.mxu0 %v2015
        %2076 = vmatprep.subr.mxu0 %v2023
        %2077 = vmatpush1.msra.mxu0 %v2021
        %2078 = vmatprep.subr.mxu0 %v2029
        %2079 = vmatpush1.msra.mxu0 %v2027
        %2080 = vmatprep.subr.mxu0 %v2035
        %2081 = vmatpush1.msra.mxu0 %v2033
        %2082 = vmatprep.subr.mxu0 %v2041
        %2083 = vmatpush1.msra.mxu0 %v2039
        %2084 = vmatprep.subr.mxu0 %v2047
        %2085 = vmatpush1.msra.mxu0 %v2045
        %2086 = vmatprep.subr.mxu0 %v2053
        %2087 = vmatpush1.msra.mxu0 %v2051
        %2088 = vmatprep.subr.mxu0 0.0
        %2089 = vmatpush1.msra.mxu0 0.0
        %2090 = vmatprep.subr.mxu0 0.0
        %2091 = vmatpush1.msra.mxu0 0.0
        %2092 = vmatprep.subr.mxu0 0.0
        %2093 = vmatpush1.msra.mxu0 0.0
        %2094 = vmatprep.subr.mxu0 0.0
        %2095 = vmatpush1.msra.mxu0 0.0
        %2096 = vmatprep.subr.mxu0 0.0
        %2097 = vmatpush1.msra.mxu0 0.0
        %2098 = vmatprep.subr.mxu0 0.0
        %2099 = vmatpush1.msra.mxu0 0.0
        %2100 = vmatprep.subr.mxu0 0.0
        %2101 = vmatpush1.msra.mxu0 0.0
        %2102 = vmatprep.subr.mxu0 0.0
        %2103 = vmatpush1.msra.mxu0 0.0
        %2104 = vmatprep.subr.mxu0 0.0
        %2105 = vmatpush1.msra.mxu0 0.0
        %2106 = vmatprep.subr.mxu0 0.0
        %2107 = vmatpush1.msra.mxu0 0.0
        %2108 = vmatprep.subr.mxu0 0.0
        %2109 = vmatpush1.msra.mxu0 0.0
        %2110 = vmatprep.subr.mxu0 0.0
        %2111 = vmatpush1.msra.mxu0 0.0
        %2112 = vmatprep.subr.mxu0 0.0
        %2113 = vmatpush1.msra.mxu0 0.0
        %2114 = vmatprep.subr.mxu0 0.0
        %2115 = vmatpush1.msra.mxu0 0.0
        %2116 = vmatprep.subr.mxu0 0.0
        %2117 = vmatpush1.msra.mxu0 0.0
        %2118 = vmatprep.subr.mxu0 0.0
        %2119 = vmatpush1.msra.mxu0 0.0
        %2120 = vmatprep.subr.mxu0 0.0
        %2121 = vmatpush1.msra.mxu0 0.0
        %2122 = vmatprep.subr.mxu0 0.0
        %2123 = vmatpush1.msra.mxu0 0.0
        %2124 = vmatprep.subr.mxu0 0.0
        %2125 = vmatpush1.msra.mxu0 0.0
        %2126 = vmatprep.subr.mxu0 0.0
        %2127 = vmatpush1.msra.mxu0 0.0
        %2128 = vmatprep.subr.mxu0 0.0
        %2129 = vmatpush1.msra.mxu0 0.0
        %2130 = vmatprep.subr.mxu0 0.0
        %2131 = vmatpush1.msra.mxu0 0.0
        %2132 = vmatprep.subr.mxu0 0.0
        %2133 = vmatpush1.msra.mxu0 0.0
        %2134 = vmatprep.subr.mxu0 0.0
        %2135 = vmatpush1.msra.mxu0 0.0
        %2136 = vmatprep.mubr.f32.mxu0 0.0
        %2137 = vmatmul.mubr.f32.gmra.mrb[0].mxu0 %v1325
        %v2138 = vpop.f32.mrb[0].mxu0
        %v2139 = vadd.f32 0.0, %v2138
        %v2140 = vpop.f32.mrb[0].mxu0
        %v2141 = vadd.f32 0.0, %v2140
        %2142 = vdwg.mxu0
        %s2143 = scalar_lea.vmem [#allocation3], 32
        %2144 = vst [vmem:[%s2143] sm:$0xff] %v2139
        %2145 = vst [vmem:[%s2143 + $0x8] sm:$0xff] %v2141
        %v2146 = vld [vmem:[%s454] sm:$0xff]
        %v2147 = vld [vmem:[%s454 + $0x8] sm:$0xff]
        %v2148 = vld [vmem:[%s454 + $0x10] sm:$0xff]
        %v2149 = vld [vmem:[%s454 + $0x18] sm:$0xff]
        %v2150 = vld [vmem:[%s454 + $0x20] sm:$0xff]
        %v2151 = vld [vmem:[%s454 + $0x28] sm:$0xff]
        %v2152 = vld [vmem:[%s454 + $0x30] sm:$0xff]
        %v2153 = vld [vmem:[%s454 + $0x38] sm:$0xff]
        %v2154 = vsub.f32 %v2146, %v858
        %v2155 = vsub.f32 %v2147, %v860
        %v2156 = vsub.f32 %v2148, %v864
        %v2157 = vsub.f32 %v2149, %v866
        %v2158 = vsub.f32 %v2150, %v870
        %v2159 = vsub.f32 %v2151, %v872
        %v2160 = vsub.f32 %v2152, %v876
        %v2161 = vsub.f32 %v2153, %v878
        %v2162 = vmul.f32 %v2154, %v947
        %v2163 = vmul.f32 %v2155, %v949
        %v2164 = vmul.f32 %v2156, %v953
        %v2165 = vmul.f32 %v2157, %v955
        %v2166 = vmul.f32 %v2158, %v959
        %v2167 = vmul.f32 %v2159, %v961
        %v2168 = vmul.f32 %v2160, %v965
        %v2169 = vmul.f32 %v2161, %v967
        %s2170 = scalar_lea.vmem %s299, 384
        %v2171 = vld [vmem:[%s2170] sm:$0xff]
        %v2172 = vld [vmem:[%s2170 + $0x8] sm:$0xff]
        %v2173 = vld [vmem:[%s2170 + $0x10] sm:$0xff]
        %v2174 = vld [vmem:[%s2170 + $0x18] sm:$0xff]
        %v2175 = vld [vmem:[%s2170 + $0x20] sm:$0xff]
        %v2176 = vld [vmem:[%s2170 + $0x28] sm:$0xff]
        %v2177 = vld [vmem:[%s2170 + $0x30] sm:$0xff]
        %v2178 = vld [vmem:[%s2170 + $0x38] sm:$0xff]
        %v2179 = vld [vmem:[%s2170 + $0x40] sm:$0xff]
        %v2180 = vld [vmem:[%s2170 + $0x48] sm:$0xff]
        %v2181 = vld [vmem:[%s2170 + $0x50] sm:$0xff]
        %v2182 = vld [vmem:[%s2170 + $0x58] sm:$0xff]
        %v2183 = vld [vmem:[%s2170 + $0x60] sm:$0xff]
        %v2184 = vld [vmem:[%s2170 + $0x68] sm:$0xff]
        %v2185 = vld [vmem:[%s2170 + $0x70] sm:$0xff]
        %v2186 = vld [vmem:[%s2170 + $0x78] sm:$0xff]
        %2188 = vset.pattern.permute.xlu0 0
        %2189 = vperm.xlu0 %2188, %v2171
        %v2190 = vpop.permute.xlu0 %2189
        %2193 = vset.pattern.permute.xlu0 0
        %2194 = vperm.xlu0 %2193, %v2172
        %v2195 = vpop.permute.xlu0 %2194
        %2198 = vset.pattern.permute.xlu0 0
        %2199 = vperm.xlu0 %2198, %v2173
        %v2200 = vpop.permute.xlu0 %2199
        %2203 = vset.pattern.permute.xlu0 0
        %2204 = vperm.xlu0 %2203, %v2174
        %v2205 = vpop.permute.xlu0 %2204
        %2208 = vset.pattern.permute.xlu0 0
        %2209 = vperm.xlu0 %2208, %v2175
        %v2210 = vpop.permute.xlu0 %2209
        %2213 = vset.pattern.permute.xlu0 0
        %2214 = vperm.xlu0 %2213, %v2176
        %v2215 = vpop.permute.xlu0 %2214
        %2218 = vset.pattern.permute.xlu0 0
        %2219 = vperm.xlu0 %2218, %v2177
        %v2220 = vpop.permute.xlu0 %2219
        %2223 = vset.pattern.permute.xlu0 0
        %2224 = vperm.xlu0 %2223, %v2178
        %v2225 = vpop.permute.xlu0 %2224
        %2228 = vset.pattern.permute.xlu0 0
        %2229 = vperm.xlu0 %2228, %v2179
        %v2230 = vpop.permute.xlu0 %2229
        %2233 = vset.pattern.permute.xlu0 0
        %2234 = vperm.xlu0 %2233, %v2180
        %v2235 = vpop.permute.xlu0 %2234
        %2238 = vset.pattern.permute.xlu0 0
        %2239 = vperm.xlu0 %2238, %v2181
        %v2240 = vpop.permute.xlu0 %2239
        %2243 = vset.pattern.permute.xlu0 0
        %2244 = vperm.xlu0 %2243, %v2182
        %v2245 = vpop.permute.xlu0 %2244
        %2248 = vset.pattern.permute.xlu0 0
        %2249 = vperm.xlu0 %2248, %v2183
        %v2250 = vpop.permute.xlu0 %2249
        %2253 = vset.pattern.permute.xlu0 0
        %2254 = vperm.xlu0 %2253, %v2184
        %v2255 = vpop.permute.xlu0 %2254
        %2258 = vset.pattern.permute.xlu0 0
        %2259 = vperm.xlu0 %2258, %v2185
        %v2260 = vpop.permute.xlu0 %2259
        %2263 = vset.pattern.permute.xlu0 0
        %2264 = vperm.xlu0 %2263, %v2186
        %v2265 = vpop.permute.xlu0 %2264
        %2267 = vmatprep.subr.mxu0 %v2163
        %2268 = vmatpush1.msra.mxu0 %v2162
        %2269 = vmatprep.subr.mxu0 %v2165
        %2270 = vmatpush1.msra.mxu0 %v2164
        %2271 = vmatprep.subr.mxu0 %v2167
        %2272 = vmatpush1.msra.mxu0 %v2166
        %2273 = vmatprep.subr.mxu0 %v2169
        %2274 = vmatpush1.msra.mxu0 %v2168
        %2275 = vmatprep.subr.mxu0 0.0
        %2276 = vmatpush1.msra.mxu0 0.0
        %2277 = vmatprep.subr.mxu0 0.0
        %2278 = vmatpush1.msra.mxu0 0.0
        %2279 = vmatprep.subr.mxu0 0.0
        %2280 = vmatpush1.msra.mxu0 0.0
        %2281 = vmatprep.subr.mxu0 0.0
        %2282 = vmatpush1.msra.mxu0 0.0
        %2283 = vmatprep.subr.mxu0 0.0
        %2284 = vmatpush1.msra.mxu0 0.0
        %2285 = vmatprep.subr.mxu0 0.0
        %2286 = vmatpush1.msra.mxu0 0.0
        %2287 = vmatprep.subr.mxu0 0.0
        %2288 = vmatpush1.msra.mxu0 0.0
        %2289 = vmatprep.subr.mxu0 0.0
        %2290 = vmatpush1.msra.mxu0 0.0
        %2291 = vmatprep.subr.mxu0 0.0
        %2292 = vmatpush1.msra.mxu0 0.0
        %2293 = vmatprep.subr.mxu0 0.0
        %2294 = vmatpush1.msra.mxu0 0.0
        %2295 = vmatprep.subr.mxu0 0.0
        %2296 = vmatpush1.msra.mxu0 0.0
        %2297 = vmatprep.subr.mxu0 0.0
        %2298 = vmatpush1.msra.mxu0 0.0
        %2299 = vmatprep.subr.mxu0 0.0
        %2300 = vmatpush1.msra.mxu0 0.0
        %2301 = vmatprep.subr.mxu0 0.0
        %2302 = vmatpush1.msra.mxu0 0.0
        %2303 = vmatprep.subr.mxu0 0.0
        %2304 = vmatpush1.msra.mxu0 0.0
        %2305 = vmatprep.subr.mxu0 0.0
        %2306 = vmatpush1.msra.mxu0 0.0
        %2307 = vmatprep.subr.mxu0 0.0
        %2308 = vmatpush1.msra.mxu0 0.0
        %2309 = vmatprep.subr.mxu0 0.0
        %2310 = vmatpush1.msra.mxu0 0.0
        %2311 = vmatprep.subr.mxu0 0.0
        %2312 = vmatpush1.msra.mxu0 0.0
        %2313 = vmatprep.subr.mxu0 0.0
        %2314 = vmatpush1.msra.mxu0 0.0
        %2315 = vmatprep.subr.mxu0 0.0
        %2316 = vmatpush1.msra.mxu0 0.0
        %2317 = vmatprep.subr.mxu0 0.0
        %2318 = vmatpush1.msra.mxu0 0.0
        %2319 = vmatprep.subr.mxu0 0.0
        %2320 = vmatpush1.msra.mxu0 0.0
        %2321 = vmatprep.subr.mxu0 0.0
        %2322 = vmatpush1.msra.mxu0 0.0
        %2323 = vmatprep.subr.mxu0 0.0
        %2324 = vmatpush1.msra.mxu0 0.0
        %2325 = vmatprep.subr.mxu0 0.0
        %2326 = vmatpush1.msra.mxu0 0.0
        %2327 = vmatprep.subr.mxu0 0.0
        %2328 = vmatpush1.msra.mxu0 0.0
        %2329 = vmatprep.subr.mxu0 0.0
        %2330 = vmatpush1.msra.mxu0 0.0
        %2331 = vmatprep.mubr.f32.mxu0 0.0
        %2332 = vmatmul.mubr.f32.gmra.mrb[0].mxu0 %v1099
        %v2333 = vpop.f32.mrb[0].mxu0
        %v2334 = vadd.f32 %v2190, %v2333
        %v2335 = vpop.f32.mrb[0].mxu0
        %v2336 = vadd.f32 %v2190, %v2335
        %2337 = vmatprep.mubr.f32.mxu0 0.0
        %2338 = vmatmul.mubr.f32.gmra.mrb[0].mxu0 %v1102
        %v2339 = vpop.f32.mrb[0].mxu0
        %v2340 = vadd.f32 %v2195, %v2339
        %v2341 = vpop.f32.mrb[0].mxu0
        %v2342 = vadd.f32 %v2195, %v2341
        %2343 = vmatprep.mubr.f32.mxu0 0.0
        %2344 = vmatmul.mubr.f32.gmra.mrb[0].mxu0 %v1105
        %v2345 = vpop.f32.mrb[0].mxu0
        %v2346 = vadd.f32 %v2200, %v2345
        %v2347 = vpop.f32.mrb[0].mxu0
        %v2348 = vadd.f32 %v2200, %v2347
        %2349 = vmatprep.mubr.f32.mxu0 0.0
        %2350 = vmatmul.mubr.f32.gmra.mrb[0].mxu0 %v1108
        %v2351 = vpop.f32.mrb[0].mxu0
        %v2352 = vadd.f32 %v2205, %v2351
        %v2353 = vpop.f32.mrb[0].mxu0
        %v2354 = vadd.f32 %v2205, %v2353
        %2355 = vmatprep.mubr.f32.mxu0 0.0
        %2356 = vmatmul.mubr.f32.gmra.mrb[0].mxu0 %v1111
        %v2357 = vpop.f32.mrb[0].mxu0
        %v2358 = vadd.f32 %v2210, %v2357
        %v2359 = vpop.f32.mrb[0].mxu0
        %v2360 = vadd.f32 %v2210, %v2359
        %2361 = vmatprep.mubr.f32.mxu0 0.0
        %2362 = vmatmul.mubr.f32.gmra.mrb[0].mxu0 %v1114
        %v2363 = vpop.f32.mrb[0].mxu0
        %v2364 = vadd.f32 %v2215, %v2363
        %v2365 = vpop.f32.mrb[0].mxu0
        %v2366 = vadd.f32 %v2215, %v2365
        %2367 = vmatprep.mubr.f32.mxu0 0.0
        %2368 = vmatmul.mubr.f32.gmra.mrb[0].mxu0 %v1117
        %v2369 = vpop.f32.mrb[0].mxu0
        %v2370 = vadd.f32 %v2220, %v2369
        %v2371 = vpop.f32.mrb[0].mxu0
        %v2372 = vadd.f32 %v2220, %v2371
        %2373 = vmatprep.mubr.f32.mxu0 0.0
        %2374 = vmatmul.mubr.f32.gmra.mrb[0].mxu0 %v1120
        %v2375 = vpop.f32.mrb[0].mxu0
        %v2376 = vadd.f32 %v2225, %v2375
        %v2377 = vpop.f32.mrb[0].mxu0
        %v2378 = vadd.f32 %v2225, %v2377
        %2379 = vmatprep.mubr.f32.mxu0 0.0
        %2380 = vmatmul.mubr.f32.gmra.mrb[0].mxu0 %v1123
        %v2381 = vpop.f32.mrb[0].mxu0
        %v2382 = vadd.f32 %v2230, %v2381
        %v2383 = vpop.f32.mrb[0].mxu0
        %v2384 = vadd.f32 %v2230, %v2383
        %2385 = vmatprep.mubr.f32.mxu0 0.0
        %2386 = vmatmul.mubr.f32.gmra.mrb[0].mxu0 %v1126
        %v2387 = vpop.f32.mrb[0].mxu0
        %v2388 = vadd.f32 %v2235, %v2387
        %v2389 = vpop.f32.mrb[0].mxu0
        %v2390 = vadd.f32 %v2235, %v2389
        %2391 = vmatprep.mubr.f32.mxu0 0.0
        %2392 = vmatmul.mubr.f32.gmra.mrb[0].mxu0 %v1129
        %v2393 = vpop.f32.mrb[0].mxu0
        %v2394 = vadd.f32 %v2240, %v2393
        %v2395 = vpop.f32.mrb[0].mxu0
        %v2396 = vadd.f32 %v2240, %v2395
        %2397 = vmatprep.mubr.f32.mxu0 0.0
        %2398 = vmatmul.mubr.f32.gmra.mrb[0].mxu0 %v1132
        %v2399 = vpop.f32.mrb[0].mxu0
        %v2400 = vadd.f32 %v2245, %v2399
        %v2401 = vpop.f32.mrb[0].mxu0
        %v2402 = vadd.f32 %v2245, %v2401
        %2403 = vmatprep.mubr.f32.mxu0 0.0
        %2404 = vmatmul.mubr.f32.gmra.mrb[0].mxu0 %v1135
        %v2405 = vpop.f32.mrb[0].mxu0
        %v2406 = vadd.f32 %v2250, %v2405
        %v2407 = vpop.f32.mrb[0].mxu0
        %v2408 = vadd.f32 %v2250, %v2407
        %2409 = vmatprep.mubr.f32.mxu0 0.0
        %2410 = vmatmul.mubr.f32.gmra.mrb[0].mxu0 %v1138
        %v2411 = vpop.f32.mrb[0].mxu0
        %v2412 = vadd.f32 %v2255, %v2411
        %v2413 = vpop.f32.mrb[0].mxu0
        %v2414 = vadd.f32 %v2255, %v2413
        %2415 = vmatprep.mubr.f32.mxu0 0.0
        %2416 = vmatmul.mubr.f32.gmra.mrb[0].mxu0 %v1141
        %v2417 = vpop.f32.mrb[0].mxu0
        %v2418 = vadd.f32 %v2260, %v2417
        %v2419 = vpop.f32.mrb[0].mxu0
        %v2420 = vadd.f32 %v2260, %v2419
        %2421 = vmatprep.mubr.f32.mxu0 0.0
        %2422 = vmatmul.mubr.f32.gmra.mrb[0].mxu0 %v1144
        %v2423 = vpop.f32.mrb[0].mxu0
        %v2424 = vadd.f32 %v2265, %v2423
        %v2425 = vpop.f32.mrb[0].mxu0
        %v2426 = vadd.f32 %v2265, %v2425
        %2427 = vdwg.mxu0
        %s2428 = scalar_lea.vmem [#allocation2], 384
        %2429 = vst [vmem:[%s2428] sm:$0xff] %v2334
        %2430 = vst [vmem:[%s2428 + $0x8] sm:$0xff] %v2336
        %2431 = vst [vmem:[%s2428 + $0x10] sm:$0xff] %v2340
        %2432 = vst [vmem:[%s2428 + $0x18] sm:$0xff] %v2342
        %2433 = vst [vmem:[%s2428 + $0x20] sm:$0xff] %v2346
        %2434 = vst [vmem:[%s2428 + $0x28] sm:$0xff] %v2348
        %2435 = vst [vmem:[%s2428 + $0x30] sm:$0xff] %v2352
        %2436 = vst [vmem:[%s2428 + $0x38] sm:$0xff] %v2354
        %2437 = vst [vmem:[%s2428 + $0x40] sm:$0xff] %v2358
        %2438 = vst [vmem:[%s2428 + $0x48] sm:$0xff] %v2360
        %2439 = vst [vmem:[%s2428 + $0x50] sm:$0xff] %v2364
        %2440 = vst [vmem:[%s2428 + $0x58] sm:$0xff] %v2366
        %2441 = vst [vmem:[%s2428 + $0x60] sm:$0xff] %v2370
        %2442 = vst [vmem:[%s2428 + $0x68] sm:$0xff] %v2372
        %2443 = vst [vmem:[%s2428 + $0x70] sm:$0xff] %v2376
        %2444 = vst [vmem:[%s2428 + $0x78] sm:$0xff] %v2378
        %2445 = vmatprep.subr.mxu0 %v2384
        %2446 = vmatpush1.msra.mxu0 %v2382
        %2447 = vmatprep.subr.mxu0 %v2390
        %2448 = vmatpush1.msra.mxu0 %v2388
        %2449 = vmatprep.subr.mxu0 %v2396
        %2450 = vmatpush1.msra.mxu0 %v2394
        %2451 = vmatprep.subr.mxu0 %v2402
        %2452 = vmatpush1.msra.mxu0 %v2400
        %2453 = vmatprep.subr.mxu0 %v2408
        %2454 = vmatpush1.msra.mxu0 %v2406
        %2455 = vmatprep.subr.mxu0 %v2414
        %2456 = vmatpush1.msra.mxu0 %v2412
        %2457 = vmatprep.subr.mxu0 %v2420
        %2458 = vmatpush1.msra.mxu0 %v2418
        %2459 = vmatprep.subr.mxu0 %v2426
        %2460 = vmatpush1.msra.mxu0 %v2424
        %2461 = vmatprep.subr.mxu0 0.0
        %2462 = vmatpush1.msra.mxu0 0.0
        %2463 = vmatprep.subr.mxu0 0.0
        %2464 = vmatpush1.msra.mxu0 0.0
        %2465 = vmatprep.subr.mxu0 0.0
        %2466 = vmatpush1.msra.mxu0 0.0
        %2467 = vmatprep.subr.mxu0 0.0
        %2468 = vmatpush1.msra.mxu0 0.0
        %2469 = vmatprep.subr.mxu0 0.0
        %2470 = vmatpush1.msra.mxu0 0.0
        %2471 = vmatprep.subr.mxu0 0.0
        %2472 = vmatpush1.msra.mxu0 0.0
        %2473 = vmatprep.subr.mxu0 0.0
        %2474 = vmatpush1.msra.mxu0 0.0
        %2475 = vmatprep.subr.mxu0 0.0
        %2476 = vmatpush1.msra.mxu0 0.0
        %2477 = vmatprep.subr.mxu0 0.0
        %2478 = vmatpush1.msra.mxu0 0.0
        %2479 = vmatprep.subr.mxu0 0.0
        %2480 = vmatpush1.msra.mxu0 0.0
        %2481 = vmatprep.subr.mxu0 0.0
        %2482 = vmatpush1.msra.mxu0 0.0
        %2483 = vmatprep.subr.mxu0 0.0
        %2484 = vmatpush1.msra.mxu0 0.0
        %2485 = vmatprep.subr.mxu0 0.0
        %2486 = vmatpush1.msra.mxu0 0.0
        %2487 = vmatprep.subr.mxu0 0.0
        %2488 = vmatpush1.msra.mxu0 0.0
        %2489 = vmatprep.subr.mxu0 0.0
        %2490 = vmatpush1.msra.mxu0 0.0
        %2491 = vmatprep.subr.mxu0 0.0
        %2492 = vmatpush1.msra.mxu0 0.0
        %2493 = vmatprep.subr.mxu0 0.0
        %2494 = vmatpush1.msra.mxu0 0.0
        %2495 = vmatprep.subr.mxu0 0.0
        %2496 = vmatpush1.msra.mxu0 0.0
        %2497 = vmatprep.subr.mxu0 0.0
        %2498 = vmatpush1.msra.mxu0 0.0
        %2499 = vmatprep.subr.mxu0 0.0
        %2500 = vmatpush1.msra.mxu0 0.0
        %2501 = vmatprep.subr.mxu0 0.0
        %2502 = vmatpush1.msra.mxu0 0.0
        %2503 = vmatprep.subr.mxu0 0.0
        %2504 = vmatpush1.msra.mxu0 0.0
        %2505 = vmatprep.subr.mxu0 0.0
        %2506 = vmatpush1.msra.mxu0 0.0
        %2507 = vmatprep.subr.mxu0 0.0
        %2508 = vmatpush1.msra.mxu0 0.0
        %2509 = vmatprep.mubr.f32.mxu0 0.0
        %2510 = vmatmul.mubr.f32.gmra.mrb[0].mxu0 %v1325
        %v2511 = vpop.f32.mrb[0].mxu0
        %v2512 = vadd.f32 0.0, %v2511
        %v2513 = vpop.f32.mrb[0].mxu0
        %v2514 = vadd.f32 0.0, %v2513
        %2515 = vdwg.mxu0
        %s2516 = scalar_lea.vmem [#allocation3], 48
        %2517 = vst [vmem:[%s2516] sm:$0xff] %v2512
        %2518 = vst [vmem:[%s2516 + $0x8] sm:$0xff] %v2514
        %v2519 = vld [vmem:[%s487] sm:$0xff]
        %v2520 = vld [vmem:[%s487 + $0x8] sm:$0xff]
        %v2521 = vld [vmem:[%s487 + $0x10] sm:$0xff]
        %v2522 = vld [vmem:[%s487 + $0x18] sm:$0xff]
        %v2523 = vld [vmem:[%s487 + $0x20] sm:$0xff]
        %v2524 = vld [vmem:[%s487 + $0x28] sm:$0xff]
        %v2525 = vld [vmem:[%s487 + $0x30] sm:$0xff]
        %v2526 = vld [vmem:[%s487 + $0x38] sm:$0xff]
        %v2527 = vsub.f32 %v2519, %v858
        %v2528 = vsub.f32 %v2520, %v860
        %v2529 = vsub.f32 %v2521, %v864
        %v2530 = vsub.f32 %v2522, %v866
        %v2531 = vsub.f32 %v2523, %v870
        %v2532 = vsub.f32 %v2524, %v872
        %v2533 = vsub.f32 %v2525, %v876
        %v2534 = vsub.f32 %v2526, %v878
        %v2535 = vmul.f32 %v2527, %v947
        %v2536 = vmul.f32 %v2528, %v949
        %v2537 = vmul.f32 %v2529, %v953
        %v2538 = vmul.f32 %v2530, %v955
        %v2539 = vmul.f32 %v2531, %v959
        %v2540 = vmul.f32 %v2532, %v961
        %v2541 = vmul.f32 %v2533, %v965
        %v2542 = vmul.f32 %v2534, %v967
        %s2543 = scalar_lea.vmem %s299, 512
        %v2544 = vld [vmem:[%s2543] sm:$0xff]
        %v2545 = vld [vmem:[%s2543 + $0x8] sm:$0xff]
        %v2546 = vld [vmem:[%s2543 + $0x10] sm:$0xff]
        %v2547 = vld [vmem:[%s2543 + $0x18] sm:$0xff]
        %v2548 = vld [vmem:[%s2543 + $0x20] sm:$0xff]
        %v2549 = vld [vmem:[%s2543 + $0x28] sm:$0xff]
        %v2550 = vld [vmem:[%s2543 + $0x30] sm:$0xff]
        %v2551 = vld [vmem:[%s2543 + $0x38] sm:$0xff]
        %v2552 = vld [vmem:[%s2543 + $0x40] sm:$0xff]
        %v2553 = vld [vmem:[%s2543 + $0x48] sm:$0xff]
        %v2554 = vld [vmem:[%s2543 + $0x50] sm:$0xff]
        %v2555 = vld [vmem:[%s2543 + $0x58] sm:$0xff]
        %v2556 = vld [vmem:[%s2543 + $0x60] sm:$0xff]
        %v2557 = vld [vmem:[%s2543 + $0x68] sm:$0xff]
        %v2558 = vld [vmem:[%s2543 + $0x70] sm:$0xff]
        %v2559 = vld [vmem:[%s2543 + $0x78] sm:$0xff]
        %2561 = vset.pattern.permute.xlu0 0
        %2562 = vperm.xlu0 %2561, %v2544
        %v2563 = vpop.permute.xlu0 %2562
        %2566 = vset.pattern.permute.xlu0 0
        %2567 = vperm.xlu0 %2566, %v2545
        %v2568 = vpop.permute.xlu0 %2567
        %2571 = vset.pattern.permute.xlu0 0
        %2572 = vperm.xlu0 %2571, %v2546
        %v2573 = vpop.permute.xlu0 %2572
        %2576 = vset.pattern.permute.xlu0 0
        %2577 = vperm.xlu0 %2576, %v2547
        %v2578 = vpop.permute.xlu0 %2577
        %2581 = vset.pattern.permute.xlu0 0
        %2582 = vperm.xlu0 %2581, %v2548
        %v2583 = vpop.permute.xlu0 %2582
        %2586 = vset.pattern.permute.xlu0 0
        %2587 = vperm.xlu0 %2586, %v2549
        %v2588 = vpop.permute.xlu0 %2587
        %2591 = vset.pattern.permute.xlu0 0
        %2592 = vperm.xlu0 %2591, %v2550
        %v2593 = vpop.permute.xlu0 %2592
        %2596 = vset.pattern.permute.xlu0 0
        %2597 = vperm.xlu0 %2596, %v2551
        %v2598 = vpop.permute.xlu0 %2597
        %2601 = vset.pattern.permute.xlu0 0
        %2602 = vperm.xlu0 %2601, %v2552
        %v2603 = vpop.permute.xlu0 %2602
        %2606 = vset.pattern.permute.xlu0 0
        %2607 = vperm.xlu0 %2606, %v2553
        %v2608 = vpop.permute.xlu0 %2607
        %2611 = vset.pattern.permute.xlu0 0
        %2612 = vperm.xlu0 %2611, %v2554
        %v2613 = vpop.permute.xlu0 %2612
        %2616 = vset.pattern.permute.xlu0 0
        %2617 = vperm.xlu0 %2616, %v2555
        %v2618 = vpop.permute.xlu0 %2617
        %2621 = vset.pattern.permute.xlu0 0
        %2622 = vperm.xlu0 %2621, %v2556
        %v2623 = vpop.permute.xlu0 %2622
        %2626 = vset.pattern.permute.xlu0 0
        %2627 = vperm.xlu0 %2626, %v2557
        %v2628 = vpop.permute.xlu0 %2627
        %2631 = vset.pattern.permute.xlu0 0
        %2632 = vperm.xlu0 %2631, %v2558
        %v2633 = vpop.permute.xlu0 %2632
        %2636 = vset.pattern.permute.xlu0 0
        %2637 = vperm.xlu0 %2636, %v2559
        %v2638 = vpop.permute.xlu0 %2637
        %2640 = vmatprep.subr.mxu0 %v2536
        %2641 = vmatpush1.msra.mxu0 %v2535
        %2642 = vmatprep.subr.mxu0 %v2538
        %2643 = vmatpush1.msra.mxu0 %v2537
        %2644 = vmatprep.subr.mxu0 %v2540
        %2645 = vmatpush1.msra.mxu0 %v2539
        %2646 = vmatprep.subr.mxu0 %v2542
        %2647 = vmatpush1.msra.mxu0 %v2541
        %2648 = vmatprep.subr.mxu0 0.0
        %2649 = vmatpush1.msra.mxu0 0.0
        %2650 = vmatprep.subr.mxu0 0.0
        %2651 = vmatpush1.msra.mxu0 0.0
        %2652 = vmatprep.subr.mxu0 0.0
        %2653 = vmatpush1.msra.mxu0 0.0
        %2654 = vmatprep.subr.mxu0 0.0
        %2655 = vmatpush1.msra.mxu0 0.0
        %2656 = vmatprep.subr.mxu0 0.0
        %2657 = vmatpush1.msra.mxu0 0.0
        %2658 = vmatprep.subr.mxu0 0.0
        %2659 = vmatpush1.msra.mxu0 0.0
        %2660 = vmatprep.subr.mxu0 0.0
        %2661 = vmatpush1.msra.mxu0 0.0
        %2662 = vmatprep.subr.mxu0 0.0
        %2663 = vmatpush1.msra.mxu0 0.0
        %2664 = vmatprep.subr.mxu0 0.0
        %2665 = vmatpush1.msra.mxu0 0.0
        %2666 = vmatprep.subr.mxu0 0.0
        %2667 = vmatpush1.msra.mxu0 0.0
        %2668 = vmatprep.subr.mxu0 0.0
        %2669 = vmatpush1.msra.mxu0 0.0
        %2670 = vmatprep.subr.mxu0 0.0
        %2671 = vmatpush1.msra.mxu0 0.0
        %2672 = vmatprep.subr.mxu0 0.0
        %2673 = vmatpush1.msra.mxu0 0.0
        %2674 = vmatprep.subr.mxu0 0.0
        %2675 = vmatpush1.msra.mxu0 0.0
        %2676 = vmatprep.subr.mxu0 0.0
        %2677 = vmatpush1.msra.mxu0 0.0
        %2678 = vmatprep.subr.mxu0 0.0
        %2679 = vmatpush1.msra.mxu0 0.0
        %2680 = vmatprep.subr.mxu0 0.0
        %2681 = vmatpush1.msra.mxu0 0.0
        %2682 = vmatprep.subr.mxu0 0.0
        %2683 = vmatpush1.msra.mxu0 0.0
        %2684 = vmatprep.subr.mxu0 0.0
        %2685 = vmatpush1.msra.mxu0 0.0
        %2686 = vmatprep.subr.mxu0 0.0
        %2687 = vmatpush1.msra.mxu0 0.0
        %2688 = vmatprep.subr.mxu0 0.0
        %2689 = vmatpush1.msra.mxu0 0.0
        %2690 = vmatprep.subr.mxu0 0.0
        %2691 = vmatpush1.msra.mxu0 0.0
        %2692 = vmatprep.subr.mxu0 0.0
        %2693 = vmatpush1.msra.mxu0 0.0
        %2694 = vmatprep.subr.mxu0 0.0
        %2695 = vmatpush1.msra.mxu0 0.0
        %2696 = vmatprep.subr.mxu0 0.0
        %2697 = vmatpush1.msra.mxu0 0.0
        %2698 = vmatprep.subr.mxu0 0.0
        %2699 = vmatpush1.msra.mxu0 0.0
        %2700 = vmatprep.subr.mxu0 0.0
        %2701 = vmatpush1.msra.mxu0 0.0
        %2702 = vmatprep.subr.mxu0 0.0
        %2703 = vmatpush1.msra.mxu0 0.0
        %2704 = vmatprep.mubr.f32.mxu0 0.0
        %2705 = vmatmul.mubr.f32.gmra.mrb[0].mxu0 %v1099
        %v2706 = vpop.f32.mrb[0].mxu0
        %v2707 = vadd.f32 %v2563, %v2706
        %v2708 = vpop.f32.mrb[0].mxu0
        %v2709 = vadd.f32 %v2563, %v2708
        %2710 = vmatprep.mubr.f32.mxu0 0.0
        %2711 = vmatmul.mubr.f32.gmra.mrb[0].mxu0 %v1102
        %v2712 = vpop.f32.mrb[0].mxu0
        %v2713 = vadd.f32 %v2568, %v2712
        %v2714 = vpop.f32.mrb[0].mxu0
        %v2715 = vadd.f32 %v2568, %v2714
        %2716 = vmatprep.mubr.f32.mxu0 0.0
        %2717 = vmatmul.mubr.f32.gmra.mrb[0].mxu0 %v1105
        %v2718 = vpop.f32.mrb[0].mxu0
        %v2719 = vadd.f32 %v2573, %v2718
        %v2720 = vpop.f32.mrb[0].mxu0
        %v2721 = vadd.f32 %v2573, %v2720
        %2722 = vmatprep.mubr.f32.mxu0 0.0
        %2723 = vmatmul.mubr.f32.gmra.mrb[0].mxu0 %v1108
        %v2724 = vpop.f32.mrb[0].mxu0
        %v2725 = vadd.f32 %v2578, %v2724
        %v2726 = vpop.f32.mrb[0].mxu0
        %v2727 = vadd.f32 %v2578, %v2726
        %2728 = vmatprep.mubr.f32.mxu0 0.0
        %2729 = vmatmul.mubr.f32.gmra.mrb[0].mxu0 %v1111
        %v2730 = vpop.f32.mrb[0].mxu0
        %v2731 = vadd.f32 %v2583, %v2730
        %v2732 = vpop.f32.mrb[0].mxu0
        %v2733 = vadd.f32 %v2583, %v2732
        %2734 = vmatprep.mubr.f32.mxu0 0.0
        %2735 = vmatmul.mubr.f32.gmra.mrb[0].mxu0 %v1114
        %v2736 = vpop.f32.mrb[0].mxu0
        %v2737 = vadd.f32 %v2588, %v2736
        %v2738 = vpop.f32.mrb[0].mxu0
        %v2739 = vadd.f32 %v2588, %v2738
        %2740 = vmatprep.mubr.f32.mxu0 0.0
        %2741 = vmatmul.mubr.f32.gmra.mrb[0].mxu0 %v1117
        %v2742 = vpop.f32.mrb[0].mxu0
        %v2743 = vadd.f32 %v2593, %v2742
        %v2744 = vpop.f32.mrb[0].mxu0
        %v2745 = vadd.f32 %v2593, %v2744
        %2746 = vmatprep.mubr.f32.mxu0 0.0
        %2747 = vmatmul.mubr.f32.gmra.mrb[0].mxu0 %v1120
        %v2748 = vpop.f32.mrb[0].mxu0
        %v2749 = vadd.f32 %v2598, %v2748
        %v2750 = vpop.f32.mrb[0].mxu0
        %v2751 = vadd.f32 %v2598, %v2750
        %2752 = vmatprep.mubr.f32.mxu0 0.0
        %2753 = vmatmul.mubr.f32.gmra.mrb[0].mxu0 %v1123
        %v2754 = vpop.f32.mrb[0].mxu0
        %v2755 = vadd.f32 %v2603, %v2754
        %v2756 = vpop.f32.mrb[0].mxu0
        %v2757 = vadd.f32 %v2603, %v2756
        %2758 = vmatprep.mubr.f32.mxu0 0.0
        %2759 = vmatmul.mubr.f32.gmra.mrb[0].mxu0 %v1126
        %v2760 = vpop.f32.mrb[0].mxu0
        %v2761 = vadd.f32 %v2608, %v2760
        %v2762 = vpop.f32.mrb[0].mxu0
        %v2763 = vadd.f32 %v2608, %v2762
        %2764 = vmatprep.mubr.f32.mxu0 0.0
        %2765 = vmatmul.mubr.f32.gmra.mrb[0].mxu0 %v1129
        %v2766 = vpop.f32.mrb[0].mxu0
        %v2767 = vadd.f32 %v2613, %v2766
        %v2768 = vpop.f32.mrb[0].mxu0
        %v2769 = vadd.f32 %v2613, %v2768
        %2770 = vmatprep.mubr.f32.mxu0 0.0
        %2771 = vmatmul.mubr.f32.gmra.mrb[0].mxu0 %v1132
        %v2772 = vpop.f32.mrb[0].mxu0
        %v2773 = vadd.f32 %v2618, %v2772
        %v2774 = vpop.f32.mrb[0].mxu0
        %v2775 = vadd.f32 %v2618, %v2774
        %2776 = vmatprep.mubr.f32.mxu0 0.0
        %2777 = vmatmul.mubr.f32.gmra.mrb[0].mxu0 %v1135
        %v2778 = vpop.f32.mrb[0].mxu0
        %v2779 = vadd.f32 %v2623, %v2778
        %v2780 = vpop.f32.mrb[0].mxu0
        %v2781 = vadd.f32 %v2623, %v2780
        %2782 = vmatprep.mubr.f32.mxu0 0.0
        %2783 = vmatmul.mubr.f32.gmra.mrb[0].mxu0 %v1138
        %v2784 = vpop.f32.mrb[0].mxu0
        %v2785 = vadd.f32 %v2628, %v2784
        %v2786 = vpop.f32.mrb[0].mxu0
        %v2787 = vadd.f32 %v2628, %v2786
        %2788 = vmatprep.mubr.f32.mxu0 0.0
        %2789 = vmatmul.mubr.f32.gmra.mrb[0].mxu0 %v1141
        %v2790 = vpop.f32.mrb[0].mxu0
        %v2791 = vadd.f32 %v2633, %v2790
        %v2792 = vpop.f32.mrb[0].mxu0
        %v2793 = vadd.f32 %v2633, %v2792
        %2794 = vmatprep.mubr.f32.mxu0 0.0
        %2795 = vmatmul.mubr.f32.gmra.mrb[0].mxu0 %v1144
        %v2796 = vpop.f32.mrb[0].mxu0
        %v2797 = vadd.f32 %v2638, %v2796
        %v2798 = vpop.f32.mrb[0].mxu0
        %v2799 = vadd.f32 %v2638, %v2798
        %2800 = vdwg.mxu0
        %s2801 = scalar_lea.vmem [#allocation2], 512
        %2802 = vst [vmem:[%s2801] sm:$0xff] %v2707
        %2803 = vst [vmem:[%s2801 + $0x8] sm:$0xff] %v2709
        %2804 = vst [vmem:[%s2801 + $0x10] sm:$0xff] %v2713
        %2805 = vst [vmem:[%s2801 + $0x18] sm:$0xff] %v2715
        %2806 = vst [vmem:[%s2801 + $0x20] sm:$0xff] %v2719
        %2807 = vst [vmem:[%s2801 + $0x28] sm:$0xff] %v2721
        %2808 = vst [vmem:[%s2801 + $0x30] sm:$0xff] %v2725
        %2809 = vst [vmem:[%s2801 + $0x38] sm:$0xff] %v2727
        %2810 = vst [vmem:[%s2801 + $0x40] sm:$0xff] %v2731
        %2811 = vst [vmem:[%s2801 + $0x48] sm:$0xff] %v2733
        %2812 = vst [vmem:[%s2801 + $0x50] sm:$0xff] %v2737
        %2813 = vst [vmem:[%s2801 + $0x58] sm:$0xff] %v2739
        %2814 = vst [vmem:[%s2801 + $0x60] sm:$0xff] %v2743
        %2815 = vst [vmem:[%s2801 + $0x68] sm:$0xff] %v2745
        %2816 = vst [vmem:[%s2801 + $0x70] sm:$0xff] %v2749
        %2817 = vst [vmem:[%s2801 + $0x78] sm:$0xff] %v2751
        %2818 = vmatprep.subr.mxu0 %v2757
        %2819 = vmatpush1.msra.mxu0 %v2755
        %2820 = vmatprep.subr.mxu0 %v2763
        %2821 = vmatpush1.msra.mxu0 %v2761
        %2822 = vmatprep.subr.mxu0 %v2769
        %2823 = vmatpush1.msra.mxu0 %v2767
        %2824 = vmatprep.subr.mxu0 %v2775
        %2825 = vmatpush1.msra.mxu0 %v2773
        %2826 = vmatprep.subr.mxu0 %v2781
        %2827 = vmatpush1.msra.mxu0 %v2779
        %2828 = vmatprep.subr.mxu0 %v2787
        %2829 = vmatpush1.msra.mxu0 %v2785
        %2830 = vmatprep.subr.mxu0 %v2793
        %2831 = vmatpush1.msra.mxu0 %v2791
        %2832 = vmatprep.subr.mxu0 %v2799
        %2833 = vmatpush1.msra.mxu0 %v2797
        %2834 = vmatprep.subr.mxu0 0.0
        %2835 = vmatpush1.msra.mxu0 0.0
        %2836 = vmatprep.subr.mxu0 0.0
        %2837 = vmatpush1.msra.mxu0 0.0
        %2838 = vmatprep.subr.mxu0 0.0
        %2839 = vmatpush1.msra.mxu0 0.0
        %2840 = vmatprep.subr.mxu0 0.0
        %2841 = vmatpush1.msra.mxu0 0.0
        %2842 = vmatprep.subr.mxu0 0.0
        %2843 = vmatpush1.msra.mxu0 0.0
        %2844 = vmatprep.subr.mxu0 0.0
        %2845 = vmatpush1.msra.mxu0 0.0
        %2846 = vmatprep.subr.mxu0 0.0
        %2847 = vmatpush1.msra.mxu0 0.0
        %2848 = vmatprep.subr.mxu0 0.0
        %2849 = vmatpush1.msra.mxu0 0.0
        %2850 = vmatprep.subr.mxu0 0.0
        %2851 = vmatpush1.msra.mxu0 0.0
        %2852 = vmatprep.subr.mxu0 0.0
        %2853 = vmatpush1.msra.mxu0 0.0
        %2854 = vmatprep.subr.mxu0 0.0
        %2855 = vmatpush1.msra.mxu0 0.0
        %2856 = vmatprep.subr.mxu0 0.0
        %2857 = vmatpush1.msra.mxu0 0.0
        %2858 = vmatprep.subr.mxu0 0.0
        %2859 = vmatpush1.msra.mxu0 0.0
        %2860 = vmatprep.subr.mxu0 0.0
        %2861 = vmatpush1.msra.mxu0 0.0
        %2862 = vmatprep.subr.mxu0 0.0
        %2863 = vmatpush1.msra.mxu0 0.0
        %2864 = vmatprep.subr.mxu0 0.0
        %2865 = vmatpush1.msra.mxu0 0.0
        %2866 = vmatprep.subr.mxu0 0.0
        %2867 = vmatpush1.msra.mxu0 0.0
        %2868 = vmatprep.subr.mxu0 0.0
        %2869 = vmatpush1.msra.mxu0 0.0
        %2870 = vmatprep.subr.mxu0 0.0
        %2871 = vmatpush1.msra.mxu0 0.0
        %2872 = vmatprep.subr.mxu0 0.0
        %2873 = vmatpush1.msra.mxu0 0.0
        %2874 = vmatprep.subr.mxu0 0.0
        %2875 = vmatpush1.msra.mxu0 0.0
        %2876 = vmatprep.subr.mxu0 0.0
        %2877 = vmatpush1.msra.mxu0 0.0
        %2878 = vmatprep.subr.mxu0 0.0
        %2879 = vmatpush1.msra.mxu0 0.0
        %2880 = vmatprep.subr.mxu0 0.0
        %2881 = vmatpush1.msra.mxu0 0.0
        %2882 = vmatprep.mubr.f32.mxu0 0.0
        %2883 = vmatmul.mubr.f32.gmra.mrb[0].mxu0 %v1325
        %v2884 = vpop.f32.mrb[0].mxu0
        %v2885 = vadd.f32 0.0, %v2884
        %v2886 = vpop.f32.mrb[0].mxu0
        %v2887 = vadd.f32 0.0, %v2886
        %2888 = vdwg.mxu0
        %s2889 = scalar_lea.vmem [#allocation3], 64
        %2890 = vst [vmem:[%s2889] sm:$0xff] %v2885
        %2891 = vst [vmem:[%s2889 + $0x8] sm:$0xff] %v2887
        %v2892 = vld [vmem:[%s520] sm:$0xff]
        %v2893 = vld [vmem:[%s520 + $0x8] sm:$0xff]
        %v2894 = vld [vmem:[%s520 + $0x10] sm:$0xff]
        %v2895 = vld [vmem:[%s520 + $0x18] sm:$0xff]
        %v2896 = vld [vmem:[%s520 + $0x20] sm:$0xff]
        %v2897 = vld [vmem:[%s520 + $0x28] sm:$0xff]
        %v2898 = vld [vmem:[%s520 + $0x30] sm:$0xff]
        %v2899 = vld [vmem:[%s520 + $0x38] sm:$0xff]
        %v2900 = vsub.f32 %v2892, %v858
        %v2901 = vsub.f32 %v2893, %v860
        %v2902 = vsub.f32 %v2894, %v864
        %v2903 = vsub.f32 %v2895, %v866
        %v2904 = vsub.f32 %v2896, %v870
        %v2905 = vsub.f32 %v2897, %v872
        %v2906 = vsub.f32 %v2898, %v876
        %v2907 = vsub.f32 %v2899, %v878
        %v2908 = vmul.f32 %v2900, %v947
        %v2909 = vmul.f32 %v2901, %v949
        %v2910 = vmul.f32 %v2902, %v953
        %v2911 = vmul.f32 %v2903, %v955
        %v2912 = vmul.f32 %v2904, %v959
        %v2913 = vmul.f32 %v2905, %v961
        %v2914 = vmul.f32 %v2906, %v965
        %v2915 = vmul.f32 %v2907, %v967
        %s2916 = scalar_lea.vmem %s299, 640
        %v2917 = vld [vmem:[%s2916] sm:$0xff]
        %v2918 = vld [vmem:[%s2916 + $0x8] sm:$0xff]
        %v2919 = vld [vmem:[%s2916 + $0x10] sm:$0xff]
        %v2920 = vld [vmem:[%s2916 + $0x18] sm:$0xff]
        %v2921 = vld [vmem:[%s2916 + $0x20] sm:$0xff]
        %v2922 = vld [vmem:[%s2916 + $0x28] sm:$0xff]
        %v2923 = vld [vmem:[%s2916 + $0x30] sm:$0xff]
        %v2924 = vld [vmem:[%s2916 + $0x38] sm:$0xff]
        %v2925 = vld [vmem:[%s2916 + $0x40] sm:$0xff]
        %v2926 = vld [vmem:[%s2916 + $0x48] sm:$0xff]
        %v2927 = vld [vmem:[%s2916 + $0x50] sm:$0xff]
        %v2928 = vld [vmem:[%s2916 + $0x58] sm:$0xff]
        %v2929 = vld [vmem:[%s2916 + $0x60] sm:$0xff]
        %v2930 = vld [vmem:[%s2916 + $0x68] sm:$0xff]
        %v2931 = vld [vmem:[%s2916 + $0x70] sm:$0xff]
        %v2932 = vld [vmem:[%s2916 + $0x78] sm:$0xff]
        %2934 = vset.pattern.permute.xlu0 0
        %2935 = vperm.xlu0 %2934, %v2917
        %v2936 = vpop.permute.xlu0 %2935
        %2939 = vset.pattern.permute.xlu0 0
        %2940 = vperm.xlu0 %2939, %v2918
        %v2941 = vpop.permute.xlu0 %2940
        %2944 = vset.pattern.permute.xlu0 0
        %2945 = vperm.xlu0 %2944, %v2919
        %v2946 = vpop.permute.xlu0 %2945
        %2949 = vset.pattern.permute.xlu0 0
        %2950 = vperm.xlu0 %2949, %v2920
        %v2951 = vpop.permute.xlu0 %2950
        %2954 = vset.pattern.permute.xlu0 0
        %2955 = vperm.xlu0 %2954, %v2921
        %v2956 = vpop.permute.xlu0 %2955
        %2959 = vset.pattern.permute.xlu0 0
        %2960 = vperm.xlu0 %2959, %v2922
        %v2961 = vpop.permute.xlu0 %2960
        %2964 = vset.pattern.permute.xlu0 0
        %2965 = vperm.xlu0 %2964, %v2923
        %v2966 = vpop.permute.xlu0 %2965
        %2969 = vset.pattern.permute.xlu0 0
        %2970 = vperm.xlu0 %2969, %v2924
        %v2971 = vpop.permute.xlu0 %2970
        %2974 = vset.pattern.permute.xlu0 0
        %2975 = vperm.xlu0 %2974, %v2925
        %v2976 = vpop.permute.xlu0 %2975
        %2979 = vset.pattern.permute.xlu0 0
        %2980 = vperm.xlu0 %2979, %v2926
        %v2981 = vpop.permute.xlu0 %2980
        %2984 = vset.pattern.permute.xlu0 0
        %2985 = vperm.xlu0 %2984, %v2927
        %v2986 = vpop.permute.xlu0 %2985
        %2989 = vset.pattern.permute.xlu0 0
        %2990 = vperm.xlu0 %2989, %v2928
        %v2991 = vpop.permute.xlu0 %2990
        %2994 = vset.pattern.permute.xlu0 0
        %2995 = vperm.xlu0 %2994, %v2929
        %v2996 = vpop.permute.xlu0 %2995
        %2999 = vset.pattern.permute.xlu0 0
        %3000 = vperm.xlu0 %2999, %v2930
        %v3001 = vpop.permute.xlu0 %3000
        %3004 = vset.pattern.permute.xlu0 0
        %3005 = vperm.xlu0 %3004, %v2931
        %v3006 = vpop.permute.xlu0 %3005
        %3009 = vset.pattern.permute.xlu0 0
        %3010 = vperm.xlu0 %3009, %v2932
        %v3011 = vpop.permute.xlu0 %3010
        %3013 = vmatprep.subr.mxu0 %v2909
        %3014 = vmatpush1.msra.mxu0 %v2908
        %3015 = vmatprep.subr.mxu0 %v2911
        %3016 = vmatpush1.msra.mxu0 %v2910
        %3017 = vmatprep.subr.mxu0 %v2913
        %3018 = vmatpush1.msra.mxu0 %v2912
        %3019 = vmatprep.subr.mxu0 %v2915
        %3020 = vmatpush1.msra.mxu0 %v2914
        %3021 = vmatprep.subr.mxu0 0.0
        %3022 = vmatpush1.msra.mxu0 0.0
        %3023 = vmatprep.subr.mxu0 0.0
        %3024 = vmatpush1.msra.mxu0 0.0
        %3025 = vmatprep.subr.mxu0 0.0
        %3026 = vmatpush1.msra.mxu0 0.0
        %3027 = vmatprep.subr.mxu0 0.0
        %3028 = vmatpush1.msra.mxu0 0.0
        %3029 = vmatprep.subr.mxu0 0.0
        %3030 = vmatpush1.msra.mxu0 0.0
        %3031 = vmatprep.subr.mxu0 0.0
        %3032 = vmatpush1.msra.mxu0 0.0
        %3033 = vmatprep.subr.mxu0 0.0
        %3034 = vmatpush1.msra.mxu0 0.0
        %3035 = vmatprep.subr.mxu0 0.0
        %3036 = vmatpush1.msra.mxu0 0.0
        %3037 = vmatprep.subr.mxu0 0.0
        %3038 = vmatpush1.msra.mxu0 0.0
        %3039 = vmatprep.subr.mxu0 0.0
        %3040 = vmatpush1.msra.mxu0 0.0
        %3041 = vmatprep.subr.mxu0 0.0
        %3042 = vmatpush1.msra.mxu0 0.0
        %3043 = vmatprep.subr.mxu0 0.0
        %3044 = vmatpush1.msra.mxu0 0.0
        %3045 = vmatprep.subr.mxu0 0.0
        %3046 = vmatpush1.msra.mxu0 0.0
        %3047 = vmatprep.subr.mxu0 0.0
        %3048 = vmatpush1.msra.mxu0 0.0
        %3049 = vmatprep.subr.mxu0 0.0
        %3050 = vmatpush1.msra.mxu0 0.0
        %3051 = vmatprep.subr.mxu0 0.0
        %3052 = vmatpush1.msra.mxu0 0.0
        %3053 = vmatprep.subr.mxu0 0.0
        %3054 = vmatpush1.msra.mxu0 0.0
        %3055 = vmatprep.subr.mxu0 0.0
        %3056 = vmatpush1.msra.mxu0 0.0
        %3057 = vmatprep.subr.mxu0 0.0
        %3058 = vmatpush1.msra.mxu0 0.0
        %3059 = vmatprep.subr.mxu0 0.0
        %3060 = vmatpush1.msra.mxu0 0.0
        %3061 = vmatprep.subr.mxu0 0.0
        %3062 = vmatpush1.msra.mxu0 0.0
        %3063 = vmatprep.subr.mxu0 0.0
        %3064 = vmatpush1.msra.mxu0 0.0
        %3065 = vmatprep.subr.mxu0 0.0
        %3066 = vmatpush1.msra.mxu0 0.0
        %3067 = vmatprep.subr.mxu0 0.0
        %3068 = vmatpush1.msra.mxu0 0.0
        %3069 = vmatprep.subr.mxu0 0.0
        %3070 = vmatpush1.msra.mxu0 0.0
        %3071 = vmatprep.subr.mxu0 0.0
        %3072 = vmatpush1.msra.mxu0 0.0
        %3073 = vmatprep.subr.mxu0 0.0
        %3074 = vmatpush1.msra.mxu0 0.0
        %3075 = vmatprep.subr.mxu0 0.0
        %3076 = vmatpush1.msra.mxu0 0.0
        %3077 = vmatprep.mubr.f32.mxu0 0.0
        %3078 = vmatmul.mubr.f32.gmra.mrb[0].mxu0 %v1099
        %v3079 = vpop.f32.mrb[0].mxu0
        %v3080 = vadd.f32 %v2936, %v3079
        %v3081 = vpop.f32.mrb[0].mxu0
        %v3082 = vadd.f32 %v2936, %v3081
        %3083 = vmatprep.mubr.f32.mxu0 0.0
        %3084 = vmatmul.mubr.f32.gmra.mrb[0].mxu0 %v1102
        %v3085 = vpop.f32.mrb[0].mxu0
        %v3086 = vadd.f32 %v2941, %v3085
        %v3087 = vpop.f32.mrb[0].mxu0
        %v3088 = vadd.f32 %v2941, %v3087
        %3089 = vmatprep.mubr.f32.mxu0 0.0
        %3090 = vmatmul.mubr.f32.gmra.mrb[0].mxu0 %v1105
        %v3091 = vpop.f32.mrb[0].mxu0
        %v3092 = vadd.f32 %v2946, %v3091
        %v3093 = vpop.f32.mrb[0].mxu0
        %v3094 = vadd.f32 %v2946, %v3093
        %3095 = vmatprep.mubr.f32.mxu0 0.0
        %3096 = vmatmul.mubr.f32.gmra.mrb[0].mxu0 %v1108
        %v3097 = vpop.f32.mrb[0].mxu0
        %v3098 = vadd.f32 %v2951, %v3097
        %v3099 = vpop.f32.mrb[0].mxu0
        %v3100 = vadd.f32 %v2951, %v3099
        %3101 = vmatprep.mubr.f32.mxu0 0.0
        %3102 = vmatmul.mubr.f32.gmra.mrb[0].mxu0 %v1111
        %v3103 = vpop.f32.mrb[0].mxu0
        %v3104 = vadd.f32 %v2956, %v3103
        %v3105 = vpop.f32.mrb[0].mxu0
        %v3106 = vadd.f32 %v2956, %v3105
        %3107 = vmatprep.mubr.f32.mxu0 0.0
        %3108 = vmatmul.mubr.f32.gmra.mrb[0].mxu0 %v1114
        %v3109 = vpop.f32.mrb[0].mxu0
        %v3110 = vadd.f32 %v2961, %v3109
        %v3111 = vpop.f32.mrb[0].mxu0
        %v3112 = vadd.f32 %v2961, %v3111
        %3113 = vmatprep.mubr.f32.mxu0 0.0
        %3114 = vmatmul.mubr.f32.gmra.mrb[0].mxu0 %v1117
        %v3115 = vpop.f32.mrb[0].mxu0
        %v3116 = vadd.f32 %v2966, %v3115
        %v3117 = vpop.f32.mrb[0].mxu0
        %v3118 = vadd.f32 %v2966, %v3117
        %3119 = vmatprep.mubr.f32.mxu0 0.0
        %3120 = vmatmul.mubr.f32.gmra.mrb[0].mxu0 %v1120
        %v3121 = vpop.f32.mrb[0].mxu0
        %v3122 = vadd.f32 %v2971, %v3121
        %v3123 = vpop.f32.mrb[0].mxu0
        %v3124 = vadd.f32 %v2971, %v3123
        %3125 = vmatprep.mubr.f32.mxu0 0.0
        %3126 = vmatmul.mubr.f32.gmra.mrb[0].mxu0 %v1123
        %v3127 = vpop.f32.mrb[0].mxu0
        %v3128 = vadd.f32 %v2976, %v3127
        %v3129 = vpop.f32.mrb[0].mxu0
        %v3130 = vadd.f32 %v2976, %v3129
        %3131 = vmatprep.mubr.f32.mxu0 0.0
        %3132 = vmatmul.mubr.f32.gmra.mrb[0].mxu0 %v1126
        %v3133 = vpop.f32.mrb[0].mxu0
        %v3134 = vadd.f32 %v2981, %v3133
        %v3135 = vpop.f32.mrb[0].mxu0
        %v3136 = vadd.f32 %v2981, %v3135
        %3137 = vmatprep.mubr.f32.mxu0 0.0
        %3138 = vmatmul.mubr.f32.gmra.mrb[0].mxu0 %v1129
        %v3139 = vpop.f32.mrb[0].mxu0
        %v3140 = vadd.f32 %v2986, %v3139
        %v3141 = vpop.f32.mrb[0].mxu0
        %v3142 = vadd.f32 %v2986, %v3141
        %3143 = vmatprep.mubr.f32.mxu0 0.0
        %3144 = vmatmul.mubr.f32.gmra.mrb[0].mxu0 %v1132
        %v3145 = vpop.f32.mrb[0].mxu0
        %v3146 = vadd.f32 %v2991, %v3145
        %v3147 = vpop.f32.mrb[0].mxu0
        %v3148 = vadd.f32 %v2991, %v3147
        %3149 = vmatprep.mubr.f32.mxu0 0.0
        %3150 = vmatmul.mubr.f32.gmra.mrb[0].mxu0 %v1135
        %v3151 = vpop.f32.mrb[0].mxu0
        %v3152 = vadd.f32 %v2996, %v3151
        %v3153 = vpop.f32.mrb[0].mxu0
        %v3154 = vadd.f32 %v2996, %v3153
        %3155 = vmatprep.mubr.f32.mxu0 0.0
        %3156 = vmatmul.mubr.f32.gmra.mrb[0].mxu0 %v1138
        %v3157 = vpop.f32.mrb[0].mxu0
        %v3158 = vadd.f32 %v3001, %v3157
        %v3159 = vpop.f32.mrb[0].mxu0
        %v3160 = vadd.f32 %v3001, %v3159
        %3161 = vmatprep.mubr.f32.mxu0 0.0
        %3162 = vmatmul.mubr.f32.gmra.mrb[0].mxu0 %v1141
        %v3163 = vpop.f32.mrb[0].mxu0
        %v3164 = vadd.f32 %v3006, %v3163
        %v3165 = vpop.f32.mrb[0].mxu0
        %v3166 = vadd.f32 %v3006, %v3165
        %3167 = vmatprep.mubr.f32.mxu0 0.0
        %3168 = vmatmul.mubr.f32.gmra.mrb[0].mxu0 %v1144
        %v3169 = vpop.f32.mrb[0].mxu0
        %v3170 = vadd.f32 %v3011, %v3169
        %v3171 = vpop.f32.mrb[0].mxu0
        %v3172 = vadd.f32 %v3011, %v3171
        %3173 = vdwg.mxu0
        %s3174 = scalar_lea.vmem [#allocation2], 640
        %3175 = vst [vmem:[%s3174] sm:$0xff] %v3080
        %3176 = vst [vmem:[%s3174 + $0x8] sm:$0xff] %v3082
        %3177 = vst [vmem:[%s3174 + $0x10] sm:$0xff] %v3086
        %3178 = vst [vmem:[%s3174 + $0x18] sm:$0xff] %v3088
        %3179 = vst [vmem:[%s3174 + $0x20] sm:$0xff] %v3092
        %3180 = vst [vmem:[%s3174 + $0x28] sm:$0xff] %v3094
        %3181 = vst [vmem:[%s3174 + $0x30] sm:$0xff] %v3098
        %3182 = vst [vmem:[%s3174 + $0x38] sm:$0xff] %v3100
        %3183 = vst [vmem:[%s3174 + $0x40] sm:$0xff] %v3104
        %3184 = vst [vmem:[%s3174 + $0x48] sm:$0xff] %v3106
        %3185 = vst [vmem:[%s3174 + $0x50] sm:$0xff] %v3110
        %3186 = vst [vmem:[%s3174 + $0x58] sm:$0xff] %v3112
        %3187 = vst [vmem:[%s3174 + $0x60] sm:$0xff] %v3116
        %3188 = vst [vmem:[%s3174 + $0x68] sm:$0xff] %v3118
        %3189 = vst [vmem:[%s3174 + $0x70] sm:$0xff] %v3122
        %3190 = vst [vmem:[%s3174 + $0x78] sm:$0xff] %v3124
        %3191 = vmatprep.subr.mxu0 %v3130
        %3192 = vmatpush1.msra.mxu0 %v3128
        %3193 = vmatprep.subr.mxu0 %v3136
        %3194 = vmatpush1.msra.mxu0 %v3134
        %3195 = vmatprep.subr.mxu0 %v3142
        %3196 = vmatpush1.msra.mxu0 %v3140
        %3197 = vmatprep.subr.mxu0 %v3148
        %3198 = vmatpush1.msra.mxu0 %v3146
        %3199 = vmatprep.subr.mxu0 %v3154
        %3200 = vmatpush1.msra.mxu0 %v3152
        %3201 = vmatprep.subr.mxu0 %v3160
        %3202 = vmatpush1.msra.mxu0 %v3158
        %3203 = vmatprep.subr.mxu0 %v3166
        %3204 = vmatpush1.msra.mxu0 %v3164
        %3205 = vmatprep.subr.mxu0 %v3172
        %3206 = vmatpush1.msra.mxu0 %v3170
        %3207 = vmatprep.subr.mxu0 0.0
        %3208 = vmatpush1.msra.mxu0 0.0
        %3209 = vmatprep.subr.mxu0 0.0
        %3210 = vmatpush1.msra.mxu0 0.0
        %3211 = vmatprep.subr.mxu0 0.0
        %3212 = vmatpush1.msra.mxu0 0.0
        %3213 = vmatprep.subr.mxu0 0.0
        %3214 = vmatpush1.msra.mxu0 0.0
        %3215 = vmatprep.subr.mxu0 0.0
        %3216 = vmatpush1.msra.mxu0 0.0
        %3217 = vmatprep.subr.mxu0 0.0
        %3218 = vmatpush1.msra.mxu0 0.0
        %3219 = vmatprep.subr.mxu0 0.0
        %3220 = vmatpush1.msra.mxu0 0.0
        %3221 = vmatprep.subr.mxu0 0.0
        %3222 = vmatpush1.msra.mxu0 0.0
        %3223 = vmatprep.subr.mxu0 0.0
        %3224 = vmatpush1.msra.mxu0 0.0
        %3225 = vmatprep.subr.mxu0 0.0
        %3226 = vmatpush1.msra.mxu0 0.0
        %3227 = vmatprep.subr.mxu0 0.0
        %3228 = vmatpush1.msra.mxu0 0.0
        %3229 = vmatprep.subr.mxu0 0.0
        %3230 = vmatpush1.msra.mxu0 0.0
        %3231 = vmatprep.subr.mxu0 0.0
        %3232 = vmatpush1.msra.mxu0 0.0
        %3233 = vmatprep.subr.mxu0 0.0
        %3234 = vmatpush1.msra.mxu0 0.0
        %3235 = vmatprep.subr.mxu0 0.0
        %3236 = vmatpush1.msra.mxu0 0.0
        %3237 = vmatprep.subr.mxu0 0.0
        %3238 = vmatpush1.msra.mxu0 0.0
        %3239 = vmatprep.subr.mxu0 0.0
        %3240 = vmatpush1.msra.mxu0 0.0
        %3241 = vmatprep.subr.mxu0 0.0
        %3242 = vmatpush1.msra.mxu0 0.0
        %3243 = vmatprep.subr.mxu0 0.0
        %3244 = vmatpush1.msra.mxu0 0.0
        %3245 = vmatprep.subr.mxu0 0.0
        %3246 = vmatpush1.msra.mxu0 0.0
        %3247 = vmatprep.subr.mxu0 0.0
        %3248 = vmatpush1.msra.mxu0 0.0
        %3249 = vmatprep.subr.mxu0 0.0
        %3250 = vmatpush1.msra.mxu0 0.0
        %3251 = vmatprep.subr.mxu0 0.0
        %3252 = vmatpush1.msra.mxu0 0.0
        %3253 = vmatprep.subr.mxu0 0.0
        %3254 = vmatpush1.msra.mxu0 0.0
        %3255 = vmatprep.mubr.f32.mxu0 0.0
        %3256 = vmatmul.mubr.f32.gmra.mrb[0].mxu0 %v1325
        %v3257 = vpop.f32.mrb[0].mxu0
        %v3258 = vadd.f32 0.0, %v3257
        %v3259 = vpop.f32.mrb[0].mxu0
        %v3260 = vadd.f32 0.0, %v3259
        %3261 = vdwg.mxu0
        %s3262 = scalar_lea.vmem [#allocation3], 80
        %3263 = vst [vmem:[%s3262] sm:$0xff] %v3258
        %3264 = vst [vmem:[%s3262 + $0x8] sm:$0xff] %v3260
        %v3265 = vld [vmem:[%s553] sm:$0xff]
        %v3266 = vld [vmem:[%s553 + $0x8] sm:$0xff]
        %v3267 = vld [vmem:[%s553 + $0x10] sm:$0xff]
        %v3268 = vld [vmem:[%s553 + $0x18] sm:$0xff]
        %v3269 = vld [vmem:[%s553 + $0x20] sm:$0xff]
        %v3270 = vld [vmem:[%s553 + $0x28] sm:$0xff]
        %v3271 = vld [vmem:[%s553 + $0x30] sm:$0xff]
        %v3272 = vld [vmem:[%s553 + $0x38] sm:$0xff]
        %v3273 = vsub.f32 %v3265, %v858
        %v3274 = vsub.f32 %v3266, %v860
        %v3275 = vsub.f32 %v3267, %v864
        %v3276 = vsub.f32 %v3268, %v866
        %v3277 = vsub.f32 %v3269, %v870
        %v3278 = vsub.f32 %v3270, %v872
        %v3279 = vsub.f32 %v3271, %v876
        %v3280 = vsub.f32 %v3272, %v878
        %v3281 = vmul.f32 %v3273, %v947
        %v3282 = vmul.f32 %v3274, %v949
        %v3283 = vmul.f32 %v3275, %v953
        %v3284 = vmul.f32 %v3276, %v955
        %v3285 = vmul.f32 %v3277, %v959
        %v3286 = vmul.f32 %v3278, %v961
        %v3287 = vmul.f32 %v3279, %v965
        %v3288 = vmul.f32 %v3280, %v967
        %s3289 = scalar_lea.vmem %s299, 768
        %v3290 = vld [vmem:[%s3289] sm:$0xff]
        %v3291 = vld [vmem:[%s3289 + $0x8] sm:$0xff]
        %v3292 = vld [vmem:[%s3289 + $0x10] sm:$0xff]
        %v3293 = vld [vmem:[%s3289 + $0x18] sm:$0xff]
        %v3294 = vld [vmem:[%s3289 + $0x20] sm:$0xff]
        %v3295 = vld [vmem:[%s3289 + $0x28] sm:$0xff]
        %v3296 = vld [vmem:[%s3289 + $0x30] sm:$0xff]
        %v3297 = vld [vmem:[%s3289 + $0x38] sm:$0xff]
        %v3298 = vld [vmem:[%s3289 + $0x40] sm:$0xff]
        %v3299 = vld [vmem:[%s3289 + $0x48] sm:$0xff]
        %v3300 = vld [vmem:[%s3289 + $0x50] sm:$0xff]
        %v3301 = vld [vmem:[%s3289 + $0x58] sm:$0xff]
        %v3302 = vld [vmem:[%s3289 + $0x60] sm:$0xff]
        %v3303 = vld [vmem:[%s3289 + $0x68] sm:$0xff]
        %v3304 = vld [vmem:[%s3289 + $0x70] sm:$0xff]
        %v3305 = vld [vmem:[%s3289 + $0x78] sm:$0xff]
        %3307 = vset.pattern.permute.xlu0 0
        %3308 = vperm.xlu0 %3307, %v3290
        %v3309 = vpop.permute.xlu0 %3308
        %3312 = vset.pattern.permute.xlu0 0
        %3313 = vperm.xlu0 %3312, %v3291
        %v3314 = vpop.permute.xlu0 %3313
        %3317 = vset.pattern.permute.xlu0 0
        %3318 = vperm.xlu0 %3317, %v3292
        %v3319 = vpop.permute.xlu0 %3318
        %3322 = vset.pattern.permute.xlu0 0
        %3323 = vperm.xlu0 %3322, %v3293
        %v3324 = vpop.permute.xlu0 %3323
        %3327 = vset.pattern.permute.xlu0 0
        %3328 = vperm.xlu0 %3327, %v3294
        %v3329 = vpop.permute.xlu0 %3328
        %3332 = vset.pattern.permute.xlu0 0
        %3333 = vperm.xlu0 %3332, %v3295
        %v3334 = vpop.permute.xlu0 %3333
        %3337 = vset.pattern.permute.xlu0 0
        %3338 = vperm.xlu0 %3337, %v3296
        %v3339 = vpop.permute.xlu0 %3338
        %3342 = vset.pattern.permute.xlu0 0
        %3343 = vperm.xlu0 %3342, %v3297
        %v3344 = vpop.permute.xlu0 %3343
        %3347 = vset.pattern.permute.xlu0 0
        %3348 = vperm.xlu0 %3347, %v3298
        %v3349 = vpop.permute.xlu0 %3348
        %3352 = vset.pattern.permute.xlu0 0
        %3353 = vperm.xlu0 %3352, %v3299
        %v3354 = vpop.permute.xlu0 %3353
        %3357 = vset.pattern.permute.xlu0 0
        %3358 = vperm.xlu0 %3357, %v3300
        %v3359 = vpop.permute.xlu0 %3358
        %3362 = vset.pattern.permute.xlu0 0
        %3363 = vperm.xlu0 %3362, %v3301
        %v3364 = vpop.permute.xlu0 %3363
        %3367 = vset.pattern.permute.xlu0 0
        %3368 = vperm.xlu0 %3367, %v3302
        %v3369 = vpop.permute.xlu0 %3368
        %3372 = vset.pattern.permute.xlu0 0
        %3373 = vperm.xlu0 %3372, %v3303
        %v3374 = vpop.permute.xlu0 %3373
        %3377 = vset.pattern.permute.xlu0 0
        %3378 = vperm.xlu0 %3377, %v3304
        %v3379 = vpop.permute.xlu0 %3378
        %3382 = vset.pattern.permute.xlu0 0
        %3383 = vperm.xlu0 %3382, %v3305
        %v3384 = vpop.permute.xlu0 %3383
        %3386 = vmatprep.subr.mxu0 %v3282
        %3387 = vmatpush1.msra.mxu0 %v3281
        %3388 = vmatprep.subr.mxu0 %v3284
        %3389 = vmatpush1.msra.mxu0 %v3283
        %3390 = vmatprep.subr.mxu0 %v3286
        %3391 = vmatpush1.msra.mxu0 %v3285
        %3392 = vmatprep.subr.mxu0 %v3288
        %3393 = vmatpush1.msra.mxu0 %v3287
        %3394 = vmatprep.subr.mxu0 0.0
        %3395 = vmatpush1.msra.mxu0 0.0
        %3396 = vmatprep.subr.mxu0 0.0
        %3397 = vmatpush1.msra.mxu0 0.0
        %3398 = vmatprep.subr.mxu0 0.0
        %3399 = vmatpush1.msra.mxu0 0.0
        %3400 = vmatprep.subr.mxu0 0.0
        %3401 = vmatpush1.msra.mxu0 0.0
        %3402 = vmatprep.subr.mxu0 0.0
        %3403 = vmatpush1.msra.mxu0 0.0
        %3404 = vmatprep.subr.mxu0 0.0
        %3405 = vmatpush1.msra.mxu0 0.0
        %3406 = vmatprep.subr.mxu0 0.0
        %3407 = vmatpush1.msra.mxu0 0.0
        %3408 = vmatprep.subr.mxu0 0.0
        %3409 = vmatpush1.msra.mxu0 0.0
        %3410 = vmatprep.subr.mxu0 0.0
        %3411 = vmatpush1.msra.mxu0 0.0
        %3412 = vmatprep.subr.mxu0 0.0
        %3413 = vmatpush1.msra.mxu0 0.0
        %3414 = vmatprep.subr.mxu0 0.0
        %3415 = vmatpush1.msra.mxu0 0.0
        %3416 = vmatprep.subr.mxu0 0.0
        %3417 = vmatpush1.msra.mxu0 0.0
        %3418 = vmatprep.subr.mxu0 0.0
        %3419 = vmatpush1.msra.mxu0 0.0
        %3420 = vmatprep.subr.mxu0 0.0
        %3421 = vmatpush1.msra.mxu0 0.0
        %3422 = vmatprep.subr.mxu0 0.0
        %3423 = vmatpush1.msra.mxu0 0.0
        %3424 = vmatprep.subr.mxu0 0.0
        %3425 = vmatpush1.msra.mxu0 0.0
        %3426 = vmatprep.subr.mxu0 0.0
        %3427 = vmatpush1.msra.mxu0 0.0
        %3428 = vmatprep.subr.mxu0 0.0
        %3429 = vmatpush1.msra.mxu0 0.0
        %3430 = vmatprep.subr.mxu0 0.0
        %3431 = vmatpush1.msra.mxu0 0.0
        %3432 = vmatprep.subr.mxu0 0.0
        %3433 = vmatpush1.msra.mxu0 0.0
        %3434 = vmatprep.subr.mxu0 0.0
        %3435 = vmatpush1.msra.mxu0 0.0
        %3436 = vmatprep.subr.mxu0 0.0
        %3437 = vmatpush1.msra.mxu0 0.0
        %3438 = vmatprep.subr.mxu0 0.0
        %3439 = vmatpush1.msra.mxu0 0.0
        %3440 = vmatprep.subr.mxu0 0.0
        %3441 = vmatpush1.msra.mxu0 0.0
        %3442 = vmatprep.subr.mxu0 0.0
        %3443 = vmatpush1.msra.mxu0 0.0
        %3444 = vmatprep.subr.mxu0 0.0
        %3445 = vmatpush1.msra.mxu0 0.0
        %3446 = vmatprep.subr.mxu0 0.0
        %3447 = vmatpush1.msra.mxu0 0.0
        %3448 = vmatprep.subr.mxu0 0.0
        %3449 = vmatpush1.msra.mxu0 0.0
        %3450 = vmatprep.mubr.f32.mxu0 0.0
        %3451 = vmatmul.mubr.f32.gmra.mrb[0].mxu0 %v1099
        %v3452 = vpop.f32.mrb[0].mxu0
        %v3453 = vadd.f32 %v3309, %v3452
        %v3454 = vpop.f32.mrb[0].mxu0
        %v3455 = vadd.f32 %v3309, %v3454
        %3456 = vmatprep.mubr.f32.mxu0 0.0
        %3457 = vmatmul.mubr.f32.gmra.mrb[0].mxu0 %v1102
        %v3458 = vpop.f32.mrb[0].mxu0
        %v3459 = vadd.f32 %v3314, %v3458
        %v3460 = vpop.f32.mrb[0].mxu0
        %v3461 = vadd.f32 %v3314, %v3460
        %3462 = vmatprep.mubr.f32.mxu0 0.0
        %3463 = vmatmul.mubr.f32.gmra.mrb[0].mxu0 %v1105
        %v3464 = vpop.f32.mrb[0].mxu0
        %v3465 = vadd.f32 %v3319, %v3464
        %v3466 = vpop.f32.mrb[0].mxu0
        %v3467 = vadd.f32 %v3319, %v3466
        %3468 = vmatprep.mubr.f32.mxu0 0.0
        %3469 = vmatmul.mubr.f32.gmra.mrb[0].mxu0 %v1108
        %v3470 = vpop.f32.mrb[0].mxu0
        %v3471 = vadd.f32 %v3324, %v3470
        %v3472 = vpop.f32.mrb[0].mxu0
        %v3473 = vadd.f32 %v3324, %v3472
        %3474 = vmatprep.mubr.f32.mxu0 0.0
        %3475 = vmatmul.mubr.f32.gmra.mrb[0].mxu0 %v1111
        %v3476 = vpop.f32.mrb[0].mxu0
        %v3477 = vadd.f32 %v3329, %v3476
        %v3478 = vpop.f32.mrb[0].mxu0
        %v3479 = vadd.f32 %v3329, %v3478
        %3480 = vmatprep.mubr.f32.mxu0 0.0
        %3481 = vmatmul.mubr.f32.gmra.mrb[0].mxu0 %v1114
        %v3482 = vpop.f32.mrb[0].mxu0
        %v3483 = vadd.f32 %v3334, %v3482
        %v3484 = vpop.f32.mrb[0].mxu0
        %v3485 = vadd.f32 %v3334, %v3484
        %3486 = vmatprep.mubr.f32.mxu0 0.0
        %3487 = vmatmul.mubr.f32.gmra.mrb[0].mxu0 %v1117
        %v3488 = vpop.f32.mrb[0].mxu0
        %v3489 = vadd.f32 %v3339, %v3488
        %v3490 = vpop.f32.mrb[0].mxu0
        %v3491 = vadd.f32 %v3339, %v3490
        %3492 = vmatprep.mubr.f32.mxu0 0.0
        %3493 = vmatmul.mubr.f32.gmra.mrb[0].mxu0 %v1120
        %v3494 = vpop.f32.mrb[0].mxu0
        %v3495 = vadd.f32 %v3344, %v3494
        %v3496 = vpop.f32.mrb[0].mxu0
        %v3497 = vadd.f32 %v3344, %v3496
        %3498 = vmatprep.mubr.f32.mxu0 0.0
        %3499 = vmatmul.mubr.f32.gmra.mrb[0].mxu0 %v1123
        %v3500 = vpop.f32.mrb[0].mxu0
        %v3501 = vadd.f32 %v3349, %v3500
        %v3502 = vpop.f32.mrb[0].mxu0
        %v3503 = vadd.f32 %v3349, %v3502
        %3504 = vmatprep.mubr.f32.mxu0 0.0
        %3505 = vmatmul.mubr.f32.gmra.mrb[0].mxu0 %v1126
        %v3506 = vpop.f32.mrb[0].mxu0
        %v3507 = vadd.f32 %v3354, %v3506
        %v3508 = vpop.f32.mrb[0].mxu0
        %v3509 = vadd.f32 %v3354, %v3508
        %3510 = vmatprep.mubr.f32.mxu0 0.0
        %3511 = vmatmul.mubr.f32.gmra.mrb[0].mxu0 %v1129
        %v3512 = vpop.f32.mrb[0].mxu0
        %v3513 = vadd.f32 %v3359, %v3512
        %v3514 = vpop.f32.mrb[0].mxu0
        %v3515 = vadd.f32 %v3359, %v3514
        %3516 = vmatprep.mubr.f32.mxu0 0.0
        %3517 = vmatmul.mubr.f32.gmra.mrb[0].mxu0 %v1132
        %v3518 = vpop.f32.mrb[0].mxu0
        %v3519 = vadd.f32 %v3364, %v3518
        %v3520 = vpop.f32.mrb[0].mxu0
        %v3521 = vadd.f32 %v3364, %v3520
        %3522 = vmatprep.mubr.f32.mxu0 0.0
        %3523 = vmatmul.mubr.f32.gmra.mrb[0].mxu0 %v1135
        %v3524 = vpop.f32.mrb[0].mxu0
        %v3525 = vadd.f32 %v3369, %v3524
        %v3526 = vpop.f32.mrb[0].mxu0
        %v3527 = vadd.f32 %v3369, %v3526
        %3528 = vmatprep.mubr.f32.mxu0 0.0
        %3529 = vmatmul.mubr.f32.gmra.mrb[0].mxu0 %v1138
        %v3530 = vpop.f32.mrb[0].mxu0
        %v3531 = vadd.f32 %v3374, %v3530
        %v3532 = vpop.f32.mrb[0].mxu0
        %v3533 = vadd.f32 %v3374, %v3532
        %3534 = vmatprep.mubr.f32.mxu0 0.0
        %3535 = vmatmul.mubr.f32.gmra.mrb[0].mxu0 %v1141
        %v3536 = vpop.f32.mrb[0].mxu0
        %v3537 = vadd.f32 %v3379, %v3536
        %v3538 = vpop.f32.mrb[0].mxu0
        %v3539 = vadd.f32 %v3379, %v3538
        %3540 = vmatprep.mubr.f32.mxu0 0.0
        %3541 = vmatmul.mubr.f32.gmra.mrb[0].mxu0 %v1144
        %v3542 = vpop.f32.mrb[0].mxu0
        %v3543 = vadd.f32 %v3384, %v3542
        %v3544 = vpop.f32.mrb[0].mxu0
        %v3545 = vadd.f32 %v3384, %v3544
        %3546 = vdwg.mxu0
        %s3547 = scalar_lea.vmem [#allocation2], 768
        %3548 = vst [vmem:[%s3547] sm:$0xff] %v3453
        %3549 = vst [vmem:[%s3547 + $0x8] sm:$0xff] %v3455
        %3550 = vst [vmem:[%s3547 + $0x10] sm:$0xff] %v3459
        %3551 = vst [vmem:[%s3547 + $0x18] sm:$0xff] %v3461
        %3552 = vst [vmem:[%s3547 + $0x20] sm:$0xff] %v3465
        %3553 = vst [vmem:[%s3547 + $0x28] sm:$0xff] %v3467
        %3554 = vst [vmem:[%s3547 + $0x30] sm:$0xff] %v3471
        %3555 = vst [vmem:[%s3547 + $0x38] sm:$0xff] %v3473
        %3556 = vst [vmem:[%s3547 + $0x40] sm:$0xff] %v3477
        %3557 = vst [vmem:[%s3547 + $0x48] sm:$0xff] %v3479
        %3558 = vst [vmem:[%s3547 + $0x50] sm:$0xff] %v3483
        %3559 = vst [vmem:[%s3547 + $0x58] sm:$0xff] %v3485
        %3560 = vst [vmem:[%s3547 + $0x60] sm:$0xff] %v3489
        %3561 = vst [vmem:[%s3547 + $0x68] sm:$0xff] %v3491
        %3562 = vst [vmem:[%s3547 + $0x70] sm:$0xff] %v3495
        %3563 = vst [vmem:[%s3547 + $0x78] sm:$0xff] %v3497
        %3564 = vmatprep.subr.mxu0 %v3503
        %3565 = vmatpush1.msra.mxu0 %v3501
        %3566 = vmatprep.subr.mxu0 %v3509
        %3567 = vmatpush1.msra.mxu0 %v3507
        %3568 = vmatprep.subr.mxu0 %v3515
        %3569 = vmatpush1.msra.mxu0 %v3513
        %3570 = vmatprep.subr.mxu0 %v3521
        %3571 = vmatpush1.msra.mxu0 %v3519
        %3572 = vmatprep.subr.mxu0 %v3527
        %3573 = vmatpush1.msra.mxu0 %v3525
        %3574 = vmatprep.subr.mxu0 %v3533
        %3575 = vmatpush1.msra.mxu0 %v3531
        %3576 = vmatprep.subr.mxu0 %v3539
        %3577 = vmatpush1.msra.mxu0 %v3537
        %3578 = vmatprep.subr.mxu0 %v3545
        %3579 = vmatpush1.msra.mxu0 %v3543
        %3580 = vmatprep.subr.mxu0 0.0
        %3581 = vmatpush1.msra.mxu0 0.0
        %3582 = vmatprep.subr.mxu0 0.0
        %3583 = vmatpush1.msra.mxu0 0.0
        %3584 = vmatprep.subr.mxu0 0.0
        %3585 = vmatpush1.msra.mxu0 0.0
        %3586 = vmatprep.subr.mxu0 0.0
        %3587 = vmatpush1.msra.mxu0 0.0
        %3588 = vmatprep.subr.mxu0 0.0
        %3589 = vmatpush1.msra.mxu0 0.0
        %3590 = vmatprep.subr.mxu0 0.0
        %3591 = vmatpush1.msra.mxu0 0.0
        %3592 = vmatprep.subr.mxu0 0.0
        %3593 = vmatpush1.msra.mxu0 0.0
        %3594 = vmatprep.subr.mxu0 0.0
        %3595 = vmatpush1.msra.mxu0 0.0
        %3596 = vmatprep.subr.mxu0 0.0
        %3597 = vmatpush1.msra.mxu0 0.0
        %3598 = vmatprep.subr.mxu0 0.0
        %3599 = vmatpush1.msra.mxu0 0.0
        %3600 = vmatprep.subr.mxu0 0.0
        %3601 = vmatpush1.msra.mxu0 0.0
        %3602 = vmatprep.subr.mxu0 0.0
        %3603 = vmatpush1.msra.mxu0 0.0
        %3604 = vmatprep.subr.mxu0 0.0
        %3605 = vmatpush1.msra.mxu0 0.0
        %3606 = vmatprep.subr.mxu0 0.0
        %3607 = vmatpush1.msra.mxu0 0.0
        %3608 = vmatprep.subr.mxu0 0.0
        %3609 = vmatpush1.msra.mxu0 0.0
        %3610 = vmatprep.subr.mxu0 0.0
        %3611 = vmatpush1.msra.mxu0 0.0
        %3612 = vmatprep.subr.mxu0 0.0
        %3613 = vmatpush1.msra.mxu0 0.0
        %3614 = vmatprep.subr.mxu0 0.0
        %3615 = vmatpush1.msra.mxu0 0.0
        %3616 = vmatprep.subr.mxu0 0.0
        %3617 = vmatpush1.msra.mxu0 0.0
        %3618 = vmatprep.subr.mxu0 0.0
        %3619 = vmatpush1.msra.mxu0 0.0
        %3620 = vmatprep.subr.mxu0 0.0
        %3621 = vmatpush1.msra.mxu0 0.0
        %3622 = vmatprep.subr.mxu0 0.0
        %3623 = vmatpush1.msra.mxu0 0.0
        %3624 = vmatprep.subr.mxu0 0.0
        %3625 = vmatpush1.msra.mxu0 0.0
        %3626 = vmatprep.subr.mxu0 0.0
        %3627 = vmatpush1.msra.mxu0 0.0
        %3628 = vmatprep.mubr.f32.mxu0 0.0
        %3629 = vmatmul.mubr.f32.gmra.mrb[0].mxu0 %v1325
        %v3630 = vpop.f32.mrb[0].mxu0
        %v3631 = vadd.f32 0.0, %v3630
        %v3632 = vpop.f32.mrb[0].mxu0
        %v3633 = vadd.f32 0.0, %v3632
        %3634 = vdwg.mxu0
        %s3635 = scalar_lea.vmem [#allocation3], 96
        %3636 = vst [vmem:[%s3635] sm:$0xff] %v3631
        %3637 = vst [vmem:[%s3635 + $0x8] sm:$0xff] %v3633
        %v3638 = vld [vmem:[%s586] sm:$0xff]
        %v3639 = vld [vmem:[%s586 + $0x8] sm:$0xff]
        %v3640 = vld [vmem:[%s586 + $0x10] sm:$0xff]
        %v3641 = vld [vmem:[%s586 + $0x18] sm:$0xff]
        %v3642 = vld [vmem:[%s586 + $0x20] sm:$0xff]
        %v3643 = vld [vmem:[%s586 + $0x28] sm:$0xff]
        %v3644 = vld [vmem:[%s586 + $0x30] sm:$0xff]
        %v3645 = vld [vmem:[%s586 + $0x38] sm:$0xff]
        %v3646 = vsub.f32 %v3638, %v858
        %v3647 = vsub.f32 %v3639, %v860
        %v3648 = vsub.f32 %v3640, %v864
        %v3649 = vsub.f32 %v3641, %v866
        %v3650 = vsub.f32 %v3642, %v870
        %v3651 = vsub.f32 %v3643, %v872
        %v3652 = vsub.f32 %v3644, %v876
        %v3653 = vsub.f32 %v3645, %v878
        %v3654 = vmul.f32 %v3646, %v947
        %v3655 = vmul.f32 %v3647, %v949
        %v3656 = vmul.f32 %v3648, %v953
        %v3657 = vmul.f32 %v3649, %v955
        %v3658 = vmul.f32 %v3650, %v959
        %v3659 = vmul.f32 %v3651, %v961
        %v3660 = vmul.f32 %v3652, %v965
        %v3661 = vmul.f32 %v3653, %v967
        %s3662 = scalar_lea.vmem %s299, 896
        %v3663 = vld [vmem:[%s3662] sm:$0xff]
        %v3664 = vld [vmem:[%s3662 + $0x8] sm:$0xff]
        %v3665 = vld [vmem:[%s3662 + $0x10] sm:$0xff]
        %v3666 = vld [vmem:[%s3662 + $0x18] sm:$0xff]
        %v3667 = vld [vmem:[%s3662 + $0x20] sm:$0xff]
        %v3668 = vld [vmem:[%s3662 + $0x28] sm:$0xff]
        %v3669 = vld [vmem:[%s3662 + $0x30] sm:$0xff]
        %v3670 = vld [vmem:[%s3662 + $0x38] sm:$0xff]
        %v3671 = vld [vmem:[%s3662 + $0x40] sm:$0xff]
        %v3672 = vld [vmem:[%s3662 + $0x48] sm:$0xff]
        %v3673 = vld [vmem:[%s3662 + $0x50] sm:$0xff]
        %v3674 = vld [vmem:[%s3662 + $0x58] sm:$0xff]
        %v3675 = vld [vmem:[%s3662 + $0x60] sm:$0xff]
        %v3676 = vld [vmem:[%s3662 + $0x68] sm:$0xff]
        %v3677 = vld [vmem:[%s3662 + $0x70] sm:$0xff]
        %v3678 = vld [vmem:[%s3662 + $0x78] sm:$0xff]
        %3680 = vset.pattern.permute.xlu0 0
        %3681 = vperm.xlu0 %3680, %v3663
        %v3682 = vpop.permute.xlu0 %3681
        %3685 = vset.pattern.permute.xlu0 0
        %3686 = vperm.xlu0 %3685, %v3664
        %v3687 = vpop.permute.xlu0 %3686
        %3690 = vset.pattern.permute.xlu0 0
        %3691 = vperm.xlu0 %3690, %v3665
        %v3692 = vpop.permute.xlu0 %3691
        %3695 = vset.pattern.permute.xlu0 0
        %3696 = vperm.xlu0 %3695, %v3666
        %v3697 = vpop.permute.xlu0 %3696
        %3700 = vset.pattern.permute.xlu0 0
        %3701 = vperm.xlu0 %3700, %v3667
        %v3702 = vpop.permute.xlu0 %3701
        %3705 = vset.pattern.permute.xlu0 0
        %3706 = vperm.xlu0 %3705, %v3668
        %v3707 = vpop.permute.xlu0 %3706
        %3710 = vset.pattern.permute.xlu0 0
        %3711 = vperm.xlu0 %3710, %v3669
        %v3712 = vpop.permute.xlu0 %3711
        %3715 = vset.pattern.permute.xlu0 0
        %3716 = vperm.xlu0 %3715, %v3670
        %v3717 = vpop.permute.xlu0 %3716
        %3720 = vset.pattern.permute.xlu0 0
        %3721 = vperm.xlu0 %3720, %v3671
        %v3722 = vpop.permute.xlu0 %3721
        %3725 = vset.pattern.permute.xlu0 0
        %3726 = vperm.xlu0 %3725, %v3672
        %v3727 = vpop.permute.xlu0 %3726
        %3730 = vset.pattern.permute.xlu0 0
        %3731 = vperm.xlu0 %3730, %v3673
        %v3732 = vpop.permute.xlu0 %3731
        %3735 = vset.pattern.permute.xlu0 0
        %3736 = vperm.xlu0 %3735, %v3674
        %v3737 = vpop.permute.xlu0 %3736
        %3740 = vset.pattern.permute.xlu0 0
        %3741 = vperm.xlu0 %3740, %v3675
        %v3742 = vpop.permute.xlu0 %3741
        %3745 = vset.pattern.permute.xlu0 0
        %3746 = vperm.xlu0 %3745, %v3676
        %v3747 = vpop.permute.xlu0 %3746
        %3750 = vset.pattern.permute.xlu0 0
        %3751 = vperm.xlu0 %3750, %v3677
        %v3752 = vpop.permute.xlu0 %3751
        %3755 = vset.pattern.permute.xlu0 0
        %3756 = vperm.xlu0 %3755, %v3678
        %v3757 = vpop.permute.xlu0 %3756
        %3759 = vmatprep.subr.mxu0 %v3655
        %3760 = vmatpush1.msra.mxu0 %v3654
        %3761 = vmatprep.subr.mxu0 %v3657
        %3762 = vmatpush1.msra.mxu0 %v3656
        %3763 = vmatprep.subr.mxu0 %v3659
        %3764 = vmatpush1.msra.mxu0 %v3658
        %3765 = vmatprep.subr.mxu0 %v3661
        %3766 = vmatpush1.msra.mxu0 %v3660
        %3767 = vmatprep.subr.mxu0 0.0
        %3768 = vmatpush1.msra.mxu0 0.0
        %3769 = vmatprep.subr.mxu0 0.0
        %3770 = vmatpush1.msra.mxu0 0.0
        %3771 = vmatprep.subr.mxu0 0.0
        %3772 = vmatpush1.msra.mxu0 0.0
        %3773 = vmatprep.subr.mxu0 0.0
        %3774 = vmatpush1.msra.mxu0 0.0
        %3775 = vmatprep.subr.mxu0 0.0
        %3776 = vmatpush1.msra.mxu0 0.0
        %3777 = vmatprep.subr.mxu0 0.0
        %3778 = vmatpush1.msra.mxu0 0.0
        %3779 = vmatprep.subr.mxu0 0.0
        %3780 = vmatpush1.msra.mxu0 0.0
        %3781 = vmatprep.subr.mxu0 0.0
        %3782 = vmatpush1.msra.mxu0 0.0
        %3783 = vmatprep.subr.mxu0 0.0
        %3784 = vmatpush1.msra.mxu0 0.0
        %3785 = vmatprep.subr.mxu0 0.0
        %3786 = vmatpush1.msra.mxu0 0.0
        %3787 = vmatprep.subr.mxu0 0.0
        %3788 = vmatpush1.msra.mxu0 0.0
        %3789 = vmatprep.subr.mxu0 0.0
        %3790 = vmatpush1.msra.mxu0 0.0
        %3791 = vmatprep.subr.mxu0 0.0
        %3792 = vmatpush1.msra.mxu0 0.0
        %3793 = vmatprep.subr.mxu0 0.0
        %3794 = vmatpush1.msra.mxu0 0.0
        %3795 = vmatprep.subr.mxu0 0.0
        %3796 = vmatpush1.msra.mxu0 0.0
        %3797 = vmatprep.subr.mxu0 0.0
        %3798 = vmatpush1.msra.mxu0 0.0
        %3799 = vmatprep.subr.mxu0 0.0
        %3800 = vmatpush1.msra.mxu0 0.0
        %3801 = vmatprep.subr.mxu0 0.0
        %3802 = vmatpush1.msra.mxu0 0.0
        %3803 = vmatprep.subr.mxu0 0.0
        %3804 = vmatpush1.msra.mxu0 0.0
        %3805 = vmatprep.subr.mxu0 0.0
        %3806 = vmatpush1.msra.mxu0 0.0
        %3807 = vmatprep.subr.mxu0 0.0
        %3808 = vmatpush1.msra.mxu0 0.0
        %3809 = vmatprep.subr.mxu0 0.0
        %3810 = vmatpush1.msra.mxu0 0.0
        %3811 = vmatprep.subr.mxu0 0.0
        %3812 = vmatpush1.msra.mxu0 0.0
        %3813 = vmatprep.subr.mxu0 0.0
        %3814 = vmatpush1.msra.mxu0 0.0
        %3815 = vmatprep.subr.mxu0 0.0
        %3816 = vmatpush1.msra.mxu0 0.0
        %3817 = vmatprep.subr.mxu0 0.0
        %3818 = vmatpush1.msra.mxu0 0.0
        %3819 = vmatprep.subr.mxu0 0.0
        %3820 = vmatpush1.msra.mxu0 0.0
        %3821 = vmatprep.subr.mxu0 0.0
        %3822 = vmatpush1.msra.mxu0 0.0
        %3823 = vmatprep.mubr.f32.mxu0 0.0
        %3824 = vmatmul.mubr.f32.gmra.mrb[0].mxu0 %v1099
        %v3825 = vpop.f32.mrb[0].mxu0
        %v3826 = vadd.f32 %v3682, %v3825
        %v3827 = vpop.f32.mrb[0].mxu0
        %v3828 = vadd.f32 %v3682, %v3827
        %3829 = vmatprep.mubr.f32.mxu0 0.0
        %3830 = vmatmul.mubr.f32.gmra.mrb[0].mxu0 %v1102
        %v3831 = vpop.f32.mrb[0].mxu0
        %v3832 = vadd.f32 %v3687, %v3831
        %v3833 = vpop.f32.mrb[0].mxu0
        %v3834 = vadd.f32 %v3687, %v3833
        %3835 = vmatprep.mubr.f32.mxu0 0.0
        %3836 = vmatmul.mubr.f32.gmra.mrb[0].mxu0 %v1105
        %v3837 = vpop.f32.mrb[0].mxu0
        %v3838 = vadd.f32 %v3692, %v3837
        %v3839 = vpop.f32.mrb[0].mxu0
        %v3840 = vadd.f32 %v3692, %v3839
        %3841 = vmatprep.mubr.f32.mxu0 0.0
        %3842 = vmatmul.mubr.f32.gmra.mrb[0].mxu0 %v1108
        %v3843 = vpop.f32.mrb[0].mxu0
        %v3844 = vadd.f32 %v3697, %v3843
        %v3845 = vpop.f32.mrb[0].mxu0
        %v3846 = vadd.f32 %v3697, %v3845
        %3847 = vmatprep.mubr.f32.mxu0 0.0
        %3848 = vmatmul.mubr.f32.gmra.mrb[0].mxu0 %v1111
        %v3849 = vpop.f32.mrb[0].mxu0
        %v3850 = vadd.f32 %v3702, %v3849
        %v3851 = vpop.f32.mrb[0].mxu0
        %v3852 = vadd.f32 %v3702, %v3851
        %3853 = vmatprep.mubr.f32.mxu0 0.0
        %3854 = vmatmul.mubr.f32.gmra.mrb[0].mxu0 %v1114
        %v3855 = vpop.f32.mrb[0].mxu0
        %v3856 = vadd.f32 %v3707, %v3855
        %v3857 = vpop.f32.mrb[0].mxu0
        %v3858 = vadd.f32 %v3707, %v3857
        %3859 = vmatprep.mubr.f32.mxu0 0.0
        %3860 = vmatmul.mubr.f32.gmra.mrb[0].mxu0 %v1117
        %v3861 = vpop.f32.mrb[0].mxu0
        %v3862 = vadd.f32 %v3712, %v3861
        %v3863 = vpop.f32.mrb[0].mxu0
        %v3864 = vadd.f32 %v3712, %v3863
        %3865 = vmatprep.mubr.f32.mxu0 0.0
        %3866 = vmatmul.mubr.f32.gmra.mrb[0].mxu0 %v1120
        %v3867 = vpop.f32.mrb[0].mxu0
        %v3868 = vadd.f32 %v3717, %v3867
        %v3869 = vpop.f32.mrb[0].mxu0
        %v3870 = vadd.f32 %v3717, %v3869
        %3871 = vmatprep.mubr.f32.mxu0 0.0
        %3872 = vmatmul.mubr.f32.gmra.mrb[0].mxu0 %v1123
        %v3873 = vpop.f32.mrb[0].mxu0
        %v3874 = vadd.f32 %v3722, %v3873
        %v3875 = vpop.f32.mrb[0].mxu0
        %v3876 = vadd.f32 %v3722, %v3875
        %3877 = vmatprep.mubr.f32.mxu0 0.0
        %3878 = vmatmul.mubr.f32.gmra.mrb[0].mxu0 %v1126
        %v3879 = vpop.f32.mrb[0].mxu0
        %v3880 = vadd.f32 %v3727, %v3879
        %v3881 = vpop.f32.mrb[0].mxu0
        %v3882 = vadd.f32 %v3727, %v3881
        %3883 = vmatprep.mubr.f32.mxu0 0.0
        %3884 = vmatmul.mubr.f32.gmra.mrb[0].mxu0 %v1129
        %v3885 = vpop.f32.mrb[0].mxu0
        %v3886 = vadd.f32 %v3732, %v3885
        %v3887 = vpop.f32.mrb[0].mxu0
        %v3888 = vadd.f32 %v3732, %v3887
        %3889 = vmatprep.mubr.f32.mxu0 0.0
        %3890 = vmatmul.mubr.f32.gmra.mrb[0].mxu0 %v1132
        %v3891 = vpop.f32.mrb[0].mxu0
        %v3892 = vadd.f32 %v3737, %v3891
        %v3893 = vpop.f32.mrb[0].mxu0
        %v3894 = vadd.f32 %v3737, %v3893
        %3895 = vmatprep.mubr.f32.mxu0 0.0
        %3896 = vmatmul.mubr.f32.gmra.mrb[0].mxu0 %v1135
        %v3897 = vpop.f32.mrb[0].mxu0
        %v3898 = vadd.f32 %v3742, %v3897
        %v3899 = vpop.f32.mrb[0].mxu0
        %v3900 = vadd.f32 %v3742, %v3899
        %3901 = vmatprep.mubr.f32.mxu0 0.0
        %3902 = vmatmul.mubr.f32.gmra.mrb[0].mxu0 %v1138
        %v3903 = vpop.f32.mrb[0].mxu0
        %v3904 = vadd.f32 %v3747, %v3903
        %v3905 = vpop.f32.mrb[0].mxu0
        %v3906 = vadd.f32 %v3747, %v3905
        %3907 = vmatprep.mubr.f32.mxu0 0.0
        %3908 = vmatmul.mubr.f32.gmra.mrb[0].mxu0 %v1141
        %v3909 = vpop.f32.mrb[0].mxu0
        %v3910 = vadd.f32 %v3752, %v3909
        %v3911 = vpop.f32.mrb[0].mxu0
        %v3912 = vadd.f32 %v3752, %v3911
        %3913 = vmatprep.mubr.f32.mxu0 0.0
        %3914 = vmatmul.mubr.f32.gmra.mrb[0].mxu0 %v1144
        %v3915 = vpop.f32.mrb[0].mxu0
        %v3916 = vadd.f32 %v3757, %v3915
        %v3917 = vpop.f32.mrb[0].mxu0
        %v3918 = vadd.f32 %v3757, %v3917
        %3919 = vdwg.mxu0
        %s3920 = scalar_lea.vmem [#allocation2], 896
        %3921 = vst [vmem:[%s3920] sm:$0xff] %v3826
        %3922 = vst [vmem:[%s3920 + $0x8] sm:$0xff] %v3828
        %3923 = vst [vmem:[%s3920 + $0x10] sm:$0xff] %v3832
        %3924 = vst [vmem:[%s3920 + $0x18] sm:$0xff] %v3834
        %3925 = vst [vmem:[%s3920 + $0x20] sm:$0xff] %v3838
        %3926 = vst [vmem:[%s3920 + $0x28] sm:$0xff] %v3840
        %3927 = vst [vmem:[%s3920 + $0x30] sm:$0xff] %v3844
        %3928 = vst [vmem:[%s3920 + $0x38] sm:$0xff] %v3846
        %3929 = vst [vmem:[%s3920 + $0x40] sm:$0xff] %v3850
        %3930 = vst [vmem:[%s3920 + $0x48] sm:$0xff] %v3852
        %3931 = vst [vmem:[%s3920 + $0x50] sm:$0xff] %v3856
        %3932 = vst [vmem:[%s3920 + $0x58] sm:$0xff] %v3858
        %3933 = vst [vmem:[%s3920 + $0x60] sm:$0xff] %v3862
        %3934 = vst [vmem:[%s3920 + $0x68] sm:$0xff] %v3864
        %3935 = vst [vmem:[%s3920 + $0x70] sm:$0xff] %v3868
        %3936 = vst [vmem:[%s3920 + $0x78] sm:$0xff] %v3870
        %3937 = vmatprep.subr.mxu0 %v3876
        %3938 = vmatpush1.msra.mxu0 %v3874
        %3939 = vmatprep.subr.mxu0 %v3882
        %3940 = vmatpush1.msra.mxu0 %v3880
        %3941 = vmatprep.subr.mxu0 %v3888
        %3942 = vmatpush1.msra.mxu0 %v3886
        %3943 = vmatprep.subr.mxu0 %v3894
        %3944 = vmatpush1.msra.mxu0 %v3892
        %3945 = vmatprep.subr.mxu0 %v3900
        %3946 = vmatpush1.msra.mxu0 %v3898
        %3947 = vmatprep.subr.mxu0 %v3906
        %3948 = vmatpush1.msra.mxu0 %v3904
        %3949 = vmatprep.subr.mxu0 %v3912
        %3950 = vmatpush1.msra.mxu0 %v3910
        %3951 = vmatprep.subr.mxu0 %v3918
        %3952 = vmatpush1.msra.mxu0 %v3916
        %3953 = vmatprep.subr.mxu0 0.0
        %3954 = vmatpush1.msra.mxu0 0.0
        %3955 = vmatprep.subr.mxu0 0.0
        %3956 = vmatpush1.msra.mxu0 0.0
        %3957 = vmatprep.subr.mxu0 0.0
        %3958 = vmatpush1.msra.mxu0 0.0
        %3959 = vmatprep.subr.mxu0 0.0
        %3960 = vmatpush1.msra.mxu0 0.0
        %3961 = vmatprep.subr.mxu0 0.0
        %3962 = vmatpush1.msra.mxu0 0.0
        %3963 = vmatprep.subr.mxu0 0.0
        %3964 = vmatpush1.msra.mxu0 0.0
        %3965 = vmatprep.subr.mxu0 0.0
        %3966 = vmatpush1.msra.mxu0 0.0
        %3967 = vmatprep.subr.mxu0 0.0
        %3968 = vmatpush1.msra.mxu0 0.0
        %3969 = vmatprep.subr.mxu0 0.0
        %3970 = vmatpush1.msra.mxu0 0.0
        %3971 = vmatprep.subr.mxu0 0.0
        %3972 = vmatpush1.msra.mxu0 0.0
        %3973 = vmatprep.subr.mxu0 0.0
        %3974 = vmatpush1.msra.mxu0 0.0
        %3975 = vmatprep.subr.mxu0 0.0
        %3976 = vmatpush1.msra.mxu0 0.0
        %3977 = vmatprep.subr.mxu0 0.0
        %3978 = vmatpush1.msra.mxu0 0.0
        %3979 = vmatprep.subr.mxu0 0.0
        %3980 = vmatpush1.msra.mxu0 0.0
        %3981 = vmatprep.subr.mxu0 0.0
        %3982 = vmatpush1.msra.mxu0 0.0
        %3983 = vmatprep.subr.mxu0 0.0
        %3984 = vmatpush1.msra.mxu0 0.0
        %3985 = vmatprep.subr.mxu0 0.0
        %3986 = vmatpush1.msra.mxu0 0.0
        %3987 = vmatprep.subr.mxu0 0.0
        %3988 = vmatpush1.msra.mxu0 0.0
        %3989 = vmatprep.subr.mxu0 0.0
        %3990 = vmatpush1.msra.mxu0 0.0
        %3991 = vmatprep.subr.mxu0 0.0
        %3992 = vmatpush1.msra.mxu0 0.0
        %3993 = vmatprep.subr.mxu0 0.0
        %3994 = vmatpush1.msra.mxu0 0.0
        %3995 = vmatprep.subr.mxu0 0.0
        %3996 = vmatpush1.msra.mxu0 0.0
        %3997 = vmatprep.subr.mxu0 0.0
        %3998 = vmatpush1.msra.mxu0 0.0
        %3999 = vmatprep.subr.mxu0 0.0
        %4000 = vmatpush1.msra.mxu0 0.0
        %4001 = vmatprep.mubr.f32.mxu0 0.0
        %4002 = vmatmul.mubr.f32.gmra.mrb[0].mxu0 %v1325
        %v4003 = vpop.f32.mrb[0].mxu0
        %v4004 = vadd.f32 0.0, %v4003
        %v4005 = vpop.f32.mrb[0].mxu0
        %v4006 = vadd.f32 0.0, %v4005
        %4007 = vdwg.mxu0
        %s4008 = scalar_lea.vmem [#allocation3], 112
        %4009 = vst [vmem:[%s4008] sm:$0xff] %v4004
        %4010 = vst [vmem:[%s4008 + $0x8] sm:$0xff] %v4006
        %v4011 = vld [vmem:[#allocation3] sm:$0xff]
        %v4012 = vld [vmem:[#allocation3 + $0x8] sm:$0xff]
        %v4013 = vld [vmem:[%s1770] sm:$0xff]
        %v4014 = vld [vmem:[%s1770 + $0x8] sm:$0xff]
        %v4015 = vmax.f32 %v4011, %v4013
        %v4016 = vmax.f32 %v4012, %v4014
        %v4017 = vld [vmem:[%s2143] sm:$0xff]
        %v4018 = vld [vmem:[%s2143 + $0x8] sm:$0xff]
        %v4019 = vmax.f32 %v4015, %v4017
        %v4020 = vmax.f32 %v4016, %v4018
        %v4021 = vld [vmem:[%s2516] sm:$0xff]
        %v4022 = vld [vmem:[%s2516 + $0x8] sm:$0xff]
        %v4023 = vmax.f32 %v4019, %v4021
        %v4024 = vmax.f32 %v4020, %v4022
        %v4025 = vld [vmem:[%s2889] sm:$0xff]
        %v4026 = vld [vmem:[%s2889 + $0x8] sm:$0xff]
        %v4027 = vmax.f32 %v4023, %v4025
        %v4028 = vmax.f32 %v4024, %v4026
        %v4029 = vld [vmem:[%s3262] sm:$0xff]
        %v4030 = vld [vmem:[%s3262 + $0x8] sm:$0xff]
        %v4031 = vmax.f32 %v4027, %v4029
        %v4032 = vmax.f32 %v4028, %v4030
        %v4033 = vld [vmem:[%s3635] sm:$0xff]
        %v4034 = vld [vmem:[%s3635 + $0x8] sm:$0xff]
        %v4035 = vmax.f32 %v4031, %v4033
        %v4036 = vmax.f32 %v4032, %v4034
        %v4037 = vld [vmem:[%s4008] sm:$0xff]
        %v4038 = vld [vmem:[%s4008 + $0x8] sm:$0xff]
        %v4039 = vmax.f32 %v4035, %v4037
        %v4040 = vmax.f32 %v4036, %v4038
        %v4041 = vsub.f32 %v4011, %v4039
        %v4042 = vsub.f32 %v4012, %v4040
        %v4043 = vmul.f32 %v4041, 1.442695
        %v4044 = vpow.pop %v4043
        %v4045 = vmul.f32 %v4042, 1.442695
        %v4046 = vpow.pop %v4045
        %4047 = vst [vmem:[#allocation3] sm:$0xff] %v4044
        %4048 = vst [vmem:[#allocation3 + $0x8] sm:$0xff] %v4046
        %v4049 = vadd.f32 %v4044, 0.0
        %v4050 = vadd.f32 %v4046, 0.0
        %v4051 = vld [vmem:[%s1770] sm:$0xff]
        %v4052 = vld [vmem:[%s1770 + $0x8] sm:$0xff]
        %v4053 = vsub.f32 %v4051, %v4039
        %v4054 = vsub.f32 %v4052, %v4040
        %v4055 = vmul.f32 %v4053, 1.442695
        %v4056 = vpow.pop %v4055
        %v4057 = vmul.f32 %v4054, 1.442695
        %v4058 = vpow.pop %v4057
        %4059 = vst [vmem:[%s1770] sm:$0xff] %v4056
        %4060 = vst [vmem:[%s1770 + $0x8] sm:$0xff] %v4058
        %v4061 = vadd.f32 %v4049, %v4056
        %v4062 = vadd.f32 %v4050, %v4058
        %v4063 = vld [vmem:[%s2143] sm:$0xff]
        %v4064 = vld [vmem:[%s2143 + $0x8] sm:$0xff]
        %v4065 = vsub.f32 %v4063, %v4039
        %v4066 = vsub.f32 %v4064, %v4040
        %v4067 = vmul.f32 %v4065, 1.442695
        %v4068 = vpow.pop %v4067
        %v4069 = vmul.f32 %v4066, 1.442695
        %v4070 = vpow.pop %v4069
        %4071 = vst [vmem:[%s2143] sm:$0xff] %v4068
        %4072 = vst [vmem:[%s2143 + $0x8] sm:$0xff] %v4070
        %v4073 = vadd.f32 %v4061, %v4068
        %v4074 = vadd.f32 %v4062, %v4070
        %v4075 = vld [vmem:[%s2516] sm:$0xff]
        %v4076 = vld [vmem:[%s2516 + $0x8] sm:$0xff]
        %v4077 = vsub.f32 %v4075, %v4039
        %v4078 = vsub.f32 %v4076, %v4040
        %v4079 = vmul.f32 %v4077, 1.442695
        %v4080 = vpow.pop %v4079
        %v4081 = vmul.f32 %v4078, 1.442695
        %v4082 = vpow.pop %v4081
        %4083 = vst [vmem:[%s2516] sm:$0xff] %v4080
        %4084 = vst [vmem:[%s2516 + $0x8] sm:$0xff] %v4082
        %v4085 = vadd.f32 %v4073, %v4080
        %v4086 = vadd.f32 %v4074, %v4082
        %v4087 = vld [vmem:[%s2889] sm:$0xff]
        %v4088 = vld [vmem:[%s2889 + $0x8] sm:$0xff]
        %v4089 = vsub.f32 %v4087, %v4039
        %v4090 = vsub.f32 %v4088, %v4040
        %v4091 = vmul.f32 %v4089, 1.442695
        %v4092 = vpow.pop %v4091
        %v4093 = vmul.f32 %v4090, 1.442695
        %v4094 = vpow.pop %v4093
        %4095 = vst [vmem:[%s2889] sm:$0xff] %v4092
        %4096 = vst [vmem:[%s2889 + $0x8] sm:$0xff] %v4094
        %v4097 = vadd.f32 %v4085, %v4092
        %v4098 = vadd.f32 %v4086, %v4094
        %v4099 = vld [vmem:[%s3262] sm:$0xff]
        %v4100 = vld [vmem:[%s3262 + $0x8] sm:$0xff]
        %v4101 = vsub.f32 %v4099, %v4039
        %v4102 = vsub.f32 %v4100, %v4040
        %v4103 = vmul.f32 %v4101, 1.442695
        %v4104 = vpow.pop %v4103
        %v4105 = vmul.f32 %v4102, 1.442695
        %v4106 = vpow.pop %v4105
        %4107 = vst [vmem:[%s3262] sm:$0xff] %v4104
        %4108 = vst [vmem:[%s3262 + $0x8] sm:$0xff] %v4106
        %v4109 = vadd.f32 %v4097, %v4104
        %v4110 = vadd.f32 %v4098, %v4106
        %v4111 = vld [vmem:[%s3635] sm:$0xff]
        %v4112 = vld [vmem:[%s3635 + $0x8] sm:$0xff]
        %v4113 = vsub.f32 %v4111, %v4039
        %v4114 = vsub.f32 %v4112, %v4040
        %v4115 = vmul.f32 %v4113, 1.442695
        %v4116 = vpow.pop %v4115
        %v4117 = vmul.f32 %v4114, 1.442695
        %v4118 = vpow.pop %v4117
        %4119 = vst [vmem:[%s3635] sm:$0xff] %v4116
        %4120 = vst [vmem:[%s3635 + $0x8] sm:$0xff] %v4118
        %v4121 = vadd.f32 %v4109, %v4116
        %v4122 = vadd.f32 %v4110, %v4118
        %v4123 = vld [vmem:[%s4008] sm:$0xff]
        %v4124 = vld [vmem:[%s4008 + $0x8] sm:$0xff]
        %v4125 = vsub.f32 %v4123, %v4039
        %v4126 = vsub.f32 %v4124, %v4040
        %v4127 = vmul.f32 %v4125, 1.442695
        %v4128 = vpow.pop %v4127
        %v4129 = vmul.f32 %v4126, 1.442695
        %v4130 = vpow.pop %v4129
        %4131 = vst [vmem:[%s4008] sm:$0xff] %v4128
        %4132 = vst [vmem:[%s4008 + $0x8] sm:$0xff] %v4130
        %v4133 = vadd.f32 %v4121, %v4128
        %v4134 = vadd.f32 %v4122, %v4130
        %v4135 = vrcp.pop %v4133
        %v4136 = vmul.f32 1.0, %v4135
        %v4137 = vrcp.pop %v4134
        %v4138 = vmul.f32 1.0, %v4137
        %v4139 = vld [vmem:[#allocation3] sm:$0xff]
        %v4140 = vld [vmem:[#allocation3 + $0x8] sm:$0xff]
        %v4141 = vmul.f32 %v4139, %v4136
        %v4142 = vmul.f32 %v4140, %v4138
        %v4144 = vsel %vm778, %v364, 0
        %v4147 = vsel %vm778, %v365, 0
        %v4150 = vsel %vm778, %v366, 0
        %v4153 = vsel %vm778, %v367, 0
        %v4156 = vsel %vm778, %v368, 0
        %v4159 = vsel %vm778, %v369, 0
        %v4162 = vsel %vm778, %v370, 0
        %v4165 = vsel %vm778, %v371, 0
        %4167 = vmatprep.subr.mxu0 %v4142
        %4168 = vmatpush1.msra.mxu0 %v4141
        %4169 = vmatprep.subr.mxu0 0.0
        %4170 = vmatpush1.msra.mxu0 0.0
        %4171 = vmatprep.subr.mxu0 0.0
        %4172 = vmatpush1.msra.mxu0 0.0
        %4173 = vmatprep.subr.mxu0 0.0
        %4174 = vmatpush1.msra.mxu0 0.0
        %4175 = vmatprep.subr.mxu0 0.0
        %4176 = vmatpush1.msra.mxu0 0.0
        %4177 = vmatprep.subr.mxu0 0.0
        %4178 = vmatpush1.msra.mxu0 0.0
        %4179 = vmatprep.subr.mxu0 0.0
        %4180 = vmatpush1.msra.mxu0 0.0
        %4181 = vmatprep.subr.mxu0 0.0
        %4182 = vmatpush1.msra.mxu0 0.0
        %4183 = vmatprep.subr.mxu0 0.0
        %4184 = vmatpush1.msra.mxu0 0.0
        %4185 = vmatprep.subr.mxu0 0.0
        %4186 = vmatpush1.msra.mxu0 0.0
        %4187 = vmatprep.subr.mxu0 0.0
        %4188 = vmatpush1.msra.mxu0 0.0
        %4189 = vmatprep.subr.mxu0 0.0
        %4190 = vmatpush1.msra.mxu0 0.0
        %4191 = vmatprep.subr.mxu0 0.0
        %4192 = vmatpush1.msra.mxu0 0.0
        %4193 = vmatprep.subr.mxu0 0.0
        %4194 = vmatpush1.msra.mxu0 0.0
        %4195 = vmatprep.subr.mxu0 0.0
        %4196 = vmatpush1.msra.mxu0 0.0
        %4197 = vmatprep.subr.mxu0 0.0
        %4198 = vmatpush1.msra.mxu0 0.0
        %4199 = vmatprep.subr.mxu0 0.0
        %4200 = vmatpush1.msra.mxu0 0.0
        %4201 = vmatprep.subr.mxu0 0.0
        %4202 = vmatpush1.msra.mxu0 0.0
        %4203 = vmatprep.subr.mxu0 0.0
        %4204 = vmatpush1.msra.mxu0 0.0
        %4205 = vmatprep.subr.mxu0 0.0
        %4206 = vmatpush1.msra.mxu0 0.0
        %4207 = vmatprep.subr.mxu0 0.0
        %4208 = vmatpush1.msra.mxu0 0.0
        %4209 = vmatprep.subr.mxu0 0.0
        %4210 = vmatpush1.msra.mxu0 0.0
        %4211 = vmatprep.subr.mxu0 0.0
        %4212 = vmatpush1.msra.mxu0 0.0
        %4213 = vmatprep.subr.mxu0 0.0
        %4214 = vmatpush1.msra.mxu0 0.0
        %4215 = vmatprep.subr.mxu0 0.0
        %4216 = vmatpush1.msra.mxu0 0.0
        %4217 = vmatprep.subr.mxu0 0.0
        %4218 = vmatpush1.msra.mxu0 0.0
        %4219 = vmatprep.subr.mxu0 0.0
        %4220 = vmatpush1.msra.mxu0 0.0
        %4221 = vmatprep.subr.mxu0 0.0
        %4222 = vmatpush1.msra.mxu0 0.0
        %4223 = vmatprep.subr.mxu0 0.0
        %4224 = vmatpush1.msra.mxu0 0.0
        %4225 = vmatprep.subr.mxu0 0.0
        %4226 = vmatpush1.msra.mxu0 0.0
        %4227 = vmatprep.subr.mxu0 0.0
        %4228 = vmatpush1.msra.mxu0 0.0
        %4229 = vmatprep.subr.mxu0 0.0
        %4230 = vmatpush1.msra.mxu0 0.0
        %4231 = vmatprep.mubr.f32.mxu0 0.0
        %4232 = vmatmul.mubr.f32.gmra.mrb[0].mxu0 %v4144
        %v4233 = vpop.f32.mrb[0].mxu0
        %v4234 = vadd.f32 0.0, %v4233
        %v4235 = vpop.f32.mrb[0].mxu0
        %v4236 = vadd.f32 0.0, %v4235
        %4237 = vmatprep.mubr.f32.mxu0 0.0
        %4238 = vmatmul.mubr.f32.gmra.mrb[0].mxu0 %v4147
        %v4239 = vpop.f32.mrb[0].mxu0
        %v4240 = vadd.f32 0.0, %v4239
        %v4241 = vpop.f32.mrb[0].mxu0
        %v4242 = vadd.f32 0.0, %v4241
        %4243 = vmatprep.mubr.f32.mxu0 0.0
        %4244 = vmatmul.mubr.f32.gmra.mrb[0].mxu0 %v4150
        %v4245 = vpop.f32.mrb[0].mxu0
        %v4246 = vadd.f32 0.0, %v4245
        %v4247 = vpop.f32.mrb[0].mxu0
        %v4248 = vadd.f32 0.0, %v4247
        %4249 = vmatprep.mubr.f32.mxu0 0.0
        %4250 = vmatmul.mubr.f32.gmra.mrb[0].mxu0 %v4153
        %v4251 = vpop.f32.mrb[0].mxu0
        %v4252 = vadd.f32 0.0, %v4251
        %v4253 = vpop.f32.mrb[0].mxu0
        %v4254 = vadd.f32 0.0, %v4253
        %4255 = vmatprep.mubr.f32.mxu0 0.0
        %4256 = vmatmul.mubr.f32.gmra.mrb[0].mxu0 %v4156
        %v4257 = vpop.f32.mrb[0].mxu0
        %v4258 = vadd.f32 0.0, %v4257
        %v4259 = vpop.f32.mrb[0].mxu0
        %v4260 = vadd.f32 0.0, %v4259
        %4261 = vmatprep.mubr.f32.mxu0 0.0
        %4262 = vmatmul.mubr.f32.gmra.mrb[0].mxu0 %v4159
        %v4263 = vpop.f32.mrb[0].mxu0
        %v4264 = vadd.f32 0.0, %v4263
        %v4265 = vpop.f32.mrb[0].mxu0
        %v4266 = vadd.f32 0.0, %v4265
        %4267 = vmatprep.mubr.f32.mxu0 0.0
        %4268 = vmatmul.mubr.f32.gmra.mrb[0].mxu0 %v4162
        %v4269 = vpop.f32.mrb[0].mxu0
        %v4270 = vadd.f32 0.0, %v4269
        %v4271 = vpop.f32.mrb[0].mxu0
        %v4272 = vadd.f32 0.0, %v4271
        %4273 = vmatprep.mubr.f32.mxu0 0.0
        %4274 = vmatmul.mubr.f32.gmra.mrb[0].mxu0 %v4165
        %v4275 = vpop.f32.mrb[0].mxu0
        %v4276 = vadd.f32 0.0, %v4275
        %v4277 = vpop.f32.mrb[0].mxu0
        %v4278 = vadd.f32 0.0, %v4277
        %4279 = vdwg.mxu0
        %v4280 = vld [vmem:[#allocation2] sm:$0xff]
        %v4281 = vld [vmem:[#allocation2 + $0x8] sm:$0xff]
        %v4282 = vld [vmem:[#allocation2 + $0x10] sm:$0xff]
        %v4283 = vld [vmem:[#allocation2 + $0x18] sm:$0xff]
        %v4284 = vld [vmem:[#allocation2 + $0x20] sm:$0xff]
        %v4285 = vld [vmem:[#allocation2 + $0x28] sm:$0xff]
        %v4286 = vld [vmem:[#allocation2 + $0x30] sm:$0xff]
        %v4287 = vld [vmem:[#allocation2 + $0x38] sm:$0xff]
        %v4288 = vld [vmem:[#allocation2 + $0x40] sm:$0xff]
        %v4289 = vld [vmem:[#allocation2 + $0x48] sm:$0xff]
        %v4290 = vld [vmem:[#allocation2 + $0x50] sm:$0xff]
        %v4291 = vld [vmem:[#allocation2 + $0x58] sm:$0xff]
        %v4292 = vld [vmem:[#allocation2 + $0x60] sm:$0xff]
        %v4293 = vld [vmem:[#allocation2 + $0x68] sm:$0xff]
        %v4294 = vld [vmem:[#allocation2 + $0x70] sm:$0xff]
        %v4295 = vld [vmem:[#allocation2 + $0x78] sm:$0xff]
        %v4296 = vmul.f32 %v4234, %v4280
        %v4297 = vmul.f32 %v4236, %v4281
        %v4298 = vmul.f32 %v4240, %v4282
        %v4299 = vmul.f32 %v4242, %v4283
        %v4300 = vmul.f32 %v4246, %v4284
        %v4301 = vmul.f32 %v4248, %v4285
        %v4302 = vmul.f32 %v4252, %v4286
        %v4303 = vmul.f32 %v4254, %v4287
        %v4304 = vmul.f32 %v4258, %v4288
        %v4305 = vmul.f32 %v4260, %v4289
        %v4306 = vmul.f32 %v4264, %v4290
        %v4307 = vmul.f32 %v4266, %v4291
        %v4308 = vmul.f32 %v4270, %v4292
        %v4309 = vmul.f32 %v4272, %v4293
        %v4310 = vmul.f32 %v4276, %v4294
        %v4311 = vmul.f32 %v4278, %v4295
        %v4312 = vadd.f32 %v4296, 0.0
        %v4313 = vadd.f32 %v4297, 0.0
        %v4314 = vadd.f32 %v4298, 0.0
        %v4315 = vadd.f32 %v4299, 0.0
        %v4316 = vadd.f32 %v4300, 0.0
        %v4317 = vadd.f32 %v4301, 0.0
        %v4318 = vadd.f32 %v4302, 0.0
        %v4319 = vadd.f32 %v4303, 0.0
        %v4320 = vadd.f32 %v4304, 0.0
        %v4321 = vadd.f32 %v4305, 0.0
        %v4322 = vadd.f32 %v4306, 0.0
        %v4323 = vadd.f32 %v4307, 0.0
        %v4324 = vadd.f32 %v4308, 0.0
        %v4325 = vadd.f32 %v4309, 0.0
        %v4326 = vadd.f32 %v4310, 0.0
        %v4327 = vadd.f32 %v4311, 0.0
        %v4328 = vld [vmem:[%s1770] sm:$0xff]
        %v4329 = vld [vmem:[%s1770 + $0x8] sm:$0xff]
        %v4330 = vmul.f32 %v4328, %v4136
        %v4331 = vmul.f32 %v4329, %v4138
        %4332 = vmatprep.subr.mxu0 %v4331
        %4333 = vmatpush1.msra.mxu0 %v4330
        %4334 = vmatprep.subr.mxu0 0.0
        %4335 = vmatpush1.msra.mxu0 0.0
        %4336 = vmatprep.subr.mxu0 0.0
        %4337 = vmatpush1.msra.mxu0 0.0
        %4338 = vmatprep.subr.mxu0 0.0
        %4339 = vmatpush1.msra.mxu0 0.0
        %4340 = vmatprep.subr.mxu0 0.0
        %4341 = vmatpush1.msra.mxu0 0.0
        %4342 = vmatprep.subr.mxu0 0.0
        %4343 = vmatpush1.msra.mxu0 0.0
        %4344 = vmatprep.subr.mxu0 0.0
        %4345 = vmatpush1.msra.mxu0 0.0
        %4346 = vmatprep.subr.mxu0 0.0
        %4347 = vmatpush1.msra.mxu0 0.0
        %4348 = vmatprep.subr.mxu0 0.0
        %4349 = vmatpush1.msra.mxu0 0.0
        %4350 = vmatprep.subr.mxu0 0.0
        %4351 = vmatpush1.msra.mxu0 0.0
        %4352 = vmatprep.subr.mxu0 0.0
        %4353 = vmatpush1.msra.mxu0 0.0
        %4354 = vmatprep.subr.mxu0 0.0
        %4355 = vmatpush1.msra.mxu0 0.0
        %4356 = vmatprep.subr.mxu0 0.0
        %4357 = vmatpush1.msra.mxu0 0.0
        %4358 = vmatprep.subr.mxu0 0.0
        %4359 = vmatpush1.msra.mxu0 0.0
        %4360 = vmatprep.subr.mxu0 0.0
        %4361 = vmatpush1.msra.mxu0 0.0
        %4362 = vmatprep.subr.mxu0 0.0
        %4363 = vmatpush1.msra.mxu0 0.0
        %4364 = vmatprep.subr.mxu0 0.0
        %4365 = vmatpush1.msra.mxu0 0.0
        %4366 = vmatprep.subr.mxu0 0.0
        %4367 = vmatpush1.msra.mxu0 0.0
        %4368 = vmatprep.subr.mxu0 0.0
        %4369 = vmatpush1.msra.mxu0 0.0
        %4370 = vmatprep.subr.mxu0 0.0
        %4371 = vmatpush1.msra.mxu0 0.0
        %4372 = vmatprep.subr.mxu0 0.0
        %4373 = vmatpush1.msra.mxu0 0.0
        %4374 = vmatprep.subr.mxu0 0.0
        %4375 = vmatpush1.msra.mxu0 0.0
        %4376 = vmatprep.subr.mxu0 0.0
        %4377 = vmatpush1.msra.mxu0 0.0
        %4378 = vmatprep.subr.mxu0 0.0
        %4379 = vmatpush1.msra.mxu0 0.0
        %4380 = vmatprep.subr.mxu0 0.0
        %4381 = vmatpush1.msra.mxu0 0.0
        %4382 = vmatprep.subr.mxu0 0.0
        %4383 = vmatpush1.msra.mxu0 0.0
        %4384 = vmatprep.subr.mxu0 0.0
        %4385 = vmatpush1.msra.mxu0 0.0
        %4386 = vmatprep.subr.mxu0 0.0
        %4387 = vmatpush1.msra.mxu0 0.0
        %4388 = vmatprep.subr.mxu0 0.0
        %4389 = vmatpush1.msra.mxu0 0.0
        %4390 = vmatprep.subr.mxu0 0.0
        %4391 = vmatpush1.msra.mxu0 0.0
        %4392 = vmatprep.subr.mxu0 0.0
        %4393 = vmatpush1.msra.mxu0 0.0
        %4394 = vmatprep.subr.mxu0 0.0
        %4395 = vmatpush1.msra.mxu0 0.0
        %4396 = vmatprep.mubr.f32.mxu0 0.0
        %4397 = vmatmul.mubr.f32.gmra.mrb[0].mxu0 %v4144
        %v4398 = vpop.f32.mrb[0].mxu0
        %v4399 = vadd.f32 0.0, %v4398
        %v4400 = vpop.f32.mrb[0].mxu0
        %v4401 = vadd.f32 0.0, %v4400
        %4402 = vmatprep.mubr.f32.mxu0 0.0
        %4403 = vmatmul.mubr.f32.gmra.mrb[0].mxu0 %v4147
        %v4404 = vpop.f32.mrb[0].mxu0
        %v4405 = vadd.f32 0.0, %v4404
        %v4406 = vpop.f32.mrb[0].mxu0
        %v4407 = vadd.f32 0.0, %v4406
        %4408 = vmatprep.mubr.f32.mxu0 0.0
        %4409 = vmatmul.mubr.f32.gmra.mrb[0].mxu0 %v4150
        %v4410 = vpop.f32.mrb[0].mxu0
        %v4411 = vadd.f32 0.0, %v4410
        %v4412 = vpop.f32.mrb[0].mxu0
        %v4413 = vadd.f32 0.0, %v4412
        %4414 = vmatprep.mubr.f32.mxu0 0.0
        %4415 = vmatmul.mubr.f32.gmra.mrb[0].mxu0 %v4153
        %v4416 = vpop.f32.mrb[0].mxu0
        %v4417 = vadd.f32 0.0, %v4416
        %v4418 = vpop.f32.mrb[0].mxu0
        %v4419 = vadd.f32 0.0, %v4418
        %4420 = vmatprep.mubr.f32.mxu0 0.0
        %4421 = vmatmul.mubr.f32.gmra.mrb[0].mxu0 %v4156
        %v4422 = vpop.f32.mrb[0].mxu0
        %v4423 = vadd.f32 0.0, %v4422
        %v4424 = vpop.f32.mrb[0].mxu0
        %v4425 = vadd.f32 0.0, %v4424
        %4426 = vmatprep.mubr.f32.mxu0 0.0
        %4427 = vmatmul.mubr.f32.gmra.mrb[0].mxu0 %v4159
        %v4428 = vpop.f32.mrb[0].mxu0
        %v4429 = vadd.f32 0.0, %v4428
        %v4430 = vpop.f32.mrb[0].mxu0
        %v4431 = vadd.f32 0.0, %v4430
        %4432 = vmatprep.mubr.f32.mxu0 0.0
        %4433 = vmatmul.mubr.f32.gmra.mrb[0].mxu0 %v4162
        %v4434 = vpop.f32.mrb[0].mxu0
        %v4435 = vadd.f32 0.0, %v4434
        %v4436 = vpop.f32.mrb[0].mxu0
        %v4437 = vadd.f32 0.0, %v4436
        %4438 = vmatprep.mubr.f32.mxu0 0.0
        %4439 = vmatmul.mubr.f32.gmra.mrb[0].mxu0 %v4165
        %v4440 = vpop.f32.mrb[0].mxu0
        %v4441 = vadd.f32 0.0, %v4440
        %v4442 = vpop.f32.mrb[0].mxu0
        %v4443 = vadd.f32 0.0, %v4442
        %4444 = vdwg.mxu0
        %v4445 = vld [vmem:[%s1682] sm:$0xff]
        %v4446 = vld [vmem:[%s1682 + $0x8] sm:$0xff]
        %v4447 = vld [vmem:[%s1682 + $0x10] sm:$0xff]
        %v4448 = vld [vmem:[%s1682 + $0x18] sm:$0xff]
        %v4449 = vld [vmem:[%s1682 + $0x20] sm:$0xff]
        %v4450 = vld [vmem:[%s1682 + $0x28] sm:$0xff]
        %v4451 = vld [vmem:[%s1682 + $0x30] sm:$0xff]
        %v4452 = vld [vmem:[%s1682 + $0x38] sm:$0xff]
        %v4453 = vld [vmem:[%s1682 + $0x40] sm:$0xff]
        %v4454 = vld [vmem:[%s1682 + $0x48] sm:$0xff]
        %v4455 = vld [vmem:[%s1682 + $0x50] sm:$0xff]
        %v4456 = vld [vmem:[%s1682 + $0x58] sm:$0xff]
        %v4457 = vld [vmem:[%s1682 + $0x60] sm:$0xff]
        %v4458 = vld [vmem:[%s1682 + $0x68] sm:$0xff]
        %v4459 = vld [vmem:[%s1682 + $0x70] sm:$0xff]
        %v4460 = vld [vmem:[%s1682 + $0x78] sm:$0xff]
        %v4461 = vmul.f32 %v4399, %v4445
        %v4462 = vmul.f32 %v4401, %v4446
        %v4463 = vmul.f32 %v4405, %v4447
        %v4464 = vmul.f32 %v4407, %v4448
        %v4465 = vmul.f32 %v4411, %v4449
        %v4466 = vmul.f32 %v4413, %v4450
        %v4467 = vmul.f32 %v4417, %v4451
        %v4468 = vmul.f32 %v4419, %v4452
        %v4469 = vmul.f32 %v4423, %v4453
        %v4470 = vmul.f32 %v4425, %v4454
        %v4471 = vmul.f32 %v4429, %v4455
        %v4472 = vmul.f32 %v4431, %v4456
        %v4473 = vmul.f32 %v4435, %v4457
        %v4474 = vmul.f32 %v4437, %v4458
        %v4475 = vmul.f32 %v4441, %v4459
        %v4476 = vmul.f32 %v4443, %v4460
        %v4477 = vadd.f32 %v4312, %v4461
        %v4478 = vadd.f32 %v4313, %v4462
        %v4479 = vadd.f32 %v4314, %v4463
        %v4480 = vadd.f32 %v4315, %v4464
        %v4481 = vadd.f32 %v4316, %v4465
        %v4482 = vadd.f32 %v4317, %v4466
        %v4483 = vadd.f32 %v4318, %v4467
        %v4484 = vadd.f32 %v4319, %v4468
        %v4485 = vadd.f32 %v4320, %v4469
        %v4486 = vadd.f32 %v4321, %v4470
        %v4487 = vadd.f32 %v4322, %v4471
        %v4488 = vadd.f32 %v4323, %v4472
        %v4489 = vadd.f32 %v4324, %v4473
        %v4490 = vadd.f32 %v4325, %v4474
        %v4491 = vadd.f32 %v4326, %v4475
        %v4492 = vadd.f32 %v4327, %v4476
        %v4493 = vld [vmem:[%s2143] sm:$0xff]
        %v4494 = vld [vmem:[%s2143 + $0x8] sm:$0xff]
        %v4495 = vmul.f32 %v4493, %v4136
        %v4496 = vmul.f32 %v4494, %v4138
        %4497 = vmatprep.subr.mxu0 %v4496
        %4498 = vmatpush1.msra.mxu0 %v4495
        %4499 = vmatprep.subr.mxu0 0.0
        %4500 = vmatpush1.msra.mxu0 0.0
        %4501 = vmatprep.subr.mxu0 0.0
        %4502 = vmatpush1.msra.mxu0 0.0
        %4503 = vmatprep.subr.mxu0 0.0
        %4504 = vmatpush1.msra.mxu0 0.0
        %4505 = vmatprep.subr.mxu0 0.0
        %4506 = vmatpush1.msra.mxu0 0.0
        %4507 = vmatprep.subr.mxu0 0.0
        %4508 = vmatpush1.msra.mxu0 0.0
        %4509 = vmatprep.subr.mxu0 0.0
        %4510 = vmatpush1.msra.mxu0 0.0
        %4511 = vmatprep.subr.mxu0 0.0
        %4512 = vmatpush1.msra.mxu0 0.0
        %4513 = vmatprep.subr.mxu0 0.0
        %4514 = vmatpush1.msra.mxu0 0.0
        %4515 = vmatprep.subr.mxu0 0.0
        %4516 = vmatpush1.msra.mxu0 0.0
        %4517 = vmatprep.subr.mxu0 0.0
        %4518 = vmatpush1.msra.mxu0 0.0
        %4519 = vmatprep.subr.mxu0 0.0
        %4520 = vmatpush1.msra.mxu0 0.0
        %4521 = vmatprep.subr.mxu0 0.0
        %4522 = vmatpush1.msra.mxu0 0.0
        %4523 = vmatprep.subr.mxu0 0.0
        %4524 = vmatpush1.msra.mxu0 0.0
        %4525 = vmatprep.subr.mxu0 0.0
        %4526 = vmatpush1.msra.mxu0 0.0
        %4527 = vmatprep.subr.mxu0 0.0
        %4528 = vmatpush1.msra.mxu0 0.0
        %4529 = vmatprep.subr.mxu0 0.0
        %4530 = vmatpush1.msra.mxu0 0.0
        %4531 = vmatprep.subr.mxu0 0.0
        %4532 = vmatpush1.msra.mxu0 0.0
        %4533 = vmatprep.subr.mxu0 0.0
        %4534 = vmatpush1.msra.mxu0 0.0
        %4535 = vmatprep.subr.mxu0 0.0
        %4536 = vmatpush1.msra.mxu0 0.0
        %4537 = vmatprep.subr.mxu0 0.0
        %4538 = vmatpush1.msra.mxu0 0.0
        %4539 = vmatprep.subr.mxu0 0.0
        %4540 = vmatpush1.msra.mxu0 0.0
        %4541 = vmatprep.subr.mxu0 0.0
        %4542 = vmatpush1.msra.mxu0 0.0
        %4543 = vmatprep.subr.mxu0 0.0
        %4544 = vmatpush1.msra.mxu0 0.0
        %4545 = vmatprep.subr.mxu0 0.0
        %4546 = vmatpush1.msra.mxu0 0.0
        %4547 = vmatprep.subr.mxu0 0.0
        %4548 = vmatpush1.msra.mxu0 0.0
        %4549 = vmatprep.subr.mxu0 0.0
        %4550 = vmatpush1.msra.mxu0 0.0
        %4551 = vmatprep.subr.mxu0 0.0
        %4552 = vmatpush1.msra.mxu0 0.0
        %4553 = vmatprep.subr.mxu0 0.0
        %4554 = vmatpush1.msra.mxu0 0.0
        %4555 = vmatprep.subr.mxu0 0.0
        %4556 = vmatpush1.msra.mxu0 0.0
        %4557 = vmatprep.subr.mxu0 0.0
        %4558 = vmatpush1.msra.mxu0 0.0
        %4559 = vmatprep.subr.mxu0 0.0
        %4560 = vmatpush1.msra.mxu0 0.0
        %4561 = vmatprep.mubr.f32.mxu0 0.0
        %4562 = vmatmul.mubr.f32.gmra.mrb[0].mxu0 %v4144
        %v4563 = vpop.f32.mrb[0].mxu0
        %v4564 = vadd.f32 0.0, %v4563
        %v4565 = vpop.f32.mrb[0].mxu0
        %v4566 = vadd.f32 0.0, %v4565
        %4567 = vmatprep.mubr.f32.mxu0 0.0
        %4568 = vmatmul.mubr.f32.gmra.mrb[0].mxu0 %v4147
        %v4569 = vpop.f32.mrb[0].mxu0
        %v4570 = vadd.f32 0.0, %v4569
        %v4571 = vpop.f32.mrb[0].mxu0
        %v4572 = vadd.f32 0.0, %v4571
        %4573 = vmatprep.mubr.f32.mxu0 0.0
        %4574 = vmatmul.mubr.f32.gmra.mrb[0].mxu0 %v4150
        %v4575 = vpop.f32.mrb[0].mxu0
        %v4576 = vadd.f32 0.0, %v4575
        %v4577 = vpop.f32.mrb[0].mxu0
        %v4578 = vadd.f32 0.0, %v4577
        %4579 = vmatprep.mubr.f32.mxu0 0.0
        %4580 = vmatmul.mubr.f32.gmra.mrb[0].mxu0 %v4153
        %v4581 = vpop.f32.mrb[0].mxu0
        %v4582 = vadd.f32 0.0, %v4581
        %v4583 = vpop.f32.mrb[0].mxu0
        %v4584 = vadd.f32 0.0, %v4583
        %4585 = vmatprep.mubr.f32.mxu0 0.0
        %4586 = vmatmul.mubr.f32.gmra.mrb[0].mxu0 %v4156
        %v4587 = vpop.f32.mrb[0].mxu0
        %v4588 = vadd.f32 0.0, %v4587
        %v4589 = vpop.f32.mrb[0].mxu0
        %v4590 = vadd.f32 0.0, %v4589
        %4591 = vmatprep.mubr.f32.mxu0 0.0
        %4592 = vmatmul.mubr.f32.gmra.mrb[0].mxu0 %v4159
        %v4593 = vpop.f32.mrb[0].mxu0
        %v4594 = vadd.f32 0.0, %v4593
        %v4595 = vpop.f32.mrb[0].mxu0
        %v4596 = vadd.f32 0.0, %v4595
        %4597 = vmatprep.mubr.f32.mxu0 0.0
        %4598 = vmatmul.mubr.f32.gmra.mrb[0].mxu0 %v4162
        %v4599 = vpop.f32.mrb[0].mxu0
        %v4600 = vadd.f32 0.0, %v4599
        %v4601 = vpop.f32.mrb[0].mxu0
        %v4602 = vadd.f32 0.0, %v4601
        %4603 = vmatprep.mubr.f32.mxu0 0.0
        %4604 = vmatmul.mubr.f32.gmra.mrb[0].mxu0 %v4165
        %v4605 = vpop.f32.mrb[0].mxu0
        %v4606 = vadd.f32 0.0, %v4605
        %v4607 = vpop.f32.mrb[0].mxu0
        %v4608 = vadd.f32 0.0, %v4607
        %4609 = vdwg.mxu0
        %v4610 = vld [vmem:[%s2055] sm:$0xff]
        %v4611 = vld [vmem:[%s2055 + $0x8] sm:$0xff]
        %v4612 = vld [vmem:[%s2055 + $0x10] sm:$0xff]
        %v4613 = vld [vmem:[%s2055 + $0x18] sm:$0xff]
        %v4614 = vld [vmem:[%s2055 + $0x20] sm:$0xff]
        %v4615 = vld [vmem:[%s2055 + $0x28] sm:$0xff]
        %v4616 = vld [vmem:[%s2055 + $0x30] sm:$0xff]
        %v4617 = vld [vmem:[%s2055 + $0x38] sm:$0xff]
        %v4618 = vld [vmem:[%s2055 + $0x40] sm:$0xff]
        %v4619 = vld [vmem:[%s2055 + $0x48] sm:$0xff]
        %v4620 = vld [vmem:[%s2055 + $0x50] sm:$0xff]
        %v4621 = vld [vmem:[%s2055 + $0x58] sm:$0xff]
        %v4622 = vld [vmem:[%s2055 + $0x60] sm:$0xff]
        %v4623 = vld [vmem:[%s2055 + $0x68] sm:$0xff]
        %v4624 = vld [vmem:[%s2055 + $0x70] sm:$0xff]
        %v4625 = vld [vmem:[%s2055 + $0x78] sm:$0xff]
        %v4626 = vmul.f32 %v4564, %v4610
        %v4627 = vmul.f32 %v4566, %v4611
        %v4628 = vmul.f32 %v4570, %v4612
        %v4629 = vmul.f32 %v4572, %v4613
        %v4630 = vmul.f32 %v4576, %v4614
        %v4631 = vmul.f32 %v4578, %v4615
        %v4632 = vmul.f32 %v4582, %v4616
        %v4633 = vmul.f32 %v4584, %v4617
        %v4634 = vmul.f32 %v4588, %v4618
        %v4635 = vmul.f32 %v4590, %v4619
        %v4636 = vmul.f32 %v4594, %v4620
        %v4637 = vmul.f32 %v4596, %v4621
        %v4638 = vmul.f32 %v4600, %v4622
        %v4639 = vmul.f32 %v4602, %v4623
        %v4640 = vmul.f32 %v4606, %v4624
        %v4641 = vmul.f32 %v4608, %v4625
        %v4642 = vadd.f32 %v4477, %v4626
        %v4643 = vadd.f32 %v4478, %v4627
        %v4644 = vadd.f32 %v4479, %v4628
        %v4645 = vadd.f32 %v4480, %v4629
        %v4646 = vadd.f32 %v4481, %v4630
        %v4647 = vadd.f32 %v4482, %v4631
        %v4648 = vadd.f32 %v4483, %v4632
        %v4649 = vadd.f32 %v4484, %v4633
        %v4650 = vadd.f32 %v4485, %v4634
        %v4651 = vadd.f32 %v4486, %v4635
        %v4652 = vadd.f32 %v4487, %v4636
        %v4653 = vadd.f32 %v4488, %v4637
        %v4654 = vadd.f32 %v4489, %v4638
        %v4655 = vadd.f32 %v4490, %v4639
        %v4656 = vadd.f32 %v4491, %v4640
        %v4657 = vadd.f32 %v4492, %v4641
        %v4658 = vld [vmem:[%s2516] sm:$0xff]
        %v4659 = vld [vmem:[%s2516 + $0x8] sm:$0xff]
        %v4660 = vmul.f32 %v4658, %v4136
        %v4661 = vmul.f32 %v4659, %v4138
        %4662 = vmatprep.subr.mxu0 %v4661
        %4663 = vmatpush1.msra.mxu0 %v4660
        %4664 = vmatprep.subr.mxu0 0.0
        %4665 = vmatpush1.msra.mxu0 0.0
        %4666 = vmatprep.subr.mxu0 0.0
        %4667 = vmatpush1.msra.mxu0 0.0
        %4668 = vmatprep.subr.mxu0 0.0
        %4669 = vmatpush1.msra.mxu0 0.0
        %4670 = vmatprep.subr.mxu0 0.0
        %4671 = vmatpush1.msra.mxu0 0.0
        %4672 = vmatprep.subr.mxu0 0.0
        %4673 = vmatpush1.msra.mxu0 0.0
        %4674 = vmatprep.subr.mxu0 0.0
        %4675 = vmatpush1.msra.mxu0 0.0
        %4676 = vmatprep.subr.mxu0 0.0
        %4677 = vmatpush1.msra.mxu0 0.0
        %4678 = vmatprep.subr.mxu0 0.0
        %4679 = vmatpush1.msra.mxu0 0.0
        %4680 = vmatprep.subr.mxu0 0.0
        %4681 = vmatpush1.msra.mxu0 0.0
        %4682 = vmatprep.subr.mxu0 0.0
        %4683 = vmatpush1.msra.mxu0 0.0
        %4684 = vmatprep.subr.mxu0 0.0
        %4685 = vmatpush1.msra.mxu0 0.0
        %4686 = vmatprep.subr.mxu0 0.0
        %4687 = vmatpush1.msra.mxu0 0.0
        %4688 = vmatprep.subr.mxu0 0.0
        %4689 = vmatpush1.msra.mxu0 0.0
        %4690 = vmatprep.subr.mxu0 0.0
        %4691 = vmatpush1.msra.mxu0 0.0
        %4692 = vmatprep.subr.mxu0 0.0
        %4693 = vmatpush1.msra.mxu0 0.0
        %4694 = vmatprep.subr.mxu0 0.0
        %4695 = vmatpush1.msra.mxu0 0.0
        %4696 = vmatprep.subr.mxu0 0.0
        %4697 = vmatpush1.msra.mxu0 0.0
        %4698 = vmatprep.subr.mxu0 0.0
        %4699 = vmatpush1.msra.mxu0 0.0
        %4700 = vmatprep.subr.mxu0 0.0
        %4701 = vmatpush1.msra.mxu0 0.0
        %4702 = vmatprep.subr.mxu0 0.0
        %4703 = vmatpush1.msra.mxu0 0.0
        %4704 = vmatprep.subr.mxu0 0.0
        %4705 = vmatpush1.msra.mxu0 0.0
        %4706 = vmatprep.subr.mxu0 0.0
        %4707 = vmatpush1.msra.mxu0 0.0
        %4708 = vmatprep.subr.mxu0 0.0
        %4709 = vmatpush1.msra.mxu0 0.0
        %4710 = vmatprep.subr.mxu0 0.0
        %4711 = vmatpush1.msra.mxu0 0.0
        %4712 = vmatprep.subr.mxu0 0.0
        %4713 = vmatpush1.msra.mxu0 0.0
        %4714 = vmatprep.subr.mxu0 0.0
        %4715 = vmatpush1.msra.mxu0 0.0
        %4716 = vmatprep.subr.mxu0 0.0
        %4717 = vmatpush1.msra.mxu0 0.0
        %4718 = vmatprep.subr.mxu0 0.0
        %4719 = vmatpush1.msra.mxu0 0.0
        %4720 = vmatprep.subr.mxu0 0.0
        %4721 = vmatpush1.msra.mxu0 0.0
        %4722 = vmatprep.subr.mxu0 0.0
        %4723 = vmatpush1.msra.mxu0 0.0
        %4724 = vmatprep.subr.mxu0 0.0
        %4725 = vmatpush1.msra.mxu0 0.0
        %4726 = vmatprep.mubr.f32.mxu0 0.0
        %4727 = vmatmul.mubr.f32.gmra.mrb[0].mxu0 %v4144
        %v4728 = vpop.f32.mrb[0].mxu0
        %v4729 = vadd.f32 0.0, %v4728
        %v4730 = vpop.f32.mrb[0].mxu0
        %v4731 = vadd.f32 0.0, %v4730
        %4732 = vmatprep.mubr.f32.mxu0 0.0
        %4733 = vmatmul.mubr.f32.gmra.mrb[0].mxu0 %v4147
        %v4734 = vpop.f32.mrb[0].mxu0
        %v4735 = vadd.f32 0.0, %v4734
        %v4736 = vpop.f32.mrb[0].mxu0
        %v4737 = vadd.f32 0.0, %v4736
        %4738 = vmatprep.mubr.f32.mxu0 0.0
        %4739 = vmatmul.mubr.f32.gmra.mrb[0].mxu0 %v4150
        %v4740 = vpop.f32.mrb[0].mxu0
        %v4741 = vadd.f32 0.0, %v4740
        %v4742 = vpop.f32.mrb[0].mxu0
        %v4743 = vadd.f32 0.0, %v4742
        %4744 = vmatprep.mubr.f32.mxu0 0.0
        %4745 = vmatmul.mubr.f32.gmra.mrb[0].mxu0 %v4153
        %v4746 = vpop.f32.mrb[0].mxu0
        %v4747 = vadd.f32 0.0, %v4746
        %v4748 = vpop.f32.mrb[0].mxu0
        %v4749 = vadd.f32 0.0, %v4748
        %4750 = vmatprep.mubr.f32.mxu0 0.0
        %4751 = vmatmul.mubr.f32.gmra.mrb[0].mxu0 %v4156
        %v4752 = vpop.f32.mrb[0].mxu0
        %v4753 = vadd.f32 0.0, %v4752
        %v4754 = vpop.f32.mrb[0].mxu0
        %v4755 = vadd.f32 0.0, %v4754
        %4756 = vmatprep.mubr.f32.mxu0 0.0
        %4757 = vmatmul.mubr.f32.gmra.mrb[0].mxu0 %v4159
        %v4758 = vpop.f32.mrb[0].mxu0
        %v4759 = vadd.f32 0.0, %v4758
        %v4760 = vpop.f32.mrb[0].mxu0
        %v4761 = vadd.f32 0.0, %v4760
        %4762 = vmatprep.mubr.f32.mxu0 0.0
        %4763 = vmatmul.mubr.f32.gmra.mrb[0].mxu0 %v4162
        %v4764 = vpop.f32.mrb[0].mxu0
        %v4765 = vadd.f32 0.0, %v4764
        %v4766 = vpop.f32.mrb[0].mxu0
        %v4767 = vadd.f32 0.0, %v4766
        %4768 = vmatprep.mubr.f32.mxu0 0.0
        %4769 = vmatmul.mubr.f32.gmra.mrb[0].mxu0 %v4165
        %v4770 = vpop.f32.mrb[0].mxu0
        %v4771 = vadd.f32 0.0, %v4770
        %v4772 = vpop.f32.mrb[0].mxu0
        %v4773 = vadd.f32 0.0, %v4772
        %4774 = vdwg.mxu0
        %v4775 = vld [vmem:[%s2428] sm:$0xff]
        %v4776 = vld [vmem:[%s2428 + $0x8] sm:$0xff]
        %v4777 = vld [vmem:[%s2428 + $0x10] sm:$0xff]
        %v4778 = vld [vmem:[%s2428 + $0x18] sm:$0xff]
        %v4779 = vld [vmem:[%s2428 + $0x20] sm:$0xff]
        %v4780 = vld [vmem:[%s2428 + $0x28] sm:$0xff]
        %v4781 = vld [vmem:[%s2428 + $0x30] sm:$0xff]
        %v4782 = vld [vmem:[%s2428 + $0x38] sm:$0xff]
        %v4783 = vld [vmem:[%s2428 + $0x40] sm:$0xff]
        %v4784 = vld [vmem:[%s2428 + $0x48] sm:$0xff]
        %v4785 = vld [vmem:[%s2428 + $0x50] sm:$0xff]
        %v4786 = vld [vmem:[%s2428 + $0x58] sm:$0xff]
        %v4787 = vld [vmem:[%s2428 + $0x60] sm:$0xff]
        %v4788 = vld [vmem:[%s2428 + $0x68] sm:$0xff]
        %v4789 = vld [vmem:[%s2428 + $0x70] sm:$0xff]
        %v4790 = vld [vmem:[%s2428 + $0x78] sm:$0xff]
        %v4791 = vmul.f32 %v4729, %v4775
        %v4792 = vmul.f32 %v4731, %v4776
        %v4793 = vmul.f32 %v4735, %v4777
        %v4794 = vmul.f32 %v4737, %v4778
        %v4795 = vmul.f32 %v4741, %v4779
        %v4796 = vmul.f32 %v4743, %v4780
        %v4797 = vmul.f32 %v4747, %v4781
        %v4798 = vmul.f32 %v4749, %v4782
        %v4799 = vmul.f32 %v4753, %v4783
        %v4800 = vmul.f32 %v4755, %v4784
        %v4801 = vmul.f32 %v4759, %v4785
        %v4802 = vmul.f32 %v4761, %v4786
        %v4803 = vmul.f32 %v4765, %v4787
        %v4804 = vmul.f32 %v4767, %v4788
        %v4805 = vmul.f32 %v4771, %v4789
        %v4806 = vmul.f32 %v4773, %v4790
        %v4807 = vadd.f32 %v4642, %v4791
        %v4808 = vadd.f32 %v4643, %v4792
        %v4809 = vadd.f32 %v4644, %v4793
        %v4810 = vadd.f32 %v4645, %v4794
        %v4811 = vadd.f32 %v4646, %v4795
        %v4812 = vadd.f32 %v4647, %v4796
        %v4813 = vadd.f32 %v4648, %v4797
        %v4814 = vadd.f32 %v4649, %v4798
        %v4815 = vadd.f32 %v4650, %v4799
        %v4816 = vadd.f32 %v4651, %v4800
        %v4817 = vadd.f32 %v4652, %v4801
        %v4818 = vadd.f32 %v4653, %v4802
        %v4819 = vadd.f32 %v4654, %v4803
        %v4820 = vadd.f32 %v4655, %v4804
        %v4821 = vadd.f32 %v4656, %v4805
        %v4822 = vadd.f32 %v4657, %v4806
        %v4823 = vld [vmem:[%s2889] sm:$0xff]
        %v4824 = vld [vmem:[%s2889 + $0x8] sm:$0xff]
        %v4825 = vmul.f32 %v4823, %v4136
        %v4826 = vmul.f32 %v4824, %v4138
        %4827 = vmatprep.subr.mxu0 %v4826
        %4828 = vmatpush1.msra.mxu0 %v4825
        %4829 = vmatprep.subr.mxu0 0.0
        %4830 = vmatpush1.msra.mxu0 0.0
        %4831 = vmatprep.subr.mxu0 0.0
        %4832 = vmatpush1.msra.mxu0 0.0
        %4833 = vmatprep.subr.mxu0 0.0
        %4834 = vmatpush1.msra.mxu0 0.0
        %4835 = vmatprep.subr.mxu0 0.0
        %4836 = vmatpush1.msra.mxu0 0.0
        %4837 = vmatprep.subr.mxu0 0.0
        %4838 = vmatpush1.msra.mxu0 0.0
        %4839 = vmatprep.subr.mxu0 0.0
        %4840 = vmatpush1.msra.mxu0 0.0
        %4841 = vmatprep.subr.mxu0 0.0
        %4842 = vmatpush1.msra.mxu0 0.0
        %4843 = vmatprep.subr.mxu0 0.0
        %4844 = vmatpush1.msra.mxu0 0.0
        %4845 = vmatprep.subr.mxu0 0.0
        %4846 = vmatpush1.msra.mxu0 0.0
        %4847 = vmatprep.subr.mxu0 0.0
        %4848 = vmatpush1.msra.mxu0 0.0
        %4849 = vmatprep.subr.mxu0 0.0
        %4850 = vmatpush1.msra.mxu0 0.0
        %4851 = vmatprep.subr.mxu0 0.0
        %4852 = vmatpush1.msra.mxu0 0.0
        %4853 = vmatprep.subr.mxu0 0.0
        %4854 = vmatpush1.msra.mxu0 0.0
        %4855 = vmatprep.subr.mxu0 0.0
        %4856 = vmatpush1.msra.mxu0 0.0
        %4857 = vmatprep.subr.mxu0 0.0
        %4858 = vmatpush1.msra.mxu0 0.0
        %4859 = vmatprep.subr.mxu0 0.0
        %4860 = vmatpush1.msra.mxu0 0.0
        %4861 = vmatprep.subr.mxu0 0.0
        %4862 = vmatpush1.msra.mxu0 0.0
        %4863 = vmatprep.subr.mxu0 0.0
        %4864 = vmatpush1.msra.mxu0 0.0
        %4865 = vmatprep.subr.mxu0 0.0
        %4866 = vmatpush1.msra.mxu0 0.0
        %4867 = vmatprep.subr.mxu0 0.0
        %4868 = vmatpush1.msra.mxu0 0.0
        %4869 = vmatprep.subr.mxu0 0.0
        %4870 = vmatpush1.msra.mxu0 0.0
        %4871 = vmatprep.subr.mxu0 0.0
        %4872 = vmatpush1.msra.mxu0 0.0
        %4873 = vmatprep.subr.mxu0 0.0
        %4874 = vmatpush1.msra.mxu0 0.0
        %4875 = vmatprep.subr.mxu0 0.0
        %4876 = vmatpush1.msra.mxu0 0.0
        %4877 = vmatprep.subr.mxu0 0.0
        %4878 = vmatpush1.msra.mxu0 0.0
        %4879 = vmatprep.subr.mxu0 0.0
        %4880 = vmatpush1.msra.mxu0 0.0
        %4881 = vmatprep.subr.mxu0 0.0
        %4882 = vmatpush1.msra.mxu0 0.0
        %4883 = vmatprep.subr.mxu0 0.0
        %4884 = vmatpush1.msra.mxu0 0.0
        %4885 = vmatprep.subr.mxu0 0.0
        %4886 = vmatpush1.msra.mxu0 0.0
        %4887 = vmatprep.subr.mxu0 0.0
        %4888 = vmatpush1.msra.mxu0 0.0
        %4889 = vmatprep.subr.mxu0 0.0
        %4890 = vmatpush1.msra.mxu0 0.0
        %4891 = vmatprep.mubr.f32.mxu0 0.0
        %4892 = vmatmul.mubr.f32.gmra.mrb[0].mxu0 %v4144
        %v4893 = vpop.f32.mrb[0].mxu0
        %v4894 = vadd.f32 0.0, %v4893
        %v4895 = vpop.f32.mrb[0].mxu0
        %v4896 = vadd.f32 0.0, %v4895
        %4897 = vmatprep.mubr.f32.mxu0 0.0
        %4898 = vmatmul.mubr.f32.gmra.mrb[0].mxu0 %v4147
        %v4899 = vpop.f32.mrb[0].mxu0
        %v4900 = vadd.f32 0.0, %v4899
        %v4901 = vpop.f32.mrb[0].mxu0
        %v4902 = vadd.f32 0.0, %v4901
        %4903 = vmatprep.mubr.f32.mxu0 0.0
        %4904 = vmatmul.mubr.f32.gmra.mrb[0].mxu0 %v4150
        %v4905 = vpop.f32.mrb[0].mxu0
        %v4906 = vadd.f32 0.0, %v4905
        %v4907 = vpop.f32.mrb[0].mxu0
        %v4908 = vadd.f32 0.0, %v4907
        %4909 = vmatprep.mubr.f32.mxu0 0.0
        %4910 = vmatmul.mubr.f32.gmra.mrb[0].mxu0 %v4153
        %v4911 = vpop.f32.mrb[0].mxu0
        %v4912 = vadd.f32 0.0, %v4911
        %v4913 = vpop.f32.mrb[0].mxu0
        %v4914 = vadd.f32 0.0, %v4913
        %4915 = vmatprep.mubr.f32.mxu0 0.0
        %4916 = vmatmul.mubr.f32.gmra.mrb[0].mxu0 %v4156
        %v4917 = vpop.f32.mrb[0].mxu0
        %v4918 = vadd.f32 0.0, %v4917
        %v4919 = vpop.f32.mrb[0].mxu0
        %v4920 = vadd.f32 0.0, %v4919
        %4921 = vmatprep.mubr.f32.mxu0 0.0
        %4922 = vmatmul.mubr.f32.gmra.mrb[0].mxu0 %v4159
        %v4923 = vpop.f32.mrb[0].mxu0
        %v4924 = vadd.f32 0.0, %v4923
        %v4925 = vpop.f32.mrb[0].mxu0
        %v4926 = vadd.f32 0.0, %v4925
        %4927 = vmatprep.mubr.f32.mxu0 0.0
        %4928 = vmatmul.mubr.f32.gmra.mrb[0].mxu0 %v4162
        %v4929 = vpop.f32.mrb[0].mxu0
        %v4930 = vadd.f32 0.0, %v4929
        %v4931 = vpop.f32.mrb[0].mxu0
        %v4932 = vadd.f32 0.0, %v4931
        %4933 = vmatprep.mubr.f32.mxu0 0.0
        %4934 = vmatmul.mubr.f32.gmra.mrb[0].mxu0 %v4165
        %v4935 = vpop.f32.mrb[0].mxu0
        %v4936 = vadd.f32 0.0, %v4935
        %v4937 = vpop.f32.mrb[0].mxu0
        %v4938 = vadd.f32 0.0, %v4937
        %4939 = vdwg.mxu0
        %v4940 = vld [vmem:[%s2801] sm:$0xff]
        %v4941 = vld [vmem:[%s2801 + $0x8] sm:$0xff]
        %v4942 = vld [vmem:[%s2801 + $0x10] sm:$0xff]
        %v4943 = vld [vmem:[%s2801 + $0x18] sm:$0xff]
        %v4944 = vld [vmem:[%s2801 + $0x20] sm:$0xff]
        %v4945 = vld [vmem:[%s2801 + $0x28] sm:$0xff]
        %v4946 = vld [vmem:[%s2801 + $0x30] sm:$0xff]
        %v4947 = vld [vmem:[%s2801 + $0x38] sm:$0xff]
        %v4948 = vld [vmem:[%s2801 + $0x40] sm:$0xff]
        %v4949 = vld [vmem:[%s2801 + $0x48] sm:$0xff]
        %v4950 = vld [vmem:[%s2801 + $0x50] sm:$0xff]
        %v4951 = vld [vmem:[%s2801 + $0x58] sm:$0xff]
        %v4952 = vld [vmem:[%s2801 + $0x60] sm:$0xff]
        %v4953 = vld [vmem:[%s2801 + $0x68] sm:$0xff]
        %v4954 = vld [vmem:[%s2801 + $0x70] sm:$0xff]
        %v4955 = vld [vmem:[%s2801 + $0x78] sm:$0xff]
        %v4956 = vmul.f32 %v4894, %v4940
        %v4957 = vmul.f32 %v4896, %v4941
        %v4958 = vmul.f32 %v4900, %v4942
        %v4959 = vmul.f32 %v4902, %v4943
        %v4960 = vmul.f32 %v4906, %v4944
        %v4961 = vmul.f32 %v4908, %v4945
        %v4962 = vmul.f32 %v4912, %v4946
        %v4963 = vmul.f32 %v4914, %v4947
        %v4964 = vmul.f32 %v4918, %v4948
        %v4965 = vmul.f32 %v4920, %v4949
        %v4966 = vmul.f32 %v4924, %v4950
        %v4967 = vmul.f32 %v4926, %v4951
        %v4968 = vmul.f32 %v4930, %v4952
        %v4969 = vmul.f32 %v4932, %v4953
        %v4970 = vmul.f32 %v4936, %v4954
        %v4971 = vmul.f32 %v4938, %v4955
        %v4972 = vadd.f32 %v4807, %v4956
        %v4973 = vadd.f32 %v4808, %v4957
        %v4974 = vadd.f32 %v4809, %v4958
        %v4975 = vadd.f32 %v4810, %v4959
        %v4976 = vadd.f32 %v4811, %v4960
        %v4977 = vadd.f32 %v4812, %v4961
        %v4978 = vadd.f32 %v4813, %v4962
        %v4979 = vadd.f32 %v4814, %v4963
        %v4980 = vadd.f32 %v4815, %v4964
        %v4981 = vadd.f32 %v4816, %v4965
        %v4982 = vadd.f32 %v4817, %v4966
        %v4983 = vadd.f32 %v4818, %v4967
        %v4984 = vadd.f32 %v4819, %v4968
        %v4985 = vadd.f32 %v4820, %v4969
        %v4986 = vadd.f32 %v4821, %v4970
        %v4987 = vadd.f32 %v4822, %v4971
        %v4988 = vld [vmem:[%s3262] sm:$0xff]
        %v4989 = vld [vmem:[%s3262 + $0x8] sm:$0xff]
        %v4990 = vmul.f32 %v4988, %v4136
        %v4991 = vmul.f32 %v4989, %v4138
        %4992 = vmatprep.subr.mxu0 %v4991
        %4993 = vmatpush1.msra.mxu0 %v4990
        %4994 = vmatprep.subr.mxu0 0.0
        %4995 = vmatpush1.msra.mxu0 0.0
        %4996 = vmatprep.subr.mxu0 0.0
        %4997 = vmatpush1.msra.mxu0 0.0
        %4998 = vmatprep.subr.mxu0 0.0
        %4999 = vmatpush1.msra.mxu0 0.0
        %5000 = vmatprep.subr.mxu0 0.0
        %5001 = vmatpush1.msra.mxu0 0.0
        %5002 = vmatprep.subr.mxu0 0.0
        %5003 = vmatpush1.msra.mxu0 0.0
        %5004 = vmatprep.subr.mxu0 0.0
        %5005 = vmatpush1.msra.mxu0 0.0
        %5006 = vmatprep.subr.mxu0 0.0
        %5007 = vmatpush1.msra.mxu0 0.0
        %5008 = vmatprep.subr.mxu0 0.0
        %5009 = vmatpush1.msra.mxu0 0.0
        %5010 = vmatprep.subr.mxu0 0.0
        %5011 = vmatpush1.msra.mxu0 0.0
        %5012 = vmatprep.subr.mxu0 0.0
        %5013 = vmatpush1.msra.mxu0 0.0
        %5014 = vmatprep.subr.mxu0 0.0
        %5015 = vmatpush1.msra.mxu0 0.0
        %5016 = vmatprep.subr.mxu0 0.0
        %5017 = vmatpush1.msra.mxu0 0.0
        %5018 = vmatprep.subr.mxu0 0.0
        %5019 = vmatpush1.msra.mxu0 0.0
        %5020 = vmatprep.subr.mxu0 0.0
        %5021 = vmatpush1.msra.mxu0 0.0
        %5022 = vmatprep.subr.mxu0 0.0
        %5023 = vmatpush1.msra.mxu0 0.0
        %5024 = vmatprep.subr.mxu0 0.0
        %5025 = vmatpush1.msra.mxu0 0.0
        %5026 = vmatprep.subr.mxu0 0.0
        %5027 = vmatpush1.msra.mxu0 0.0
        %5028 = vmatprep.subr.mxu0 0.0
        %5029 = vmatpush1.msra.mxu0 0.0
        %5030 = vmatprep.subr.mxu0 0.0
        %5031 = vmatpush1.msra.mxu0 0.0
        %5032 = vmatprep.subr.mxu0 0.0
        %5033 = vmatpush1.msra.mxu0 0.0
        %5034 = vmatprep.subr.mxu0 0.0
        %5035 = vmatpush1.msra.mxu0 0.0
        %5036 = vmatprep.subr.mxu0 0.0
        %5037 = vmatpush1.msra.mxu0 0.0
        %5038 = vmatprep.subr.mxu0 0.0
        %5039 = vmatpush1.msra.mxu0 0.0
        %5040 = vmatprep.subr.mxu0 0.0
        %5041 = vmatpush1.msra.mxu0 0.0
        %5042 = vmatprep.subr.mxu0 0.0
        %5043 = vmatpush1.msra.mxu0 0.0
        %5044 = vmatprep.subr.mxu0 0.0
        %5045 = vmatpush1.msra.mxu0 0.0
        %5046 = vmatprep.subr.mxu0 0.0
        %5047 = vmatpush1.msra.mxu0 0.0
        %5048 = vmatprep.subr.mxu0 0.0
        %5049 = vmatpush1.msra.mxu0 0.0
        %5050 = vmatprep.subr.mxu0 0.0
        %5051 = vmatpush1.msra.mxu0 0.0
        %5052 = vmatprep.subr.mxu0 0.0
        %5053 = vmatpush1.msra.mxu0 0.0
        %5054 = vmatprep.subr.mxu0 0.0
        %5055 = vmatpush1.msra.mxu0 0.0
        %5056 = vmatprep.mubr.f32.mxu0 0.0
        %5057 = vmatmul.mubr.f32.gmra.mrb[0].mxu0 %v4144
        %v5058 = vpop.f32.mrb[0].mxu0
        %v5059 = vadd.f32 0.0, %v5058
        %v5060 = vpop.f32.mrb[0].mxu0
        %v5061 = vadd.f32 0.0, %v5060
        %5062 = vmatprep.mubr.f32.mxu0 0.0
        %5063 = vmatmul.mubr.f32.gmra.mrb[0].mxu0 %v4147
        %v5064 = vpop.f32.mrb[0].mxu0
        %v5065 = vadd.f32 0.0, %v5064
        %v5066 = vpop.f32.mrb[0].mxu0
        %v5067 = vadd.f32 0.0, %v5066
        %5068 = vmatprep.mubr.f32.mxu0 0.0
        %5069 = vmatmul.mubr.f32.gmra.mrb[0].mxu0 %v4150
        %v5070 = vpop.f32.mrb[0].mxu0
        %v5071 = vadd.f32 0.0, %v5070
        %v5072 = vpop.f32.mrb[0].mxu0
        %v5073 = vadd.f32 0.0, %v5072
        %5074 = vmatprep.mubr.f32.mxu0 0.0
        %5075 = vmatmul.mubr.f32.gmra.mrb[0].mxu0 %v4153
        %v5076 = vpop.f32.mrb[0].mxu0
        %v5077 = vadd.f32 0.0, %v5076
        %v5078 = vpop.f32.mrb[0].mxu0
        %v5079 = vadd.f32 0.0, %v5078
        %5080 = vmatprep.mubr.f32.mxu0 0.0
        %5081 = vmatmul.mubr.f32.gmra.mrb[0].mxu0 %v4156
        %v5082 = vpop.f32.mrb[0].mxu0
        %v5083 = vadd.f32 0.0, %v5082
        %v5084 = vpop.f32.mrb[0].mxu0
        %v5085 = vadd.f32 0.0, %v5084
        %5086 = vmatprep.mubr.f32.mxu0 0.0
        %5087 = vmatmul.mubr.f32.gmra.mrb[0].mxu0 %v4159
        %v5088 = vpop.f32.mrb[0].mxu0
        %v5089 = vadd.f32 0.0, %v5088
        %v5090 = vpop.f32.mrb[0].mxu0
        %v5091 = vadd.f32 0.0, %v5090
        %5092 = vmatprep.mubr.f32.mxu0 0.0
        %5093 = vmatmul.mubr.f32.gmra.mrb[0].mxu0 %v4162
        %v5094 = vpop.f32.mrb[0].mxu0
        %v5095 = vadd.f32 0.0, %v5094
        %v5096 = vpop.f32.mrb[0].mxu0
        %v5097 = vadd.f32 0.0, %v5096
        %5098 = vmatprep.mubr.f32.mxu0 0.0
        %5099 = vmatmul.mubr.f32.gmra.mrb[0].mxu0 %v4165
        %v5100 = vpop.f32.mrb[0].mxu0
        %v5101 = vadd.f32 0.0, %v5100
        %v5102 = vpop.f32.mrb[0].mxu0
        %v5103 = vadd.f32 0.0, %v5102
        %5104 = vdwg.mxu0
        %v5105 = vld [vmem:[%s3174] sm:$0xff]
        %v5106 = vld [vmem:[%s3174 + $0x8] sm:$0xff]
        %v5107 = vld [vmem:[%s3174 + $0x10] sm:$0xff]
        %v5108 = vld [vmem:[%s3174 + $0x18] sm:$0xff]
        %v5109 = vld [vmem:[%s3174 + $0x20] sm:$0xff]
        %v5110 = vld [vmem:[%s3174 + $0x28] sm:$0xff]
        %v5111 = vld [vmem:[%s3174 + $0x30] sm:$0xff]
        %v5112 = vld [vmem:[%s3174 + $0x38] sm:$0xff]
        %v5113 = vld [vmem:[%s3174 + $0x40] sm:$0xff]
        %v5114 = vld [vmem:[%s3174 + $0x48] sm:$0xff]
        %v5115 = vld [vmem:[%s3174 + $0x50] sm:$0xff]
        %v5116 = vld [vmem:[%s3174 + $0x58] sm:$0xff]
        %v5117 = vld [vmem:[%s3174 + $0x60] sm:$0xff]
        %v5118 = vld [vmem:[%s3174 + $0x68] sm:$0xff]
        %v5119 = vld [vmem:[%s3174 + $0x70] sm:$0xff]
        %v5120 = vld [vmem:[%s3174 + $0x78] sm:$0xff]
        %v5121 = vmul.f32 %v5059, %v5105
        %v5122 = vmul.f32 %v5061, %v5106
        %v5123 = vmul.f32 %v5065, %v5107
        %v5124 = vmul.f32 %v5067, %v5108
        %v5125 = vmul.f32 %v5071, %v5109
        %v5126 = vmul.f32 %v5073, %v5110
        %v5127 = vmul.f32 %v5077, %v5111
        %v5128 = vmul.f32 %v5079, %v5112
        %v5129 = vmul.f32 %v5083, %v5113
        %v5130 = vmul.f32 %v5085, %v5114
        %v5131 = vmul.f32 %v5089, %v5115
        %v5132 = vmul.f32 %v5091, %v5116
        %v5133 = vmul.f32 %v5095, %v5117
        %v5134 = vmul.f32 %v5097, %v5118
        %v5135 = vmul.f32 %v5101, %v5119
        %v5136 = vmul.f32 %v5103, %v5120
        %v5137 = vadd.f32 %v4972, %v5121
        %v5138 = vadd.f32 %v4973, %v5122
        %v5139 = vadd.f32 %v4974, %v5123
        %v5140 = vadd.f32 %v4975, %v5124
        %v5141 = vadd.f32 %v4976, %v5125
        %v5142 = vadd.f32 %v4977, %v5126
        %v5143 = vadd.f32 %v4978, %v5127
        %v5144 = vadd.f32 %v4979, %v5128
        %v5145 = vadd.f32 %v4980, %v5129
        %v5146 = vadd.f32 %v4981, %v5130
        %v5147 = vadd.f32 %v4982, %v5131
        %v5148 = vadd.f32 %v4983, %v5132
        %v5149 = vadd.f32 %v4984, %v5133
        %v5150 = vadd.f32 %v4985, %v5134
        %v5151 = vadd.f32 %v4986, %v5135
        %v5152 = vadd.f32 %v4987, %v5136
        %v5153 = vld [vmem:[%s3635] sm:$0xff]
        %v5154 = vld [vmem:[%s3635 + $0x8] sm:$0xff]
        %v5155 = vmul.f32 %v5153, %v4136
        %v5156 = vmul.f32 %v5154, %v4138
        %5157 = vmatprep.subr.mxu0 %v5156
        %5158 = vmatpush1.msra.mxu0 %v5155
        %5159 = vmatprep.subr.mxu0 0.0
        %5160 = vmatpush1.msra.mxu0 0.0
        %5161 = vmatprep.subr.mxu0 0.0
        %5162 = vmatpush1.msra.mxu0 0.0
        %5163 = vmatprep.subr.mxu0 0.0
        %5164 = vmatpush1.msra.mxu0 0.0
        %5165 = vmatprep.subr.mxu0 0.0
        %5166 = vmatpush1.msra.mxu0 0.0
        %5167 = vmatprep.subr.mxu0 0.0
        %5168 = vmatpush1.msra.mxu0 0.0
        %5169 = vmatprep.subr.mxu0 0.0
        %5170 = vmatpush1.msra.mxu0 0.0
        %5171 = vmatprep.subr.mxu0 0.0
        %5172 = vmatpush1.msra.mxu0 0.0
        %5173 = vmatprep.subr.mxu0 0.0
        %5174 = vmatpush1.msra.mxu0 0.0
        %5175 = vmatprep.subr.mxu0 0.0
        %5176 = vmatpush1.msra.mxu0 0.0
        %5177 = vmatprep.subr.mxu0 0.0
        %5178 = vmatpush1.msra.mxu0 0.0
        %5179 = vmatprep.subr.mxu0 0.0
        %5180 = vmatpush1.msra.mxu0 0.0
        %5181 = vmatprep.subr.mxu0 0.0
        %5182 = vmatpush1.msra.mxu0 0.0
        %5183 = vmatprep.subr.mxu0 0.0
        %5184 = vmatpush1.msra.mxu0 0.0
        %5185 = vmatprep.subr.mxu0 0.0
        %5186 = vmatpush1.msra.mxu0 0.0
        %5187 = vmatprep.subr.mxu0 0.0
        %5188 = vmatpush1.msra.mxu0 0.0
        %5189 = vmatprep.subr.mxu0 0.0
        %5190 = vmatpush1.msra.mxu0 0.0
        %5191 = vmatprep.subr.mxu0 0.0
        %5192 = vmatpush1.msra.mxu0 0.0
        %5193 = vmatprep.subr.mxu0 0.0
        %5194 = vmatpush1.msra.mxu0 0.0
        %5195 = vmatprep.subr.mxu0 0.0
        %5196 = vmatpush1.msra.mxu0 0.0
        %5197 = vmatprep.subr.mxu0 0.0
        %5198 = vmatpush1.msra.mxu0 0.0
        %5199 = vmatprep.subr.mxu0 0.0
        %5200 = vmatpush1.msra.mxu0 0.0
        %5201 = vmatprep.subr.mxu0 0.0
        %5202 = vmatpush1.msra.mxu0 0.0
        %5203 = vmatprep.subr.mxu0 0.0
        %5204 = vmatpush1.msra.mxu0 0.0
        %5205 = vmatprep.subr.mxu0 0.0
        %5206 = vmatpush1.msra.mxu0 0.0
        %5207 = vmatprep.subr.mxu0 0.0
        %5208 = vmatpush1.msra.mxu0 0.0
        %5209 = vmatprep.subr.mxu0 0.0
        %5210 = vmatpush1.msra.mxu0 0.0
        %5211 = vmatprep.subr.mxu0 0.0
        %5212 = vmatpush1.msra.mxu0 0.0
        %5213 = vmatprep.subr.mxu0 0.0
        %5214 = vmatpush1.msra.mxu0 0.0
        %5215 = vmatprep.subr.mxu0 0.0
        %5216 = vmatpush1.msra.mxu0 0.0
        %5217 = vmatprep.subr.mxu0 0.0
        %5218 = vmatpush1.msra.mxu0 0.0
        %5219 = vmatprep.subr.mxu0 0.0
        %5220 = vmatpush1.msra.mxu0 0.0
        %5221 = vmatprep.mubr.f32.mxu0 0.0
        %5222 = vmatmul.mubr.f32.gmra.mrb[0].mxu0 %v4144
        %v5223 = vpop.f32.mrb[0].mxu0
        %v5224 = vadd.f32 0.0, %v5223
        %v5225 = vpop.f32.mrb[0].mxu0
        %v5226 = vadd.f32 0.0, %v5225
        %5227 = vmatprep.mubr.f32.mxu0 0.0
        %5228 = vmatmul.mubr.f32.gmra.mrb[0].mxu0 %v4147
        %v5229 = vpop.f32.mrb[0].mxu0
        %v5230 = vadd.f32 0.0, %v5229
        %v5231 = vpop.f32.mrb[0].mxu0
        %v5232 = vadd.f32 0.0, %v5231
        %5233 = vmatprep.mubr.f32.mxu0 0.0
        %5234 = vmatmul.mubr.f32.gmra.mrb[0].mxu0 %v4150
        %v5235 = vpop.f32.mrb[0].mxu0
        %v5236 = vadd.f32 0.0, %v5235
        %v5237 = vpop.f32.mrb[0].mxu0
        %v5238 = vadd.f32 0.0, %v5237
        %5239 = vmatprep.mubr.f32.mxu0 0.0
        %5240 = vmatmul.mubr.f32.gmra.mrb[0].mxu0 %v4153
        %v5241 = vpop.f32.mrb[0].mxu0
        %v5242 = vadd.f32 0.0, %v5241
        %v5243 = vpop.f32.mrb[0].mxu0
        %v5244 = vadd.f32 0.0, %v5243
        %5245 = vmatprep.mubr.f32.mxu0 0.0
        %5246 = vmatmul.mubr.f32.gmra.mrb[0].mxu0 %v4156
        %v5247 = vpop.f32.mrb[0].mxu0
        %v5248 = vadd.f32 0.0, %v5247
        %v5249 = vpop.f32.mrb[0].mxu0
        %v5250 = vadd.f32 0.0, %v5249
        %5251 = vmatprep.mubr.f32.mxu0 0.0
        %5252 = vmatmul.mubr.f32.gmra.mrb[0].mxu0 %v4159
        %v5253 = vpop.f32.mrb[0].mxu0
        %v5254 = vadd.f32 0.0, %v5253
        %v5255 = vpop.f32.mrb[0].mxu0
        %v5256 = vadd.f32 0.0, %v5255
        %5257 = vmatprep.mubr.f32.mxu0 0.0
        %5258 = vmatmul.mubr.f32.gmra.mrb[0].mxu0 %v4162
        %v5259 = vpop.f32.mrb[0].mxu0
        %v5260 = vadd.f32 0.0, %v5259
        %v5261 = vpop.f32.mrb[0].mxu0
        %v5262 = vadd.f32 0.0, %v5261
        %5263 = vmatprep.mubr.f32.mxu0 0.0
        %5264 = vmatmul.mubr.f32.gmra.mrb[0].mxu0 %v4165
        %v5265 = vpop.f32.mrb[0].mxu0
        %v5266 = vadd.f32 0.0, %v5265
        %v5267 = vpop.f32.mrb[0].mxu0
        %v5268 = vadd.f32 0.0, %v5267
        %5269 = vdwg.mxu0
        %v5270 = vld [vmem:[%s3547] sm:$0xff]
        %v5271 = vld [vmem:[%s3547 + $0x8] sm:$0xff]
        %v5272 = vld [vmem:[%s3547 + $0x10] sm:$0xff]
        %v5273 = vld [vmem:[%s3547 + $0x18] sm:$0xff]
        %v5274 = vld [vmem:[%s3547 + $0x20] sm:$0xff]
        %v5275 = vld [vmem:[%s3547 + $0x28] sm:$0xff]
        %v5276 = vld [vmem:[%s3547 + $0x30] sm:$0xff]
        %v5277 = vld [vmem:[%s3547 + $0x38] sm:$0xff]
        %v5278 = vld [vmem:[%s3547 + $0x40] sm:$0xff]
        %v5279 = vld [vmem:[%s3547 + $0x48] sm:$0xff]
        %v5280 = vld [vmem:[%s3547 + $0x50] sm:$0xff]
        %v5281 = vld [vmem:[%s3547 + $0x58] sm:$0xff]
        %v5282 = vld [vmem:[%s3547 + $0x60] sm:$0xff]
        %v5283 = vld [vmem:[%s3547 + $0x68] sm:$0xff]
        %v5284 = vld [vmem:[%s3547 + $0x70] sm:$0xff]
        %v5285 = vld [vmem:[%s3547 + $0x78] sm:$0xff]
        %v5286 = vmul.f32 %v5224, %v5270
        %v5287 = vmul.f32 %v5226, %v5271
        %v5288 = vmul.f32 %v5230, %v5272
        %v5289 = vmul.f32 %v5232, %v5273
        %v5290 = vmul.f32 %v5236, %v5274
        %v5291 = vmul.f32 %v5238, %v5275
        %v5292 = vmul.f32 %v5242, %v5276
        %v5293 = vmul.f32 %v5244, %v5277
        %v5294 = vmul.f32 %v5248, %v5278
        %v5295 = vmul.f32 %v5250, %v5279
        %v5296 = vmul.f32 %v5254, %v5280
        %v5297 = vmul.f32 %v5256, %v5281
        %v5298 = vmul.f32 %v5260, %v5282
        %v5299 = vmul.f32 %v5262, %v5283
        %v5300 = vmul.f32 %v5266, %v5284
        %v5301 = vmul.f32 %v5268, %v5285
        %v5302 = vadd.f32 %v5137, %v5286
        %v5303 = vadd.f32 %v5138, %v5287
        %v5304 = vadd.f32 %v5139, %v5288
        %v5305 = vadd.f32 %v5140, %v5289
        %v5306 = vadd.f32 %v5141, %v5290
        %v5307 = vadd.f32 %v5142, %v5291
        %v5308 = vadd.f32 %v5143, %v5292
        %v5309 = vadd.f32 %v5144, %v5293
        %v5310 = vadd.f32 %v5145, %v5294
        %v5311 = vadd.f32 %v5146, %v5295
        %v5312 = vadd.f32 %v5147, %v5296
        %v5313 = vadd.f32 %v5148, %v5297
        %v5314 = vadd.f32 %v5149, %v5298
        %v5315 = vadd.f32 %v5150, %v5299
        %v5316 = vadd.f32 %v5151, %v5300
        %v5317 = vadd.f32 %v5152, %v5301
        %v5318 = vld [vmem:[%s4008] sm:$0xff]
        %v5319 = vld [vmem:[%s4008 + $0x8] sm:$0xff]
        %v5320 = vmul.f32 %v5318, %v4136
        %v5321 = vmul.f32 %v5319, %v4138
        %5322 = vmatprep.subr.mxu0 %v5321
        %5323 = vmatpush1.msra.mxu0 %v5320
        %5324 = vmatprep.subr.mxu0 0.0
        %5325 = vmatpush1.msra.mxu0 0.0
        %5326 = vmatprep.subr.mxu0 0.0
        %5327 = vmatpush1.msra.mxu0 0.0
        %5328 = vmatprep.subr.mxu0 0.0
        %5329 = vmatpush1.msra.mxu0 0.0
        %5330 = vmatprep.subr.mxu0 0.0
        %5331 = vmatpush1.msra.mxu0 0.0
        %5332 = vmatprep.subr.mxu0 0.0
        %5333 = vmatpush1.msra.mxu0 0.0
        %5334 = vmatprep.subr.mxu0 0.0
        %5335 = vmatpush1.msra.mxu0 0.0
        %5336 = vmatprep.subr.mxu0 0.0
        %5337 = vmatpush1.msra.mxu0 0.0
        %5338 = vmatprep.subr.mxu0 0.0
        %5339 = vmatpush1.msra.mxu0 0.0
        %5340 = vmatprep.subr.mxu0 0.0
        %5341 = vmatpush1.msra.mxu0 0.0
        %5342 = vmatprep.subr.mxu0 0.0
        %5343 = vmatpush1.msra.mxu0 0.0
        %5344 = vmatprep.subr.mxu0 0.0
        %5345 = vmatpush1.msra.mxu0 0.0
        %5346 = vmatprep.subr.mxu0 0.0
        %5347 = vmatpush1.msra.mxu0 0.0
        %5348 = vmatprep.subr.mxu0 0.0
        %5349 = vmatpush1.msra.mxu0 0.0
        %5350 = vmatprep.subr.mxu0 0.0
        %5351 = vmatpush1.msra.mxu0 0.0
        %5352 = vmatprep.subr.mxu0 0.0
        %5353 = vmatpush1.msra.mxu0 0.0
        %5354 = vmatprep.subr.mxu0 0.0
        %5355 = vmatpush1.msra.mxu0 0.0
        %5356 = vmatprep.subr.mxu0 0.0
        %5357 = vmatpush1.msra.mxu0 0.0
        %5358 = vmatprep.subr.mxu0 0.0
        %5359 = vmatpush1.msra.mxu0 0.0
        %5360 = vmatprep.subr.mxu0 0.0
        %5361 = vmatpush1.msra.mxu0 0.0
        %5362 = vmatprep.subr.mxu0 0.0
        %5363 = vmatpush1.msra.mxu0 0.0
        %5364 = vmatprep.subr.mxu0 0.0
        %5365 = vmatpush1.msra.mxu0 0.0
        %5366 = vmatprep.subr.mxu0 0.0
        %5367 = vmatpush1.msra.mxu0 0.0
        %5368 = vmatprep.subr.mxu0 0.0
        %5369 = vmatpush1.msra.mxu0 0.0
        %5370 = vmatprep.subr.mxu0 0.0
        %5371 = vmatpush1.msra.mxu0 0.0
        %5372 = vmatprep.subr.mxu0 0.0
        %5373 = vmatpush1.msra.mxu0 0.0
        %5374 = vmatprep.subr.mxu0 0.0
        %5375 = vmatpush1.msra.mxu0 0.0
        %5376 = vmatprep.subr.mxu0 0.0
        %5377 = vmatpush1.msra.mxu0 0.0
        %5378 = vmatprep.subr.mxu0 0.0
        %5379 = vmatpush1.msra.mxu0 0.0
        %5380 = vmatprep.subr.mxu0 0.0
        %5381 = vmatpush1.msra.mxu0 0.0
        %5382 = vmatprep.subr.mxu0 0.0
        %5383 = vmatpush1.msra.mxu0 0.0
        %5384 = vmatprep.subr.mxu0 0.0
        %5385 = vmatpush1.msra.mxu0 0.0
        %5386 = vmatprep.mubr.f32.mxu0 0.0
        %5387 = vmatmul.mubr.f32.gmra.mrb[0].mxu0 %v4144
        %v5388 = vpop.f32.mrb[0].mxu0
        %v5389 = vadd.f32 0.0, %v5388
        %v5390 = vpop.f32.mrb[0].mxu0
        %v5391 = vadd.f32 0.0, %v5390
        %5392 = vmatprep.mubr.f32.mxu0 0.0
        %5393 = vmatmul.mubr.f32.gmra.mrb[0].mxu0 %v4147
        %v5394 = vpop.f32.mrb[0].mxu0
        %v5395 = vadd.f32 0.0, %v5394
        %v5396 = vpop.f32.mrb[0].mxu0
        %v5397 = vadd.f32 0.0, %v5396
        %5398 = vmatprep.mubr.f32.mxu0 0.0
        %5399 = vmatmul.mubr.f32.gmra.mrb[0].mxu0 %v4150
        %v5400 = vpop.f32.mrb[0].mxu0
        %v5401 = vadd.f32 0.0, %v5400
        %v5402 = vpop.f32.mrb[0].mxu0
        %v5403 = vadd.f32 0.0, %v5402
        %5404 = vmatprep.mubr.f32.mxu0 0.0
        %5405 = vmatmul.mubr.f32.gmra.mrb[0].mxu0 %v4153
        %v5406 = vpop.f32.mrb[0].mxu0
        %v5407 = vadd.f32 0.0, %v5406
        %v5408 = vpop.f32.mrb[0].mxu0
        %v5409 = vadd.f32 0.0, %v5408
        %5410 = vmatprep.mubr.f32.mxu0 0.0
        %5411 = vmatmul.mubr.f32.gmra.mrb[0].mxu0 %v4156
        %v5412 = vpop.f32.mrb[0].mxu0
        %v5413 = vadd.f32 0.0, %v5412
        %v5414 = vpop.f32.mrb[0].mxu0
        %v5415 = vadd.f32 0.0, %v5414
        %5416 = vmatprep.mubr.f32.mxu0 0.0
        %5417 = vmatmul.mubr.f32.gmra.mrb[0].mxu0 %v4159
        %v5418 = vpop.f32.mrb[0].mxu0
        %v5419 = vadd.f32 0.0, %v5418
        %v5420 = vpop.f32.mrb[0].mxu0
        %v5421 = vadd.f32 0.0, %v5420
        %5422 = vmatprep.mubr.f32.mxu0 0.0
        %5423 = vmatmul.mubr.f32.gmra.mrb[0].mxu0 %v4162
        %v5424 = vpop.f32.mrb[0].mxu0
        %v5425 = vadd.f32 0.0, %v5424
        %v5426 = vpop.f32.mrb[0].mxu0
        %v5427 = vadd.f32 0.0, %v5426
        %5428 = vmatprep.mubr.f32.mxu0 0.0
        %5429 = vmatmul.mubr.f32.gmra.mrb[0].mxu0 %v4165
        %v5430 = vpop.f32.mrb[0].mxu0
        %v5431 = vadd.f32 0.0, %v5430
        %v5432 = vpop.f32.mrb[0].mxu0
        %v5433 = vadd.f32 0.0, %v5432
        %5434 = vdwg.mxu0
        %v5435 = vld [vmem:[%s3920] sm:$0xff]
        %v5436 = vld [vmem:[%s3920 + $0x8] sm:$0xff]
        %v5437 = vld [vmem:[%s3920 + $0x10] sm:$0xff]
        %v5438 = vld [vmem:[%s3920 + $0x18] sm:$0xff]
        %v5439 = vld [vmem:[%s3920 + $0x20] sm:$0xff]
        %v5440 = vld [vmem:[%s3920 + $0x28] sm:$0xff]
        %v5441 = vld [vmem:[%s3920 + $0x30] sm:$0xff]
        %v5442 = vld [vmem:[%s3920 + $0x38] sm:$0xff]
        %v5443 = vld [vmem:[%s3920 + $0x40] sm:$0xff]
        %v5444 = vld [vmem:[%s3920 + $0x48] sm:$0xff]
        %v5445 = vld [vmem:[%s3920 + $0x50] sm:$0xff]
        %v5446 = vld [vmem:[%s3920 + $0x58] sm:$0xff]
        %v5447 = vld [vmem:[%s3920 + $0x60] sm:$0xff]
        %v5448 = vld [vmem:[%s3920 + $0x68] sm:$0xff]
        %v5449 = vld [vmem:[%s3920 + $0x70] sm:$0xff]
        %v5450 = vld [vmem:[%s3920 + $0x78] sm:$0xff]
        %v5451 = vmul.f32 %v5389, %v5435
        %v5452 = vmul.f32 %v5391, %v5436
        %v5453 = vmul.f32 %v5395, %v5437
        %v5454 = vmul.f32 %v5397, %v5438
        %v5455 = vmul.f32 %v5401, %v5439
        %v5456 = vmul.f32 %v5403, %v5440
        %v5457 = vmul.f32 %v5407, %v5441
        %v5458 = vmul.f32 %v5409, %v5442
        %v5459 = vmul.f32 %v5413, %v5443
        %v5460 = vmul.f32 %v5415, %v5444
        %v5461 = vmul.f32 %v5419, %v5445
        %v5462 = vmul.f32 %v5421, %v5446
        %v5463 = vmul.f32 %v5425, %v5447
        %v5464 = vmul.f32 %v5427, %v5448
        %v5465 = vmul.f32 %v5431, %v5449
        %v5466 = vmul.f32 %v5433, %v5450
        %v5467 = vadd.f32 %v5302, %v5451
        %v5468 = vadd.f32 %v5303, %v5452
        %v5469 = vadd.f32 %v5304, %v5453
        %v5470 = vadd.f32 %v5305, %v5454
        %v5471 = vadd.f32 %v5306, %v5455
        %v5472 = vadd.f32 %v5307, %v5456
        %v5473 = vadd.f32 %v5308, %v5457
        %v5474 = vadd.f32 %v5309, %v5458
        %v5475 = vadd.f32 %v5310, %v5459
        %v5476 = vadd.f32 %v5311, %v5460
        %v5477 = vadd.f32 %v5312, %v5461
        %v5478 = vadd.f32 %v5313, %v5462
        %v5479 = vadd.f32 %v5314, %v5463
        %v5480 = vadd.f32 %v5315, %v5464
        %v5481 = vadd.f32 %v5316, %v5465
        %v5482 = vadd.f32 %v5317, %v5466
        %v5483 = vld [vmem:[%s4] sm:$0xff]
        %v5484 = vld [vmem:[%s4 + $0x8] sm:$0xff]
        %v5485 = vld [vmem:[%s4 + $0x10] sm:$0xff]
        %v5486 = vld [vmem:[%s4 + $0x18] sm:$0xff]
        %v5487 = vld [vmem:[%s5] sm:$0xff]
        %v5488 = vld [vmem:[%s5 + $0x8] sm:$0xff]
        %v5489 = vld [vmem:[%s5 + $0x10] sm:$0xff]
        %v5490 = vld [vmem:[%s5 + $0x18] sm:$0xff]
        %5492 = vset.pattern.permute.xlu0 0
        %5493 = vperm.xlu0 %5492, %v5487
        %v5494 = vpop.permute.xlu0 %5493
        %5497 = vset.pattern.permute.xlu0 0
        %5498 = vperm.xlu0 %5497, %v5488
        %v5499 = vpop.permute.xlu0 %5498
        %5502 = vset.pattern.permute.xlu0 0
        %5503 = vperm.xlu0 %5502, %v5489
        %v5504 = vpop.permute.xlu0 %5503
        %5507 = vset.pattern.permute.xlu0 0
        %5508 = vperm.xlu0 %5507, %v5490
        %v5509 = vpop.permute.xlu0 %5508
        %v5512 = vsel %vm1323, %v5483, 0
        %v5515 = vsel %vm1323, %v5484, 0
        %v5518 = vsel %vm1323, %v5485, 0
        %v5521 = vsel %vm1323, %v5486, 0
        %5523 = vmatprep.subr.mxu0 %v5468
        %5524 = vmatpush1.msra.mxu0 %v5467
        %5525 = vmatprep.subr.mxu0 %v5470
        %5526 = vmatpush1.msra.mxu0 %v5469
        %5527 = vmatprep.subr.mxu0 %v5472
        %5528 = vmatpush1.msra.mxu0 %v5471
        %5529 = vmatprep.subr.mxu0 %v5474
        %5530 = vmatpush1.msra.mxu0 %v5473
        %5531 = vmatprep.subr.mxu0 %v5476
        %5532 = vmatpush1.msra.mxu0 %v5475
        %5533 = vmatprep.subr.mxu0 %v5478
        %5534 = vmatpush1.msra.mxu0 %v5477
        %5535 = vmatprep.subr.mxu0 %v5480
        %5536 = vmatpush1.msra.mxu0 %v5479
        %5537 = vmatprep.subr.mxu0 %v5482
        %5538 = vmatpush1.msra.mxu0 %v5481
        %5539 = vmatprep.subr.mxu0 0.0
        %5540 = vmatpush1.msra.mxu0 0.0
        %5541 = vmatprep.subr.mxu0 0.0
        %5542 = vmatpush1.msra.mxu0 0.0
        %5543 = vmatprep.subr.mxu0 0.0
        %5544 = vmatpush1.msra.mxu0 0.0
        %5545 = vmatprep.subr.mxu0 0.0
        %5546 = vmatpush1.msra.mxu0 0.0
        %5547 = vmatprep.subr.mxu0 0.0
        %5548 = vmatpush1.msra.mxu0 0.0
        %5549 = vmatprep.subr.mxu0 0.0
        %5550 = vmatpush1.msra.mxu0 0.0
        %5551 = vmatprep.subr.mxu0 0.0
        %5552 = vmatpush1.msra.mxu0 0.0
        %5553 = vmatprep.subr.mxu0 0.0
        %5554 = vmatpush1.msra.mxu0 0.0
        %5555 = vmatprep.subr.mxu0 0.0
        %5556 = vmatpush1.msra.mxu0 0.0
        %5557 = vmatprep.subr.mxu0 0.0
        %5558 = vmatpush1.msra.mxu0 0.0
        %5559 = vmatprep.subr.mxu0 0.0
        %5560 = vmatpush1.msra.mxu0 0.0
        %5561 = vmatprep.subr.mxu0 0.0
        %5562 = vmatpush1.msra.mxu0 0.0
        %5563 = vmatprep.subr.mxu0 0.0
        %5564 = vmatpush1.msra.mxu0 0.0
        %5565 = vmatprep.subr.mxu0 0.0
        %5566 = vmatpush1.msra.mxu0 0.0
        %5567 = vmatprep.subr.mxu0 0.0
        %5568 = vmatpush1.msra.mxu0 0.0
        %5569 = vmatprep.subr.mxu0 0.0
        %5570 = vmatpush1.msra.mxu0 0.0
        %5571 = vmatprep.subr.mxu0 0.0
        %5572 = vmatpush1.msra.mxu0 0.0
        %5573 = vmatprep.subr.mxu0 0.0
        %5574 = vmatpush1.msra.mxu0 0.0
        %5575 = vmatprep.subr.mxu0 0.0
        %5576 = vmatpush1.msra.mxu0 0.0
        %5577 = vmatprep.subr.mxu0 0.0
        %5578 = vmatpush1.msra.mxu0 0.0
        %5579 = vmatprep.subr.mxu0 0.0
        %5580 = vmatpush1.msra.mxu0 0.0
        %5581 = vmatprep.subr.mxu0 0.0
        %5582 = vmatpush1.msra.mxu0 0.0
        %5583 = vmatprep.subr.mxu0 0.0
        %5584 = vmatpush1.msra.mxu0 0.0
        %5585 = vmatprep.subr.mxu0 0.0
        %5586 = vmatpush1.msra.mxu0 0.0
        %5587 = vmatprep.mubr.f32.mxu0 0.0
        %5588 = vmatmul.mubr.f32.gmra.mrb[0].mxu0 %v5512
        %v5589 = vpop.f32.mrb[0].mxu0
        %v5590 = vadd.f32 %v5494, %v5589
        %v5591 = vpop.f32.mrb[0].mxu0
        %v5592 = vadd.f32 %v5494, %v5591
        %5593 = vmatprep.mubr.f32.mxu0 0.0
        %5594 = vmatmul.mubr.f32.gmra.mrb[0].mxu0 %v5515
        %v5595 = vpop.f32.mrb[0].mxu0
        %v5596 = vadd.f32 %v5499, %v5595
        %v5597 = vpop.f32.mrb[0].mxu0
        %v5598 = vadd.f32 %v5499, %v5597
        %5599 = vmatprep.mubr.f32.mxu0 0.0
        %5600 = vmatmul.mubr.f32.gmra.mrb[0].mxu0 %v5518
        %v5601 = vpop.f32.mrb[0].mxu0
        %v5602 = vadd.f32 %v5504, %v5601
        %v5603 = vpop.f32.mrb[0].mxu0
        %v5604 = vadd.f32 %v5504, %v5603
        %5605 = vmatprep.mubr.f32.mxu0 0.0
        %5606 = vmatmul.mubr.f32.gmra.mrb[0].mxu0 %v5521
        %v5607 = vpop.f32.mrb[0].mxu0
        %v5608 = vadd.f32 %v5509, %v5607
        %v5609 = vpop.f32.mrb[0].mxu0
        %v5610 = vadd.f32 %v5509, %v5609
        %5611 = vdwg.mxu0
        %v5612 = vmax.f32 %v5590, 0.0
        %v5613 = vmax.f32 %v5592, 0.0
        %v5614 = vmax.f32 %v5596, 0.0
        %v5615 = vmax.f32 %v5598, 0.0
        %v5616 = vmax.f32 %v5602, 0.0
        %v5617 = vmax.f32 %v5604, 0.0
        %v5618 = vmax.f32 %v5608, 0.0
        %v5619 = vmax.f32 %v5610, 0.0
        %5620 = vmatprep.subr.mxu0 %v5613
        %5621 = vmatpush1.msra.mxu0 %v5612
        %5622 = vmatprep.subr.mxu0 %v5615
        %5623 = vmatpush1.msra.mxu0 %v5614
        %5624 = vmatprep.subr.mxu0 %v5617
        %5625 = vmatpush1.msra.mxu0 %v5616
        %5626 = vmatprep.subr.mxu0 %v5619
        %5627 = vmatpush1.msra.mxu0 %v5618
        %5628 = vmatprep.subr.mxu0 0.0
        %5629 = vmatpush1.msra.mxu0 0.0
        %5630 = vmatprep.subr.mxu0 0.0
        %5631 = vmatpush1.msra.mxu0 0.0
        %5632 = vmatprep.subr.mxu0 0.0
        %5633 = vmatpush1.msra.mxu0 0.0
        %5634 = vmatprep.subr.mxu0 0.0
        %5635 = vmatpush1.msra.mxu0 0.0
        %5636 = vmatprep.subr.mxu0 0.0
        %5637 = vmatpush1.msra.mxu0 0.0
        %5638 = vmatprep.subr.mxu0 0.0
        %5639 = vmatpush1.msra.mxu0 0.0
        %5640 = vmatprep.subr.mxu0 0.0
        %5641 = vmatpush1.msra.mxu0 0.0
        %5642 = vmatprep.subr.mxu0 0.0
        %5643 = vmatpush1.msra.mxu0 0.0
        %5644 = vmatprep.subr.mxu0 0.0
        %5645 = vmatpush1.msra.mxu0 0.0
        %5646 = vmatprep.subr.mxu0 0.0
        %5647 = vmatpush1.msra.mxu0 0.0
        %5648 = vmatprep.subr.mxu0 0.0
        %5649 = vmatpush1.msra.mxu0 0.0
        %5650 = vmatprep.subr.mxu0 0.0
        %5651 = vmatpush1.msra.mxu0 0.0
        %5652 = vmatprep.subr.mxu0 0.0
        %5653 = vmatpush1.msra.mxu0 0.0
        %5654 = vmatprep.subr.mxu0 0.0
        %5655 = vmatpush1.msra.mxu0 0.0
        %5656 = vmatprep.subr.mxu0 0.0
        %5657 = vmatpush1.msra.mxu0 0.0
        %5658 = vmatprep.subr.mxu0 0.0
        %5659 = vmatpush1.msra.mxu0 0.0
        %5660 = vmatprep.subr.mxu0 0.0
        %5661 = vmatpush1.msra.mxu0 0.0
        %5662 = vmatprep.subr.mxu0 0.0
        %5663 = vmatpush1.msra.mxu0 0.0
        %5664 = vmatprep.subr.mxu0 0.0
        %5665 = vmatpush1.msra.mxu0 0.0
        %5666 = vmatprep.subr.mxu0 0.0
        %5667 = vmatpush1.msra.mxu0 0.0
        %5668 = vmatprep.subr.mxu0 0.0
        %5669 = vmatpush1.msra.mxu0 0.0
        %5670 = vmatprep.subr.mxu0 0.0
        %5671 = vmatpush1.msra.mxu0 0.0
        %5672 = vmatprep.subr.mxu0 0.0
        %5673 = vmatpush1.msra.mxu0 0.0
        %5674 = vmatprep.subr.mxu0 0.0
        %5675 = vmatpush1.msra.mxu0 0.0
        %5676 = vmatprep.subr.mxu0 0.0
        %5677 = vmatpush1.msra.mxu0 0.0
        %5678 = vmatprep.subr.mxu0 0.0
        %5679 = vmatpush1.msra.mxu0 0.0
        %5680 = vmatprep.subr.mxu0 0.0
        %5681 = vmatpush1.msra.mxu0 0.0
        %5682 = vmatprep.subr.mxu0 0.0
        %5683 = vmatpush1.msra.mxu0 0.0
        %5684 = vmatprep.mubr.f32.mxu0 0.0
        %5685 = vmatmul.mubr.f32.gmra.mrb[0].mxu0 %v621
        %v5686 = vpop.f32.mrb[0].mxu0
        %v5687 = vadd.f32 0.0, %v5686
        %v5688 = vpop.f32.mrb[0].mxu0
        %v5689 = vadd.f32 0.0, %v5688
        %5690 = vdwg.mxu0
        %v5691 = vmul.f32 %v5612, %v5612
        %v5692 = vmul.f32 %v5613, %v5613
        %v5693 = vmul.f32 %v5614, %v5614
        %v5694 = vmul.f32 %v5615, %v5615
        %v5695 = vmul.f32 %v5616, %v5616
        %v5696 = vmul.f32 %v5617, %v5617
        %v5697 = vmul.f32 %v5618, %v5618
        %v5698 = vmul.f32 %v5619, %v5619
        %5699 = vmatprep.subr.mxu0 %v5692
        %5700 = vmatpush1.msra.mxu0 %v5691
        %5701 = vmatprep.subr.mxu0 %v5694
        %5702 = vmatpush1.msra.mxu0 %v5693
        %5703 = vmatprep.subr.mxu0 %v5696
        %5704 = vmatpush1.msra.mxu0 %v5695
        %5705 = vmatprep.subr.mxu0 %v5698
        %5706 = vmatpush1.msra.mxu0 %v5697
        %5707 = vmatprep.subr.mxu0 0.0
        %5708 = vmatpush1.msra.mxu0 0.0
        %5709 = vmatprep.subr.mxu0 0.0
        %5710 = vmatpush1.msra.mxu0 0.0
        %5711 = vmatprep.subr.mxu0 0.0
        %5712 = vmatpush1.msra.mxu0 0.0
        %5713 = vmatprep.subr.mxu0 0.0
        %5714 = vmatpush1.msra.mxu0 0.0
        %5715 = vmatprep.subr.mxu0 0.0
        %5716 = vmatpush1.msra.mxu0 0.0
        %5717 = vmatprep.subr.mxu0 0.0
        %5718 = vmatpush1.msra.mxu0 0.0
        %5719 = vmatprep.subr.mxu0 0.0
        %5720 = vmatpush1.msra.mxu0 0.0
        %5721 = vmatprep.subr.mxu0 0.0
        %5722 = vmatpush1.msra.mxu0 0.0
        %5723 = vmatprep.subr.mxu0 0.0
        %5724 = vmatpush1.msra.mxu0 0.0
        %5725 = vmatprep.subr.mxu0 0.0
        %5726 = vmatpush1.msra.mxu0 0.0
        %5727 = vmatprep.subr.mxu0 0.0
        %5728 = vmatpush1.msra.mxu0 0.0
        %5729 = vmatprep.subr.mxu0 0.0
        %5730 = vmatpush1.msra.mxu0 0.0
        %5731 = vmatprep.subr.mxu0 0.0
        %5732 = vmatpush1.msra.mxu0 0.0
        %5733 = vmatprep.subr.mxu0 0.0
        %5734 = vmatpush1.msra.mxu0 0.0
        %5735 = vmatprep.subr.mxu0 0.0
        %5736 = vmatpush1.msra.mxu0 0.0
        %5737 = vmatprep.subr.mxu0 0.0
        %5738 = vmatpush1.msra.mxu0 0.0
        %5739 = vmatprep.subr.mxu0 0.0
        %5740 = vmatpush1.msra.mxu0 0.0
        %5741 = vmatprep.subr.mxu0 0.0
        %5742 = vmatpush1.msra.mxu0 0.0
        %5743 = vmatprep.subr.mxu0 0.0
        %5744 = vmatpush1.msra.mxu0 0.0
        %5745 = vmatprep.subr.mxu0 0.0
        %5746 = vmatpush1.msra.mxu0 0.0
        %5747 = vmatprep.subr.mxu0 0.0
        %5748 = vmatpush1.msra.mxu0 0.0
        %5749 = vmatprep.subr.mxu0 0.0
        %5750 = vmatpush1.msra.mxu0 0.0
        %5751 = vmatprep.subr.mxu0 0.0
        %5752 = vmatpush1.msra.mxu0 0.0
        %5753 = vmatprep.subr.mxu0 0.0
        %5754 = vmatpush1.msra.mxu0 0.0
        %5755 = vmatprep.subr.mxu0 0.0
        %5756 = vmatpush1.msra.mxu0 0.0
        %5757 = vmatprep.subr.mxu0 0.0
        %5758 = vmatpush1.msra.mxu0 0.0
        %5759 = vmatprep.subr.mxu0 0.0
        %5760 = vmatpush1.msra.mxu0 0.0
        %5761 = vmatprep.subr.mxu0 0.0
        %5762 = vmatpush1.msra.mxu0 0.0
        %5763 = vmatprep.mubr.f32.mxu0 0.0
        %5764 = vmatmul.mubr.f32.gmra.mrb[0].mxu0 %v621
        %v5765 = vpop.f32.mrb[0].mxu0
        %v5766 = vadd.f32 0.0, %v5765
        %v5767 = vpop.f32.mrb[0].mxu0
        %v5768 = vadd.f32 0.0, %v5767
        %5769 = vdwg.mxu0
        %v5770 = vrcp.pop 4.0
        %v5771 = vmul.f32 %v5687, %v5770
        %v5772 = vmul.f32 %v5689, %v5770
        %v5773 = vmul.f32 %v5766, %v5770
        %v5774 = vmul.f32 %v5768, %v5770
        %v5775 = vmul.f32 %v5771, %v5771
        %v5776 = vmul.f32 %v5772, %v5772
        %v5777 = vsub.f32 %v5773, %v5775
        %v5778 = vsub.f32 %v5774, %v5776
        %v5779 = vadd.f32 %v5777, 1e-05
        %v5780 = vadd.f32 %v5778, 1e-05
        %v5781 = vrsqrt.pop %v5779
        %v5782 = vrsqrt.pop %v5780
        %5783 = vmatprep.subr.mxu0 %v5772
        %5784 = vmatpush1.msra.mxu0 %v5771
        %5785 = vmatprep.subr.mxu0 0.0
        %5786 = vmatpush1.msra.mxu0 0.0
        %5787 = vmatprep.subr.mxu0 0.0
        %5788 = vmatpush1.msra.mxu0 0.0
        %5789 = vmatprep.subr.mxu0 0.0
        %5790 = vmatpush1.msra.mxu0 0.0
        %5791 = vmatprep.subr.mxu0 0.0
        %5792 = vmatpush1.msra.mxu0 0.0
        %5793 = vmatprep.subr.mxu0 0.0
        %5794 = vmatpush1.msra.mxu0 0.0
        %5795 = vmatprep.subr.mxu0 0.0
        %5796 = vmatpush1.msra.mxu0 0.0
        %5797 = vmatprep.subr.mxu0 0.0
        %5798 = vmatpush1.msra.mxu0 0.0
        %5799 = vmatprep.subr.mxu0 0.0
        %5800 = vmatpush1.msra.mxu0 0.0
        %5801 = vmatprep.subr.mxu0 0.0
        %5802 = vmatpush1.msra.mxu0 0.0
        %5803 = vmatprep.subr.mxu0 0.0
        %5804 = vmatpush1.msra.mxu0 0.0
        %5805 = vmatprep.subr.mxu0 0.0
        %5806 = vmatpush1.msra.mxu0 0.0
        %5807 = vmatprep.subr.mxu0 0.0
        %5808 = vmatpush1.msra.mxu0 0.0
        %5809 = vmatprep.subr.mxu0 0.0
        %5810 = vmatpush1.msra.mxu0 0.0
        %5811 = vmatprep.subr.mxu0 0.0
        %5812 = vmatpush1.msra.mxu0 0.0
        %5813 = vmatprep.subr.mxu0 0.0
        %5814 = vmatpush1.msra.mxu0 0.0
        %5815 = vmatprep.subr.mxu0 0.0
        %5816 = vmatpush1.msra.mxu0 0.0
        %5817 = vmatprep.subr.mxu0 0.0
        %5818 = vmatpush1.msra.mxu0 0.0
        %5819 = vmatprep.subr.mxu0 0.0
        %5820 = vmatpush1.msra.mxu0 0.0
        %5821 = vmatprep.subr.mxu0 0.0
        %5822 = vmatpush1.msra.mxu0 0.0
        %5823 = vmatprep.subr.mxu0 0.0
        %5824 = vmatpush1.msra.mxu0 0.0
        %5825 = vmatprep.subr.mxu0 0.0
        %5826 = vmatpush1.msra.mxu0 0.0
        %5827 = vmatprep.subr.mxu0 0.0
        %5828 = vmatpush1.msra.mxu0 0.0
        %5829 = vmatprep.subr.mxu0 0.0
        %5830 = vmatpush1.msra.mxu0 0.0
        %5831 = vmatprep.subr.mxu0 0.0
        %5832 = vmatpush1.msra.mxu0 0.0
        %5833 = vmatprep.subr.mxu0 0.0
        %5834 = vmatpush1.msra.mxu0 0.0
        %5835 = vmatprep.subr.mxu0 0.0
        %5836 = vmatpush1.msra.mxu0 0.0
        %5837 = vmatprep.subr.mxu0 0.0
        %5838 = vmatpush1.msra.mxu0 0.0
        %5839 = vmatprep.subr.mxu0 0.0
        %5840 = vmatpush1.msra.mxu0 0.0
        %5841 = vmatprep.subr.mxu0 0.0
        %5842 = vmatpush1.msra.mxu0 0.0
        %5843 = vmatprep.subr.mxu0 0.0
        %5844 = vmatpush1.msra.mxu0 0.0
        %5845 = vmatprep.subr.mxu0 0.0
        %5846 = vmatpush1.msra.mxu0 0.0
        %5847 = vmatprep.mubr.f32.mxu0 0.0
        %5848 = vmatmul.mubr.f32.gmra.mrb[0].mxu0 %v780
        %v5849 = vpop.f32.mrb[0].mxu0
        %v5850 = vadd.f32 0.0, %v5849
        %v5851 = vpop.f32.mrb[0].mxu0
        %v5852 = vadd.f32 0.0, %v5851
        %5853 = vmatprep.mubr.f32.mxu0 0.0
        %5854 = vmatmul.mubr.f32.gmra.mrb[0].mxu0 %v783
        %v5855 = vpop.f32.mrb[0].mxu0
        %v5856 = vadd.f32 0.0, %v5855
        %v5857 = vpop.f32.mrb[0].mxu0
        %v5858 = vadd.f32 0.0, %v5857
        %5859 = vmatprep.mubr.f32.mxu0 0.0
        %5860 = vmatmul.mubr.f32.gmra.mrb[0].mxu0 %v786
        %v5861 = vpop.f32.mrb[0].mxu0
        %v5862 = vadd.f32 0.0, %v5861
        %v5863 = vpop.f32.mrb[0].mxu0
        %v5864 = vadd.f32 0.0, %v5863
        %5865 = vmatprep.mubr.f32.mxu0 0.0
        %5866 = vmatmul.mubr.f32.gmra.mrb[0].mxu0 %v789
        %v5867 = vpop.f32.mrb[0].mxu0
        %v5868 = vadd.f32 0.0, %v5867
        %v5869 = vpop.f32.mrb[0].mxu0
        %v5870 = vadd.f32 0.0, %v5869
        %5871 = vdwg.mxu0
        %5872 = vmatprep.subr.mxu0 %v5782
        %5873 = vmatpush1.msra.mxu0 %v5781
        %5874 = vmatprep.subr.mxu0 0.0
        %5875 = vmatpush1.msra.mxu0 0.0
        %5876 = vmatprep.subr.mxu0 0.0
        %5877 = vmatpush1.msra.mxu0 0.0
        %5878 = vmatprep.subr.mxu0 0.0
        %5879 = vmatpush1.msra.mxu0 0.0
        %5880 = vmatprep.subr.mxu0 0.0
        %5881 = vmatpush1.msra.mxu0 0.0
        %5882 = vmatprep.subr.mxu0 0.0
        %5883 = vmatpush1.msra.mxu0 0.0
        %5884 = vmatprep.subr.mxu0 0.0
        %5885 = vmatpush1.msra.mxu0 0.0
        %5886 = vmatprep.subr.mxu0 0.0
        %5887 = vmatpush1.msra.mxu0 0.0
        %5888 = vmatprep.subr.mxu0 0.0
        %5889 = vmatpush1.msra.mxu0 0.0
        %5890 = vmatprep.subr.mxu0 0.0
        %5891 = vmatpush1.msra.mxu0 0.0
        %5892 = vmatprep.subr.mxu0 0.0
        %5893 = vmatpush1.msra.mxu0 0.0
        %5894 = vmatprep.subr.mxu0 0.0
        %5895 = vmatpush1.msra.mxu0 0.0
        %5896 = vmatprep.subr.mxu0 0.0
        %5897 = vmatpush1.msra.mxu0 0.0
        %5898 = vmatprep.subr.mxu0 0.0
        %5899 = vmatpush1.msra.mxu0 0.0
        %5900 = vmatprep.subr.mxu0 0.0
        %5901 = vmatpush1.msra.mxu0 0.0
        %5902 = vmatprep.subr.mxu0 0.0
        %5903 = vmatpush1.msra.mxu0 0.0
        %5904 = vmatprep.subr.mxu0 0.0
        %5905 = vmatpush1.msra.mxu0 0.0
        %5906 = vmatprep.subr.mxu0 0.0
        %5907 = vmatpush1.msra.mxu0 0.0
        %5908 = vmatprep.subr.mxu0 0.0
        %5909 = vmatpush1.msra.mxu0 0.0
        %5910 = vmatprep.subr.mxu0 0.0
        %5911 = vmatpush1.msra.mxu0 0.0
        %5912 = vmatprep.subr.mxu0 0.0
        %5913 = vmatpush1.msra.mxu0 0.0
        %5914 = vmatprep.subr.mxu0 0.0
        %5915 = vmatpush1.msra.mxu0 0.0
        %5916 = vmatprep.subr.mxu0 0.0
        %5917 = vmatpush1.msra.mxu0 0.0
        %5918 = vmatprep.subr.mxu0 0.0
        %5919 = vmatpush1.msra.mxu0 0.0
        %5920 = vmatprep.subr.mxu0 0.0
        %5921 = vmatpush1.msra.mxu0 0.0
        %5922 = vmatprep.subr.mxu0 0.0
        %5923 = vmatpush1.msra.mxu0 0.0
        %5924 = vmatprep.subr.mxu0 0.0
        %5925 = vmatpush1.msra.mxu0 0.0
        %5926 = vmatprep.subr.mxu0 0.0
        %5927 = vmatpush1.msra.mxu0 0.0
        %5928 = vmatprep.subr.mxu0 0.0
        %5929 = vmatpush1.msra.mxu0 0.0
        %5930 = vmatprep.subr.mxu0 0.0
        %5931 = vmatpush1.msra.mxu0 0.0
        %5932 = vmatprep.subr.mxu0 0.0
        %5933 = vmatpush1.msra.mxu0 0.0
        %5934 = vmatprep.subr.mxu0 0.0
        %5935 = vmatpush1.msra.mxu0 0.0
        %5936 = vmatprep.mubr.f32.mxu0 0.0
        %5937 = vmatmul.mubr.f32.gmra.mrb[0].mxu0 %v780
        %v5938 = vpop.f32.mrb[0].mxu0
        %v5939 = vadd.f32 0.0, %v5938
        %v5940 = vpop.f32.mrb[0].mxu0
        %v5941 = vadd.f32 0.0, %v5940
        %5942 = vmatprep.mubr.f32.mxu0 0.0
        %5943 = vmatmul.mubr.f32.gmra.mrb[0].mxu0 %v783
        %v5944 = vpop.f32.mrb[0].mxu0
        %v5945 = vadd.f32 0.0, %v5944
        %v5946 = vpop.f32.mrb[0].mxu0
        %v5947 = vadd.f32 0.0, %v5946
        %5948 = vmatprep.mubr.f32.mxu0 0.0
        %5949 = vmatmul.mubr.f32.gmra.mrb[0].mxu0 %v786
        %v5950 = vpop.f32.mrb[0].mxu0
        %v5951 = vadd.f32 0.0, %v5950
        %v5952 = vpop.f32.mrb[0].mxu0
        %v5953 = vadd.f32 0.0, %v5952
        %5954 = vmatprep.mubr.f32.mxu0 0.0
        %5955 = vmatmul.mubr.f32.gmra.mrb[0].mxu0 %v789
        %v5956 = vpop.f32.mrb[0].mxu0
        %v5957 = vadd.f32 0.0, %v5956
        %v5958 = vpop.f32.mrb[0].mxu0
        %v5959 = vadd.f32 0.0, %v5958
        %5960 = vdwg.mxu0
        %v5961 = vsub.f32 %v5612, %v5850
        %v5962 = vsub.f32 %v5613, %v5852
        %v5963 = vsub.f32 %v5614, %v5856
        %v5964 = vsub.f32 %v5615, %v5858
        %v5965 = vsub.f32 %v5616, %v5862
        %v5966 = vsub.f32 %v5617, %v5864
        %v5967 = vsub.f32 %v5618, %v5868
        %v5968 = vsub.f32 %v5619, %v5870
        %v5969 = vmul.f32 %v5961, %v5939
        %v5970 = vmul.f32 %v5962, %v5941
        %v5971 = vmul.f32 %v5963, %v5945
        %v5972 = vmul.f32 %v5964, %v5947
        %v5973 = vmul.f32 %v5965, %v5951
        %v5974 = vmul.f32 %v5966, %v5953
        %v5975 = vmul.f32 %v5967, %v5957
        %v5976 = vmul.f32 %v5968, %v5959
        %s5977 = scalar_lea.vmem %s5, 32
        %v5978 = vld [vmem:[%s5977] sm:$0xff]
        %v5979 = vld [vmem:[%s5977 + $0x8] sm:$0xff]
        %v5980 = vld [vmem:[%s5977 + $0x10] sm:$0xff]
        %v5981 = vld [vmem:[%s5977 + $0x18] sm:$0xff]
        %5983 = vset.pattern.permute.xlu0 0
        %5984 = vperm.xlu0 %5983, %v5978
        %v5985 = vpop.permute.xlu0 %5984
        %5988 = vset.pattern.permute.xlu0 0
        %5989 = vperm.xlu0 %5988, %v5979
        %v5990 = vpop.permute.xlu0 %5989
        %5993 = vset.pattern.permute.xlu0 0
        %5994 = vperm.xlu0 %5993, %v5980
        %v5995 = vpop.permute.xlu0 %5994
        %5998 = vset.pattern.permute.xlu0 0
        %5999 = vperm.xlu0 %5998, %v5981
        %v6000 = vpop.permute.xlu0 %5999
        %v6002 = vmul.f32 %v5969, %v5985
        %v6003 = vmul.f32 %v5970, %v5985
        %v6004 = vmul.f32 %v5971, %v5990
        %v6005 = vmul.f32 %v5972, %v5990
        %v6006 = vmul.f32 %v5973, %v5995
        %v6007 = vmul.f32 %v5974, %v5995
        %v6008 = vmul.f32 %v5975, %v6000
        %v6009 = vmul.f32 %v5976, %v6000
        %s6010 = scalar_lea.vmem %s5, 64
        %v6011 = vld [vmem:[%s6010] sm:$0xff]
        %v6012 = vld [vmem:[%s6010 + $0x8] sm:$0xff]
        %v6013 = vld [vmem:[%s6010 + $0x10] sm:$0xff]
        %v6014 = vld [vmem:[%s6010 + $0x18] sm:$0xff]
        %6016 = vset.pattern.permute.xlu0 0
        %6017 = vperm.xlu0 %6016, %v6011
        %v6018 = vpop.permute.xlu0 %6017
        %6021 = vset.pattern.permute.xlu0 0
        %6022 = vperm.xlu0 %6021, %v6012
        %v6023 = vpop.permute.xlu0 %6022
        %6026 = vset.pattern.permute.xlu0 0
        %6027 = vperm.xlu0 %6026, %v6013
        %v6028 = vpop.permute.xlu0 %6027
        %6031 = vset.pattern.permute.xlu0 0
        %6032 = vperm.xlu0 %6031, %v6014
        %v6033 = vpop.permute.xlu0 %6032
        %v6035 = vadd.f32 %v6002, %v6018
        %v6036 = vadd.f32 %v6003, %v6018
        %v6037 = vadd.f32 %v6004, %v6023
        %v6038 = vadd.f32 %v6005, %v6023
        %v6039 = vadd.f32 %v6006, %v6028
        %v6040 = vadd.f32 %v6007, %v6028
        %v6041 = vadd.f32 %v6008, %v6033
        %v6042 = vadd.f32 %v6009, %v6033
        %6043 = vst [vmem:[%s284] sm:$0xff] %v6035
        %6044 = vst [vmem:[%s284 + $0x8] sm:$0xff] %v6036
        %6045 = vst [vmem:[%s284 + $0x10] sm:$0xff] %v6037
        %6046 = vst [vmem:[%s284 + $0x18] sm:$0xff] %v6038
        %6047 = vst [vmem:[%s284 + $0x20] sm:$0xff] %v6039
        %6048 = vst [vmem:[%s284 + $0x28] sm:$0xff] %v6040
        %6049 = vst [vmem:[%s284 + $0x30] sm:$0xff] %v6041
        %6050 = vst [vmem:[%s284 + $0x38] sm:$0xff] %v6042
        %s6051 = sand.u32 %s180, 1
        %s6052 = scalar_lea.sflag [#allocation5], %s6051
        %s6053 = sand.u32 %s180, 1
        %s6054 = smul.addr %s6053, 64
        %s6055 = scalar_lea.vmem [#allocation4], %s6054
        // Predicated region
        $region45: #{tpu_custom_call.1} parent=43 // pred_check
          %p6056 = pneg %p190
        $region46: #{tpu_custom_call.1} parent=43 // pred_check_branch
          %6058 = sbr.rel (%p6056) target = $region48
        $region47: #{tpu_custom_call.1} parent=43 // pred_region
          %s6059 = smul.u32 2, %s25
          %s6061 = ssub.s32 1024, 1024
          %6062 = vsyncadd %s6052, %s6061
          %s6063 = smul.addr %s24, 8
          %s6064 = sadd.s32 %s6059, %s6063
          %s6065 = smul.addr %s6064, 128
          %s6066 = scalar_lea.hbm %s6, %s6065
          %s6067 = sshll.u32 %s6055, 4
          %s6068 = int_to_ptr.vmem [resolvable:$true] %s6067
          %6073 = dma.vmem_to_hbm [thread:$0]  %s6068, 1024, %s6066, %s6052, 256, 256, 16
        $region48: #{tpu_custom_call.1} parent=43 // pred_fallthru
          _
      $region44: #{tpu_custom_call.1} parent=5 // pred_fallthru
        _
      %p6074 = scmp.le.s32.totalorder 2, %s15
      // Predicated region
      $region49: #{tpu_custom_call.1} parent=5 // pred_check
        %p6075 = pneg %p6074
      $region50: #{tpu_custom_call.1} parent=5 // pred_check_branch
        %6077 = sbr.rel (%p6075) target = $region52
      $region51: #{tpu_custom_call.1} parent=5 // pred_region
        %s6078 = ssub.s32 %s15, 2
        // Predicated region
        $region53: #{tpu_custom_call.1} parent=51 // pred_check
          %p6079 = pneg %p196
        $region54: #{tpu_custom_call.1} parent=51 // pred_check_branch
          %6081 = sbr.rel (%p6079) target = $region56
        $region55: #{tpu_custom_call.1} parent=51 // pred_region
          %s6082 = sand.u32 %s181, 1
          %s6083 = scalar_lea.sflag [#allocation5], %s6082
          %s6084 = sand.u32 %s181, 1
          %s6085 = smul.addr %s6084, 64
          %s6086 = scalar_lea.vmem [#allocation4], %s6085
          %6087 = dma.done %s6083, 1024
        $region56: #{tpu_custom_call.1} parent=51 // pred_fallthru
          _
      $region52: #{tpu_custom_call.1} parent=5 // pred_fallthru
        _
    $region6: #{tpu_custom_call.1} parent=1 // loop_footer
      %s19 = sadd.s32 1, %s15
    $region7: #{tpu_custom_call.1} parent=1 // loop_footer_branch
      %14 = sbr.rel target = $region3
    $region8: #{tpu_custom_call.1} parent=1 // loop_exit
      _
    %6088 = vsyncpa [#allocation5], 1
    %s6089 = scalar_lea.sflag [#allocation5], 1
    %6090 = vsyncpa %s6089, 1

</llo_original>
